<compile_context>
chip_gen: v5e
topology: v5e:2x2
jax: 0.10.0
libtpu: 0.0.40
codegen_flags: <defaults>
</compile_context>

<pallas_src>
import functools

import jax
import jax.numpy as jnp
from jax.experimental import pallas as pl
from jax.experimental.pallas import tpu as pltpu


# -----------------------------------------------------------------------------
# Static configuration
# -----------------------------------------------------------------------------
_VMEM_LIMIT_BYTES = 32 * 1024 * 1024

# (name, ksize, stride, real_in_channels, real_out_channels, padded_im2col_K)
_CONV_CFG = (
    ("c1", 8, 4, 4, 32, 256),     # K = 8*8*4  = 256  (already 128-aligned)
    ("c2", 4, 2, 32, 64, 512),    # K = 4*4*32 = 512
    ("c3", 3, 1, 64, 64, 640),    # K = 3*3*64 = 576 -> padded to 640
)
_CONV_N = 128                     # lane-dense stored output channels

_FEAT_C, _FEAT_H, _FEAT_W = 64, 7, 7
_FEAT_K = _FEAT_C * _FEAT_H * _FEAT_W      # 3136
_HEAD1_K = 3584                            # 14 * 256 (256-aligned for MXU)
_HEAD1_N = 1024                            # [V hidden 512 | A hidden 512]
_HEAD2_N = 128                             # [V | A_1..A_n | zero pad]
_HEAD_TK = 1792                            # 2 pipelined K steps over head1_w


def _round_up(v, m):
    return (v + m - 1) // m * m


# -----------------------------------------------------------------------------
# Pallas kernel 1: conv-as-GEMM (+ bias + ReLU), batch-major grid
# -----------------------------------------------------------------------------
def _conv_gemm_kernel(x_ref, w_ref, b_ref, o_ref, acc_ref):
    # grid = (B, K_steps); K innermost ("arbitrary"), batch "parallel".
    @pl.when(pl.program_id(1) == 0)
    def _init():
        acc_ref[...] = jnp.zeros_like(acc_ref)

    acc_ref[...] += jnp.dot(
        x_ref[...], w_ref[...], preferred_element_type=jnp.float32
    )

    @pl.when(pl.program_id(1) == pl.num_programs(1) - 1)
    def _finalize():
        out = jnp.maximum(acc_ref[...] + b_ref[...], 0.0)   # f32 epilogue
        o_ref[...] = out.astype(o_ref.dtype)


def conv_gemm_relu(patches, w, b, *, out_dtype=jnp.bfloat16):
    """out[b] = relu(patches[b] @ w + b).

    patches: (B, S, K) bf16 im2col patches (K already 128-aligned, zero-padded)
    w:       (K, N)    bf16 weights (N = 128, zero columns beyond real O)
    b:       (1, N)    f32 bias (zero beyond real O)
    returns  (B, S, N) out_dtype, lane-dense (N = 128).
    """
    B, S, K = patches.shape
    Kw, N = w.shape
    assert Kw == K and K % 128 == 0 and N % 128 == 0 and b.shape == (1, N)

    tk = K                      # conv K is small; one K step, full-S / full-N blocks
    grid = (B, K // tk)

    flops = 2 * B * S * K * N
    bytes_accessed = (
        B * S * K * 2 + K * N * 2 + 4 * N + B * S * N * jnp.dtype(out_dtype).itemsize
    )

    return pl.pallas_call(
        _conv_gemm_kernel,
        out_shape=jax.ShapeDtypeStruct((B, S, N), out_dtype),
        grid_spec=pltpu.PrefetchScalarGridSpec(
            num_scalar_prefetch=0,
            grid=grid,
            in_specs=[
                pl.BlockSpec((None, S, tk), lambda bi, ki: (bi, 0, ki)),
                pl.BlockSpec((tk, N), lambda bi, ki: (ki, 0)),
                pl.BlockSpec((1, N), lambda bi, ki: (0, 0)),
            ],
            out_specs=pl.BlockSpec((None, S, N), lambda bi, ki: (bi, 0, 0)),
            scratch_shapes=[pltpu.VMEM((S, N), jnp.float32)],
        ),
        compiler_params=pltpu.CompilerParams(
            dimension_semantics=("parallel", "arbitrary"),
            vmem_limit_bytes=_VMEM_LIMIT_BYTES,
        ),
        cost_estimate=pl.CostEstimate(
            flops=flops, transcendentals=0, bytes_accessed=bytes_accessed
        ),
    )(patches, w, b)


# -----------------------------------------------------------------------------
# Pallas kernel 2: fused dueling head (feat -> hidden -> Q) in one launch
# -----------------------------------------------------------------------------
def _dueling_head_kernel(x_ref, w1_ref, b1_ref, w2_ref, b2_ref, o_ref, h_acc,
                         *, num_actions):
    # grid = (K1_steps,) over head1's K ("arbitrary"); hidden stays in VMEM.
    @pl.when(pl.program_id(0) == 0)
    def _init():
        h_acc[...] = jnp.zeros_like(h_acc)

    h_acc[...] += jnp.dot(
        x_ref[...], w1_ref[...], preferred_element_type=jnp.float32
    )

    @pl.when(pl.program_id(0) == pl.num_programs(0) - 1)
    def _finalize():
        hidden = jnp.maximum(h_acc[...] + b1_ref[...], 0.0)          # f32
        hidden = hidden.astype(jnp.bfloat16)                         # MXU input
        out = jnp.dot(hidden, w2_ref[...], preferred_element_type=jnp.float32)
        out = out + b2_ref[...]
        # Column 0 = V, columns 1..A = advantages, columns > A are exact zeros
        # (zero-padded weights / bias).
        col = jax.lax.broadcasted_iota(jnp.int32, out.shape, 1)
        a_mask = (col >= 1) & (col <= num_actions)
        a_mean = (
            jnp.sum(jnp.where(a_mask, out, 0.0), axis=1, keepdims=True)
            / num_actions
        )
        q = jnp.where(a_mask, out + out[:, 0:1] - a_mean, 0.0)       # Q in cols 1..A
        o_ref[...] = q.astype(o_ref.dtype)


def fused_dueling_head(feat, w1, b1, w2, b2, *, num_actions, tk=_HEAD_TK):
    """Q = dueling_combine(relu(feat @ w1 + b1) @ w2 + b2), one pallas_call.

    feat: (B, K1) bf16 (K1 = _HEAD1_K, zero-padded beyond the real 3136 rows)
    w1:   (K1, 1024) bf16; b1: (1, 1024) f32
    w2:   (1024, 128) bf16 block-diagonal [V | A]; b2: (1, 128) f32
    Returns (B, 128) f32 with Q-values in columns 1..num_actions.
    """
    B, K1 = feat.shape
    K1w, N1 = w1.shape
    K2, N2 = w2.shape
    assert K1w == K1 and N1 == K2
    assert b1.shape == (1, N1) and b2.shape == (1, N2)
    assert num_actions + 1 <= N2 and N2 % 128 == 0
    assert K1 % tk == 0 and tk % 128 == 0
    grid = (K1 // tk,)

    flops = 2 * B * (K1 * N1 + N1 * N2)
    bytes_accessed = (
        B * K1 * 2 + K1 * N1 * 2 + N1 * N2 * 2 + 4 * (N1 + N2) + B * N2 * 4
    )

    return pl.pallas_call(
        functools.partial(_dueling_head_kernel, num_actions=num_actions),
        out_shape=jax.ShapeDtypeStruct((B, N2), jnp.float32),
        grid_spec=pltpu.PrefetchScalarGridSpec(
            num_scalar_prefetch=0,
            grid=grid,
            in_specs=[
                pl.BlockSpec((B, tk), lambda k: (0, k)),
                pl.BlockSpec((tk, N1), lambda k: (k, 0)),
                pl.BlockSpec((1, N1), lambda k: (0, 0)),
                pl.BlockSpec((K2, N2), lambda k: (0, 0)),
                pl.BlockSpec((1, N2), lambda k: (0, 0)),
            ],
            out_specs=pl.BlockSpec((B, N2), lambda k: (0, 0)),
            scratch_shapes=[pltpu.VMEM((B, N1), jnp.float32)],
        ),
        compiler_params=pltpu.CompilerParams(
            dimension_semantics=("arbitrary",),
            vmem_limit_bytes=_VMEM_LIMIT_BYTES,
        ),
        cost_estimate=pl.CostEstimate(
            flops=flops, transcendentals=0, bytes_accessed=bytes_accessed
        ),
    )(feat, w1, b1, w2, b2)


# -----------------------------------------------------------------------------
# im2col glue (NHWC, pure slicing / reshape — no compute)
# -----------------------------------------------------------------------------
def im2col_nhwc(x, ksize, stride, c_real, k_pad):
    """x: (B, H, W, C_stored) -> (B, Ho*Wo, k_pad); K ordered (kh, kw, c_real).

    Only the first `c_real` channels are used (the rest are zero padding from
    the previous lane-dense conv store); the tail of K is zero-padded to the
    128-aligned `k_pad` (matching zero rows in the prepared weights).
    """
    B, H, W, _ = x.shape
    Ho = (H - ksize) // stride + 1
    Wo = (W - ksize) // stride + 1
    xs = x[..., :c_real]
    cols = []
    for i in range(ksize):
        for j in range(ksize):
            cols.append(xs[:, i:i + stride * Ho:stride, j:j + stride * Wo:stride, :])
    p = jnp.stack(cols, axis=3)                      # (B, Ho, Wo, kh*kw, c_real)
    p = p.reshape(B, Ho * Wo, ksize * ksize * c_real)
    k_real = ksize * ksize * c_real
    if k_pad > k_real:
        p = jnp.pad(p, ((0, 0), (0, 0), (0, k_pad - k_real)))
    return p, Ho, Wo


# -----------------------------------------------------------------------------
# Parameters
# -----------------------------------------------------------------------------
def init_params(key, num_actions, input_channels=4):
    """Synthetic parameters in PyTorch layouts (Conv2d weight: (O, C, kh, kw))."""
    ks = jax.random.split(key, 14)

    def u(k, shape, fan_in):
        bound = 1.0 / (fan_in ** 0.5)
        return jax.random.uniform(k, shape, jnp.float32, -bound, bound)

    return {
        "c1_w": u(ks[0], (32, input_channels, 8, 8), input_channels * 64),
        "c1_b": u(ks[1], (32,), input_channels * 64),
        "c2_w": u(ks[2], (64, 32, 4, 4), 32 * 16),
        "c2_b": u(ks[3], (64,), 32 * 16),
        "c3_w": u(ks[4], (64, 64, 3, 3), 64 * 9),
        "c3_b": u(ks[5], (64,), 64 * 9),
        "v1_w": u(ks[6], (_FEAT_K, 512), _FEAT_K),
        "v1_b": u(ks[7], (512,), _FEAT_K),
        "v2_w": u(ks[8], (512, 1), 512),
        "v2_b": u(ks[9], (1,), 512),
        "a1_w": u(ks[10], (_FEAT_K, 512), _FEAT_K),
        "a1_b": u(ks[11], (512,), _FEAT_K),
        "a2_w": u(ks[12], (_FEAT_K // _FEAT_K * 512, num_actions), 512),
        "a2_b": u(ks[13], (num_actions,), 512),
    }


def prepare_params(raw, num_actions):
    """One-time conversion of PyTorch-layout params into kernel-friendly layouts:
    (kh,kw,c)-ordered conv weights with 128-padded output channels, fused and
    zero-padded V/A head weights, bf16 matmul operands, f32 biases."""
    assert num_actions + 1 <= _HEAD2_N
    p = {}

    # Conv weights (O, C, kh, kw) -> (K_pad, 128) bf16; biases -> (1, 128) f32.
    for name, ks, _, cin, cout, kpad in _CONV_CFG:
        w = raw[f"{name}_w"]
        O = w.shape[0]
        assert O == cout and w.shape[1] == cin
        w2 = jnp.transpose(w, (2, 3, 1, 0)).reshape(ks * ks * cin, O)
        w2 = jnp.pad(w2, ((0, kpad - w2.shape[0]), (0, _CONV_N - O)))
        p[f"{name}_w"] = w2.astype(jnp.bfloat16)
        p[f"{name}_b"] = (
            jnp.pad(raw[f"{name}_b"], (0, _CONV_N - O)).reshape(1, _CONV_N)
            .astype(jnp.float32)
        )

    # FC1 (fused V/A hidden): reorder rows from PyTorch's (C,H,W) flatten to the
    # NHWC (H,W,C) flatten used by the kernel path, concat streams, pad K to
    # 3584 (= 14*256, MXU-aligned).
    def reorder_rows(w_fc):
        return jnp.transpose(
            w_fc.reshape(_FEAT_C, _FEAT_H, _FEAT_W, -1), (1, 2, 0, 3)
        ).reshape(_FEAT_K, -1)

    h_w = jnp.concatenate(
        [reorder_rows(raw["v1_w"]), reorder_rows(raw["a1_w"])], axis=1
    )
    h_w = jnp.pad(h_w, ((0, _HEAD1_K - _FEAT_K), (0, 0)))
    p["head1_w"] = h_w.astype(jnp.bfloat16)
    p["head1_b"] = (
        jnp.concatenate([raw["v1_b"], raw["a1_b"]]).reshape(1, _HEAD1_N)
        .astype(jnp.float32)
    )

    # FC2 (fused V/A output + in-kernel dueling combine): block-diagonal
    # (1024, 1+A), padded to 128 output lanes so the store is lane-dense.
    A = num_actions
    o_w = jnp.zeros((_HEAD1_N, 1 + A), jnp.float32)
    o_w = o_w.at[:512, 0:1].set(raw["v2_w"])
    o_w = o_w.at[512:, 1:].set(raw["a2_w"])
    o_b = jnp.concatenate([raw["v2_b"], raw["a2_b"]]).reshape(1, 1 + A)
    p["head2_w"] = jnp.pad(o_w, ((0, 0), (0, _HEAD2_N - (1 + A)))).astype(jnp.bfloat16)
    p["head2_b"] = jnp.pad(o_b, ((0, 0), (0, _HEAD2_N - (1 + A)))).astype(jnp.float32)
    return p


# -----------------------------------------------------------------------------
# Forward pass (matches DQN.forward)
# -----------------------------------------------------------------------------
def dqn_forward(params, x, *, num_actions):
    """x: (B, C, H, W) f32 (PyTorch NCHW). Returns Q-values (B, num_actions) f32."""
    B = x.shape[0]
    h = jnp.transpose(x, (0, 2, 3, 1)).astype(jnp.bfloat16)          # NHWC once
    for name, ks, st, cin, cout, kpad in _CONV_CFG:
        patches, Ho, Wo = im2col_nhwc(h, ks, st, cin, kpad)          # (B, S, kpad)
        out = conv_gemm_relu(patches, params[f"{name}_w"], params[f"{name}_b"])
        h = out.reshape(B, Ho, Wo, _CONV_N)                          # lane-dense NHWC

    # Flatten real channels (HWC order) and zero-pad K to the head's aligned K.
    feat = h[..., :_FEAT_C].reshape(B, _FEAT_K)
    feat = jnp.pad(feat, ((0, 0), (0, _HEAD1_K - _FEAT_K)))

    q_pad = fused_dueling_head(
        feat, params["head1_w"], params["head1_b"],
        params["head2_w"], params["head2_b"], num_actions=num_actions
    )                                                                # (B, 128)
    return q_pad[:, 1:1 + num_actions]


# -----------------------------------------------------------------------------
# Pure-JAX reference (PyTorch layouts; bf16 matmul inputs to match kernel numerics)
# -----------------------------------------------------------------------------
def dqn_forward_ref(raw, x, *, num_actions):
    def mm(a, b):
        return jnp.dot(a.astype(jnp.bfloat16), b.astype(jnp.bfloat16),
                       preferred_element_type=jnp.float32)

    def conv(x, w, b, stride):
        B, C, H, W = x.shape
        O, _, kh, kw = w.shape
        Ho = (H - kh) // stride + 1
        Wo = (W - kw) // stride + 1
        cols = []
        for i in range(kh):
            for j in range(kw):
                cols.append(x[:, :, i:i + stride * Ho:stride, j:j + stride * Wo:stride])
        p = jnp.stack(cols, axis=2).transpose(0, 3, 4, 1, 2).reshape(B * Ho * Wo, C * kh * kw)
        out = jnp.maximum(mm(p, w.reshape(O, -1).T) + b, 0.0).astype(jnp.bfloat16)
        return out.reshape(B, Ho, Wo, O).transpose(0, 3, 1, 2)

    h = conv(x.astype(jnp.bfloat16), raw["c1_w"], raw["c1_b"], 4)
    h = conv(h, raw["c2_w"], raw["c2_b"], 2)
    h = conv(h, raw["c3_w"], raw["c3_b"], 1)
    feat = h.reshape(h.shape[0], -1)
    hv = jnp.maximum(mm(feat, raw["v1_w"]) + raw["v1_b"], 0.0).astype(jnp.bfloat16)
    ha = jnp.maximum(mm(feat, raw["a1_w"]) + raw["a1_b"], 0.0).astype(jnp.bfloat16)
    v = mm(hv, raw["v2_w"]) + raw["v2_b"]
    a = mm(ha, raw["a2_w"]) + raw["a2_b"]
    return v + (a - a.mean(axis=1, keepdims=True))


if __name__ == "__main__":
    num_actions = 6
    batch = 2
    # The 7*7*64 flatten in the module implies an 84x84 Atari input.
    key = jax.random.PRNGKey(0)
    k_x, k_p = jax.random.split(key)
    x = jax.random.normal(k_x, (batch, 4, 84, 84), dtype=jnp.float32)

    raw = init_params(k_p, num_actions)
    params = prepare_params(raw, num_actions)

    forward = jax.jit(functools.partial(dqn_forward, num_actions=num_actions))
    q = jax.block_until_ready(forward(params, x))

    q_ref = dqn_forward_ref(raw, x, num_actions=num_actions)
    assert q.shape == (batch, num_actions)
    assert jnp.allclose(q, q_ref, atol=2e-2, rtol=2e-2), "mismatch vs reference"

    print("KERNEL_OK")
</pallas_src>

<mosaic_0001>
module attributes {stable_mosaic.version = 11 : i64} {
  func.func @_conv_gemm_kernel(%arg0: i32, %arg1: i32, %arg2: memref<1x400x256xbf16, #tpu.memory_space<vmem>>, %arg3: memref<256x128xbf16, #tpu.memory_space<vmem>>, %arg4: memref<1x128xf32, #tpu.memory_space<vmem>>, %arg5: memref<1x400x128xbf16, #tpu.memory_space<vmem>>, %arg6: memref<400x128xf32, #tpu.memory_space<vmem>>) attributes {dimension_semantics = [#tpu.dimension_semantics<parallel>, #tpu.dimension_semantics<arbitrary>], iteration_bounds = array<i64: 2, 1>, scalar_prefetch = 0 : i64, scratch_operands = 1 : i64, tpu.core_type = #tpu.core_type<tc>, window_params = [{transform_indices = @transform_0, window_bounds = array<i64: 1, 400, 256>}, {transform_indices = @transform_1, window_bounds = array<i64: 256, 128>}, {pipeline_mode = #tpu.pipeline_mode<synchronous>, transform_indices = @transform_2, window_bounds = array<i64: 1, 128>}, {transform_indices = @transform_3, window_bounds = array<i64: 1, 400, 128>}]} {
    %c0_i32 = arith.constant 0 : i32
    %0 = arith.cmpi eq, %arg1, %c0_i32 : i32
    %1 = arith.extui %0 : i1 to i32
    %c0_i32_0 = arith.constant 0 : i32
    %2 = arith.cmpi ne, %1, %c0_i32_0 : i32
    scf.if %2 {
      %cst_11 = arith.constant 0.000000e+00 : f32
      %13 = vector.broadcast %cst_11 : f32 to vector<400x128xf32>
      %c0_12 = arith.constant 0 : index
      %c0_13 = arith.constant 0 : index
      %14 = vector.load %arg6[%c0_12, %c0_13] : memref<400x128xf32, #tpu.memory_space<vmem>>, vector<400x128xf32>
      tpu.vector_store %arg6[%c0_12, %c0_13], %13 {strides = array<i32>} : memref<400x128xf32, #tpu.memory_space<vmem>>, vector<400x128xf32>,
    } else {
    }
    %c0 = arith.constant 0 : index
    %c0_1 = arith.constant 0 : index
    %3 = vector.load %arg6[%c0, %c0_1] : memref<400x128xf32, #tpu.memory_space<vmem>>, vector<400x128xf32>
    %c0_2 = arith.constant 0 : index
    %c0_3 = arith.constant 0 : index
    %c0_4 = arith.constant 0 : index
    %4 = vector.load %arg2[%c0_2, %c0_3, %c0_4] : memref<1x400x256xbf16, #tpu.memory_space<vmem>>, vector<1x400x256xbf16>
    %5 = vector.shape_cast %4 : vector<1x400x256xbf16> to vector<400x256xbf16>
    %c0_5 = arith.constant 0 : index
    %c0_6 = arith.constant 0 : index
    %6 = vector.load %arg3[%c0_5, %c0_6] : memref<256x128xbf16, #tpu.memory_space<vmem>>, vector<256x128xbf16>
    %cst = arith.constant dense<0.000000e+00> : vector<400x128xf32>
    %7 = tpu.matmul %5, %6, %cst {dimension_numbers = #tpu.dot_dimension_numbers<[1], [0], [0], [1], [0, 0, 1, 1], [], []>} : vector<400x256xbf16>, vector<256x128xbf16>, vector<400x128xf32> -> vector<400x128xf32>
    %8 = arith.addf %3, %7 : vector<400x128xf32>
    %c0_7 = arith.constant 0 : index
    %c0_8 = arith.constant 0 : index
    %9 = vector.load %arg6[%c0_7, %c0_8] : memref<400x128xf32, #tpu.memory_space<vmem>>, vector<400x128xf32>
    tpu.vector_store %arg6[%c0_7, %c0_8], %8 {strides = array<i32>} : memref<400x128xf32, #tpu.memory_space<vmem>>, vector<400x128xf32>,
    %c0_i32_9 = arith.constant 0 : i32
    %10 = arith.cmpi eq, %arg1, %c0_i32_9 : i32
    %11 = arith.extui %10 : i1 to i32
    %c0_i32_10 = arith.constant 0 : i32
    %12 = arith.cmpi ne, %11, %c0_i32_10 : i32
    scf.if %12 {
      %c0_11 = arith.constant 0 : index
      %c0_12 = arith.constant 0 : index
      %13 = vector.load %arg6[%c0_11, %c0_12] : memref<400x128xf32, #tpu.memory_space<vmem>>, vector<400x128xf32>
      %c0_13 = arith.constant 0 : index
      %c0_14 = arith.constant 0 : index
      %14 = vector.load %arg4[%c0_13, %c0_14] : memref<1x128xf32, #tpu.memory_space<vmem>>, vector<1x128xf32>
      %15 = vector.broadcast %14 : vector<1x128xf32> to vector<400x128xf32>
      %16 = arith.addf %13, %15 : vector<400x128xf32>
      %cst_15 = arith.constant 0.000000e+00 : f32
      %17 = vector.broadcast %cst_15 : f32 to vector<400x128xf32>
      %18 = arith.maximumf %16, %17 : vector<400x128xf32>
      %19 = arith.truncf %18 : vector<400x128xf32> to vector<400x128xbf16>
      %c0_16 = arith.constant 0 : index
      %c0_17 = arith.constant 0 : index
      %c0_18 = arith.constant 0 : index
      %20 = vector.load %arg5[%c0_16, %c0_17, %c0_18] : memref<1x400x128xbf16, #tpu.memory_space<vmem>>, vector<1x400x128xbf16>
      %21 = vector.shape_cast %20 : vector<1x400x128xbf16> to vector<400x128xbf16>
      %22 = vector.shape_cast %19 : vector<400x128xbf16> to vector<1x400x128xbf16>
      tpu.vector_store %arg5[%c0_16, %c0_17, %c0_18], %22 {strides = array<i32>} : memref<1x400x128xbf16, #tpu.memory_space<vmem>>, vector<1x400x128xbf16>,
    } else {
    }
    return
  }
  func.func @transform_0(%arg0: i32, %arg1: i32) -> (i32, i32, i32) {
    %c0_i32 = arith.constant 0 : i32
    %c0_i32_0 = arith.constant 0 : i32
    return %arg0, %c0_i32, %arg1 : i32, i32, i32
  }
  func.func @transform_1(%arg0: i32, %arg1: i32) -> (i32, i32) {
    %c0_i32 = arith.constant 0 : i32
    %c0_i32_0 = arith.constant 0 : i32
    return %arg1, %c0_i32 : i32, i32
  }
  func.func @transform_2(%arg0: i32, %arg1: i32) -> (i32, i32) {
    %c0_i32 = arith.constant 0 : i32
    %c0_i32_0 = arith.constant 0 : i32
    %c0_i32_1 = arith.constant 0 : i32
    return %c0_i32, %c0_i32_0 : i32, i32
  }
  func.func @transform_3(%arg0: i32, %arg1: i32) -> (i32, i32, i32) {
    %c0_i32 = arith.constant 0 : i32
    %c0_i32_0 = arith.constant 0 : i32
    %c0_i32_1 = arith.constant 0 : i32
    return %arg0, %c0_i32, %c0_i32_0 : i32, i32, i32
  }
}

module attributes {stable_mosaic.version = 11 : i64} {
  func.func @_conv_gemm_kernel(%arg0: i32, %arg1: i32, %arg2: memref<1x81x512xbf16, #tpu.memory_space<vmem>>, %arg3: memref<512x128xbf16, #tpu.memory_space<vmem>>, %arg4: memref<1x128xf32, #tpu.memory_space<vmem>>, %arg5: memref<1x81x128xbf16, #tpu.memory_space<vmem>>, %arg6: memref<81x128xf32, #tpu.memory_space<vmem>>) attributes {dimension_semantics = [#tpu.dimension_semantics<parallel>, #tpu.dimension_semantics<arbitrary>], iteration_bounds = array<i64: 2, 1>, scalar_prefetch = 0 : i64, scratch_operands = 1 : i64, tpu.core_type = #tpu.core_type<tc>, window_params = [{transform_indices = @transform_0, window_bounds = array<i64: 1, 81, 512>}, {transform_indices = @transform_1, window_bounds = array<i64: 512, 128>}, {pipeline_mode = #tpu.pipeline_mode<synchronous>, transform_indices = @transform_2, window_bounds = array<i64: 1, 128>}, {transform_indices = @transform_3, window_bounds = array<i64: 1, 81, 128>}]} {
    %c0_i32 = arith.constant 0 : i32
    %0 = arith.cmpi eq, %arg1, %c0_i32 : i32
    %1 = arith.extui %0 : i1 to i32
    %c0_i32_0 = arith.constant 0 : i32
    %2 = arith.cmpi ne, %1, %c0_i32_0 : i32
    scf.if %2 {
      %cst_11 = arith.constant 0.000000e+00 : f32
      %13 = vector.broadcast %cst_11 : f32 to vector<81x128xf32>
      %c0_12 = arith.constant 0 : index
      %c0_13 = arith.constant 0 : index
      %14 = vector.load %arg6[%c0_12, %c0_13] : memref<81x128xf32, #tpu.memory_space<vmem>>, vector<81x128xf32>
      tpu.vector_store %arg6[%c0_12, %c0_13], %13 {strides = array<i32>} : memref<81x128xf32, #tpu.memory_space<vmem>>, vector<81x128xf32>,
    } else {
    }
    %c0 = arith.constant 0 : index
    %c0_1 = arith.constant 0 : index
    %3 = vector.load %arg6[%c0, %c0_1] : memref<81x128xf32, #tpu.memory_space<vmem>>, vector<81x128xf32>
    %c0_2 = arith.constant 0 : index
    %c0_3 = arith.constant 0 : index
    %c0_4 = arith.constant 0 : index
    %4 = vector.load %arg2[%c0_2, %c0_3, %c0_4] : memref<1x81x512xbf16, #tpu.memory_space<vmem>>, vector<1x81x512xbf16>
    %5 = vector.shape_cast %4 : vector<1x81x512xbf16> to vector<81x512xbf16>
    %c0_5 = arith.constant 0 : index
    %c0_6 = arith.constant 0 : index
    %6 = vector.load %arg3[%c0_5, %c0_6] : memref<512x128xbf16, #tpu.memory_space<vmem>>, vector<512x128xbf16>
    %cst = arith.constant dense<0.000000e+00> : vector<81x128xf32>
    %7 = tpu.matmul %5, %6, %cst {dimension_numbers = #tpu.dot_dimension_numbers<[1], [0], [0], [1], [0, 0, 1, 1], [], []>} : vector<81x512xbf16>, vector<512x128xbf16>, vector<81x128xf32> -> vector<81x128xf32>
    %8 = arith.addf %3, %7 : vector<81x128xf32>
    %c0_7 = arith.constant 0 : index
    %c0_8 = arith.constant 0 : index
    %9 = vector.load %arg6[%c0_7, %c0_8] : memref<81x128xf32, #tpu.memory_space<vmem>>, vector<81x128xf32>
    tpu.vector_store %arg6[%c0_7, %c0_8], %8 {strides = array<i32>} : memref<81x128xf32, #tpu.memory_space<vmem>>, vector<81x128xf32>,
    %c0_i32_9 = arith.constant 0 : i32
    %10 = arith.cmpi eq, %arg1, %c0_i32_9 : i32
    %11 = arith.extui %10 : i1 to i32
    %c0_i32_10 = arith.constant 0 : i32
    %12 = arith.cmpi ne, %11, %c0_i32_10 : i32
    scf.if %12 {
      %c0_11 = arith.constant 0 : index
      %c0_12 = arith.constant 0 : index
      %13 = vector.load %arg6[%c0_11, %c0_12] : memref<81x128xf32, #tpu.memory_space<vmem>>, vector<81x128xf32>
      %c0_13 = arith.constant 0 : index
      %c0_14 = arith.constant 0 : index
      %14 = vector.load %arg4[%c0_13, %c0_14] : memref<1x128xf32, #tpu.memory_space<vmem>>, vector<1x128xf32>
      %15 = vector.broadcast %14 : vector<1x128xf32> to vector<81x128xf32>
      %16 = arith.addf %13, %15 : vector<81x128xf32>
      %cst_15 = arith.constant 0.000000e+00 : f32
      %17 = vector.broadcast %cst_15 : f32 to vector<81x128xf32>
      %18 = arith.maximumf %16, %17 : vector<81x128xf32>
      %19 = arith.truncf %18 : vector<81x128xf32> to vector<81x128xbf16>
      %c0_16 = arith.constant 0 : index
      %c0_17 = arith.constant 0 : index
      %c0_18 = arith.constant 0 : index
      %20 = vector.load %arg5[%c0_16, %c0_17, %c0_18] : memref<1x81x128xbf16, #tpu.memory_space<vmem>>, vector<1x81x128xbf16>
      %21 = vector.shape_cast %20 : vector<1x81x128xbf16> to vector<81x128xbf16>
      %22 = vector.shape_cast %19 : vector<81x128xbf16> to vector<1x81x128xbf16>
      tpu.vector_store %arg5[%c0_16, %c0_17, %c0_18], %22 {strides = array<i32>} : memref<1x81x128xbf16, #tpu.memory_space<vmem>>, vector<1x81x128xbf16>,
    } else {
    }
    return
  }
  func.func @transform_0(%arg0: i32, %arg1: i32) -> (i32, i32, i32) {
    %c0_i32 = arith.constant 0 : i32
    %c0_i32_0 = arith.constant 0 : i32
    return %arg0, %c0_i32, %arg1 : i32, i32, i32
  }
  func.func @transform_1(%arg0: i32, %arg1: i32) -> (i32, i32) {
    %c0_i32 = arith.constant 0 : i32
    %c0_i32_0 = arith.constant 0 : i32
    return %arg1, %c0_i32 : i32, i32
  }
  func.func @transform_2(%arg0: i32, %arg1: i32) -> (i32, i32) {
    %c0_i32 = arith.constant 0 : i32
    %c0_i32_0 = arith.constant 0 : i32
    %c0_i32_1 = arith.constant 0 : i32
    return %c0_i32, %c0_i32_0 : i32, i32
  }
  func.func @transform_3(%arg0: i32, %arg1: i32) -> (i32, i32, i32) {
    %c0_i32 = arith.constant 0 : i32
    %c0_i32_0 = arith.constant 0 : i32
    %c0_i32_1 = arith.constant 0 : i32
    return %arg0, %c0_i32, %c0_i32_0 : i32, i32, i32
  }
}

module attributes {stable_mosaic.version = 11 : i64} {
  func.func @_conv_gemm_kernel(%arg0: i32, %arg1: i32, %arg2: memref<1x49x640xbf16, #tpu.memory_space<vmem>>, %arg3: memref<640x128xbf16, #tpu.memory_space<vmem>>, %arg4: memref<1x128xf32, #tpu.memory_space<vmem>>, %arg5: memref<1x49x128xbf16, #tpu.memory_space<vmem>>, %arg6: memref<49x128xf32, #tpu.memory_space<vmem>>) attributes {dimension_semantics = [#tpu.dimension_semantics<parallel>, #tpu.dimension_semantics<arbitrary>], iteration_bounds = array<i64: 2, 1>, scalar_prefetch = 0 : i64, scratch_operands = 1 : i64, tpu.core_type = #tpu.core_type<tc>, window_params = [{transform_indices = @transform_0, window_bounds = array<i64: 1, 49, 640>}, {transform_indices = @transform_1, window_bounds = array<i64: 640, 128>}, {pipeline_mode = #tpu.pipeline_mode<synchronous>, transform_indices = @transform_2, window_bounds = array<i64: 1, 128>}, {transform_indices = @transform_3, window_bounds = array<i64: 1, 49, 128>}]} {
    %c0_i32 = arith.constant 0 : i32
    %0 = arith.cmpi eq, %arg1, %c0_i32 : i32
    %1 = arith.extui %0 : i1 to i32
    %c0_i32_0 = arith.constant 0 : i32
    %2 = arith.cmpi ne, %1, %c0_i32_0 : i32
    scf.if %2 {
      %cst_11 = arith.constant 0.000000e+00 : f32
      %13 = vector.broadcast %cst_11 : f32 to vector<49x128xf32>
      %c0_12 = arith.constant 0 : index
      %c0_13 = arith.constant 0 : index
      %14 = vector.load %arg6[%c0_12, %c0_13] : memref<49x128xf32, #tpu.memory_space<vmem>>, vector<49x128xf32>
      tpu.vector_store %arg6[%c0_12, %c0_13], %13 {strides = array<i32>} : memref<49x128xf32, #tpu.memory_space<vmem>>, vector<49x128xf32>,
    } else {
    }
    %c0 = arith.constant 0 : index
    %c0_1 = arith.constant 0 : index
    %3 = vector.load %arg6[%c0, %c0_1] : memref<49x128xf32, #tpu.memory_space<vmem>>, vector<49x128xf32>
    %c0_2 = arith.constant 0 : index
    %c0_3 = arith.constant 0 : index
    %c0_4 = arith.constant 0 : index
    %4 = vector.load %arg2[%c0_2, %c0_3, %c0_4] : memref<1x49x640xbf16, #tpu.memory_space<vmem>>, vector<1x49x640xbf16>
    %5 = vector.shape_cast %4 : vector<1x49x640xbf16> to vector<49x640xbf16>
    %c0_5 = arith.constant 0 : index
    %c0_6 = arith.constant 0 : index
    %6 = vector.load %arg3[%c0_5, %c0_6] : memref<640x128xbf16, #tpu.memory_space<vmem>>, vector<640x128xbf16>
    %cst = arith.constant dense<0.000000e+00> : vector<49x128xf32>
    %7 = tpu.matmul %5, %6, %cst {dimension_numbers = #tpu.dot_dimension_numbers<[1], [0], [0], [1], [0, 0, 1, 1], [], []>} : vector<49x640xbf16>, vector<640x128xbf16>, vector<49x128xf32> -> vector<49x128xf32>
    %8 = arith.addf %3, %7 : vector<49x128xf32>
    %c0_7 = arith.constant 0 : index
    %c0_8 = arith.constant 0 : index
    %9 = vector.load %arg6[%c0_7, %c0_8] : memref<49x128xf32, #tpu.memory_space<vmem>>, vector<49x128xf32>
    tpu.vector_store %arg6[%c0_7, %c0_8], %8 {strides = array<i32>} : memref<49x128xf32, #tpu.memory_space<vmem>>, vector<49x128xf32>,
    %c0_i32_9 = arith.constant 0 : i32
    %10 = arith.cmpi eq, %arg1, %c0_i32_9 : i32
    %11 = arith.extui %10 : i1 to i32
    %c0_i32_10 = arith.constant 0 : i32
    %12 = arith.cmpi ne, %11, %c0_i32_10 : i32
    scf.if %12 {
      %c0_11 = arith.constant 0 : index
      %c0_12 = arith.constant 0 : index
      %13 = vector.load %arg6[%c0_11, %c0_12] : memref<49x128xf32, #tpu.memory_space<vmem>>, vector<49x128xf32>
      %c0_13 = arith.constant 0 : index
      %c0_14 = arith.constant 0 : index
      %14 = vector.load %arg4[%c0_13, %c0_14] : memref<1x128xf32, #tpu.memory_space<vmem>>, vector<1x128xf32>
      %15 = vector.broadcast %14 : vector<1x128xf32> to vector<49x128xf32>
      %16 = arith.addf %13, %15 : vector<49x128xf32>
      %cst_15 = arith.constant 0.000000e+00 : f32
      %17 = vector.broadcast %cst_15 : f32 to vector<49x128xf32>
      %18 = arith.maximumf %16, %17 : vector<49x128xf32>
      %19 = arith.truncf %18 : vector<49x128xf32> to vector<49x128xbf16>
      %c0_16 = arith.constant 0 : index
      %c0_17 = arith.constant 0 : index
      %c0_18 = arith.constant 0 : index
      %20 = vector.load %arg5[%c0_16, %c0_17, %c0_18] : memref<1x49x128xbf16, #tpu.memory_space<vmem>>, vector<1x49x128xbf16>
      %21 = vector.shape_cast %20 : vector<1x49x128xbf16> to vector<49x128xbf16>
      %22 = vector.shape_cast %19 : vector<49x128xbf16> to vector<1x49x128xbf16>
      tpu.vector_store %arg5[%c0_16, %c0_17, %c0_18], %22 {strides = array<i32>} : memref<1x49x128xbf16, #tpu.memory_space<vmem>>, vector<1x49x128xbf16>,
    } else {
    }
    return
  }
  func.func @transform_0(%arg0: i32, %arg1: i32) -> (i32, i32, i32) {
    %c0_i32 = arith.constant 0 : i32
    %c0_i32_0 = arith.constant 0 : i32
    return %arg0, %c0_i32, %arg1 : i32, i32, i32
  }
  func.func @transform_1(%arg0: i32, %arg1: i32) -> (i32, i32) {
    %c0_i32 = arith.constant 0 : i32
    %c0_i32_0 = arith.constant 0 : i32
    return %arg1, %c0_i32 : i32, i32
  }
  func.func @transform_2(%arg0: i32, %arg1: i32) -> (i32, i32) {
    %c0_i32 = arith.constant 0 : i32
    %c0_i32_0 = arith.constant 0 : i32
    %c0_i32_1 = arith.constant 0 : i32
    return %c0_i32, %c0_i32_0 : i32, i32
  }
  func.func @transform_3(%arg0: i32, %arg1: i32) -> (i32, i32, i32) {
    %c0_i32 = arith.constant 0 : i32
    %c0_i32_0 = arith.constant 0 : i32
    %c0_i32_1 = arith.constant 0 : i32
    return %arg0, %c0_i32, %c0_i32_0 : i32, i32, i32
  }
}

module attributes {stable_mosaic.version = 11 : i64} {
  func.func @_dueling_head_kernel(%arg0: i32, %arg1: memref<2x1792xbf16, #tpu.memory_space<vmem>>, %arg2: memref<1792x1024xbf16, #tpu.memory_space<vmem>>, %arg3: memref<1x1024xf32, #tpu.memory_space<vmem>>, %arg4: memref<1024x128xbf16, #tpu.memory_space<vmem>>, %arg5: memref<1x128xf32, #tpu.memory_space<vmem>>, %arg6: memref<2x128xf32, #tpu.memory_space<vmem>>, %arg7: memref<2x1024xf32, #tpu.memory_space<vmem>>) attributes {dimension_semantics = [#tpu.dimension_semantics<arbitrary>], iteration_bounds = array<i64: 2>, scalar_prefetch = 0 : i64, scratch_operands = 1 : i64, tpu.core_type = #tpu.core_type<tc>, window_params = [{transform_indices = @transform_0, window_bounds = array<i64: 2, 1792>}, {transform_indices = @transform_1, window_bounds = array<i64: 1792, 1024>}, {pipeline_mode = #tpu.pipeline_mode<synchronous>, transform_indices = @transform_2, window_bounds = array<i64: 1, 1024>}, {pipeline_mode = #tpu.pipeline_mode<synchronous>, transform_indices = @transform_3, window_bounds = array<i64: 1024, 128>}, {pipeline_mode = #tpu.pipeline_mode<synchronous>, transform_indices = @transform_4, window_bounds = array<i64: 1, 128>}, {pipeline_mode = #tpu.pipeline_mode<synchronous>, transform_indices = @transform_5, window_bounds = array<i64: 2, 128>}]} {
    %c0_i32 = arith.constant 0 : i32
    %0 = arith.cmpi eq, %arg0, %c0_i32 : i32
    %1 = arith.extui %0 : i1 to i32
    %c0_i32_0 = arith.constant 0 : i32
    %2 = arith.cmpi ne, %1, %c0_i32_0 : i32
    scf.if %2 {
      %cst_9 = arith.constant 0.000000e+00 : f32
      %12 = vector.broadcast %cst_9 : f32 to vector<2x1024xf32>
      %c0_10 = arith.constant 0 : index
      %c0_11 = arith.constant 0 : index
      %13 = vector.load %arg7[%c0_10, %c0_11] : memref<2x1024xf32, #tpu.memory_space<vmem>>, vector<2x1024xf32>
      tpu.vector_store %arg7[%c0_10, %c0_11], %12 {strides = array<i32>} : memref<2x1024xf32, #tpu.memory_space<vmem>>, vector<2x1024xf32>,
    } else {
    }
    %c0 = arith.constant 0 : index
    %c0_1 = arith.constant 0 : index
    %3 = vector.load %arg7[%c0, %c0_1] : memref<2x1024xf32, #tpu.memory_space<vmem>>, vector<2x1024xf32>
    %c0_2 = arith.constant 0 : index
    %c0_3 = arith.constant 0 : index
    %4 = vector.load %arg1[%c0_2, %c0_3] : memref<2x1792xbf16, #tpu.memory_space<vmem>>, vector<2x1792xbf16>
    %c0_4 = arith.constant 0 : index
    %c0_5 = arith.constant 0 : index
    %5 = vector.load %arg2[%c0_4, %c0_5] : memref<1792x1024xbf16, #tpu.memory_space<vmem>>, vector<1792x1024xbf16>
    %cst = arith.constant dense<0.000000e+00> : vector<2x1024xf32>
    %6 = tpu.matmul %4, %5, %cst {dimension_numbers = #tpu.dot_dimension_numbers<[1], [0], [0], [1], [0, 0, 1, 1], [], []>} : vector<2x1792xbf16>, vector<1792x1024xbf16>, vector<2x1024xf32> -> vector<2x1024xf32>
    %7 = arith.addf %3, %6 : vector<2x1024xf32>
    %c0_6 = arith.constant 0 : index
    %c0_7 = arith.constant 0 : index
    %8 = vector.load %arg7[%c0_6, %c0_7] : memref<2x1024xf32, #tpu.memory_space<vmem>>, vector<2x1024xf32>
    tpu.vector_store %arg7[%c0_6, %c0_7], %7 {strides = array<i32>} : memref<2x1024xf32, #tpu.memory_space<vmem>>, vector<2x1024xf32>,
    %c1_i32 = arith.constant 1 : i32
    %9 = arith.cmpi eq, %arg0, %c1_i32 : i32
    %10 = arith.extui %9 : i1 to i32
    %c0_i32_8 = arith.constant 0 : i32
    %11 = arith.cmpi ne, %10, %c0_i32_8 : i32
    scf.if %11 {
      %c0_9 = arith.constant 0 : index
      %c0_10 = arith.constant 0 : index
      %12 = vector.load %arg7[%c0_9, %c0_10] : memref<2x1024xf32, #tpu.memory_space<vmem>>, vector<2x1024xf32>
      %c0_11 = arith.constant 0 : index
      %c0_12 = arith.constant 0 : index
      %13 = vector.load %arg3[%c0_11, %c0_12] : memref<1x1024xf32, #tpu.memory_space<vmem>>, vector<1x1024xf32>
      %14 = vector.broadcast %13 : vector<1x1024xf32> to vector<2x1024xf32>
      %15 = arith.addf %12, %14 : vector<2x1024xf32>
      %cst_13 = arith.constant 0.000000e+00 : f32
      %16 = vector.broadcast %cst_13 : f32 to vector<2x1024xf32>
      %17 = arith.maximumf %15, %16 : vector<2x1024xf32>
      %18 = arith.truncf %17 : vector<2x1024xf32> to vector<2x1024xbf16>
      %c0_14 = arith.constant 0 : index
      %c0_15 = arith.constant 0 : index
      %19 = vector.load %arg4[%c0_14, %c0_15] : memref<1024x128xbf16, #tpu.memory_space<vmem>>, vector<1024x128xbf16>
      %cst_16 = arith.constant dense<0.000000e+00> : vector<2x128xf32>
      %20 = tpu.matmul %18, %19, %cst_16 {dimension_numbers = #tpu.dot_dimension_numbers<[1], [0], [0], [1], [0, 0, 1, 1], [], []>} : vector<2x1024xbf16>, vector<1024x128xbf16>, vector<2x128xf32> -> vector<2x128xf32>
      %c0_17 = arith.constant 0 : index
      %c0_18 = arith.constant 0 : index
      %21 = vector.load %arg5[%c0_17, %c0_18] : memref<1x128xf32, #tpu.memory_space<vmem>>, vector<1x128xf32>
      %22 = vector.broadcast %21 : vector<1x128xf32> to vector<2x128xf32>
      %23 = arith.addf %20, %22 : vector<2x128xf32>
      %24 = tpu.iota {dimensions = array<i32: 1>} : vector<2x128xi32>
      %c1_i32_19 = arith.constant 1 : i32
      %25 = vector.broadcast %c1_i32_19 : i32 to vector<2x128xi32>
      %26 = arith.cmpi sge, %24, %25 : vector<2x128xi32>
      %c6_i32 = arith.constant 6 : i32
      %27 = vector.broadcast %c6_i32 : i32 to vector<2x128xi32>
      %28 = arith.cmpi sle, %24, %27 : vector<2x128xi32>
      %29 = arith.andi %26, %28 : vector<2x128xi1>
      %cst_20 = arith.constant 0.000000e+00 : f32
      %30 = vector.broadcast %cst_20 : f32 to vector<2x128xf32>
      %31 = arith.select %29, %23, %30 : vector<2x128xi1>, vector<2x128xf32>
      %cst_21 = arith.constant dense<0.000000e+00> : vector<2xf32>
      %32 = vector.multi_reduction <add>, %31, %cst_21 [1] : vector<2x128xf32> to vector<2xf32>
      %33 = vector.shape_cast %32 : vector<2xf32> to vector<2x1xf32>
      %cst_22 = arith.constant 6.000000e+00 : f32
      %34 = vector.broadcast %cst_22 : f32 to vector<2x1xf32>
      %35 = arith.divf %33, %34 : vector<2x1xf32>
      %36 = vector.extract_strided_slice %23 {offsets = [0, 0], sizes = [2, 1], strides = [1, 1]} : vector<2x128xf32> to vector<2x1xf32>
      %37 = vector.broadcast %36 : vector<2x1xf32> to vector<2x128xf32>
      %38 = arith.addf %23, %37 : vector<2x128xf32>
      %39 = vector.broadcast %35 : vector<2x1xf32> to vector<2x128xf32>
      %40 = arith.subf %38, %39 : vector<2x128xf32>
      %cst_23 = arith.constant 0.000000e+00 : f32
      %41 = vector.broadcast %cst_23 : f32 to vector<2x128xf32>
      %42 = arith.select %29, %40, %41 : vector<2x128xi1>, vector<2x128xf32>
      %c0_24 = arith.constant 0 : index
      %c0_25 = arith.constant 0 : index
      %43 = vector.load %arg6[%c0_24, %c0_25] : memref<2x128xf32, #tpu.memory_space<vmem>>, vector<2x128xf32>
      tpu.vector_store %arg6[%c0_24, %c0_25], %42 {strides = array<i32>} : memref<2x128xf32, #tpu.memory_space<vmem>>, vector<2x128xf32>,
    } else {
    }
    return
  }
  func.func @transform_0(%arg0: i32) -> (i32, i32) {
    %c0_i32 = arith.constant 0 : i32
    %c0_i32_0 = arith.constant 0 : i32
    return %c0_i32, %arg0 : i32, i32
  }
  func.func @transform_1(%arg0: i32) -> (i32, i32) {
    %c0_i32 = arith.constant 0 : i32
    %c0_i32_0 = arith.constant 0 : i32
    return %arg0, %c0_i32 : i32, i32
  }
  func.func @transform_2(%arg0: i32) -> (i32, i32) {
    %c0_i32 = arith.constant 0 : i32
    %c0_i32_0 = arith.constant 0 : i32
    %c0_i32_1 = arith.constant 0 : i32
    return %c0_i32, %c0_i32_0 : i32, i32
  }
  func.func @transform_3(%arg0: i32) -> (i32, i32) {
    %c0_i32 = arith.constant 0 : i32
    %c0_i32_0 = arith.constant 0 : i32
    %c0_i32_1 = arith.constant 0 : i32
    return %c0_i32, %c0_i32_0 : i32, i32
  }
  func.func @transform_4(%arg0: i32) -> (i32, i32) {
    %c0_i32 = arith.constant 0 : i32
    %c0_i32_0 = arith.constant 0 : i32
    %c0_i32_1 = arith.constant 0 : i32
    return %c0_i32, %c0_i32_0 : i32, i32
  }
  func.func @transform_5(%arg0: i32) -> (i32, i32) {
    %c0_i32 = arith.constant 0 : i32
    %c0_i32_0 = arith.constant 0 : i32
    %c0_i32_1 = arith.constant 0 : i32
    return %c0_i32, %c0_i32_0 : i32, i32
  }
}

</mosaic_0001>

<llo_original>
// kernel: dqn_forward.4
$region0: #{dqn_forward.4}
  #allocation0 [shape = 'u32[]', space=smem, size = 0x4, offset = 0x4, fixed_abs, tag = 'smem constant byte address 0x4 - core index']
  #allocation1 [shape = 'u32[72,128]{1,0:T(1,128)}', space=vmem, size = 0x9000, scoped, tag = 'internal scratch']
  #allocation2 [shape = 'f32[400,128]{1,0:T(8,128)}', space=vmem, size = 0x32000, scoped, tag = 'scratch operand']
  %s0 = inlined_call_operand.vmem [shape: bf16[2,400,256], index: 0, kind: input, shape index: {}]
  %s1 = inlined_call_operand.vmem [shape: bf16[256,128], index: 1, kind: input, shape index: {}]
  %s2 = inlined_call_operand.vmem [shape: f32[1,128], index: 2, kind: input, shape index: {}]
  %s3 = inlined_call_operand.vmem [shape: bf16[2,400,128], index: 3, kind: output, shape index: {}]
  %s4 = sld [smem:[#allocation0]]
  $region53: #{dqn_forward.4} parent=0
    _
  %s6 = ssub.s32 1, %s4
  %s7 = scalar_select 0, %s6, %s4
  loop: start=0, step=1, limit=4
  $region2: #{dqn_forward.4} parent=0 // loop_pre_header
    _
  $region3: #{dqn_forward.4} parent=0 // loop_header
    %s9 = sphi 0, %s13
    %p10 = scmp.ge.s32.totalorder %s9, 4
    %s16 = sphi 0, %s28
    %s17 = sphi 0, %s24
    %s18 = sphi 0, %s16
    %s19 = sphi 0, %s17
    %s20 = sphi 0, %s18
    %s21 = sphi 0, %s19
    %s33 = sphi 0, %s35
    %s36 = sphi 0, %s33
    %s37 = sphi 0, %s36
    %s53 = sphi 0, %s37
    %s59 = sphi 0, %s61
    %s62 = sphi 0, %s59
    %s63 = sphi 0, %s62
    %s79 = sphi 0, %s63
    %s83 = sphi 0, %s83
    %s85 = sphi 0, %s83
    %s86 = sphi 0, %s85
    %s100 = sphi 0, %s86
    %s106 = sphi 0, %s108
    %s109 = sphi 0, %s106
    %s110 = sphi 0, %s109
    %s126 = sphi 0, %s110
  $region4: #{dqn_forward.4} parent=0 // loop_header_branch
    %12 = sbr.rel (%p10) target = $region8
  $region5: #{dqn_forward.4} parent=0 // loop_body
    %s14 = ssub.s32 %s9, 1
    %s15 = ssub.s32 %s9, 2
    %s22 = sadd.s32 1, %s17
    %p23 = scmp.ge.s32.totalorder %s22, 1
    %s24 = scalar_select %p23, 0, %s22
    %s25 = sadd.s32 1, %s16
    %s26 = scalar_select %p23, %s25, %s16
    %p27 = scmp.ge.s32.totalorder %s26, 2
    %s28 = scalar_select %p27, 0, %s26
    %s29 = ssub.s32 %s16, %s28
    %s30 = ssub.s32 %s17, %s24
    %s31 = sor.u32 %s29, %s30
    %p32 = scmp.eq.s32.totalorder %s31, 0
    %s34 = sadd.s32 %s33, 1
    %s35 = scalar_select %p32, %s33, %s34
    %p38 = pneg %p32
    %p39 = scmp.eq.s32.totalorder %s9, 1
    %p40 = por %p38, %p39
    %p41 = scmp.ne.s32.totalorder %s33, %s36
    %p42 = scmp.eq.s32.totalorder %s9, 0
    %p43 = por %p41, %p42
    %p44 = scmp.ne.s32.totalorder %s33, %s36
    %p45 = scmp.eq.s32.totalorder %s14, 1
    %p46 = por %p44, %p45
    %p47 = scmp.ne.s32.totalorder %s36, %s37
    %p48 = scmp.eq.s32.totalorder %s14, 0
    %p49 = por %p47, %p48
    %p50 = scmp.ne.s32.totalorder %s36, %s37
    %p51 = scmp.eq.s32.totalorder %s15, 1
    %p52 = por %p50, %p51
    %p54 = scmp.ne.s32.totalorder %s37, %s53
    %p55 = scmp.eq.s32.totalorder %s15, 0
    %p56 = por %p54, %p55
    %s57 = ssub.s32 %s17, %s24
    %p58 = scmp.eq.s32.totalorder %s57, 0
    %s60 = sadd.s32 %s59, 1
    %s61 = scalar_select %p58, %s59, %s60
    %p64 = pneg %p58
    %p65 = scmp.eq.s32.totalorder %s9, 1
    %p66 = por %p64, %p65
    %p67 = scmp.ne.s32.totalorder %s59, %s62
    %p68 = scmp.eq.s32.totalorder %s9, 0
    %p69 = por %p67, %p68
    %p70 = scmp.ne.s32.totalorder %s59, %s62
    %p71 = scmp.eq.s32.totalorder %s14, 1
    %p72 = por %p70, %p71
    %p73 = scmp.ne.s32.totalorder %s62, %s63
    %p74 = scmp.eq.s32.totalorder %s14, 0
    %p75 = por %p73, %p74
    %p76 = scmp.ne.s32.totalorder %s62, %s63
    %p77 = scmp.eq.s32.totalorder %s15, 1
    %p78 = por %p76, %p77
    %p80 = scmp.ne.s32.totalorder %s63, %s79
    %p81 = scmp.eq.s32.totalorder %s15, 0
    %p82 = por %p80, %p81
    %s84 = sadd.s32 %s83, 1
    %p87 = scmp.eq.s32.totalorder %s9, 1
    %p88 = scmp.ne.s32.totalorder %s83, %s85
    %p89 = scmp.eq.s32.totalorder %s9, 0
    %p90 = por %p88, %p89
    %p91 = scmp.ne.s32.totalorder %s83, %s85
    %p92 = scmp.eq.s32.totalorder %s14, 1
    %p93 = por %p91, %p92
    %p94 = scmp.ne.s32.totalorder %s85, %s86
    %p95 = scmp.eq.s32.totalorder %s14, 0
    %p96 = por %p94, %p95
    %p97 = scmp.ne.s32.totalorder %s85, %s86
    %p98 = scmp.eq.s32.totalorder %s15, 1
    %p99 = por %p97, %p98
    %p101 = scmp.ne.s32.totalorder %s86, %s100
    %p102 = scmp.eq.s32.totalorder %s15, 0
    %p103 = por %p101, %p102
    %s104 = ssub.s32 %s16, %s28
    %p105 = scmp.eq.s32.totalorder %s104, 0
    %s107 = sadd.s32 %s106, 1
    %s108 = scalar_select %p105, %s106, %s107
    %p111 = pneg %p105
    %p112 = scmp.eq.s32.totalorder %s9, 1
    %p113 = por %p111, %p112
    %p114 = scmp.ne.s32.totalorder %s106, %s109
    %p115 = scmp.eq.s32.totalorder %s9, 0
    %p116 = por %p114, %p115
    %p117 = scmp.ne.s32.totalorder %s106, %s109
    %p118 = scmp.eq.s32.totalorder %s14, 1
    %p119 = por %p117, %p118
    %p120 = scmp.ne.s32.totalorder %s109, %s110
    %p121 = scmp.eq.s32.totalorder %s14, 0
    %p122 = por %p120, %p121
    %p123 = scmp.ne.s32.totalorder %s109, %s110
    %p124 = scmp.eq.s32.totalorder %s15, 1
    %p125 = por %p123, %p124
    %p127 = scmp.ne.s32.totalorder %s110, %s126
    %p128 = scmp.eq.s32.totalorder %s15, 0
    %p129 = por %p127, %p128
    %p130 = scmp.le.s32.totalorder 1, %s9
    %p131 = scmp.lt.s32.totalorder %s9, 3
    %p132 = pnand %p130, %p131
    %p133 = pneg %p132
    // Predicated region
    $region9: #{dqn_forward.4} parent=5 // pred_check
      _
    $region10: #{dqn_forward.4} parent=5 // pred_check_branch
      %135 = sbr.rel (%p132) target = $region12
    $region11: #{dqn_forward.4} parent=5 // pred_region
      %s136 = ssub.s32 %s9, 1
      // Predicated region
      $region13: #{dqn_forward.4} parent=11 // pred_check
        %p137 = pneg %p75
      $region14: #{dqn_forward.4} parent=11 // pred_check_branch
        %139 = sbr.rel (%p137) target = $region16
      $region15: #{dqn_forward.4} parent=11 // pred_region
        %s140 = smul.u32 32, %s19
        %p141 = scmp.lt.s32.totalorder %s140, 31
        %s142 = scalar_select %p141, %s140, 31
        %s143 = smul.addr %s142, 4
        %s144 = scalar_lea.vmem %s1, %s143
        %s145 = smul.u32 32, %s19
      $region16: #{dqn_forward.4} parent=11 // pred_fallthru
        _
      // Predicated region
      $region17: #{dqn_forward.4} parent=11 // pred_check
        %p146 = pneg %p96
      $region18: #{dqn_forward.4} parent=11 // pred_check_branch
        %148 = sbr.rel (%p146) target = $region20
      $region19: #{dqn_forward.4} parent=11 // pred_region
        _
      $region20: #{dqn_forward.4} parent=11 // pred_fallthru
        _
    $region12: #{dqn_forward.4} parent=5 // pred_fallthru
      _
    %p149 = scmp.lt.s32.totalorder %s9, 2
    // Predicated region
    $region21: #{dqn_forward.4} parent=5 // pred_check
      %p150 = pneg %p149
    $region22: #{dqn_forward.4} parent=5 // pred_check_branch
      %152 = sbr.rel (%p150) target = $region24
    $region23: #{dqn_forward.4} parent=5 // pred_region
      // Predicated region
      $region25: #{dqn_forward.4} parent=23 // pred_check
        %p153 = pneg %p43
      $region26: #{dqn_forward.4} parent=23 // pred_check_branch
        %155 = sbr.rel (%p153) target = $region28
      $region27: #{dqn_forward.4} parent=23 // pred_region
        %s156 = smul.u32 2, %s17
        %p157 = scmp.lt.s32.totalorder %s16, 1
        %s158 = scalar_select %p157, %s16, 1
        %p159 = scmp.lt.s32.totalorder %s156, 1
        %s160 = scalar_select %p159, %s156, 1
        %s161 = smul.addr %s158, 100
        %s162 = sadd.s32 %s160, %s161
        %s163 = smul.addr %s162, 4
        %s164 = scalar_lea.vmem %s0, %s163
        %s165 = smul.u32 2, %s17
      $region28: #{dqn_forward.4} parent=23 // pred_fallthru
        _
    $region24: #{dqn_forward.4} parent=5 // pred_fallthru
      _
    %p166 = scmp.le.s32.totalorder 1, %s9
    %p167 = scmp.lt.s32.totalorder %s9, 3
    %p168 = pnand %p166, %p167
    %p169 = pneg %p168
    // Predicated region
    $region29: #{dqn_forward.4} parent=5 // pred_check
      _
    $region30: #{dqn_forward.4} parent=5 // pred_check_branch
      %171 = sbr.rel (%p168) target = $region32
    $region31: #{dqn_forward.4} parent=5 // pred_region
      %s172 = ssub.s32 %s9, 1
      %s173 = smul.u32 2, %s19
      %p174 = scmp.lt.s32.totalorder %s18, 1
      %s175 = scalar_select %p174, %s18, 1
      %p176 = scmp.lt.s32.totalorder %s173, 1
      %s177 = scalar_select %p176, %s173, 1
      %s178 = smul.addr %s175, 100
      %s179 = sadd.s32 %s177, %s178
      %s180 = smul.addr %s179, 4
      %s181 = scalar_lea.vmem %s0, %s180
      %p182 = pneg %p49
      %p183 = pneg %p46
      %s184 = smul.u32 32, %s19
      %p185 = scmp.lt.s32.totalorder %s184, 31
      %s186 = scalar_select %p185, %s184, 31
      %s187 = smul.addr %s186, 4
      %s188 = scalar_lea.vmem %s1, %s187
      %p189 = pneg %p75
      %p190 = pneg %p72
      %p191 = pneg %p96
      %p192 = pneg %p93
      %p193 = pneg %p122
      %p194 = pneg %p119
      %p195 = scmp.lt.s32.totalorder %s18, 1
      %s196 = scalar_select %p195, %s18, 1
      %s197 = smul.addr %s196, 50
      %s198 = smul.addr %s197, 4
      %s199 = scalar_lea.vmem %s3, %s198
      %s200 = smul.u32 2, %s19
      %p201 = scmp.lt.s32.totalorder %s18, 1
      %s202 = scalar_select %p201, %s18, 1
      %p203 = scmp.lt.s32.totalorder %s200, 1
      %s204 = scalar_select %p203, %s200, 1
      %s205 = smul.addr %s202, 100
      %s206 = sadd.s32 %s204, %s205
      %s207 = smul.addr %s206, 4
      %s208 = scalar_lea.vmem %s0, %s207
      %s209 = smul.u32 2, %s19
      %s210 = smul.u32 32, %s19
      %p211 = scmp.lt.s32.totalorder %s210, 31
      %s212 = scalar_select %p211, %s210, 31
      %s213 = smul.addr %s212, 4
      %s214 = scalar_lea.vmem %s1, %s213
      %s215 = smul.u32 32, %s19
      %p216 = scmp.lt.s32.totalorder %s18, 1
      %s217 = scalar_select %p216, %s18, 1
      %s218 = smul.addr %s217, 50
      %s219 = smul.addr %s218, 4
      %s220 = scalar_lea.vmem %s3, %s219
      %p221 = scmp.eq.s32.totalorder %s19, 0
      // Predicated region
      $region33: #{dqn_forward.4} parent=31 // pred_check
        %p222 = pneg %p221
      $region34: #{dqn_forward.4} parent=31 // pred_check_branch
        %224 = sbr.rel (%p222) target = $region36
      $region35: #{dqn_forward.4} parent=31 // pred_region
        %225 = vst [vmem:[#allocation2] sm:$0xff] 0.0
        %226 = vst [vmem:[#allocation2 + $0x8] sm:$0xff] 0.0
        %227 = vst [vmem:[#allocation2 + $0x10] sm:$0xff] 0.0
        %228 = vst [vmem:[#allocation2 + $0x18] sm:$0xff] 0.0
        %229 = vst [vmem:[#allocation2 + $0x20] sm:$0xff] 0.0
        %230 = vst [vmem:[#allocation2 + $0x28] sm:$0xff] 0.0
        %231 = vst [vmem:[#allocation2 + $0x30] sm:$0xff] 0.0
        %232 = vst [vmem:[#allocation2 + $0x38] sm:$0xff] 0.0
        %233 = vst [vmem:[#allocation2 + $0x40] sm:$0xff] 0.0
        %234 = vst [vmem:[#allocation2 + $0x48] sm:$0xff] 0.0
        %235 = vst [vmem:[#allocation2 + $0x50] sm:$0xff] 0.0
        %236 = vst [vmem:[#allocation2 + $0x58] sm:$0xff] 0.0
        %237 = vst [vmem:[#allocation2 + $0x60] sm:$0xff] 0.0
        %238 = vst [vmem:[#allocation2 + $0x68] sm:$0xff] 0.0
        %239 = vst [vmem:[#allocation2 + $0x70] sm:$0xff] 0.0
        %240 = vst [vmem:[#allocation2 + $0x78] sm:$0xff] 0.0
        %241 = vst [vmem:[#allocation2 + $0x80] sm:$0xff] 0.0
        %242 = vst [vmem:[#allocation2 + $0x88] sm:$0xff] 0.0
        %243 = vst [vmem:[#allocation2 + $0x90] sm:$0xff] 0.0
        %244 = vst [vmem:[#allocation2 + $0x98] sm:$0xff] 0.0
        %245 = vst [vmem:[#allocation2 + $0xa0] sm:$0xff] 0.0
        %246 = vst [vmem:[#allocation2 + $0xa8] sm:$0xff] 0.0
        %247 = vst [vmem:[#allocation2 + $0xb0] sm:$0xff] 0.0
        %248 = vst [vmem:[#allocation2 + $0xb8] sm:$0xff] 0.0
        %249 = vst [vmem:[#allocation2 + $0xc0] sm:$0xff] 0.0
        %250 = vst [vmem:[#allocation2 + $0xc8] sm:$0xff] 0.0
        %251 = vst [vmem:[#allocation2 + $0xd0] sm:$0xff] 0.0
        %252 = vst [vmem:[#allocation2 + $0xd8] sm:$0xff] 0.0
        %253 = vst [vmem:[#allocation2 + $0xe0] sm:$0xff] 0.0
        %254 = vst [vmem:[#allocation2 + $0xe8] sm:$0xff] 0.0
        %255 = vst [vmem:[#allocation2 + $0xf0] sm:$0xff] 0.0
        %256 = vst [vmem:[#allocation2 + $0xf8] sm:$0xff] 0.0
        %257 = vst [vmem:[#allocation2 + $0x100] sm:$0xff] 0.0
        %258 = vst [vmem:[#allocation2 + $0x108] sm:$0xff] 0.0
        %259 = vst [vmem:[#allocation2 + $0x110] sm:$0xff] 0.0
        %260 = vst [vmem:[#allocation2 + $0x118] sm:$0xff] 0.0
        %261 = vst [vmem:[#allocation2 + $0x120] sm:$0xff] 0.0
        %262 = vst [vmem:[#allocation2 + $0x128] sm:$0xff] 0.0
        %263 = vst [vmem:[#allocation2 + $0x130] sm:$0xff] 0.0
        %264 = vst [vmem:[#allocation2 + $0x138] sm:$0xff] 0.0
        %265 = vst [vmem:[#allocation2 + $0x140] sm:$0xff] 0.0
        %266 = vst [vmem:[#allocation2 + $0x148] sm:$0xff] 0.0
        %267 = vst [vmem:[#allocation2 + $0x150] sm:$0xff] 0.0
        %268 = vst [vmem:[#allocation2 + $0x158] sm:$0xff] 0.0
        %269 = vst [vmem:[#allocation2 + $0x160] sm:$0xff] 0.0
        %270 = vst [vmem:[#allocation2 + $0x168] sm:$0xff] 0.0
        %271 = vst [vmem:[#allocation2 + $0x170] sm:$0xff] 0.0
        %272 = vst [vmem:[#allocation2 + $0x178] sm:$0xff] 0.0
        %273 = vst [vmem:[#allocation2 + $0x180] sm:$0xff] 0.0
        %274 = vst [vmem:[#allocation2 + $0x188] sm:$0xff] 0.0
      $region36: #{dqn_forward.4} parent=31 // pred_fallthru
        _
      %v275 = vld [vmem:[#allocation2] sm:$0xff]
      %v276 = vld [vmem:[#allocation2 + $0x8] sm:$0xff]
      %v277 = vld [vmem:[#allocation2 + $0x10] sm:$0xff]
      %v278 = vld [vmem:[#allocation2 + $0x18] sm:$0xff]
      %v279 = vld [vmem:[#allocation2 + $0x20] sm:$0xff]
      %v280 = vld [vmem:[#allocation2 + $0x28] sm:$0xff]
      %v281 = vld [vmem:[#allocation2 + $0x30] sm:$0xff]
      %v282 = vld [vmem:[#allocation2 + $0x38] sm:$0xff]
      %v283 = vld [vmem:[#allocation2 + $0x40] sm:$0xff]
      %v284 = vld [vmem:[#allocation2 + $0x48] sm:$0xff]
      %v285 = vld [vmem:[#allocation2 + $0x50] sm:$0xff]
      %v286 = vld [vmem:[#allocation2 + $0x58] sm:$0xff]
      %v287 = vld [vmem:[#allocation2 + $0x60] sm:$0xff]
      %v288 = vld [vmem:[#allocation2 + $0x68] sm:$0xff]
      %v289 = vld [vmem:[#allocation2 + $0x70] sm:$0xff]
      %v290 = vld [vmem:[#allocation2 + $0x78] sm:$0xff]
      %v291 = vld [vmem:[#allocation2 + $0x80] sm:$0xff]
      %v292 = vld [vmem:[#allocation2 + $0x88] sm:$0xff]
      %v293 = vld [vmem:[#allocation2 + $0x90] sm:$0xff]
      %v294 = vld [vmem:[#allocation2 + $0x98] sm:$0xff]
      %v295 = vld [vmem:[#allocation2 + $0xa0] sm:$0xff]
      %v296 = vld [vmem:[#allocation2 + $0xa8] sm:$0xff]
      %v297 = vld [vmem:[#allocation2 + $0xb0] sm:$0xff]
      %v298 = vld [vmem:[#allocation2 + $0xb8] sm:$0xff]
      %v299 = vld [vmem:[#allocation2 + $0xc0] sm:$0xff]
      %v300 = vld [vmem:[#allocation2 + $0xc8] sm:$0xff]
      %v301 = vld [vmem:[#allocation2 + $0xd0] sm:$0xff]
      %v302 = vld [vmem:[#allocation2 + $0xd8] sm:$0xff]
      %v303 = vld [vmem:[#allocation2 + $0xe0] sm:$0xff]
      %v304 = vld [vmem:[#allocation2 + $0xe8] sm:$0xff]
      %v305 = vld [vmem:[#allocation2 + $0xf0] sm:$0xff]
      %v306 = vld [vmem:[#allocation2 + $0xf8] sm:$0xff]
      %v307 = vld [vmem:[#allocation2 + $0x100] sm:$0xff]
      %v308 = vld [vmem:[#allocation2 + $0x108] sm:$0xff]
      %v309 = vld [vmem:[#allocation2 + $0x110] sm:$0xff]
      %v310 = vld [vmem:[#allocation2 + $0x118] sm:$0xff]
      %v311 = vld [vmem:[#allocation2 + $0x120] sm:$0xff]
      %v312 = vld [vmem:[#allocation2 + $0x128] sm:$0xff]
      %v313 = vld [vmem:[#allocation2 + $0x130] sm:$0xff]
      %v314 = vld [vmem:[#allocation2 + $0x138] sm:$0xff]
      %v315 = vld [vmem:[#allocation2 + $0x140] sm:$0xff]
      %v316 = vld [vmem:[#allocation2 + $0x148] sm:$0xff]
      %v317 = vld [vmem:[#allocation2 + $0x150] sm:$0xff]
      %v318 = vld [vmem:[#allocation2 + $0x158] sm:$0xff]
      %v319 = vld [vmem:[#allocation2 + $0x160] sm:$0xff]
      %v320 = vld [vmem:[#allocation2 + $0x168] sm:$0xff]
      %v321 = vld [vmem:[#allocation2 + $0x170] sm:$0xff]
      %v322 = vld [vmem:[#allocation2 + $0x178] sm:$0xff]
      %v323 = vld [vmem:[#allocation2 + $0x180] sm:$0xff]
      %v324 = vld [vmem:[#allocation2 + $0x188] sm:$0xff]
      %v325 = vld [vmem:[%s208] sm:$0xff]
      %v326 = vld [vmem:[%s208 + $0x8] sm:$0xff]
      %v327 = vld [vmem:[%s208 + $0x10] sm:$0xff]
      %v328 = vld [vmem:[%s208 + $0x18] sm:$0xff]
      %v329 = vld [vmem:[%s208 + $0x20] sm:$0xff]
      %v330 = vld [vmem:[%s208 + $0x28] sm:$0xff]
      %v331 = vld [vmem:[%s208 + $0x30] sm:$0xff]
      %v332 = vld [vmem:[%s208 + $0x38] sm:$0xff]
      %v333 = vld [vmem:[%s208 + $0x40] sm:$0xff]
      %v334 = vld [vmem:[%s208 + $0x48] sm:$0xff]
      %v335 = vld [vmem:[%s208 + $0x50] sm:$0xff]
      %v336 = vld [vmem:[%s208 + $0x58] sm:$0xff]
      %v337 = vld [vmem:[%s208 + $0x60] sm:$0xff]
      %v338 = vld [vmem:[%s208 + $0x68] sm:$0xff]
      %v339 = vld [vmem:[%s208 + $0x70] sm:$0xff]
      %v340 = vld [vmem:[%s208 + $0x78] sm:$0xff]
      %v341 = vld [vmem:[%s208 + $0x80] sm:$0xff]
      %v342 = vld [vmem:[%s208 + $0x88] sm:$0xff]
      %v343 = vld [vmem:[%s208 + $0x90] sm:$0xff]
      %v344 = vld [vmem:[%s208 + $0x98] sm:$0xff]
      %v345 = vld [vmem:[%s208 + $0xa0] sm:$0xff]
      %v346 = vld [vmem:[%s208 + $0xa8] sm:$0xff]
      %v347 = vld [vmem:[%s208 + $0xb0] sm:$0xff]
      %v348 = vld [vmem:[%s208 + $0xb8] sm:$0xff]
      %v349 = vld [vmem:[%s208 + $0xc0] sm:$0xff]
      %v350 = vld [vmem:[%s208 + $0xc8] sm:$0xff]
      %v351 = vld [vmem:[%s208 + $0xd0] sm:$0xff]
      %v352 = vld [vmem:[%s208 + $0xd8] sm:$0xff]
      %v353 = vld [vmem:[%s208 + $0xe0] sm:$0xff]
      %v354 = vld [vmem:[%s208 + $0xe8] sm:$0xff]
      %v355 = vld [vmem:[%s208 + $0xf0] sm:$0xff]
      %v356 = vld [vmem:[%s208 + $0xf8] sm:$0xff]
      %v357 = vld [vmem:[%s208 + $0x100] sm:$0xff]
      %v358 = vld [vmem:[%s208 + $0x108] sm:$0xff]
      %v359 = vld [vmem:[%s208 + $0x110] sm:$0xff]
      %v360 = vld [vmem:[%s208 + $0x118] sm:$0xff]
      %v361 = vld [vmem:[%s208 + $0x120] sm:$0xff]
      %v362 = vld [vmem:[%s208 + $0x128] sm:$0xff]
      %v363 = vld [vmem:[%s208 + $0x130] sm:$0xff]
      %v364 = vld [vmem:[%s208 + $0x138] sm:$0xff]
      %v365 = vld [vmem:[%s208 + $0x140] sm:$0xff]
      %v366 = vld [vmem:[%s208 + $0x148] sm:$0xff]
      %v367 = vld [vmem:[%s208 + $0x150] sm:$0xff]
      %v368 = vld [vmem:[%s208 + $0x158] sm:$0xff]
      %v369 = vld [vmem:[%s208 + $0x160] sm:$0xff]
      %v370 = vld [vmem:[%s208 + $0x168] sm:$0xff]
      %v371 = vld [vmem:[%s208 + $0x170] sm:$0xff]
      %v372 = vld [vmem:[%s208 + $0x178] sm:$0xff]
      %v373 = vld [vmem:[%s208 + $0x180] sm:$0xff]
      %v374 = vld [vmem:[%s208 + $0x188] sm:$0xff]
      %v375 = vld [vmem:[%s214] sm:$0xf]
      %v376 = vld [vmem:[%s214 + $0x4] sm:$0xf]
      %v377 = vld [vmem:[%s214 + $0x8] sm:$0xf]
      %v378 = vld [vmem:[%s214 + $0xc] sm:$0xf]
      %v379 = vld [vmem:[%s214 + $0x10] sm:$0xf]
      %v380 = vld [vmem:[%s214 + $0x14] sm:$0xf]
      %v381 = vld [vmem:[%s214 + $0x18] sm:$0xf]
      %v382 = vld [vmem:[%s214 + $0x1c] sm:$0xf]
      %v383 = vld [vmem:[%s214 + $0x20] sm:$0xf]
      %v384 = vld [vmem:[%s214 + $0x24] sm:$0xf]
      %v385 = vld [vmem:[%s214 + $0x28] sm:$0xf]
      %v386 = vld [vmem:[%s214 + $0x2c] sm:$0xf]
      %v387 = vld [vmem:[%s214 + $0x30] sm:$0xf]
      %v388 = vld [vmem:[%s214 + $0x34] sm:$0xf]
      %v389 = vld [vmem:[%s214 + $0x38] sm:$0xf]
      %v390 = vld [vmem:[%s214 + $0x3c] sm:$0xf]
      %v391 = vld [vmem:[%s214 + $0x40] sm:$0xf]
      %v392 = vld [vmem:[%s214 + $0x44] sm:$0xf]
      %v393 = vld [vmem:[%s214 + $0x48] sm:$0xf]
      %v394 = vld [vmem:[%s214 + $0x4c] sm:$0xf]
      %v395 = vld [vmem:[%s214 + $0x50] sm:$0xf]
      %v396 = vld [vmem:[%s214 + $0x54] sm:$0xf]
      %v397 = vld [vmem:[%s214 + $0x58] sm:$0xf]
      %v398 = vld [vmem:[%s214 + $0x5c] sm:$0xf]
      %v399 = vld [vmem:[%s214 + $0x60] sm:$0xf]
      %v400 = vld [vmem:[%s214 + $0x64] sm:$0xf]
      %v401 = vld [vmem:[%s214 + $0x68] sm:$0xf]
      %v402 = vld [vmem:[%s214 + $0x6c] sm:$0xf]
      %v403 = vld [vmem:[%s214 + $0x70] sm:$0xf]
      %v404 = vld [vmem:[%s214 + $0x74] sm:$0xf]
      %v405 = vld [vmem:[%s214 + $0x78] sm:$0xf]
      %v406 = vld [vmem:[%s214 + $0x7c] sm:$0xf]
      %v457 = vunpack.c.l.b16 %v325
      %v458 = vunpack.c.h.b16 %v325
      %v459 = vunpack.c.l.b16 %v326
      %v460 = vunpack.c.h.b16 %v326
      %v461 = vunpack.c.l.b16 %v327
      %v462 = vunpack.c.h.b16 %v327
      %v463 = vunpack.c.l.b16 %v328
      %v464 = vunpack.c.h.b16 %v328
      %v465 = vunpack.c.l.b16 %v329
      %v466 = vunpack.c.h.b16 %v329
      %v467 = vunpack.c.l.b16 %v330
      %v468 = vunpack.c.h.b16 %v330
      %v469 = vunpack.c.l.b16 %v331
      %v470 = vunpack.c.h.b16 %v331
      %v471 = vunpack.c.l.b16 %v332
      %v472 = vunpack.c.h.b16 %v332
      %v473 = vunpack.c.l.b16 %v333
      %v474 = vunpack.c.h.b16 %v333
      %v475 = vunpack.c.l.b16 %v334
      %v476 = vunpack.c.h.b16 %v334
      %v477 = vunpack.c.l.b16 %v335
      %v478 = vunpack.c.h.b16 %v335
      %v479 = vunpack.c.l.b16 %v336
      %v480 = vunpack.c.h.b16 %v336
      %v481 = vunpack.c.l.b16 %v337
      %v482 = vunpack.c.h.b16 %v337
      %v483 = vunpack.c.l.b16 %v338
      %v484 = vunpack.c.h.b16 %v338
      %v485 = vunpack.c.l.b16 %v339
      %v486 = vunpack.c.h.b16 %v339
      %v487 = vunpack.c.l.b16 %v340
      %v488 = vunpack.c.h.b16 %v340
      %v489 = vunpack.c.l.b16 %v341
      %v490 = vunpack.c.h.b16 %v341
      %v491 = vunpack.c.l.b16 %v342
      %v492 = vunpack.c.h.b16 %v342
      %v493 = vunpack.c.l.b16 %v343
      %v494 = vunpack.c.h.b16 %v343
      %v495 = vunpack.c.l.b16 %v344
      %v496 = vunpack.c.h.b16 %v344
      %v497 = vunpack.c.l.b16 %v345
      %v498 = vunpack.c.h.b16 %v345
      %v499 = vunpack.c.l.b16 %v346
      %v500 = vunpack.c.h.b16 %v346
      %v501 = vunpack.c.l.b16 %v347
      %v502 = vunpack.c.h.b16 %v347
      %v503 = vunpack.c.l.b16 %v348
      %v504 = vunpack.c.h.b16 %v348
      %v505 = vunpack.c.l.b16 %v349
      %v506 = vunpack.c.h.b16 %v349
      %v507 = vunpack.c.l.b16 %v350
      %v508 = vunpack.c.h.b16 %v350
      %v509 = vunpack.c.l.b16 %v351
      %v510 = vunpack.c.h.b16 %v351
      %v511 = vunpack.c.l.b16 %v352
      %v512 = vunpack.c.h.b16 %v352
      %v513 = vunpack.c.l.b16 %v353
      %v514 = vunpack.c.h.b16 %v353
      %v515 = vunpack.c.l.b16 %v354
      %v516 = vunpack.c.h.b16 %v354
      %v517 = vunpack.c.l.b16 %v355
      %v518 = vunpack.c.h.b16 %v355
      %v519 = vunpack.c.l.b16 %v356
      %v520 = vunpack.c.h.b16 %v356
      %v521 = vunpack.c.l.b16 %v357
      %v522 = vunpack.c.h.b16 %v357
      %v523 = vunpack.c.l.b16 %v358
      %v524 = vunpack.c.h.b16 %v358
      %v525 = vunpack.c.l.b16 %v359
      %v526 = vunpack.c.h.b16 %v359
      %v527 = vunpack.c.l.b16 %v360
      %v528 = vunpack.c.h.b16 %v360
      %v529 = vunpack.c.l.b16 %v361
      %v530 = vunpack.c.h.b16 %v361
      %v531 = vunpack.c.l.b16 %v362
      %v532 = vunpack.c.h.b16 %v362
      %v533 = vunpack.c.l.b16 %v363
      %v534 = vunpack.c.h.b16 %v363
      %v535 = vunpack.c.l.b16 %v364
      %v536 = vunpack.c.h.b16 %v364
      %v537 = vunpack.c.l.b16 %v365
      %v538 = vunpack.c.h.b16 %v365
      %v539 = vunpack.c.l.b16 %v366
      %v540 = vunpack.c.h.b16 %v366
      %v541 = vunpack.c.l.b16 %v367
      %v542 = vunpack.c.h.b16 %v367
      %v543 = vunpack.c.l.b16 %v368
      %v544 = vunpack.c.h.b16 %v368
      %v545 = vunpack.c.l.b16 %v369
      %v546 = vunpack.c.h.b16 %v369
      %v547 = vunpack.c.l.b16 %v370
      %v548 = vunpack.c.h.b16 %v370
      %v549 = vunpack.c.l.b16 %v371
      %v550 = vunpack.c.h.b16 %v371
      %v551 = vunpack.c.l.b16 %v372
      %v552 = vunpack.c.h.b16 %v372
      %v553 = vunpack.c.l.b16 %v373
      %v554 = vunpack.c.h.b16 %v373
      %v555 = vunpack.c.l.b16 %v374
      %v556 = vunpack.c.h.b16 %v374
      %v557 = vpack.c.b16 %v459, %v457
      %v558 = vpack.c.b16 %v460, %v458
      %v559 = vpack.c.b16 %v463, %v461
      %v560 = vpack.c.b16 %v464, %v462
      %v561 = vpack.c.b16 %v467, %v465
      %v562 = vpack.c.b16 %v468, %v466
      %v563 = vpack.c.b16 %v471, %v469
      %v564 = vpack.c.b16 %v472, %v470
      %v565 = vpack.c.b16 %v475, %v473
      %v566 = vpack.c.b16 %v476, %v474
      %v567 = vpack.c.b16 %v479, %v477
      %v568 = vpack.c.b16 %v480, %v478
      %v569 = vpack.c.b16 %v483, %v481
      %v570 = vpack.c.b16 %v484, %v482
      %v571 = vpack.c.b16 %v487, %v485
      %v572 = vpack.c.b16 %v488, %v486
      %v573 = vpack.c.b16 %v491, %v489
      %v574 = vpack.c.b16 %v492, %v490
      %v575 = vpack.c.b16 %v495, %v493
      %v576 = vpack.c.b16 %v496, %v494
      %v577 = vpack.c.b16 %v499, %v497
      %v578 = vpack.c.b16 %v500, %v498
      %v579 = vpack.c.b16 %v503, %v501
      %v580 = vpack.c.b16 %v504, %v502
      %v581 = vpack.c.b16 %v507, %v505
      %v582 = vpack.c.b16 %v508, %v506
      %v583 = vpack.c.b16 %v511, %v509
      %v584 = vpack.c.b16 %v512, %v510
      %v585 = vpack.c.b16 %v515, %v513
      %v586 = vpack.c.b16 %v516, %v514
      %v587 = vpack.c.b16 %v519, %v517
      %v588 = vpack.c.b16 %v520, %v518
      %v589 = vpack.c.b16 %v523, %v521
      %v590 = vpack.c.b16 %v524, %v522
      %v591 = vpack.c.b16 %v527, %v525
      %v592 = vpack.c.b16 %v528, %v526
      %v593 = vpack.c.b16 %v531, %v529
      %v594 = vpack.c.b16 %v532, %v530
      %v595 = vpack.c.b16 %v535, %v533
      %v596 = vpack.c.b16 %v536, %v534
      %v597 = vpack.c.b16 %v539, %v537
      %v598 = vpack.c.b16 %v540, %v538
      %v599 = vpack.c.b16 %v543, %v541
      %v600 = vpack.c.b16 %v544, %v542
      %v601 = vpack.c.b16 %v547, %v545
      %v602 = vpack.c.b16 %v548, %v546
      %v603 = vpack.c.b16 %v551, %v549
      %v604 = vpack.c.b16 %v552, %v550
      %v605 = vpack.c.b16 %v555, %v553
      %v606 = vpack.c.b16 %v556, %v554
      %v689 = vunpack.c.l.b16 %v375
      %v690 = vunpack.c.l.b16 %v376
      %v691 = vunpack.c.l.b16 %v377
      %v692 = vunpack.c.l.b16 %v378
      %v693 = vunpack.c.l.b16 %v379
      %v694 = vunpack.c.l.b16 %v380
      %v695 = vunpack.c.l.b16 %v381
      %v696 = vunpack.c.l.b16 %v382
      %v697 = vunpack.c.l.b16 %v383
      %v698 = vunpack.c.l.b16 %v384
      %v699 = vunpack.c.l.b16 %v385
      %v700 = vunpack.c.l.b16 %v386
      %v701 = vunpack.c.l.b16 %v387
      %v702 = vunpack.c.l.b16 %v388
      %v703 = vunpack.c.l.b16 %v389
      %v704 = vunpack.c.l.b16 %v390
      %v705 = vunpack.c.l.b16 %v391
      %v706 = vunpack.c.l.b16 %v392
      %v707 = vunpack.c.l.b16 %v393
      %v708 = vunpack.c.l.b16 %v394
      %v709 = vunpack.c.l.b16 %v395
      %v710 = vunpack.c.l.b16 %v396
      %v711 = vunpack.c.l.b16 %v397
      %v712 = vunpack.c.l.b16 %v398
      %v713 = vunpack.c.l.b16 %v399
      %v714 = vunpack.c.l.b16 %v400
      %v715 = vunpack.c.l.b16 %v401
      %v716 = vunpack.c.l.b16 %v402
      %v717 = vunpack.c.l.b16 %v403
      %v718 = vunpack.c.l.b16 %v404
      %v719 = vunpack.c.l.b16 %v405
      %v720 = vunpack.c.l.b16 %v406
      %v721 = vpack.c.b16 %v690, %v689
      %v722 = vpack.c.b16 %v692, %v691
      %v723 = vpack.c.b16 %v694, %v693
      %v724 = vpack.c.b16 %v696, %v695
      %v725 = vpack.c.b16 %v698, %v697
      %v726 = vpack.c.b16 %v700, %v699
      %v727 = vpack.c.b16 %v702, %v701
      %v728 = vpack.c.b16 %v704, %v703
      %v729 = vpack.c.b16 %v706, %v705
      %v730 = vpack.c.b16 %v708, %v707
      %v731 = vpack.c.b16 %v710, %v709
      %v732 = vpack.c.b16 %v712, %v711
      %v733 = vpack.c.b16 %v714, %v713
      %v734 = vpack.c.b16 %v716, %v715
      %v735 = vpack.c.b16 %v718, %v717
      %v736 = vpack.c.b16 %v720, %v719
      %753 = vmatpush.bf16.msra.mxu0 %v728
      %754 = vmatpush.bf16.msra.mxu0 %v727
      %755 = vmatpush.bf16.msra.mxu0 %v726
      %756 = vmatpush.bf16.msra.mxu0 %v725
      %757 = vmatpush.bf16.msra.mxu0 %v724
      %758 = vmatpush.bf16.msra.mxu0 %v723
      %759 = vmatpush.bf16.msra.mxu0 %v722
      %760 = vmatpush.bf16.msra.mxu0 %v721
      %761 = vmatmul.bf16.gmra.mxu0 %v557
      %v762 = vpop.f32.mrf.mxu0
      %v763 = vadd.f32 0.0, %v762
      %v764 = vpop.f32.mrf.mxu0
      %v765 = vadd.f32 0.0, %v764
      %766 = vmatmul.bf16.gmra.mxu0 %v559
      %v767 = vpop.f32.mrf.mxu0
      %v768 = vadd.f32 0.0, %v767
      %v769 = vpop.f32.mrf.mxu0
      %v770 = vadd.f32 0.0, %v769
      %771 = vmatmul.bf16.gmra.mxu0 %v561
      %v772 = vpop.f32.mrf.mxu0
      %v773 = vadd.f32 0.0, %v772
      %v774 = vpop.f32.mrf.mxu0
      %v775 = vadd.f32 0.0, %v774
      %776 = vmatmul.bf16.gmra.mxu0 %v563
      %v777 = vpop.f32.mrf.mxu0
      %v778 = vadd.f32 0.0, %v777
      %v779 = vpop.f32.mrf.mxu0
      %v780 = vadd.f32 0.0, %v779
      %781 = vmatmul.bf16.gmra.mxu0 %v565
      %v782 = vpop.f32.mrf.mxu0
      %v783 = vadd.f32 0.0, %v782
      %v784 = vpop.f32.mrf.mxu0
      %v785 = vadd.f32 0.0, %v784
      %786 = vmatmul.bf16.gmra.mxu0 %v567
      %v787 = vpop.f32.mrf.mxu0
      %v788 = vadd.f32 0.0, %v787
      %v789 = vpop.f32.mrf.mxu0
      %v790 = vadd.f32 0.0, %v789
      %791 = vmatmul.bf16.gmra.mxu0 %v569
      %v792 = vpop.f32.mrf.mxu0
      %v793 = vadd.f32 0.0, %v792
      %v794 = vpop.f32.mrf.mxu0
      %v795 = vadd.f32 0.0, %v794
      %796 = vmatmul.bf16.gmra.mxu0 %v571
      %v797 = vpop.f32.mrf.mxu0
      %v798 = vadd.f32 0.0, %v797
      %v799 = vpop.f32.mrf.mxu0
      %v800 = vadd.f32 0.0, %v799
      %801 = vmatmul.bf16.gmra.mxu0 %v573
      %v802 = vpop.f32.mrf.mxu0
      %v803 = vadd.f32 0.0, %v802
      %v804 = vpop.f32.mrf.mxu0
      %v805 = vadd.f32 0.0, %v804
      %806 = vmatmul.bf16.gmra.mxu0 %v575
      %v807 = vpop.f32.mrf.mxu0
      %v808 = vadd.f32 0.0, %v807
      %v809 = vpop.f32.mrf.mxu0
      %v810 = vadd.f32 0.0, %v809
      %811 = vmatmul.bf16.gmra.mxu0 %v577
      %v812 = vpop.f32.mrf.mxu0
      %v813 = vadd.f32 0.0, %v812
      %v814 = vpop.f32.mrf.mxu0
      %v815 = vadd.f32 0.0, %v814
      %816 = vmatmul.bf16.gmra.mxu0 %v579
      %v817 = vpop.f32.mrf.mxu0
      %v818 = vadd.f32 0.0, %v817
      %v819 = vpop.f32.mrf.mxu0
      %v820 = vadd.f32 0.0, %v819
      %821 = vmatmul.bf16.gmra.mxu0 %v581
      %v822 = vpop.f32.mrf.mxu0
      %v823 = vadd.f32 0.0, %v822
      %v824 = vpop.f32.mrf.mxu0
      %v825 = vadd.f32 0.0, %v824
      %826 = vmatmul.bf16.gmra.mxu0 %v583
      %v827 = vpop.f32.mrf.mxu0
      %v828 = vadd.f32 0.0, %v827
      %v829 = vpop.f32.mrf.mxu0
      %v830 = vadd.f32 0.0, %v829
      %831 = vmatmul.bf16.gmra.mxu0 %v585
      %v832 = vpop.f32.mrf.mxu0
      %v833 = vadd.f32 0.0, %v832
      %v834 = vpop.f32.mrf.mxu0
      %v835 = vadd.f32 0.0, %v834
      %836 = vmatmul.bf16.gmra.mxu0 %v587
      %v837 = vpop.f32.mrf.mxu0
      %v838 = vadd.f32 0.0, %v837
      %v839 = vpop.f32.mrf.mxu0
      %v840 = vadd.f32 0.0, %v839
      %841 = vmatmul.bf16.gmra.mxu0 %v589
      %v842 = vpop.f32.mrf.mxu0
      %v843 = vadd.f32 0.0, %v842
      %v844 = vpop.f32.mrf.mxu0
      %v845 = vadd.f32 0.0, %v844
      %846 = vmatmul.bf16.gmra.mxu0 %v591
      %v847 = vpop.f32.mrf.mxu0
      %v848 = vadd.f32 0.0, %v847
      %v849 = vpop.f32.mrf.mxu0
      %v850 = vadd.f32 0.0, %v849
      %851 = vmatmul.bf16.gmra.mxu0 %v593
      %v852 = vpop.f32.mrf.mxu0
      %v853 = vadd.f32 0.0, %v852
      %v854 = vpop.f32.mrf.mxu0
      %v855 = vadd.f32 0.0, %v854
      %856 = vmatmul.bf16.gmra.mxu0 %v595
      %v857 = vpop.f32.mrf.mxu0
      %v858 = vadd.f32 0.0, %v857
      %v859 = vpop.f32.mrf.mxu0
      %v860 = vadd.f32 0.0, %v859
      %861 = vmatmul.bf16.gmra.mxu0 %v597
      %v862 = vpop.f32.mrf.mxu0
      %v863 = vadd.f32 0.0, %v862
      %v864 = vpop.f32.mrf.mxu0
      %v865 = vadd.f32 0.0, %v864
      %866 = vmatmul.bf16.gmra.mxu0 %v599
      %v867 = vpop.f32.mrf.mxu0
      %v868 = vadd.f32 0.0, %v867
      %v869 = vpop.f32.mrf.mxu0
      %v870 = vadd.f32 0.0, %v869
      %871 = vmatmul.bf16.gmra.mxu0 %v601
      %v872 = vpop.f32.mrf.mxu0
      %v873 = vadd.f32 0.0, %v872
      %v874 = vpop.f32.mrf.mxu0
      %v875 = vadd.f32 0.0, %v874
      %876 = vmatmul.bf16.gmra.mxu0 %v603
      %v877 = vpop.f32.mrf.mxu0
      %v878 = vadd.f32 0.0, %v877
      %v879 = vpop.f32.mrf.mxu0
      %v880 = vadd.f32 0.0, %v879
      %881 = vmatmul.bf16.gmra.mxu0 %v605
      %v882 = vpop.f32.mrf.mxu0
      %v883 = vadd.f32 0.0, %v882
      %v884 = vpop.f32.mrf.mxu0
      %v885 = vadd.f32 0.0, %v884
      %886 = vdwg.mxu0
      %887 = vmatpush.bf16.msra.mxu0 %v736
      %888 = vmatpush.bf16.msra.mxu0 %v735
      %889 = vmatpush.bf16.msra.mxu0 %v734
      %890 = vmatpush.bf16.msra.mxu0 %v733
      %891 = vmatpush.bf16.msra.mxu0 %v732
      %892 = vmatpush.bf16.msra.mxu0 %v731
      %893 = vmatpush.bf16.msra.mxu0 %v730
      %894 = vmatpush.bf16.msra.mxu0 %v729
      %895 = vmatmul.bf16.gmra.mxu0 %v558
      %v896 = vpop.f32.mrf.mxu0
      %v897 = vadd.f32 %v763, %v896
      %v898 = vpop.f32.mrf.mxu0
      %v899 = vadd.f32 %v765, %v898
      %900 = vmatmul.bf16.gmra.mxu0 %v560
      %v901 = vpop.f32.mrf.mxu0
      %v902 = vadd.f32 %v768, %v901
      %v903 = vpop.f32.mrf.mxu0
      %v904 = vadd.f32 %v770, %v903
      %905 = vmatmul.bf16.gmra.mxu0 %v562
      %v906 = vpop.f32.mrf.mxu0
      %v907 = vadd.f32 %v773, %v906
      %v908 = vpop.f32.mrf.mxu0
      %v909 = vadd.f32 %v775, %v908
      %910 = vmatmul.bf16.gmra.mxu0 %v564
      %v911 = vpop.f32.mrf.mxu0
      %v912 = vadd.f32 %v778, %v911
      %v913 = vpop.f32.mrf.mxu0
      %v914 = vadd.f32 %v780, %v913
      %915 = vmatmul.bf16.gmra.mxu0 %v566
      %v916 = vpop.f32.mrf.mxu0
      %v917 = vadd.f32 %v783, %v916
      %v918 = vpop.f32.mrf.mxu0
      %v919 = vadd.f32 %v785, %v918
      %920 = vmatmul.bf16.gmra.mxu0 %v568
      %v921 = vpop.f32.mrf.mxu0
      %v922 = vadd.f32 %v788, %v921
      %v923 = vpop.f32.mrf.mxu0
      %v924 = vadd.f32 %v790, %v923
      %925 = vmatmul.bf16.gmra.mxu0 %v570
      %v926 = vpop.f32.mrf.mxu0
      %v927 = vadd.f32 %v793, %v926
      %v928 = vpop.f32.mrf.mxu0
      %v929 = vadd.f32 %v795, %v928
      %930 = vmatmul.bf16.gmra.mxu0 %v572
      %v931 = vpop.f32.mrf.mxu0
      %v932 = vadd.f32 %v798, %v931
      %v933 = vpop.f32.mrf.mxu0
      %v934 = vadd.f32 %v800, %v933
      %935 = vmatmul.bf16.gmra.mxu0 %v574
      %v936 = vpop.f32.mrf.mxu0
      %v937 = vadd.f32 %v803, %v936
      %v938 = vpop.f32.mrf.mxu0
      %v939 = vadd.f32 %v805, %v938
      %940 = vmatmul.bf16.gmra.mxu0 %v576
      %v941 = vpop.f32.mrf.mxu0
      %v942 = vadd.f32 %v808, %v941
      %v943 = vpop.f32.mrf.mxu0
      %v944 = vadd.f32 %v810, %v943
      %945 = vmatmul.bf16.gmra.mxu0 %v578
      %v946 = vpop.f32.mrf.mxu0
      %v947 = vadd.f32 %v813, %v946
      %v948 = vpop.f32.mrf.mxu0
      %v949 = vadd.f32 %v815, %v948
      %950 = vmatmul.bf16.gmra.mxu0 %v580
      %v951 = vpop.f32.mrf.mxu0
      %v952 = vadd.f32 %v818, %v951
      %v953 = vpop.f32.mrf.mxu0
      %v954 = vadd.f32 %v820, %v953
      %955 = vmatmul.bf16.gmra.mxu0 %v582
      %v956 = vpop.f32.mrf.mxu0
      %v957 = vadd.f32 %v823, %v956
      %v958 = vpop.f32.mrf.mxu0
      %v959 = vadd.f32 %v825, %v958
      %960 = vmatmul.bf16.gmra.mxu0 %v584
      %v961 = vpop.f32.mrf.mxu0
      %v962 = vadd.f32 %v828, %v961
      %v963 = vpop.f32.mrf.mxu0
      %v964 = vadd.f32 %v830, %v963
      %965 = vmatmul.bf16.gmra.mxu0 %v586
      %v966 = vpop.f32.mrf.mxu0
      %v967 = vadd.f32 %v833, %v966
      %v968 = vpop.f32.mrf.mxu0
      %v969 = vadd.f32 %v835, %v968
      %970 = vmatmul.bf16.gmra.mxu0 %v588
      %v971 = vpop.f32.mrf.mxu0
      %v972 = vadd.f32 %v838, %v971
      %v973 = vpop.f32.mrf.mxu0
      %v974 = vadd.f32 %v840, %v973
      %975 = vmatmul.bf16.gmra.mxu0 %v590
      %v976 = vpop.f32.mrf.mxu0
      %v977 = vadd.f32 %v843, %v976
      %v978 = vpop.f32.mrf.mxu0
      %v979 = vadd.f32 %v845, %v978
      %980 = vmatmul.bf16.gmra.mxu0 %v592
      %v981 = vpop.f32.mrf.mxu0
      %v982 = vadd.f32 %v848, %v981
      %v983 = vpop.f32.mrf.mxu0
      %v984 = vadd.f32 %v850, %v983
      %985 = vmatmul.bf16.gmra.mxu0 %v594
      %v986 = vpop.f32.mrf.mxu0
      %v987 = vadd.f32 %v853, %v986
      %v988 = vpop.f32.mrf.mxu0
      %v989 = vadd.f32 %v855, %v988
      %990 = vmatmul.bf16.gmra.mxu0 %v596
      %v991 = vpop.f32.mrf.mxu0
      %v992 = vadd.f32 %v858, %v991
      %v993 = vpop.f32.mrf.mxu0
      %v994 = vadd.f32 %v860, %v993
      %995 = vmatmul.bf16.gmra.mxu0 %v598
      %v996 = vpop.f32.mrf.mxu0
      %v997 = vadd.f32 %v863, %v996
      %v998 = vpop.f32.mrf.mxu0
      %v999 = vadd.f32 %v865, %v998
      %1000 = vmatmul.bf16.gmra.mxu0 %v600
      %v1001 = vpop.f32.mrf.mxu0
      %v1002 = vadd.f32 %v868, %v1001
      %v1003 = vpop.f32.mrf.mxu0
      %v1004 = vadd.f32 %v870, %v1003
      %1005 = vmatmul.bf16.gmra.mxu0 %v602
      %v1006 = vpop.f32.mrf.mxu0
      %v1007 = vadd.f32 %v873, %v1006
      %v1008 = vpop.f32.mrf.mxu0
      %v1009 = vadd.f32 %v875, %v1008
      %1010 = vmatmul.bf16.gmra.mxu0 %v604
      %v1011 = vpop.f32.mrf.mxu0
      %v1012 = vadd.f32 %v878, %v1011
      %v1013 = vpop.f32.mrf.mxu0
      %v1014 = vadd.f32 %v880, %v1013
      %1015 = vmatmul.bf16.gmra.mxu0 %v606
      %v1016 = vpop.f32.mrf.mxu0
      %v1017 = vadd.f32 %v883, %v1016
      %v1018 = vpop.f32.mrf.mxu0
      %v1019 = vadd.f32 %v885, %v1018
      %1020 = vdwg.mxu0
      %v1021 = vadd.f32 %v275, %v897
      %v1022 = vadd.f32 %v276, %v899
      %v1023 = vadd.f32 %v277, %v902
      %v1024 = vadd.f32 %v278, %v904
      %v1025 = vadd.f32 %v279, %v907
      %v1026 = vadd.f32 %v280, %v909
      %v1027 = vadd.f32 %v281, %v912
      %v1028 = vadd.f32 %v282, %v914
      %v1029 = vadd.f32 %v283, %v917
      %v1030 = vadd.f32 %v284, %v919
      %v1031 = vadd.f32 %v285, %v922
      %v1032 = vadd.f32 %v286, %v924
      %v1033 = vadd.f32 %v287, %v927
      %v1034 = vadd.f32 %v288, %v929
      %v1035 = vadd.f32 %v289, %v932
      %v1036 = vadd.f32 %v290, %v934
      %v1037 = vadd.f32 %v291, %v937
      %v1038 = vadd.f32 %v292, %v939
      %v1039 = vadd.f32 %v293, %v942
      %v1040 = vadd.f32 %v294, %v944
      %v1041 = vadd.f32 %v295, %v947
      %v1042 = vadd.f32 %v296, %v949
      %v1043 = vadd.f32 %v297, %v952
      %v1044 = vadd.f32 %v298, %v954
      %v1045 = vadd.f32 %v299, %v957
      %v1046 = vadd.f32 %v300, %v959
      %v1047 = vadd.f32 %v301, %v962
      %v1048 = vadd.f32 %v302, %v964
      %v1049 = vadd.f32 %v303, %v967
      %v1050 = vadd.f32 %v304, %v969
      %v1051 = vadd.f32 %v305, %v972
      %v1052 = vadd.f32 %v306, %v974
      %v1053 = vadd.f32 %v307, %v977
      %v1054 = vadd.f32 %v308, %v979
      %v1055 = vadd.f32 %v309, %v982
      %v1056 = vadd.f32 %v310, %v984
      %v1057 = vadd.f32 %v311, %v987
      %v1058 = vadd.f32 %v312, %v989
      %v1059 = vadd.f32 %v313, %v992
      %v1060 = vadd.f32 %v314, %v994
      %v1061 = vadd.f32 %v315, %v997
      %v1062 = vadd.f32 %v316, %v999
      %v1063 = vadd.f32 %v317, %v1002
      %v1064 = vadd.f32 %v318, %v1004
      %v1065 = vadd.f32 %v319, %v1007
      %v1066 = vadd.f32 %v320, %v1009
      %v1067 = vadd.f32 %v321, %v1012
      %v1068 = vadd.f32 %v322, %v1014
      %v1069 = vadd.f32 %v323, %v1017
      %v1070 = vadd.f32 %v324, %v1019
      %1071 = vst [vmem:[#allocation2] sm:$0xff] %v1021
      %1072 = vst [vmem:[#allocation2 + $0x8] sm:$0xff] %v1022
      %1073 = vst [vmem:[#allocation2 + $0x10] sm:$0xff] %v1023
      %1074 = vst [vmem:[#allocation2 + $0x18] sm:$0xff] %v1024
      %1075 = vst [vmem:[#allocation2 + $0x20] sm:$0xff] %v1025
      %1076 = vst [vmem:[#allocation2 + $0x28] sm:$0xff] %v1026
      %1077 = vst [vmem:[#allocation2 + $0x30] sm:$0xff] %v1027
      %1078 = vst [vmem:[#allocation2 + $0x38] sm:$0xff] %v1028
      %1079 = vst [vmem:[#allocation2 + $0x40] sm:$0xff] %v1029
      %1080 = vst [vmem:[#allocation2 + $0x48] sm:$0xff] %v1030
      %1081 = vst [vmem:[#allocation2 + $0x50] sm:$0xff] %v1031
      %1082 = vst [vmem:[#allocation2 + $0x58] sm:$0xff] %v1032
      %1083 = vst [vmem:[#allocation2 + $0x60] sm:$0xff] %v1033
      %1084 = vst [vmem:[#allocation2 + $0x68] sm:$0xff] %v1034
      %1085 = vst [vmem:[#allocation2 + $0x70] sm:$0xff] %v1035
      %1086 = vst [vmem:[#allocation2 + $0x78] sm:$0xff] %v1036
      %1087 = vst [vmem:[#allocation2 + $0x80] sm:$0xff] %v1037
      %1088 = vst [vmem:[#allocation2 + $0x88] sm:$0xff] %v1038
      %1089 = vst [vmem:[#allocation2 + $0x90] sm:$0xff] %v1039
      %1090 = vst [vmem:[#allocation2 + $0x98] sm:$0xff] %v1040
      %1091 = vst [vmem:[#allocation2 + $0xa0] sm:$0xff] %v1041
      %1092 = vst [vmem:[#allocation2 + $0xa8] sm:$0xff] %v1042
      %1093 = vst [vmem:[#allocation2 + $0xb0] sm:$0xff] %v1043
      %1094 = vst [vmem:[#allocation2 + $0xb8] sm:$0xff] %v1044
      %1095 = vst [vmem:[#allocation2 + $0xc0] sm:$0xff] %v1045
      %1096 = vst [vmem:[#allocation2 + $0xc8] sm:$0xff] %v1046
      %1097 = vst [vmem:[#allocation2 + $0xd0] sm:$0xff] %v1047
      %1098 = vst [vmem:[#allocation2 + $0xd8] sm:$0xff] %v1048
      %1099 = vst [vmem:[#allocation2 + $0xe0] sm:$0xff] %v1049
      %1100 = vst [vmem:[#allocation2 + $0xe8] sm:$0xff] %v1050
      %1101 = vst [vmem:[#allocation2 + $0xf0] sm:$0xff] %v1051
      %1102 = vst [vmem:[#allocation2 + $0xf8] sm:$0xff] %v1052
      %1103 = vst [vmem:[#allocation2 + $0x100] sm:$0xff] %v1053
      %1104 = vst [vmem:[#allocation2 + $0x108] sm:$0xff] %v1054
      %1105 = vst [vmem:[#allocation2 + $0x110] sm:$0xff] %v1055
      %1106 = vst [vmem:[#allocation2 + $0x118] sm:$0xff] %v1056
      %1107 = vst [vmem:[#allocation2 + $0x120] sm:$0xff] %v1057
      %1108 = vst [vmem:[#allocation2 + $0x128] sm:$0xff] %v1058
      %1109 = vst [vmem:[#allocation2 + $0x130] sm:$0xff] %v1059
      %1110 = vst [vmem:[#allocation2 + $0x138] sm:$0xff] %v1060
      %1111 = vst [vmem:[#allocation2 + $0x140] sm:$0xff] %v1061
      %1112 = vst [vmem:[#allocation2 + $0x148] sm:$0xff] %v1062
      %1113 = vst [vmem:[#allocation2 + $0x150] sm:$0xff] %v1063
      %1114 = vst [vmem:[#allocation2 + $0x158] sm:$0xff] %v1064
      %1115 = vst [vmem:[#allocation2 + $0x160] sm:$0xff] %v1065
      %1116 = vst [vmem:[#allocation2 + $0x168] sm:$0xff] %v1066
      %1117 = vst [vmem:[#allocation2 + $0x170] sm:$0xff] %v1067
      %1118 = vst [vmem:[#allocation2 + $0x178] sm:$0xff] %v1068
      %1119 = vst [vmem:[#allocation2 + $0x180] sm:$0xff] %v1069
      %1120 = vst [vmem:[#allocation2 + $0x188] sm:$0xff] %v1070
      // Predicated region
      $region37: #{dqn_forward.4} parent=31 // pred_check
        %p1121 = pneg %p221
      $region38: #{dqn_forward.4} parent=31 // pred_check_branch
        %1123 = sbr.rel (%p1121) target = $region40
      $region39: #{dqn_forward.4} parent=31 // pred_region
        %v1124 = vld [vmem:[#allocation2] sm:$0xff]
        %v1125 = vld [vmem:[#allocation2 + $0x8] sm:$0xff]
        %v1126 = vld [vmem:[#allocation2 + $0x10] sm:$0xff]
        %v1127 = vld [vmem:[#allocation2 + $0x18] sm:$0xff]
        %v1128 = vld [vmem:[#allocation2 + $0x20] sm:$0xff]
        %v1129 = vld [vmem:[#allocation2 + $0x28] sm:$0xff]
        %v1130 = vld [vmem:[#allocation2 + $0x30] sm:$0xff]
        %v1131 = vld [vmem:[#allocation2 + $0x38] sm:$0xff]
        %v1132 = vld [vmem:[#allocation2 + $0x40] sm:$0xff]
        %v1133 = vld [vmem:[#allocation2 + $0x48] sm:$0xff]
        %v1134 = vld [vmem:[#allocation2 + $0x50] sm:$0xff]
        %v1135 = vld [vmem:[#allocation2 + $0x58] sm:$0xff]
        %v1136 = vld [vmem:[#allocation2 + $0x60] sm:$0xff]
        %v1137 = vld [vmem:[#allocation2 + $0x68] sm:$0xff]
        %v1138 = vld [vmem:[#allocation2 + $0x70] sm:$0xff]
        %v1139 = vld [vmem:[#allocation2 + $0x78] sm:$0xff]
        %v1140 = vld [vmem:[#allocation2 + $0x80] sm:$0xff]
        %v1141 = vld [vmem:[#allocation2 + $0x88] sm:$0xff]
        %v1142 = vld [vmem:[#allocation2 + $0x90] sm:$0xff]
        %v1143 = vld [vmem:[#allocation2 + $0x98] sm:$0xff]
        %v1144 = vld [vmem:[#allocation2 + $0xa0] sm:$0xff]
        %v1145 = vld [vmem:[#allocation2 + $0xa8] sm:$0xff]
        %v1146 = vld [vmem:[#allocation2 + $0xb0] sm:$0xff]
        %v1147 = vld [vmem:[#allocation2 + $0xb8] sm:$0xff]
        %v1148 = vld [vmem:[#allocation2 + $0xc0] sm:$0xff]
        %v1149 = vld [vmem:[#allocation2 + $0xc8] sm:$0xff]
        %v1150 = vld [vmem:[#allocation2 + $0xd0] sm:$0xff]
        %v1151 = vld [vmem:[#allocation2 + $0xd8] sm:$0xff]
        %v1152 = vld [vmem:[#allocation2 + $0xe0] sm:$0xff]
        %v1153 = vld [vmem:[#allocation2 + $0xe8] sm:$0xff]
        %v1154 = vld [vmem:[#allocation2 + $0xf0] sm:$0xff]
        %v1155 = vld [vmem:[#allocation2 + $0xf8] sm:$0xff]
        %v1156 = vld [vmem:[#allocation2 + $0x100] sm:$0xff]
        %v1157 = vld [vmem:[#allocation2 + $0x108] sm:$0xff]
        %v1158 = vld [vmem:[#allocation2 + $0x110] sm:$0xff]
        %v1159 = vld [vmem:[#allocation2 + $0x118] sm:$0xff]
        %v1160 = vld [vmem:[#allocation2 + $0x120] sm:$0xff]
        %v1161 = vld [vmem:[#allocation2 + $0x128] sm:$0xff]
        %v1162 = vld [vmem:[#allocation2 + $0x130] sm:$0xff]
        %v1163 = vld [vmem:[#allocation2 + $0x138] sm:$0xff]
        %v1164 = vld [vmem:[#allocation2 + $0x140] sm:$0xff]
        %v1165 = vld [vmem:[#allocation2 + $0x148] sm:$0xff]
        %v1166 = vld [vmem:[#allocation2 + $0x150] sm:$0xff]
        %v1167 = vld [vmem:[#allocation2 + $0x158] sm:$0xff]
        %v1168 = vld [vmem:[#allocation2 + $0x160] sm:$0xff]
        %v1169 = vld [vmem:[#allocation2 + $0x168] sm:$0xff]
        %v1170 = vld [vmem:[#allocation2 + $0x170] sm:$0xff]
        %v1171 = vld [vmem:[#allocation2 + $0x178] sm:$0xff]
        %v1172 = vld [vmem:[#allocation2 + $0x180] sm:$0xff]
        %v1173 = vld [vmem:[#allocation2 + $0x188] sm:$0xff]
        %v1174 = vld [vmem:[%s2] sm:$0x1]
        %v1176 = vperm.slane %v1174, 0
        %v1178 = vadd.f32 %v1124, %v1176
        %v1179 = vadd.f32 %v1125, %v1176
        %v1180 = vadd.f32 %v1126, %v1176
        %v1181 = vadd.f32 %v1127, %v1176
        %v1182 = vadd.f32 %v1128, %v1176
        %v1183 = vadd.f32 %v1129, %v1176
        %v1184 = vadd.f32 %v1130, %v1176
        %v1185 = vadd.f32 %v1131, %v1176
        %v1186 = vadd.f32 %v1132, %v1176
        %v1187 = vadd.f32 %v1133, %v1176
        %v1188 = vadd.f32 %v1134, %v1176
        %v1189 = vadd.f32 %v1135, %v1176
        %v1190 = vadd.f32 %v1136, %v1176
        %v1191 = vadd.f32 %v1137, %v1176
        %v1192 = vadd.f32 %v1138, %v1176
        %v1193 = vadd.f32 %v1139, %v1176
        %v1194 = vadd.f32 %v1140, %v1176
        %v1195 = vadd.f32 %v1141, %v1176
        %v1196 = vadd.f32 %v1142, %v1176
        %v1197 = vadd.f32 %v1143, %v1176
        %v1198 = vadd.f32 %v1144, %v1176
        %v1199 = vadd.f32 %v1145, %v1176
        %v1200 = vadd.f32 %v1146, %v1176
        %v1201 = vadd.f32 %v1147, %v1176
        %v1202 = vadd.f32 %v1148, %v1176
        %v1203 = vadd.f32 %v1149, %v1176
        %v1204 = vadd.f32 %v1150, %v1176
        %v1205 = vadd.f32 %v1151, %v1176
        %v1206 = vadd.f32 %v1152, %v1176
        %v1207 = vadd.f32 %v1153, %v1176
        %v1208 = vadd.f32 %v1154, %v1176
        %v1209 = vadd.f32 %v1155, %v1176
        %v1210 = vadd.f32 %v1156, %v1176
        %v1211 = vadd.f32 %v1157, %v1176
        %v1212 = vadd.f32 %v1158, %v1176
        %v1213 = vadd.f32 %v1159, %v1176
        %v1214 = vadd.f32 %v1160, %v1176
        %v1215 = vadd.f32 %v1161, %v1176
        %v1216 = vadd.f32 %v1162, %v1176
        %v1217 = vadd.f32 %v1163, %v1176
        %v1218 = vadd.f32 %v1164, %v1176
        %v1219 = vadd.f32 %v1165, %v1176
        %v1220 = vadd.f32 %v1166, %v1176
        %v1221 = vadd.f32 %v1167, %v1176
        %v1222 = vadd.f32 %v1168, %v1176
        %v1223 = vadd.f32 %v1169, %v1176
        %v1224 = vadd.f32 %v1170, %v1176
        %v1225 = vadd.f32 %v1171, %v1176
        %v1226 = vadd.f32 %v1172, %v1176
        %v1227 = vadd.f32 %v1173, %v1176
        %v1228 = vmax.f32 %v1178, 0.0
        %v1229 = vmax.f32 %v1179, 0.0
        %v1230 = vmax.f32 %v1180, 0.0
        %v1231 = vmax.f32 %v1181, 0.0
        %v1232 = vmax.f32 %v1182, 0.0
        %v1233 = vmax.f32 %v1183, 0.0
        %v1234 = vmax.f32 %v1184, 0.0
        %v1235 = vmax.f32 %v1185, 0.0
        %v1236 = vmax.f32 %v1186, 0.0
        %v1237 = vmax.f32 %v1187, 0.0
        %v1238 = vmax.f32 %v1188, 0.0
        %v1239 = vmax.f32 %v1189, 0.0
        %v1240 = vmax.f32 %v1190, 0.0
        %v1241 = vmax.f32 %v1191, 0.0
        %v1242 = vmax.f32 %v1192, 0.0
        %v1243 = vmax.f32 %v1193, 0.0
        %v1244 = vmax.f32 %v1194, 0.0
        %v1245 = vmax.f32 %v1195, 0.0
        %v1246 = vmax.f32 %v1196, 0.0
        %v1247 = vmax.f32 %v1197, 0.0
        %v1248 = vmax.f32 %v1198, 0.0
        %v1249 = vmax.f32 %v1199, 0.0
        %v1250 = vmax.f32 %v1200, 0.0
        %v1251 = vmax.f32 %v1201, 0.0
        %v1252 = vmax.f32 %v1202, 0.0
        %v1253 = vmax.f32 %v1203, 0.0
        %v1254 = vmax.f32 %v1204, 0.0
        %v1255 = vmax.f32 %v1205, 0.0
        %v1256 = vmax.f32 %v1206, 0.0
        %v1257 = vmax.f32 %v1207, 0.0
        %v1258 = vmax.f32 %v1208, 0.0
        %v1259 = vmax.f32 %v1209, 0.0
        %v1260 = vmax.f32 %v1210, 0.0
        %v1261 = vmax.f32 %v1211, 0.0
        %v1262 = vmax.f32 %v1212, 0.0
        %v1263 = vmax.f32 %v1213, 0.0
        %v1264 = vmax.f32 %v1214, 0.0
        %v1265 = vmax.f32 %v1215, 0.0
        %v1266 = vmax.f32 %v1216, 0.0
        %v1267 = vmax.f32 %v1217, 0.0
        %v1268 = vmax.f32 %v1218, 0.0
        %v1269 = vmax.f32 %v1219, 0.0
        %v1270 = vmax.f32 %v1220, 0.0
        %v1271 = vmax.f32 %v1221, 0.0
        %v1272 = vmax.f32 %v1222, 0.0
        %v1273 = vmax.f32 %v1223, 0.0
        %v1274 = vmax.f32 %v1224, 0.0
        %v1275 = vmax.f32 %v1225, 0.0
        %v1276 = vmax.f32 %v1226, 0.0
        %v1277 = vmax.f32 %v1227, 0.0
        %v1278 = vpack.c.bf16 %v1228, %v1228
        %v1279 = vpack.c.bf16 %v1229, %v1229
        %v1280 = vpack.c.bf16 %v1230, %v1230
        %v1281 = vpack.c.bf16 %v1231, %v1231
        %v1282 = vpack.c.bf16 %v1232, %v1232
        %v1283 = vpack.c.bf16 %v1233, %v1233
        %v1284 = vpack.c.bf16 %v1234, %v1234
        %v1285 = vpack.c.bf16 %v1235, %v1235
        %v1286 = vpack.c.bf16 %v1236, %v1236
        %v1287 = vpack.c.bf16 %v1237, %v1237
        %v1288 = vpack.c.bf16 %v1238, %v1238
        %v1289 = vpack.c.bf16 %v1239, %v1239
        %v1290 = vpack.c.bf16 %v1240, %v1240
        %v1291 = vpack.c.bf16 %v1241, %v1241
        %v1292 = vpack.c.bf16 %v1242, %v1242
        %v1293 = vpack.c.bf16 %v1243, %v1243
        %v1294 = vpack.c.bf16 %v1244, %v1244
        %v1295 = vpack.c.bf16 %v1245, %v1245
        %v1296 = vpack.c.bf16 %v1246, %v1246
        %v1297 = vpack.c.bf16 %v1247, %v1247
        %v1298 = vpack.c.bf16 %v1248, %v1248
        %v1299 = vpack.c.bf16 %v1249, %v1249
        %v1300 = vpack.c.bf16 %v1250, %v1250
        %v1301 = vpack.c.bf16 %v1251, %v1251
        %v1302 = vpack.c.bf16 %v1252, %v1252
        %v1303 = vpack.c.bf16 %v1253, %v1253
        %v1304 = vpack.c.bf16 %v1254, %v1254
        %v1305 = vpack.c.bf16 %v1255, %v1255
        %v1306 = vpack.c.bf16 %v1256, %v1256
        %v1307 = vpack.c.bf16 %v1257, %v1257
        %v1308 = vpack.c.bf16 %v1258, %v1258
        %v1309 = vpack.c.bf16 %v1259, %v1259
        %v1310 = vpack.c.bf16 %v1260, %v1260
        %v1311 = vpack.c.bf16 %v1261, %v1261
        %v1312 = vpack.c.bf16 %v1262, %v1262
        %v1313 = vpack.c.bf16 %v1263, %v1263
        %v1314 = vpack.c.bf16 %v1264, %v1264
        %v1315 = vpack.c.bf16 %v1265, %v1265
        %v1316 = vpack.c.bf16 %v1266, %v1266
        %v1317 = vpack.c.bf16 %v1267, %v1267
        %v1318 = vpack.c.bf16 %v1268, %v1268
        %v1319 = vpack.c.bf16 %v1269, %v1269
        %v1320 = vpack.c.bf16 %v1270, %v1270
        %v1321 = vpack.c.bf16 %v1271, %v1271
        %v1322 = vpack.c.bf16 %v1272, %v1272
        %v1323 = vpack.c.bf16 %v1273, %v1273
        %v1324 = vpack.c.bf16 %v1274, %v1274
        %v1325 = vpack.c.bf16 %v1275, %v1275
        %v1326 = vpack.c.bf16 %v1276, %v1276
        %v1327 = vpack.c.bf16 %v1277, %v1277
        %1328 = vst [vmem:[%s220] sm:$0xf] %v1278
        %1329 = vst [vmem:[%s220 + $0x4] sm:$0xf] %v1279
        %1330 = vst [vmem:[%s220 + $0x8] sm:$0xf] %v1280
        %1331 = vst [vmem:[%s220 + $0xc] sm:$0xf] %v1281
        %1332 = vst [vmem:[%s220 + $0x10] sm:$0xf] %v1282
        %1333 = vst [vmem:[%s220 + $0x14] sm:$0xf] %v1283
        %1334 = vst [vmem:[%s220 + $0x18] sm:$0xf] %v1284
        %1335 = vst [vmem:[%s220 + $0x1c] sm:$0xf] %v1285
        %1336 = vst [vmem:[%s220 + $0x20] sm:$0xf] %v1286
        %1337 = vst [vmem:[%s220 + $0x24] sm:$0xf] %v1287
        %1338 = vst [vmem:[%s220 + $0x28] sm:$0xf] %v1288
        %1339 = vst [vmem:[%s220 + $0x2c] sm:$0xf] %v1289
        %1340 = vst [vmem:[%s220 + $0x30] sm:$0xf] %v1290
        %1341 = vst [vmem:[%s220 + $0x34] sm:$0xf] %v1291
        %1342 = vst [vmem:[%s220 + $0x38] sm:$0xf] %v1292
        %1343 = vst [vmem:[%s220 + $0x3c] sm:$0xf] %v1293
        %1344 = vst [vmem:[%s220 + $0x40] sm:$0xf] %v1294
        %1345 = vst [vmem:[%s220 + $0x44] sm:$0xf] %v1295
        %1346 = vst [vmem:[%s220 + $0x48] sm:$0xf] %v1296
        %1347 = vst [vmem:[%s220 + $0x4c] sm:$0xf] %v1297
        %1348 = vst [vmem:[%s220 + $0x50] sm:$0xf] %v1298
        %1349 = vst [vmem:[%s220 + $0x54] sm:$0xf] %v1299
        %1350 = vst [vmem:[%s220 + $0x58] sm:$0xf] %v1300
        %1351 = vst [vmem:[%s220 + $0x5c] sm:$0xf] %v1301
        %1352 = vst [vmem:[%s220 + $0x60] sm:$0xf] %v1302
        %1353 = vst [vmem:[%s220 + $0x64] sm:$0xf] %v1303
        %1354 = vst [vmem:[%s220 + $0x68] sm:$0xf] %v1304
        %1355 = vst [vmem:[%s220 + $0x6c] sm:$0xf] %v1305
        %1356 = vst [vmem:[%s220 + $0x70] sm:$0xf] %v1306
        %1357 = vst [vmem:[%s220 + $0x74] sm:$0xf] %v1307
        %1358 = vst [vmem:[%s220 + $0x78] sm:$0xf] %v1308
        %1359 = vst [vmem:[%s220 + $0x7c] sm:$0xf] %v1309
        %1360 = vst [vmem:[%s220 + $0x80] sm:$0xf] %v1310
        %1361 = vst [vmem:[%s220 + $0x84] sm:$0xf] %v1311
        %1362 = vst [vmem:[%s220 + $0x88] sm:$0xf] %v1312
        %1363 = vst [vmem:[%s220 + $0x8c] sm:$0xf] %v1313
        %1364 = vst [vmem:[%s220 + $0x90] sm:$0xf] %v1314
        %1365 = vst [vmem:[%s220 + $0x94] sm:$0xf] %v1315
        %1366 = vst [vmem:[%s220 + $0x98] sm:$0xf] %v1316
        %1367 = vst [vmem:[%s220 + $0x9c] sm:$0xf] %v1317
        %1368 = vst [vmem:[%s220 + $0xa0] sm:$0xf] %v1318
        %1369 = vst [vmem:[%s220 + $0xa4] sm:$0xf] %v1319
        %1370 = vst [vmem:[%s220 + $0xa8] sm:$0xf] %v1320
        %1371 = vst [vmem:[%s220 + $0xac] sm:$0xf] %v1321
        %1372 = vst [vmem:[%s220 + $0xb0] sm:$0xf] %v1322
        %1373 = vst [vmem:[%s220 + $0xb4] sm:$0xf] %v1323
        %1374 = vst [vmem:[%s220 + $0xb8] sm:$0xf] %v1324
        %1375 = vst [vmem:[%s220 + $0xbc] sm:$0xf] %v1325
        %1376 = vst [vmem:[%s220 + $0xc0] sm:$0xf] %v1326
        %1377 = vst [vmem:[%s220 + $0xc4] sm:$0xf] %v1327
      $region40: #{dqn_forward.4} parent=31 // pred_fallthru
        _
      %p1378 = scmp.lt.s32.totalorder %s18, 1
      %s1379 = scalar_select %p1378, %s18, 1
      %s1380 = smul.addr %s1379, 50
      %s1381 = smul.addr %s1380, 4
      %s1382 = scalar_lea.vmem %s3, %s1381
      // Predicated region
      $region41: #{dqn_forward.4} parent=31 // pred_check
        %p1383 = pneg %p119
      $region42: #{dqn_forward.4} parent=31 // pred_check_branch
        %1385 = sbr.rel (%p1383) target = $region44
      $region43: #{dqn_forward.4} parent=31 // pred_region
        _
      $region44: #{dqn_forward.4} parent=31 // pred_fallthru
        _
    $region32: #{dqn_forward.4} parent=5 // pred_fallthru
      _
    %p1386 = scmp.le.s32.totalorder 2, %s9
    // Predicated region
    $region45: #{dqn_forward.4} parent=5 // pred_check
      %p1387 = pneg %p1386
    $region46: #{dqn_forward.4} parent=5 // pred_check_branch
      %1389 = sbr.rel (%p1387) target = $region48
    $region47: #{dqn_forward.4} parent=5 // pred_region
      %s1390 = ssub.s32 %s9, 2
      // Predicated region
      $region49: #{dqn_forward.4} parent=47 // pred_check
        %p1391 = pneg %p125
      $region50: #{dqn_forward.4} parent=47 // pred_check_branch
        %1393 = sbr.rel (%p1391) target = $region52
      $region51: #{dqn_forward.4} parent=47 // pred_region
        %p1394 = scmp.lt.s32.totalorder %s20, 1
        %s1395 = scalar_select %p1394, %s20, 1
        %s1396 = smul.addr %s1395, 50
        %s1397 = smul.addr %s1396, 4
        %s1398 = scalar_lea.vmem %s3, %s1397
      $region52: #{dqn_forward.4} parent=47 // pred_fallthru
        _
    $region48: #{dqn_forward.4} parent=5 // pred_fallthru
      _
  $region6: #{dqn_forward.4} parent=0 // loop_footer
    %s13 = sadd.s32 1, %s9
  $region7: #{dqn_forward.4} parent=0 // loop_footer_branch
    %8 = sbr.rel target = $region3
  $region8: #{dqn_forward.4} parent=0 // loop_exit
    _

// kernel: dqn_forward.5
$region0: #{dqn_forward.5}
  #allocation0 [shape = 'u32[]', space=smem, size = 0x4, offset = 0x4, fixed_abs, tag = 'smem constant byte address 0x4 - core index']
  #allocation1 [shape = 'u32[72,128]{1,0:T(1,128)}', space=vmem, size = 0x9000, scoped, tag = 'internal scratch']
  #allocation2 [shape = 'f32[81,128]{1,0:T(8,128)}', space=vmem, size = 0xb000, scoped, tag = 'scratch operand']
  %s0 = inlined_call_operand.vmem [shape: bf16[2,81,512], index: 0, kind: input, shape index: {}]
  %s1 = inlined_call_operand.vmem [shape: bf16[512,128], index: 1, kind: input, shape index: {}]
  %s2 = inlined_call_operand.vmem [shape: f32[1,128], index: 2, kind: input, shape index: {}]
  %s3 = inlined_call_operand.vmem [shape: bf16[2,81,128], index: 3, kind: output, shape index: {}]
  %s4 = sld [smem:[#allocation0]]
  $region53: #{dqn_forward.5} parent=0
    _
  %s6 = ssub.s32 1, %s4
  %s7 = scalar_select 0, %s6, %s4
  loop: start=0, step=1, limit=4
  $region2: #{dqn_forward.5} parent=0 // loop_pre_header
    _
  $region3: #{dqn_forward.5} parent=0 // loop_header
    %s9 = sphi 0, %s13
    %p10 = scmp.ge.s32.totalorder %s9, 4
    %s16 = sphi 0, %s28
    %s17 = sphi 0, %s24
    %s18 = sphi 0, %s16
    %s19 = sphi 0, %s17
    %s20 = sphi 0, %s18
    %s21 = sphi 0, %s19
    %s33 = sphi 0, %s35
    %s36 = sphi 0, %s33
    %s37 = sphi 0, %s36
    %s53 = sphi 0, %s37
    %s59 = sphi 0, %s61
    %s62 = sphi 0, %s59
    %s63 = sphi 0, %s62
    %s79 = sphi 0, %s63
    %s83 = sphi 0, %s83
    %s85 = sphi 0, %s83
    %s86 = sphi 0, %s85
    %s100 = sphi 0, %s86
    %s106 = sphi 0, %s108
    %s109 = sphi 0, %s106
    %s110 = sphi 0, %s109
    %s126 = sphi 0, %s110
  $region4: #{dqn_forward.5} parent=0 // loop_header_branch
    %12 = sbr.rel (%p10) target = $region8
  $region5: #{dqn_forward.5} parent=0 // loop_body
    %s14 = ssub.s32 %s9, 1
    %s15 = ssub.s32 %s9, 2
    %s22 = sadd.s32 1, %s17
    %p23 = scmp.ge.s32.totalorder %s22, 1
    %s24 = scalar_select %p23, 0, %s22
    %s25 = sadd.s32 1, %s16
    %s26 = scalar_select %p23, %s25, %s16
    %p27 = scmp.ge.s32.totalorder %s26, 2
    %s28 = scalar_select %p27, 0, %s26
    %s29 = ssub.s32 %s16, %s28
    %s30 = ssub.s32 %s17, %s24
    %s31 = sor.u32 %s29, %s30
    %p32 = scmp.eq.s32.totalorder %s31, 0
    %s34 = sadd.s32 %s33, 1
    %s35 = scalar_select %p32, %s33, %s34
    %p38 = pneg %p32
    %p39 = scmp.eq.s32.totalorder %s9, 1
    %p40 = por %p38, %p39
    %p41 = scmp.ne.s32.totalorder %s33, %s36
    %p42 = scmp.eq.s32.totalorder %s9, 0
    %p43 = por %p41, %p42
    %p44 = scmp.ne.s32.totalorder %s33, %s36
    %p45 = scmp.eq.s32.totalorder %s14, 1
    %p46 = por %p44, %p45
    %p47 = scmp.ne.s32.totalorder %s36, %s37
    %p48 = scmp.eq.s32.totalorder %s14, 0
    %p49 = por %p47, %p48
    %p50 = scmp.ne.s32.totalorder %s36, %s37
    %p51 = scmp.eq.s32.totalorder %s15, 1
    %p52 = por %p50, %p51
    %p54 = scmp.ne.s32.totalorder %s37, %s53
    %p55 = scmp.eq.s32.totalorder %s15, 0
    %p56 = por %p54, %p55
    %s57 = ssub.s32 %s17, %s24
    %p58 = scmp.eq.s32.totalorder %s57, 0
    %s60 = sadd.s32 %s59, 1
    %s61 = scalar_select %p58, %s59, %s60
    %p64 = pneg %p58
    %p65 = scmp.eq.s32.totalorder %s9, 1
    %p66 = por %p64, %p65
    %p67 = scmp.ne.s32.totalorder %s59, %s62
    %p68 = scmp.eq.s32.totalorder %s9, 0
    %p69 = por %p67, %p68
    %p70 = scmp.ne.s32.totalorder %s59, %s62
    %p71 = scmp.eq.s32.totalorder %s14, 1
    %p72 = por %p70, %p71
    %p73 = scmp.ne.s32.totalorder %s62, %s63
    %p74 = scmp.eq.s32.totalorder %s14, 0
    %p75 = por %p73, %p74
    %p76 = scmp.ne.s32.totalorder %s62, %s63
    %p77 = scmp.eq.s32.totalorder %s15, 1
    %p78 = por %p76, %p77
    %p80 = scmp.ne.s32.totalorder %s63, %s79
    %p81 = scmp.eq.s32.totalorder %s15, 0
    %p82 = por %p80, %p81
    %s84 = sadd.s32 %s83, 1
    %p87 = scmp.eq.s32.totalorder %s9, 1
    %p88 = scmp.ne.s32.totalorder %s83, %s85
    %p89 = scmp.eq.s32.totalorder %s9, 0
    %p90 = por %p88, %p89
    %p91 = scmp.ne.s32.totalorder %s83, %s85
    %p92 = scmp.eq.s32.totalorder %s14, 1
    %p93 = por %p91, %p92
    %p94 = scmp.ne.s32.totalorder %s85, %s86
    %p95 = scmp.eq.s32.totalorder %s14, 0
    %p96 = por %p94, %p95
    %p97 = scmp.ne.s32.totalorder %s85, %s86
    %p98 = scmp.eq.s32.totalorder %s15, 1
    %p99 = por %p97, %p98
    %p101 = scmp.ne.s32.totalorder %s86, %s100
    %p102 = scmp.eq.s32.totalorder %s15, 0
    %p103 = por %p101, %p102
    %s104 = ssub.s32 %s16, %s28
    %p105 = scmp.eq.s32.totalorder %s104, 0
    %s107 = sadd.s32 %s106, 1
    %s108 = scalar_select %p105, %s106, %s107
    %p111 = pneg %p105
    %p112 = scmp.eq.s32.totalorder %s9, 1
    %p113 = por %p111, %p112
    %p114 = scmp.ne.s32.totalorder %s106, %s109
    %p115 = scmp.eq.s32.totalorder %s9, 0
    %p116 = por %p114, %p115
    %p117 = scmp.ne.s32.totalorder %s106, %s109
    %p118 = scmp.eq.s32.totalorder %s14, 1
    %p119 = por %p117, %p118
    %p120 = scmp.ne.s32.totalorder %s109, %s110
    %p121 = scmp.eq.s32.totalorder %s14, 0
    %p122 = por %p120, %p121
    %p123 = scmp.ne.s32.totalorder %s109, %s110
    %p124 = scmp.eq.s32.totalorder %s15, 1
    %p125 = por %p123, %p124
    %p127 = scmp.ne.s32.totalorder %s110, %s126
    %p128 = scmp.eq.s32.totalorder %s15, 0
    %p129 = por %p127, %p128
    %p130 = scmp.le.s32.totalorder 1, %s9
    %p131 = scmp.lt.s32.totalorder %s9, 3
    %p132 = pnand %p130, %p131
    %p133 = pneg %p132
    // Predicated region
    $region9: #{dqn_forward.5} parent=5 // pred_check
      _
    $region10: #{dqn_forward.5} parent=5 // pred_check_branch
      %135 = sbr.rel (%p132) target = $region12
    $region11: #{dqn_forward.5} parent=5 // pred_region
      %s136 = ssub.s32 %s9, 1
      // Predicated region
      $region13: #{dqn_forward.5} parent=11 // pred_check
        %p137 = pneg %p75
      $region14: #{dqn_forward.5} parent=11 // pred_check_branch
        %139 = sbr.rel (%p137) target = $region16
      $region15: #{dqn_forward.5} parent=11 // pred_region
        %s140 = smul.u32 64, %s19
        %p141 = scmp.lt.s32.totalorder %s140, 63
        %s142 = scalar_select %p141, %s140, 63
        %s143 = smul.addr %s142, 4
        %s144 = scalar_lea.vmem %s1, %s143
        %s145 = smul.u32 64, %s19
      $region16: #{dqn_forward.5} parent=11 // pred_fallthru
        _
      // Predicated region
      $region17: #{dqn_forward.5} parent=11 // pred_check
        %p146 = pneg %p96
      $region18: #{dqn_forward.5} parent=11 // pred_check_branch
        %148 = sbr.rel (%p146) target = $region20
      $region19: #{dqn_forward.5} parent=11 // pred_region
        _
      $region20: #{dqn_forward.5} parent=11 // pred_fallthru
        _
    $region12: #{dqn_forward.5} parent=5 // pred_fallthru
      _
    %p149 = scmp.lt.s32.totalorder %s9, 2
    // Predicated region
    $region21: #{dqn_forward.5} parent=5 // pred_check
      %p150 = pneg %p149
    $region22: #{dqn_forward.5} parent=5 // pred_check_branch
      %152 = sbr.rel (%p150) target = $region24
    $region23: #{dqn_forward.5} parent=5 // pred_region
      // Predicated region
      $region25: #{dqn_forward.5} parent=23 // pred_check
        %p153 = pneg %p43
      $region26: #{dqn_forward.5} parent=23 // pred_check_branch
        %155 = sbr.rel (%p153) target = $region28
      $region27: #{dqn_forward.5} parent=23 // pred_region
        %s156 = smul.u32 4, %s17
        %p157 = scmp.lt.s32.totalorder %s16, 1
        %s158 = scalar_select %p157, %s16, 1
        %p159 = scmp.lt.s32.totalorder %s156, 3
        %s160 = scalar_select %p159, %s156, 3
        %s161 = smul.addr %s158, 44
        %s162 = sadd.s32 %s160, %s161
        %s163 = smul.addr %s162, 4
        %s164 = scalar_lea.vmem %s0, %s163
        %s165 = smul.u32 4, %s17
      $region28: #{dqn_forward.5} parent=23 // pred_fallthru
        _
    $region24: #{dqn_forward.5} parent=5 // pred_fallthru
      _
    %p166 = scmp.le.s32.totalorder 1, %s9
    %p167 = scmp.lt.s32.totalorder %s9, 3
    %p168 = pnand %p166, %p167
    %p169 = pneg %p168
    // Predicated region
    $region29: #{dqn_forward.5} parent=5 // pred_check
      _
    $region30: #{dqn_forward.5} parent=5 // pred_check_branch
      %171 = sbr.rel (%p168) target = $region32
    $region31: #{dqn_forward.5} parent=5 // pred_region
      %s172 = ssub.s32 %s9, 1
      %s173 = smul.u32 4, %s19
      %p174 = scmp.lt.s32.totalorder %s18, 1
      %s175 = scalar_select %p174, %s18, 1
      %p176 = scmp.lt.s32.totalorder %s173, 3
      %s177 = scalar_select %p176, %s173, 3
      %s178 = smul.addr %s175, 44
      %s179 = sadd.s32 %s177, %s178
      %s180 = smul.addr %s179, 4
      %s181 = scalar_lea.vmem %s0, %s180
      %p182 = pneg %p49
      %p183 = pneg %p46
      %s184 = smul.u32 64, %s19
      %p185 = scmp.lt.s32.totalorder %s184, 63
      %s186 = scalar_select %p185, %s184, 63
      %s187 = smul.addr %s186, 4
      %s188 = scalar_lea.vmem %s1, %s187
      %p189 = pneg %p75
      %p190 = pneg %p72
      %p191 = pneg %p96
      %p192 = pneg %p93
      %p193 = pneg %p122
      %p194 = pneg %p119
      %p195 = scmp.lt.s32.totalorder %s18, 1
      %s196 = scalar_select %p195, %s18, 1
      %s197 = smul.addr %s196, 11
      %s198 = smul.addr %s197, 4
      %s199 = scalar_lea.vmem %s3, %s198
      %s200 = smul.u32 4, %s19
      %p201 = scmp.lt.s32.totalorder %s18, 1
      %s202 = scalar_select %p201, %s18, 1
      %p203 = scmp.lt.s32.totalorder %s200, 3
      %s204 = scalar_select %p203, %s200, 3
      %s205 = smul.addr %s202, 44
      %s206 = sadd.s32 %s204, %s205
      %s207 = smul.addr %s206, 4
      %s208 = scalar_lea.vmem %s0, %s207
      %s209 = smul.u32 4, %s19
      %s210 = smul.u32 64, %s19
      %p211 = scmp.lt.s32.totalorder %s210, 63
      %s212 = scalar_select %p211, %s210, 63
      %s213 = smul.addr %s212, 4
      %s214 = scalar_lea.vmem %s1, %s213
      %s215 = smul.u32 64, %s19
      %p216 = scmp.lt.s32.totalorder %s18, 1
      %s217 = scalar_select %p216, %s18, 1
      %s218 = smul.addr %s217, 11
      %s219 = smul.addr %s218, 4
      %s220 = scalar_lea.vmem %s3, %s219
      %p221 = scmp.eq.s32.totalorder %s19, 0
      // Predicated region
      $region33: #{dqn_forward.5} parent=31 // pred_check
        %p222 = pneg %p221
      $region34: #{dqn_forward.5} parent=31 // pred_check_branch
        %224 = sbr.rel (%p222) target = $region36
      $region35: #{dqn_forward.5} parent=31 // pred_region
        %225 = vst [vmem:[#allocation2] sm:$0xff] 0.0
        %226 = vst [vmem:[#allocation2 + $0x8] sm:$0xff] 0.0
        %227 = vst [vmem:[#allocation2 + $0x10] sm:$0xff] 0.0
        %228 = vst [vmem:[#allocation2 + $0x18] sm:$0xff] 0.0
        %229 = vst [vmem:[#allocation2 + $0x20] sm:$0xff] 0.0
        %230 = vst [vmem:[#allocation2 + $0x28] sm:$0xff] 0.0
        %231 = vst [vmem:[#allocation2 + $0x30] sm:$0xff] 0.0
        %232 = vst [vmem:[#allocation2 + $0x38] sm:$0xff] 0.0
        %233 = vst [vmem:[#allocation2 + $0x40] sm:$0xff] 0.0
        %234 = vst [vmem:[#allocation2 + $0x48] sm:$0xff] 0.0
        %235 = vst [vmem:[#allocation2 + $0x50] sm:$0x1] 0.0
      $region36: #{dqn_forward.5} parent=31 // pred_fallthru
        _
      %v236 = vld [vmem:[#allocation2] sm:$0xff]
      %v237 = vld [vmem:[#allocation2 + $0x8] sm:$0xff]
      %v238 = vld [vmem:[#allocation2 + $0x10] sm:$0xff]
      %v239 = vld [vmem:[#allocation2 + $0x18] sm:$0xff]
      %v240 = vld [vmem:[#allocation2 + $0x20] sm:$0xff]
      %v241 = vld [vmem:[#allocation2 + $0x28] sm:$0xff]
      %v242 = vld [vmem:[#allocation2 + $0x30] sm:$0xff]
      %v243 = vld [vmem:[#allocation2 + $0x38] sm:$0xff]
      %v244 = vld [vmem:[#allocation2 + $0x40] sm:$0xff]
      %v245 = vld [vmem:[#allocation2 + $0x48] sm:$0xff]
      %v246 = vld [vmem:[#allocation2 + $0x50] sm:$0x1]
      %v247 = vld [vmem:[%s208] sm:$0xff]
      %v248 = vld [vmem:[%s208 + $0x8] sm:$0xff]
      %v249 = vld [vmem:[%s208 + $0x10] sm:$0xff]
      %v250 = vld [vmem:[%s208 + $0x18] sm:$0xff]
      %v251 = vld [vmem:[%s208 + $0x20] sm:$0xff]
      %v252 = vld [vmem:[%s208 + $0x28] sm:$0xff]
      %v253 = vld [vmem:[%s208 + $0x30] sm:$0xff]
      %v254 = vld [vmem:[%s208 + $0x38] sm:$0xff]
      %v255 = vld [vmem:[%s208 + $0x40] sm:$0xff]
      %v256 = vld [vmem:[%s208 + $0x48] sm:$0xff]
      %v257 = vld [vmem:[%s208 + $0x50] sm:$0xff]
      %v258 = vld [vmem:[%s208 + $0x58] sm:$0xff]
      %v259 = vld [vmem:[%s208 + $0x60] sm:$0xff]
      %v260 = vld [vmem:[%s208 + $0x68] sm:$0xff]
      %v261 = vld [vmem:[%s208 + $0x70] sm:$0xff]
      %v262 = vld [vmem:[%s208 + $0x78] sm:$0xff]
      %v263 = vld [vmem:[%s208 + $0x80] sm:$0xff]
      %v264 = vld [vmem:[%s208 + $0x88] sm:$0xff]
      %v265 = vld [vmem:[%s208 + $0x90] sm:$0xff]
      %v266 = vld [vmem:[%s208 + $0x98] sm:$0xff]
      %v267 = vld [vmem:[%s208 + $0xa0] sm:$0x11]
      %v268 = vld [vmem:[%s208 + $0xa8] sm:$0x11]
      %v269 = vld [vmem:[%s214] sm:$0xf]
      %v270 = vld [vmem:[%s214 + $0x4] sm:$0xf]
      %v271 = vld [vmem:[%s214 + $0x8] sm:$0xf]
      %v272 = vld [vmem:[%s214 + $0xc] sm:$0xf]
      %v273 = vld [vmem:[%s214 + $0x10] sm:$0xf]
      %v274 = vld [vmem:[%s214 + $0x14] sm:$0xf]
      %v275 = vld [vmem:[%s214 + $0x18] sm:$0xf]
      %v276 = vld [vmem:[%s214 + $0x1c] sm:$0xf]
      %v277 = vld [vmem:[%s214 + $0x20] sm:$0xf]
      %v278 = vld [vmem:[%s214 + $0x24] sm:$0xf]
      %v279 = vld [vmem:[%s214 + $0x28] sm:$0xf]
      %v280 = vld [vmem:[%s214 + $0x2c] sm:$0xf]
      %v281 = vld [vmem:[%s214 + $0x30] sm:$0xf]
      %v282 = vld [vmem:[%s214 + $0x34] sm:$0xf]
      %v283 = vld [vmem:[%s214 + $0x38] sm:$0xf]
      %v284 = vld [vmem:[%s214 + $0x3c] sm:$0xf]
      %v285 = vld [vmem:[%s214 + $0x40] sm:$0xf]
      %v286 = vld [vmem:[%s214 + $0x44] sm:$0xf]
      %v287 = vld [vmem:[%s214 + $0x48] sm:$0xf]
      %v288 = vld [vmem:[%s214 + $0x4c] sm:$0xf]
      %v289 = vld [vmem:[%s214 + $0x50] sm:$0xf]
      %v290 = vld [vmem:[%s214 + $0x54] sm:$0xf]
      %v291 = vld [vmem:[%s214 + $0x58] sm:$0xf]
      %v292 = vld [vmem:[%s214 + $0x5c] sm:$0xf]
      %v293 = vld [vmem:[%s214 + $0x60] sm:$0xf]
      %v294 = vld [vmem:[%s214 + $0x64] sm:$0xf]
      %v295 = vld [vmem:[%s214 + $0x68] sm:$0xf]
      %v296 = vld [vmem:[%s214 + $0x6c] sm:$0xf]
      %v297 = vld [vmem:[%s214 + $0x70] sm:$0xf]
      %v298 = vld [vmem:[%s214 + $0x74] sm:$0xf]
      %v299 = vld [vmem:[%s214 + $0x78] sm:$0xf]
      %v300 = vld [vmem:[%s214 + $0x7c] sm:$0xf]
      %v301 = vld [vmem:[%s214 + $0x80] sm:$0xf]
      %v302 = vld [vmem:[%s214 + $0x84] sm:$0xf]
      %v303 = vld [vmem:[%s214 + $0x88] sm:$0xf]
      %v304 = vld [vmem:[%s214 + $0x8c] sm:$0xf]
      %v305 = vld [vmem:[%s214 + $0x90] sm:$0xf]
      %v306 = vld [vmem:[%s214 + $0x94] sm:$0xf]
      %v307 = vld [vmem:[%s214 + $0x98] sm:$0xf]
      %v308 = vld [vmem:[%s214 + $0x9c] sm:$0xf]
      %v309 = vld [vmem:[%s214 + $0xa0] sm:$0xf]
      %v310 = vld [vmem:[%s214 + $0xa4] sm:$0xf]
      %v311 = vld [vmem:[%s214 + $0xa8] sm:$0xf]
      %v312 = vld [vmem:[%s214 + $0xac] sm:$0xf]
      %v313 = vld [vmem:[%s214 + $0xb0] sm:$0xf]
      %v314 = vld [vmem:[%s214 + $0xb4] sm:$0xf]
      %v315 = vld [vmem:[%s214 + $0xb8] sm:$0xf]
      %v316 = vld [vmem:[%s214 + $0xbc] sm:$0xf]
      %v317 = vld [vmem:[%s214 + $0xc0] sm:$0xf]
      %v318 = vld [vmem:[%s214 + $0xc4] sm:$0xf]
      %v319 = vld [vmem:[%s214 + $0xc8] sm:$0xf]
      %v320 = vld [vmem:[%s214 + $0xcc] sm:$0xf]
      %v321 = vld [vmem:[%s214 + $0xd0] sm:$0xf]
      %v322 = vld [vmem:[%s214 + $0xd4] sm:$0xf]
      %v323 = vld [vmem:[%s214 + $0xd8] sm:$0xf]
      %v324 = vld [vmem:[%s214 + $0xdc] sm:$0xf]
      %v325 = vld [vmem:[%s214 + $0xe0] sm:$0xf]
      %v326 = vld [vmem:[%s214 + $0xe4] sm:$0xf]
      %v327 = vld [vmem:[%s214 + $0xe8] sm:$0xf]
      %v328 = vld [vmem:[%s214 + $0xec] sm:$0xf]
      %v329 = vld [vmem:[%s214 + $0xf0] sm:$0xf]
      %v330 = vld [vmem:[%s214 + $0xf4] sm:$0xf]
      %v331 = vld [vmem:[%s214 + $0xf8] sm:$0xf]
      %v332 = vld [vmem:[%s214 + $0xfc] sm:$0xf]
      %v355 = vunpack.c.l.b16 %v247
      %v356 = vunpack.c.h.b16 %v247
      %v357 = vunpack.c.l.b16 %v248
      %v358 = vunpack.c.h.b16 %v248
      %v359 = vunpack.c.l.b16 %v249
      %v360 = vunpack.c.h.b16 %v249
      %v361 = vunpack.c.l.b16 %v250
      %v362 = vunpack.c.h.b16 %v250
      %v363 = vunpack.c.l.b16 %v251
      %v364 = vunpack.c.h.b16 %v251
      %v365 = vunpack.c.l.b16 %v252
      %v366 = vunpack.c.h.b16 %v252
      %v367 = vunpack.c.l.b16 %v253
      %v368 = vunpack.c.h.b16 %v253
      %v369 = vunpack.c.l.b16 %v254
      %v370 = vunpack.c.h.b16 %v254
      %v371 = vunpack.c.l.b16 %v255
      %v372 = vunpack.c.h.b16 %v255
      %v373 = vunpack.c.l.b16 %v256
      %v374 = vunpack.c.h.b16 %v256
      %v375 = vunpack.c.l.b16 %v257
      %v376 = vunpack.c.h.b16 %v257
      %v377 = vunpack.c.l.b16 %v258
      %v378 = vunpack.c.h.b16 %v258
      %v379 = vunpack.c.l.b16 %v259
      %v380 = vunpack.c.h.b16 %v259
      %v381 = vunpack.c.l.b16 %v260
      %v382 = vunpack.c.h.b16 %v260
      %v383 = vunpack.c.l.b16 %v261
      %v384 = vunpack.c.h.b16 %v261
      %v385 = vunpack.c.l.b16 %v262
      %v386 = vunpack.c.h.b16 %v262
      %v387 = vunpack.c.l.b16 %v263
      %v388 = vunpack.c.h.b16 %v263
      %v389 = vunpack.c.l.b16 %v264
      %v390 = vunpack.c.h.b16 %v264
      %v391 = vunpack.c.l.b16 %v265
      %v392 = vunpack.c.h.b16 %v265
      %v393 = vunpack.c.l.b16 %v266
      %v394 = vunpack.c.h.b16 %v266
      %v395 = vunpack.c.l.b16 %v267
      %v396 = vunpack.c.h.b16 %v267
      %v397 = vunpack.c.l.b16 %v268
      %v398 = vunpack.c.h.b16 %v268
      %v399 = vpack.c.b16 %v359, %v355
      %v400 = vpack.c.b16 %v360, %v356
      %v401 = vpack.c.b16 %v361, %v357
      %v402 = vpack.c.b16 %v362, %v358
      %v403 = vpack.c.b16 %v367, %v363
      %v404 = vpack.c.b16 %v368, %v364
      %v405 = vpack.c.b16 %v369, %v365
      %v406 = vpack.c.b16 %v370, %v366
      %v407 = vpack.c.b16 %v375, %v371
      %v408 = vpack.c.b16 %v376, %v372
      %v409 = vpack.c.b16 %v377, %v373
      %v410 = vpack.c.b16 %v378, %v374
      %v411 = vpack.c.b16 %v383, %v379
      %v412 = vpack.c.b16 %v384, %v380
      %v413 = vpack.c.b16 %v385, %v381
      %v414 = vpack.c.b16 %v386, %v382
      %v415 = vpack.c.b16 %v391, %v387
      %v416 = vpack.c.b16 %v392, %v388
      %v417 = vpack.c.b16 %v393, %v389
      %v418 = vpack.c.b16 %v394, %v390
      %v419 = vpack.c.b16 %v395, %v395
      %v420 = vpack.c.b16 %v396, %v396
      %v421 = vpack.c.b16 %v397, %v397
      %v422 = vpack.c.b16 %v398, %v398
      %v511 = vunpack.c.l.b16 %v269
      %v512 = vunpack.c.l.b16 %v270
      %v513 = vunpack.c.l.b16 %v271
      %v514 = vunpack.c.l.b16 %v272
      %v515 = vunpack.c.l.b16 %v273
      %v516 = vunpack.c.l.b16 %v274
      %v517 = vunpack.c.l.b16 %v275
      %v518 = vunpack.c.l.b16 %v276
      %v519 = vunpack.c.l.b16 %v277
      %v520 = vunpack.c.l.b16 %v278
      %v521 = vunpack.c.l.b16 %v279
      %v522 = vunpack.c.l.b16 %v280
      %v523 = vunpack.c.l.b16 %v281
      %v524 = vunpack.c.l.b16 %v282
      %v525 = vunpack.c.l.b16 %v283
      %v526 = vunpack.c.l.b16 %v284
      %v527 = vunpack.c.l.b16 %v285
      %v528 = vunpack.c.l.b16 %v286
      %v529 = vunpack.c.l.b16 %v287
      %v530 = vunpack.c.l.b16 %v288
      %v531 = vunpack.c.l.b16 %v289
      %v532 = vunpack.c.l.b16 %v290
      %v533 = vunpack.c.l.b16 %v291
      %v534 = vunpack.c.l.b16 %v292
      %v535 = vunpack.c.l.b16 %v293
      %v536 = vunpack.c.l.b16 %v294
      %v537 = vunpack.c.l.b16 %v295
      %v538 = vunpack.c.l.b16 %v296
      %v539 = vunpack.c.l.b16 %v297
      %v540 = vunpack.c.l.b16 %v298
      %v541 = vunpack.c.l.b16 %v299
      %v542 = vunpack.c.l.b16 %v300
      %v543 = vunpack.c.l.b16 %v301
      %v544 = vunpack.c.l.b16 %v302
      %v545 = vunpack.c.l.b16 %v303
      %v546 = vunpack.c.l.b16 %v304
      %v547 = vunpack.c.l.b16 %v305
      %v548 = vunpack.c.l.b16 %v306
      %v549 = vunpack.c.l.b16 %v307
      %v550 = vunpack.c.l.b16 %v308
      %v551 = vunpack.c.l.b16 %v309
      %v552 = vunpack.c.l.b16 %v310
      %v553 = vunpack.c.l.b16 %v311
      %v554 = vunpack.c.l.b16 %v312
      %v555 = vunpack.c.l.b16 %v313
      %v556 = vunpack.c.l.b16 %v314
      %v557 = vunpack.c.l.b16 %v315
      %v558 = vunpack.c.l.b16 %v316
      %v559 = vunpack.c.l.b16 %v317
      %v560 = vunpack.c.l.b16 %v318
      %v561 = vunpack.c.l.b16 %v319
      %v562 = vunpack.c.l.b16 %v320
      %v563 = vunpack.c.l.b16 %v321
      %v564 = vunpack.c.l.b16 %v322
      %v565 = vunpack.c.l.b16 %v323
      %v566 = vunpack.c.l.b16 %v324
      %v567 = vunpack.c.l.b16 %v325
      %v568 = vunpack.c.l.b16 %v326
      %v569 = vunpack.c.l.b16 %v327
      %v570 = vunpack.c.l.b16 %v328
      %v571 = vunpack.c.l.b16 %v329
      %v572 = vunpack.c.l.b16 %v330
      %v573 = vunpack.c.l.b16 %v331
      %v574 = vunpack.c.l.b16 %v332
      %v575 = vpack.c.b16 %v512, %v511
      %v576 = vpack.c.b16 %v514, %v513
      %v577 = vpack.c.b16 %v516, %v515
      %v578 = vpack.c.b16 %v518, %v517
      %v579 = vpack.c.b16 %v520, %v519
      %v580 = vpack.c.b16 %v522, %v521
      %v581 = vpack.c.b16 %v524, %v523
      %v582 = vpack.c.b16 %v526, %v525
      %v583 = vpack.c.b16 %v528, %v527
      %v584 = vpack.c.b16 %v530, %v529
      %v585 = vpack.c.b16 %v532, %v531
      %v586 = vpack.c.b16 %v534, %v533
      %v587 = vpack.c.b16 %v536, %v535
      %v588 = vpack.c.b16 %v538, %v537
      %v589 = vpack.c.b16 %v540, %v539
      %v590 = vpack.c.b16 %v542, %v541
      %v591 = vpack.c.b16 %v544, %v543
      %v592 = vpack.c.b16 %v546, %v545
      %v593 = vpack.c.b16 %v548, %v547
      %v594 = vpack.c.b16 %v550, %v549
      %v595 = vpack.c.b16 %v552, %v551
      %v596 = vpack.c.b16 %v554, %v553
      %v597 = vpack.c.b16 %v556, %v555
      %v598 = vpack.c.b16 %v558, %v557
      %v599 = vpack.c.b16 %v560, %v559
      %v600 = vpack.c.b16 %v562, %v561
      %v601 = vpack.c.b16 %v564, %v563
      %v602 = vpack.c.b16 %v566, %v565
      %v603 = vpack.c.b16 %v568, %v567
      %v604 = vpack.c.b16 %v570, %v569
      %v605 = vpack.c.b16 %v572, %v571
      %v606 = vpack.c.b16 %v574, %v573
      %639 = vmatpush.bf16.msra.mxu0 %v582
      %640 = vmatpush.bf16.msra.mxu0 %v581
      %641 = vmatpush.bf16.msra.mxu0 %v580
      %642 = vmatpush.bf16.msra.mxu0 %v579
      %643 = vmatpush.bf16.msra.mxu0 %v578
      %644 = vmatpush.bf16.msra.mxu0 %v577
      %645 = vmatpush.bf16.msra.mxu0 %v576
      %646 = vmatpush.bf16.msra.mxu0 %v575
      %647 = vmatmul.bf16.gmra.mxu0 %v399
      %v648 = vpop.f32.mrf.mxu0
      %v649 = vadd.f32 0.0, %v648
      %v650 = vpop.f32.mrf.mxu0
      %v651 = vadd.f32 0.0, %v650
      %652 = vmatmul.bf16.gmra.mxu0 %v403
      %v653 = vpop.f32.mrf.mxu0
      %v654 = vadd.f32 0.0, %v653
      %v655 = vpop.f32.mrf.mxu0
      %v656 = vadd.f32 0.0, %v655
      %657 = vmatmul.bf16.gmra.mxu0 %v407
      %v658 = vpop.f32.mrf.mxu0
      %v659 = vadd.f32 0.0, %v658
      %v660 = vpop.f32.mrf.mxu0
      %v661 = vadd.f32 0.0, %v660
      %662 = vmatmul.bf16.gmra.mxu0 %v411
      %v663 = vpop.f32.mrf.mxu0
      %v664 = vadd.f32 0.0, %v663
      %v665 = vpop.f32.mrf.mxu0
      %v666 = vadd.f32 0.0, %v665
      %667 = vmatmul.bf16.gmra.mxu0 %v415
      %v668 = vpop.f32.mrf.mxu0
      %v669 = vadd.f32 0.0, %v668
      %v670 = vpop.f32.mrf.mxu0
      %v671 = vadd.f32 0.0, %v670
      %672 = vmatmul.bf16.gmra.mxu0 %v419
      %v673 = vpop.f32.mrf.mxu0
      %v674 = vadd.f32 0.0, %v673
      %v675 = vpop.f32.mrf.mxu0
      %676 = vdwg.mxu0
      %677 = vmatpush.bf16.msra.mxu0 %v590
      %678 = vmatpush.bf16.msra.mxu0 %v589
      %679 = vmatpush.bf16.msra.mxu0 %v588
      %680 = vmatpush.bf16.msra.mxu0 %v587
      %681 = vmatpush.bf16.msra.mxu0 %v586
      %682 = vmatpush.bf16.msra.mxu0 %v585
      %683 = vmatpush.bf16.msra.mxu0 %v584
      %684 = vmatpush.bf16.msra.mxu0 %v583
      %685 = vmatmul.bf16.gmra.mxu0 %v400
      %v686 = vpop.f32.mrf.mxu0
      %v687 = vadd.f32 %v649, %v686
      %v688 = vpop.f32.mrf.mxu0
      %v689 = vadd.f32 %v651, %v688
      %690 = vmatmul.bf16.gmra.mxu0 %v404
      %v691 = vpop.f32.mrf.mxu0
      %v692 = vadd.f32 %v654, %v691
      %v693 = vpop.f32.mrf.mxu0
      %v694 = vadd.f32 %v656, %v693
      %695 = vmatmul.bf16.gmra.mxu0 %v408
      %v696 = vpop.f32.mrf.mxu0
      %v697 = vadd.f32 %v659, %v696
      %v698 = vpop.f32.mrf.mxu0
      %v699 = vadd.f32 %v661, %v698
      %700 = vmatmul.bf16.gmra.mxu0 %v412
      %v701 = vpop.f32.mrf.mxu0
      %v702 = vadd.f32 %v664, %v701
      %v703 = vpop.f32.mrf.mxu0
      %v704 = vadd.f32 %v666, %v703
      %705 = vmatmul.bf16.gmra.mxu0 %v416
      %v706 = vpop.f32.mrf.mxu0
      %v707 = vadd.f32 %v669, %v706
      %v708 = vpop.f32.mrf.mxu0
      %v709 = vadd.f32 %v671, %v708
      %710 = vmatmul.bf16.gmra.mxu0 %v420
      %v711 = vpop.f32.mrf.mxu0
      %v712 = vadd.f32 %v674, %v711
      %v713 = vpop.f32.mrf.mxu0
      %714 = vdwg.mxu0
      %715 = vmatpush.bf16.msra.mxu0 %v598
      %716 = vmatpush.bf16.msra.mxu0 %v597
      %717 = vmatpush.bf16.msra.mxu0 %v596
      %718 = vmatpush.bf16.msra.mxu0 %v595
      %719 = vmatpush.bf16.msra.mxu0 %v594
      %720 = vmatpush.bf16.msra.mxu0 %v593
      %721 = vmatpush.bf16.msra.mxu0 %v592
      %722 = vmatpush.bf16.msra.mxu0 %v591
      %723 = vmatmul.bf16.gmra.mxu0 %v401
      %v724 = vpop.f32.mrf.mxu0
      %v725 = vadd.f32 %v687, %v724
      %v726 = vpop.f32.mrf.mxu0
      %v727 = vadd.f32 %v689, %v726
      %728 = vmatmul.bf16.gmra.mxu0 %v405
      %v729 = vpop.f32.mrf.mxu0
      %v730 = vadd.f32 %v692, %v729
      %v731 = vpop.f32.mrf.mxu0
      %v732 = vadd.f32 %v694, %v731
      %733 = vmatmul.bf16.gmra.mxu0 %v409
      %v734 = vpop.f32.mrf.mxu0
      %v735 = vadd.f32 %v697, %v734
      %v736 = vpop.f32.mrf.mxu0
      %v737 = vadd.f32 %v699, %v736
      %738 = vmatmul.bf16.gmra.mxu0 %v413
      %v739 = vpop.f32.mrf.mxu0
      %v740 = vadd.f32 %v702, %v739
      %v741 = vpop.f32.mrf.mxu0
      %v742 = vadd.f32 %v704, %v741
      %743 = vmatmul.bf16.gmra.mxu0 %v417
      %v744 = vpop.f32.mrf.mxu0
      %v745 = vadd.f32 %v707, %v744
      %v746 = vpop.f32.mrf.mxu0
      %v747 = vadd.f32 %v709, %v746
      %748 = vmatmul.bf16.gmra.mxu0 %v421
      %v749 = vpop.f32.mrf.mxu0
      %v750 = vadd.f32 %v712, %v749
      %v751 = vpop.f32.mrf.mxu0
      %752 = vdwg.mxu0
      %753 = vmatpush.bf16.msra.mxu0 %v606
      %754 = vmatpush.bf16.msra.mxu0 %v605
      %755 = vmatpush.bf16.msra.mxu0 %v604
      %756 = vmatpush.bf16.msra.mxu0 %v603
      %757 = vmatpush.bf16.msra.mxu0 %v602
      %758 = vmatpush.bf16.msra.mxu0 %v601
      %759 = vmatpush.bf16.msra.mxu0 %v600
      %760 = vmatpush.bf16.msra.mxu0 %v599
      %761 = vmatmul.bf16.gmra.mxu0 %v402
      %v762 = vpop.f32.mrf.mxu0
      %v763 = vadd.f32 %v725, %v762
      %v764 = vpop.f32.mrf.mxu0
      %v765 = vadd.f32 %v727, %v764
      %766 = vmatmul.bf16.gmra.mxu0 %v406
      %v767 = vpop.f32.mrf.mxu0
      %v768 = vadd.f32 %v730, %v767
      %v769 = vpop.f32.mrf.mxu0
      %v770 = vadd.f32 %v732, %v769
      %771 = vmatmul.bf16.gmra.mxu0 %v410
      %v772 = vpop.f32.mrf.mxu0
      %v773 = vadd.f32 %v735, %v772
      %v774 = vpop.f32.mrf.mxu0
      %v775 = vadd.f32 %v737, %v774
      %776 = vmatmul.bf16.gmra.mxu0 %v414
      %v777 = vpop.f32.mrf.mxu0
      %v778 = vadd.f32 %v740, %v777
      %v779 = vpop.f32.mrf.mxu0
      %v780 = vadd.f32 %v742, %v779
      %781 = vmatmul.bf16.gmra.mxu0 %v418
      %v782 = vpop.f32.mrf.mxu0
      %v783 = vadd.f32 %v745, %v782
      %v784 = vpop.f32.mrf.mxu0
      %v785 = vadd.f32 %v747, %v784
      %786 = vmatmul.bf16.gmra.mxu0 %v422
      %v787 = vpop.f32.mrf.mxu0
      %v788 = vadd.f32 %v750, %v787
      %v789 = vpop.f32.mrf.mxu0
      %790 = vdwg.mxu0
      %v791 = vadd.f32 %v236, %v763
      %v792 = vadd.f32 %v237, %v765
      %v793 = vadd.f32 %v238, %v768
      %v794 = vadd.f32 %v239, %v770
      %v795 = vadd.f32 %v240, %v773
      %v796 = vadd.f32 %v241, %v775
      %v797 = vadd.f32 %v242, %v778
      %v798 = vadd.f32 %v243, %v780
      %v799 = vadd.f32 %v244, %v783
      %v800 = vadd.f32 %v245, %v785
      %v801 = vadd.f32 %v246, %v788
      %802 = vst [vmem:[#allocation2] sm:$0xff] %v791
      %803 = vst [vmem:[#allocation2 + $0x8] sm:$0xff] %v792
      %804 = vst [vmem:[#allocation2 + $0x10] sm:$0xff] %v793
      %805 = vst [vmem:[#allocation2 + $0x18] sm:$0xff] %v794
      %806 = vst [vmem:[#allocation2 + $0x20] sm:$0xff] %v795
      %807 = vst [vmem:[#allocation2 + $0x28] sm:$0xff] %v796
      %808 = vst [vmem:[#allocation2 + $0x30] sm:$0xff] %v797
      %809 = vst [vmem:[#allocation2 + $0x38] sm:$0xff] %v798
      %810 = vst [vmem:[#allocation2 + $0x40] sm:$0xff] %v799
      %811 = vst [vmem:[#allocation2 + $0x48] sm:$0xff] %v800
      %812 = vst [vmem:[#allocation2 + $0x50] sm:$0x1] %v801
      // Predicated region
      $region37: #{dqn_forward.5} parent=31 // pred_check
        %p813 = pneg %p221
      $region38: #{dqn_forward.5} parent=31 // pred_check_branch
        %815 = sbr.rel (%p813) target = $region40
      $region39: #{dqn_forward.5} parent=31 // pred_region
        %v816 = vld [vmem:[#allocation2] sm:$0xff]
        %v817 = vld [vmem:[#allocation2 + $0x8] sm:$0xff]
        %v818 = vld [vmem:[#allocation2 + $0x10] sm:$0xff]
        %v819 = vld [vmem:[#allocation2 + $0x18] sm:$0xff]
        %v820 = vld [vmem:[#allocation2 + $0x20] sm:$0xff]
        %v821 = vld [vmem:[#allocation2 + $0x28] sm:$0xff]
        %v822 = vld [vmem:[#allocation2 + $0x30] sm:$0xff]
        %v823 = vld [vmem:[#allocation2 + $0x38] sm:$0xff]
        %v824 = vld [vmem:[#allocation2 + $0x40] sm:$0xff]
        %v825 = vld [vmem:[#allocation2 + $0x48] sm:$0xff]
        %v826 = vld [vmem:[#allocation2 + $0x50] sm:$0x1]
        %v827 = vld [vmem:[%s2] sm:$0x1]
        %v829 = vperm.slane %v827, 0
        %v831 = vadd.f32 %v816, %v829
        %v832 = vadd.f32 %v817, %v829
        %v833 = vadd.f32 %v818, %v829
        %v834 = vadd.f32 %v819, %v829
        %v835 = vadd.f32 %v820, %v829
        %v836 = vadd.f32 %v821, %v829
        %v837 = vadd.f32 %v822, %v829
        %v838 = vadd.f32 %v823, %v829
        %v839 = vadd.f32 %v824, %v829
        %v840 = vadd.f32 %v825, %v829
        %v841 = vadd.f32 %v826, %v829
        %v842 = vmax.f32 %v831, 0.0
        %v843 = vmax.f32 %v832, 0.0
        %v844 = vmax.f32 %v833, 0.0
        %v845 = vmax.f32 %v834, 0.0
        %v846 = vmax.f32 %v835, 0.0
        %v847 = vmax.f32 %v836, 0.0
        %v848 = vmax.f32 %v837, 0.0
        %v849 = vmax.f32 %v838, 0.0
        %v850 = vmax.f32 %v839, 0.0
        %v851 = vmax.f32 %v840, 0.0
        %v852 = vmax.f32 %v841, 0.0
        %v853 = vpack.c.bf16 %v842, %v842
        %v854 = vpack.c.bf16 %v843, %v843
        %v855 = vpack.c.bf16 %v844, %v844
        %v856 = vpack.c.bf16 %v845, %v845
        %v857 = vpack.c.bf16 %v846, %v846
        %v858 = vpack.c.bf16 %v847, %v847
        %v859 = vpack.c.bf16 %v848, %v848
        %v860 = vpack.c.bf16 %v849, %v849
        %v861 = vpack.c.bf16 %v850, %v850
        %v862 = vpack.c.bf16 %v851, %v851
        %v863 = vpack.c.bf16 %v852, %v852
        %864 = vst [vmem:[%s220] sm:$0xf] %v853
        %865 = vst [vmem:[%s220 + $0x4] sm:$0xf] %v854
        %866 = vst [vmem:[%s220 + $0x8] sm:$0xf] %v855
        %867 = vst [vmem:[%s220 + $0xc] sm:$0xf] %v856
        %868 = vst [vmem:[%s220 + $0x10] sm:$0xf] %v857
        %869 = vst [vmem:[%s220 + $0x14] sm:$0xf] %v858
        %870 = vst [vmem:[%s220 + $0x18] sm:$0xf] %v859
        %871 = vst [vmem:[%s220 + $0x1c] sm:$0xf] %v860
        %872 = vst [vmem:[%s220 + $0x20] sm:$0xf] %v861
        %873 = vst [vmem:[%s220 + $0x24] sm:$0xf] %v862
        %vm874 = vcmask 1040384
        %vm875 = vsmask.f32 256
        %vm876 = vmand %vm874, %vm875
        %v877 = vld [vmem:[%s220 + $0x28] sm:$0x1]
        %v878 = vsel %vm876, %v863, %v877
        %879 = vst [vmem:[%s220 + $0x28] sm:$0x1] %v878
      $region40: #{dqn_forward.5} parent=31 // pred_fallthru
        _
      %p880 = scmp.lt.s32.totalorder %s18, 1
      %s881 = scalar_select %p880, %s18, 1
      %s882 = smul.addr %s881, 11
      %s883 = smul.addr %s882, 4
      %s884 = scalar_lea.vmem %s3, %s883
      // Predicated region
      $region41: #{dqn_forward.5} parent=31 // pred_check
        %p885 = pneg %p119
      $region42: #{dqn_forward.5} parent=31 // pred_check_branch
        %887 = sbr.rel (%p885) target = $region44
      $region43: #{dqn_forward.5} parent=31 // pred_region
        _
      $region44: #{dqn_forward.5} parent=31 // pred_fallthru
        _
    $region32: #{dqn_forward.5} parent=5 // pred_fallthru
      _
    %p888 = scmp.le.s32.totalorder 2, %s9
    // Predicated region
    $region45: #{dqn_forward.5} parent=5 // pred_check
      %p889 = pneg %p888
    $region46: #{dqn_forward.5} parent=5 // pred_check_branch
      %891 = sbr.rel (%p889) target = $region48
    $region47: #{dqn_forward.5} parent=5 // pred_region
      %s892 = ssub.s32 %s9, 2
      // Predicated region
      $region49: #{dqn_forward.5} parent=47 // pred_check
        %p893 = pneg %p125
      $region50: #{dqn_forward.5} parent=47 // pred_check_branch
        %895 = sbr.rel (%p893) target = $region52
      $region51: #{dqn_forward.5} parent=47 // pred_region
        %p896 = scmp.lt.s32.totalorder %s20, 1
        %s897 = scalar_select %p896, %s20, 1
        %s898 = smul.addr %s897, 11
        %s899 = smul.addr %s898, 4
        %s900 = scalar_lea.vmem %s3, %s899
      $region52: #{dqn_forward.5} parent=47 // pred_fallthru
        _
    $region48: #{dqn_forward.5} parent=5 // pred_fallthru
      _
  $region6: #{dqn_forward.5} parent=0 // loop_footer
    %s13 = sadd.s32 1, %s9
  $region7: #{dqn_forward.5} parent=0 // loop_footer_branch
    %8 = sbr.rel target = $region3
  $region8: #{dqn_forward.5} parent=0 // loop_exit
    _

// kernel: dqn_forward.6
$region0: #{dqn_forward.6}
  #allocation0 [shape = 'u32[]', space=smem, size = 0x4, offset = 0x4, fixed_abs, tag = 'smem constant byte address 0x4 - core index']
  #allocation1 [shape = 'u32[72,128]{1,0:T(1,128)}', space=vmem, size = 0x9000, scoped, tag = 'internal scratch']
  #allocation2 [shape = 'f32[49,128]{1,0:T(8,128)}', space=vmem, size = 0x7000, scoped, tag = 'scratch operand']
  %s0 = inlined_call_operand.vmem [shape: bf16[2,49,640], index: 0, kind: input, shape index: {}]
  %s1 = inlined_call_operand.vmem [shape: bf16[640,128], index: 1, kind: input, shape index: {}]
  %s2 = inlined_call_operand.vmem [shape: f32[1,128], index: 2, kind: input, shape index: {}]
  %s3 = inlined_call_operand.vmem [shape: bf16[2,49,128], index: 3, kind: output, shape index: {}]
  %s4 = sld [smem:[#allocation0]]
  $region53: #{dqn_forward.6} parent=0
    _
  %s6 = ssub.s32 1, %s4
  %s7 = scalar_select 0, %s6, %s4
  loop: start=0, step=1, limit=4
  $region2: #{dqn_forward.6} parent=0 // loop_pre_header
    _
  $region3: #{dqn_forward.6} parent=0 // loop_header
    %s9 = sphi 0, %s13
    %p10 = scmp.ge.s32.totalorder %s9, 4
    %s16 = sphi 0, %s28
    %s17 = sphi 0, %s24
    %s18 = sphi 0, %s16
    %s19 = sphi 0, %s17
    %s20 = sphi 0, %s18
    %s21 = sphi 0, %s19
    %s33 = sphi 0, %s35
    %s36 = sphi 0, %s33
    %s37 = sphi 0, %s36
    %s53 = sphi 0, %s37
    %s59 = sphi 0, %s61
    %s62 = sphi 0, %s59
    %s63 = sphi 0, %s62
    %s79 = sphi 0, %s63
    %s83 = sphi 0, %s83
    %s85 = sphi 0, %s83
    %s86 = sphi 0, %s85
    %s100 = sphi 0, %s86
    %s106 = sphi 0, %s108
    %s109 = sphi 0, %s106
    %s110 = sphi 0, %s109
    %s126 = sphi 0, %s110
  $region4: #{dqn_forward.6} parent=0 // loop_header_branch
    %12 = sbr.rel (%p10) target = $region8
  $region5: #{dqn_forward.6} parent=0 // loop_body
    %s14 = ssub.s32 %s9, 1
    %s15 = ssub.s32 %s9, 2
    %s22 = sadd.s32 1, %s17
    %p23 = scmp.ge.s32.totalorder %s22, 1
    %s24 = scalar_select %p23, 0, %s22
    %s25 = sadd.s32 1, %s16
    %s26 = scalar_select %p23, %s25, %s16
    %p27 = scmp.ge.s32.totalorder %s26, 2
    %s28 = scalar_select %p27, 0, %s26
    %s29 = ssub.s32 %s16, %s28
    %s30 = ssub.s32 %s17, %s24
    %s31 = sor.u32 %s29, %s30
    %p32 = scmp.eq.s32.totalorder %s31, 0
    %s34 = sadd.s32 %s33, 1
    %s35 = scalar_select %p32, %s33, %s34
    %p38 = pneg %p32
    %p39 = scmp.eq.s32.totalorder %s9, 1
    %p40 = por %p38, %p39
    %p41 = scmp.ne.s32.totalorder %s33, %s36
    %p42 = scmp.eq.s32.totalorder %s9, 0
    %p43 = por %p41, %p42
    %p44 = scmp.ne.s32.totalorder %s33, %s36
    %p45 = scmp.eq.s32.totalorder %s14, 1
    %p46 = por %p44, %p45
    %p47 = scmp.ne.s32.totalorder %s36, %s37
    %p48 = scmp.eq.s32.totalorder %s14, 0
    %p49 = por %p47, %p48
    %p50 = scmp.ne.s32.totalorder %s36, %s37
    %p51 = scmp.eq.s32.totalorder %s15, 1
    %p52 = por %p50, %p51
    %p54 = scmp.ne.s32.totalorder %s37, %s53
    %p55 = scmp.eq.s32.totalorder %s15, 0
    %p56 = por %p54, %p55
    %s57 = ssub.s32 %s17, %s24
    %p58 = scmp.eq.s32.totalorder %s57, 0
    %s60 = sadd.s32 %s59, 1
    %s61 = scalar_select %p58, %s59, %s60
    %p64 = pneg %p58
    %p65 = scmp.eq.s32.totalorder %s9, 1
    %p66 = por %p64, %p65
    %p67 = scmp.ne.s32.totalorder %s59, %s62
    %p68 = scmp.eq.s32.totalorder %s9, 0
    %p69 = por %p67, %p68
    %p70 = scmp.ne.s32.totalorder %s59, %s62
    %p71 = scmp.eq.s32.totalorder %s14, 1
    %p72 = por %p70, %p71
    %p73 = scmp.ne.s32.totalorder %s62, %s63
    %p74 = scmp.eq.s32.totalorder %s14, 0
    %p75 = por %p73, %p74
    %p76 = scmp.ne.s32.totalorder %s62, %s63
    %p77 = scmp.eq.s32.totalorder %s15, 1
    %p78 = por %p76, %p77
    %p80 = scmp.ne.s32.totalorder %s63, %s79
    %p81 = scmp.eq.s32.totalorder %s15, 0
    %p82 = por %p80, %p81
    %s84 = sadd.s32 %s83, 1
    %p87 = scmp.eq.s32.totalorder %s9, 1
    %p88 = scmp.ne.s32.totalorder %s83, %s85
    %p89 = scmp.eq.s32.totalorder %s9, 0
    %p90 = por %p88, %p89
    %p91 = scmp.ne.s32.totalorder %s83, %s85
    %p92 = scmp.eq.s32.totalorder %s14, 1
    %p93 = por %p91, %p92
    %p94 = scmp.ne.s32.totalorder %s85, %s86
    %p95 = scmp.eq.s32.totalorder %s14, 0
    %p96 = por %p94, %p95
    %p97 = scmp.ne.s32.totalorder %s85, %s86
    %p98 = scmp.eq.s32.totalorder %s15, 1
    %p99 = por %p97, %p98
    %p101 = scmp.ne.s32.totalorder %s86, %s100
    %p102 = scmp.eq.s32.totalorder %s15, 0
    %p103 = por %p101, %p102
    %s104 = ssub.s32 %s16, %s28
    %p105 = scmp.eq.s32.totalorder %s104, 0
    %s107 = sadd.s32 %s106, 1
    %s108 = scalar_select %p105, %s106, %s107
    %p111 = pneg %p105
    %p112 = scmp.eq.s32.totalorder %s9, 1
    %p113 = por %p111, %p112
    %p114 = scmp.ne.s32.totalorder %s106, %s109
    %p115 = scmp.eq.s32.totalorder %s9, 0
    %p116 = por %p114, %p115
    %p117 = scmp.ne.s32.totalorder %s106, %s109
    %p118 = scmp.eq.s32.totalorder %s14, 1
    %p119 = por %p117, %p118
    %p120 = scmp.ne.s32.totalorder %s109, %s110
    %p121 = scmp.eq.s32.totalorder %s14, 0
    %p122 = por %p120, %p121
    %p123 = scmp.ne.s32.totalorder %s109, %s110
    %p124 = scmp.eq.s32.totalorder %s15, 1
    %p125 = por %p123, %p124
    %p127 = scmp.ne.s32.totalorder %s110, %s126
    %p128 = scmp.eq.s32.totalorder %s15, 0
    %p129 = por %p127, %p128
    %p130 = scmp.le.s32.totalorder 1, %s9
    %p131 = scmp.lt.s32.totalorder %s9, 3
    %p132 = pnand %p130, %p131
    %p133 = pneg %p132
    // Predicated region
    $region9: #{dqn_forward.6} parent=5 // pred_check
      _
    $region10: #{dqn_forward.6} parent=5 // pred_check_branch
      %135 = sbr.rel (%p132) target = $region12
    $region11: #{dqn_forward.6} parent=5 // pred_region
      %s136 = ssub.s32 %s9, 1
      // Predicated region
      $region13: #{dqn_forward.6} parent=11 // pred_check
        %p137 = pneg %p75
      $region14: #{dqn_forward.6} parent=11 // pred_check_branch
        %139 = sbr.rel (%p137) target = $region16
      $region15: #{dqn_forward.6} parent=11 // pred_region
        %s140 = smul.u32 80, %s19
        %p141 = scmp.lt.s32.totalorder %s140, 79
        %s142 = scalar_select %p141, %s140, 79
        %s143 = smul.addr %s142, 4
        %s144 = scalar_lea.vmem %s1, %s143
        %s145 = smul.u32 80, %s19
      $region16: #{dqn_forward.6} parent=11 // pred_fallthru
        _
      // Predicated region
      $region17: #{dqn_forward.6} parent=11 // pred_check
        %p146 = pneg %p96
      $region18: #{dqn_forward.6} parent=11 // pred_check_branch
        %148 = sbr.rel (%p146) target = $region20
      $region19: #{dqn_forward.6} parent=11 // pred_region
        _
      $region20: #{dqn_forward.6} parent=11 // pred_fallthru
        _
    $region12: #{dqn_forward.6} parent=5 // pred_fallthru
      _
    %p149 = scmp.lt.s32.totalorder %s9, 2
    // Predicated region
    $region21: #{dqn_forward.6} parent=5 // pred_check
      %p150 = pneg %p149
    $region22: #{dqn_forward.6} parent=5 // pred_check_branch
      %152 = sbr.rel (%p150) target = $region24
    $region23: #{dqn_forward.6} parent=5 // pred_region
      // Predicated region
      $region25: #{dqn_forward.6} parent=23 // pred_check
        %p153 = pneg %p43
      $region26: #{dqn_forward.6} parent=23 // pred_check_branch
        %155 = sbr.rel (%p153) target = $region28
      $region27: #{dqn_forward.6} parent=23 // pred_region
        %s156 = smul.u32 5, %s17
        %p157 = scmp.lt.s32.totalorder %s16, 1
        %s158 = scalar_select %p157, %s16, 1
        %p159 = scmp.lt.s32.totalorder %s156, 4
        %s160 = scalar_select %p159, %s156, 4
        %s161 = smul.addr %s158, 35
        %s162 = sadd.s32 %s160, %s161
        %s163 = smul.addr %s162, 4
        %s164 = scalar_lea.vmem %s0, %s163
        %s165 = smul.u32 5, %s17
      $region28: #{dqn_forward.6} parent=23 // pred_fallthru
        _
    $region24: #{dqn_forward.6} parent=5 // pred_fallthru
      _
    %p166 = scmp.le.s32.totalorder 1, %s9
    %p167 = scmp.lt.s32.totalorder %s9, 3
    %p168 = pnand %p166, %p167
    %p169 = pneg %p168
    // Predicated region
    $region29: #{dqn_forward.6} parent=5 // pred_check
      _
    $region30: #{dqn_forward.6} parent=5 // pred_check_branch
      %171 = sbr.rel (%p168) target = $region32
    $region31: #{dqn_forward.6} parent=5 // pred_region
      %s172 = ssub.s32 %s9, 1
      %s173 = smul.u32 5, %s19
      %p174 = scmp.lt.s32.totalorder %s18, 1
      %s175 = scalar_select %p174, %s18, 1
      %p176 = scmp.lt.s32.totalorder %s173, 4
      %s177 = scalar_select %p176, %s173, 4
      %s178 = smul.addr %s175, 35
      %s179 = sadd.s32 %s177, %s178
      %s180 = smul.addr %s179, 4
      %s181 = scalar_lea.vmem %s0, %s180
      %p182 = pneg %p49
      %p183 = pneg %p46
      %s184 = smul.u32 80, %s19
      %p185 = scmp.lt.s32.totalorder %s184, 79
      %s186 = scalar_select %p185, %s184, 79
      %s187 = smul.addr %s186, 4
      %s188 = scalar_lea.vmem %s1, %s187
      %p189 = pneg %p75
      %p190 = pneg %p72
      %p191 = pneg %p96
      %p192 = pneg %p93
      %p193 = pneg %p122
      %p194 = pneg %p119
      %p195 = scmp.lt.s32.totalorder %s18, 1
      %s196 = scalar_select %p195, %s18, 1
      %s197 = smul.addr %s196, 7
      %s198 = smul.addr %s197, 4
      %s199 = scalar_lea.vmem %s3, %s198
      %s200 = smul.u32 5, %s19
      %p201 = scmp.lt.s32.totalorder %s18, 1
      %s202 = scalar_select %p201, %s18, 1
      %p203 = scmp.lt.s32.totalorder %s200, 4
      %s204 = scalar_select %p203, %s200, 4
      %s205 = smul.addr %s202, 35
      %s206 = sadd.s32 %s204, %s205
      %s207 = smul.addr %s206, 4
      %s208 = scalar_lea.vmem %s0, %s207
      %s209 = smul.u32 5, %s19
      %s210 = smul.u32 80, %s19
      %p211 = scmp.lt.s32.totalorder %s210, 79
      %s212 = scalar_select %p211, %s210, 79
      %s213 = smul.addr %s212, 4
      %s214 = scalar_lea.vmem %s1, %s213
      %s215 = smul.u32 80, %s19
      %p216 = scmp.lt.s32.totalorder %s18, 1
      %s217 = scalar_select %p216, %s18, 1
      %s218 = smul.addr %s217, 7
      %s219 = smul.addr %s218, 4
      %s220 = scalar_lea.vmem %s3, %s219
      %p221 = scmp.eq.s32.totalorder %s19, 0
      // Predicated region
      $region33: #{dqn_forward.6} parent=31 // pred_check
        %p222 = pneg %p221
      $region34: #{dqn_forward.6} parent=31 // pred_check_branch
        %224 = sbr.rel (%p222) target = $region36
      $region35: #{dqn_forward.6} parent=31 // pred_region
        %225 = vst [vmem:[#allocation2] sm:$0xff] 0.0
        %226 = vst [vmem:[#allocation2 + $0x8] sm:$0xff] 0.0
        %227 = vst [vmem:[#allocation2 + $0x10] sm:$0xff] 0.0
        %228 = vst [vmem:[#allocation2 + $0x18] sm:$0xff] 0.0
        %229 = vst [vmem:[#allocation2 + $0x20] sm:$0xff] 0.0
        %230 = vst [vmem:[#allocation2 + $0x28] sm:$0xff] 0.0
        %231 = vst [vmem:[#allocation2 + $0x30] sm:$0x1] 0.0
      $region36: #{dqn_forward.6} parent=31 // pred_fallthru
        _
      %v232 = vld [vmem:[#allocation2] sm:$0xff]
      %v233 = vld [vmem:[#allocation2 + $0x8] sm:$0xff]
      %v234 = vld [vmem:[#allocation2 + $0x10] sm:$0xff]
      %v235 = vld [vmem:[#allocation2 + $0x18] sm:$0xff]
      %v236 = vld [vmem:[#allocation2 + $0x20] sm:$0xff]
      %v237 = vld [vmem:[#allocation2 + $0x28] sm:$0xff]
      %v238 = vld [vmem:[#allocation2 + $0x30] sm:$0x1]
      %v239 = vld [vmem:[%s208] sm:$0xff]
      %v240 = vld [vmem:[%s208 + $0x8] sm:$0xff]
      %v241 = vld [vmem:[%s208 + $0x10] sm:$0xf]
      %v242 = vld [vmem:[%s208 + $0x14] sm:$0xff]
      %v243 = vld [vmem:[%s208 + $0x1c] sm:$0xff]
      %v244 = vld [vmem:[%s208 + $0x24] sm:$0xf]
      %v245 = vld [vmem:[%s208 + $0x28] sm:$0xff]
      %v246 = vld [vmem:[%s208 + $0x30] sm:$0xff]
      %v247 = vld [vmem:[%s208 + $0x38] sm:$0xf]
      %v248 = vld [vmem:[%s208 + $0x3c] sm:$0xff]
      %v249 = vld [vmem:[%s208 + $0x44] sm:$0xff]
      %v250 = vld [vmem:[%s208 + $0x4c] sm:$0xf]
      %v251 = vld [vmem:[%s208 + $0x50] sm:$0xff]
      %v252 = vld [vmem:[%s208 + $0x58] sm:$0xff]
      %v253 = vld [vmem:[%s208 + $0x60] sm:$0xf]
      %v254 = vld [vmem:[%s208 + $0x64] sm:$0xff]
      %v255 = vld [vmem:[%s208 + $0x6c] sm:$0xff]
      %v256 = vld [vmem:[%s208 + $0x74] sm:$0xf]
      %v257 = vld [vmem:[%s208 + $0x78] sm:$0x11]
      %v258 = vld [vmem:[%s208 + $0x80] sm:$0x11]
      %v259 = vld [vmem:[%s208 + $0x88] sm:$0x1]
      %v260 = vld [vmem:[%s214] sm:$0xf]
      %v261 = vld [vmem:[%s214 + $0x4] sm:$0xf]
      %v262 = vld [vmem:[%s214 + $0x8] sm:$0xf]
      %v263 = vld [vmem:[%s214 + $0xc] sm:$0xf]
      %v264 = vld [vmem:[%s214 + $0x10] sm:$0xf]
      %v265 = vld [vmem:[%s214 + $0x14] sm:$0xf]
      %v266 = vld [vmem:[%s214 + $0x18] sm:$0xf]
      %v267 = vld [vmem:[%s214 + $0x1c] sm:$0xf]
      %v268 = vld [vmem:[%s214 + $0x20] sm:$0xf]
      %v269 = vld [vmem:[%s214 + $0x24] sm:$0xf]
      %v270 = vld [vmem:[%s214 + $0x28] sm:$0xf]
      %v271 = vld [vmem:[%s214 + $0x2c] sm:$0xf]
      %v272 = vld [vmem:[%s214 + $0x30] sm:$0xf]
      %v273 = vld [vmem:[%s214 + $0x34] sm:$0xf]
      %v274 = vld [vmem:[%s214 + $0x38] sm:$0xf]
      %v275 = vld [vmem:[%s214 + $0x3c] sm:$0xf]
      %v276 = vld [vmem:[%s214 + $0x40] sm:$0xf]
      %v277 = vld [vmem:[%s214 + $0x44] sm:$0xf]
      %v278 = vld [vmem:[%s214 + $0x48] sm:$0xf]
      %v279 = vld [vmem:[%s214 + $0x4c] sm:$0xf]
      %v280 = vld [vmem:[%s214 + $0x50] sm:$0xf]
      %v281 = vld [vmem:[%s214 + $0x54] sm:$0xf]
      %v282 = vld [vmem:[%s214 + $0x58] sm:$0xf]
      %v283 = vld [vmem:[%s214 + $0x5c] sm:$0xf]
      %v284 = vld [vmem:[%s214 + $0x60] sm:$0xf]
      %v285 = vld [vmem:[%s214 + $0x64] sm:$0xf]
      %v286 = vld [vmem:[%s214 + $0x68] sm:$0xf]
      %v287 = vld [vmem:[%s214 + $0x6c] sm:$0xf]
      %v288 = vld [vmem:[%s214 + $0x70] sm:$0xf]
      %v289 = vld [vmem:[%s214 + $0x74] sm:$0xf]
      %v290 = vld [vmem:[%s214 + $0x78] sm:$0xf]
      %v291 = vld [vmem:[%s214 + $0x7c] sm:$0xf]
      %v292 = vld [vmem:[%s214 + $0x80] sm:$0xf]
      %v293 = vld [vmem:[%s214 + $0x84] sm:$0xf]
      %v294 = vld [vmem:[%s214 + $0x88] sm:$0xf]
      %v295 = vld [vmem:[%s214 + $0x8c] sm:$0xf]
      %v296 = vld [vmem:[%s214 + $0x90] sm:$0xf]
      %v297 = vld [vmem:[%s214 + $0x94] sm:$0xf]
      %v298 = vld [vmem:[%s214 + $0x98] sm:$0xf]
      %v299 = vld [vmem:[%s214 + $0x9c] sm:$0xf]
      %v300 = vld [vmem:[%s214 + $0xa0] sm:$0xf]
      %v301 = vld [vmem:[%s214 + $0xa4] sm:$0xf]
      %v302 = vld [vmem:[%s214 + $0xa8] sm:$0xf]
      %v303 = vld [vmem:[%s214 + $0xac] sm:$0xf]
      %v304 = vld [vmem:[%s214 + $0xb0] sm:$0xf]
      %v305 = vld [vmem:[%s214 + $0xb4] sm:$0xf]
      %v306 = vld [vmem:[%s214 + $0xb8] sm:$0xf]
      %v307 = vld [vmem:[%s214 + $0xbc] sm:$0xf]
      %v308 = vld [vmem:[%s214 + $0xc0] sm:$0xf]
      %v309 = vld [vmem:[%s214 + $0xc4] sm:$0xf]
      %v310 = vld [vmem:[%s214 + $0xc8] sm:$0xf]
      %v311 = vld [vmem:[%s214 + $0xcc] sm:$0xf]
      %v312 = vld [vmem:[%s214 + $0xd0] sm:$0xf]
      %v313 = vld [vmem:[%s214 + $0xd4] sm:$0xf]
      %v314 = vld [vmem:[%s214 + $0xd8] sm:$0xf]
      %v315 = vld [vmem:[%s214 + $0xdc] sm:$0xf]
      %v316 = vld [vmem:[%s214 + $0xe0] sm:$0xf]
      %v317 = vld [vmem:[%s214 + $0xe4] sm:$0xf]
      %v318 = vld [vmem:[%s214 + $0xe8] sm:$0xf]
      %v319 = vld [vmem:[%s214 + $0xec] sm:$0xf]
      %v320 = vld [vmem:[%s214 + $0xf0] sm:$0xf]
      %v321 = vld [vmem:[%s214 + $0xf4] sm:$0xf]
      %v322 = vld [vmem:[%s214 + $0xf8] sm:$0xf]
      %v323 = vld [vmem:[%s214 + $0xfc] sm:$0xf]
      %v324 = vld [vmem:[%s214 + $0x100] sm:$0xf]
      %v325 = vld [vmem:[%s214 + $0x104] sm:$0xf]
      %v326 = vld [vmem:[%s214 + $0x108] sm:$0xf]
      %v327 = vld [vmem:[%s214 + $0x10c] sm:$0xf]
      %v328 = vld [vmem:[%s214 + $0x110] sm:$0xf]
      %v329 = vld [vmem:[%s214 + $0x114] sm:$0xf]
      %v330 = vld [vmem:[%s214 + $0x118] sm:$0xf]
      %v331 = vld [vmem:[%s214 + $0x11c] sm:$0xf]
      %v332 = vld [vmem:[%s214 + $0x120] sm:$0xf]
      %v333 = vld [vmem:[%s214 + $0x124] sm:$0xf]
      %v334 = vld [vmem:[%s214 + $0x128] sm:$0xf]
      %v335 = vld [vmem:[%s214 + $0x12c] sm:$0xf]
      %v336 = vld [vmem:[%s214 + $0x130] sm:$0xf]
      %v337 = vld [vmem:[%s214 + $0x134] sm:$0xf]
      %v338 = vld [vmem:[%s214 + $0x138] sm:$0xf]
      %v339 = vld [vmem:[%s214 + $0x13c] sm:$0xf]
      %v361 = vunpack.c.l.b16 %v239
      %v362 = vunpack.c.h.b16 %v239
      %v363 = vunpack.c.l.b16 %v240
      %v364 = vunpack.c.h.b16 %v240
      %v365 = vunpack.c.l.b16 %v241
      %v366 = vunpack.c.l.b16 %v242
      %v367 = vunpack.c.h.b16 %v242
      %v368 = vunpack.c.l.b16 %v243
      %v369 = vunpack.c.h.b16 %v243
      %v370 = vunpack.c.l.b16 %v244
      %v371 = vunpack.c.l.b16 %v245
      %v372 = vunpack.c.h.b16 %v245
      %v373 = vunpack.c.l.b16 %v246
      %v374 = vunpack.c.h.b16 %v246
      %v375 = vunpack.c.l.b16 %v247
      %v376 = vunpack.c.l.b16 %v248
      %v377 = vunpack.c.h.b16 %v248
      %v378 = vunpack.c.l.b16 %v249
      %v379 = vunpack.c.h.b16 %v249
      %v380 = vunpack.c.l.b16 %v250
      %v381 = vunpack.c.l.b16 %v251
      %v382 = vunpack.c.h.b16 %v251
      %v383 = vunpack.c.l.b16 %v252
      %v384 = vunpack.c.h.b16 %v252
      %v385 = vunpack.c.l.b16 %v253
      %v386 = vunpack.c.l.b16 %v254
      %v387 = vunpack.c.h.b16 %v254
      %v388 = vunpack.c.l.b16 %v255
      %v389 = vunpack.c.h.b16 %v255
      %v390 = vunpack.c.l.b16 %v256
      %v391 = vunpack.c.l.b16 %v257
      %v392 = vunpack.c.h.b16 %v257
      %v393 = vunpack.c.l.b16 %v258
      %v394 = vunpack.c.h.b16 %v258
      %v395 = vunpack.c.l.b16 %v259
      %v396 = vpack.c.b16 %v366, %v361
      %v397 = vpack.c.b16 %v367, %v362
      %v398 = vpack.c.b16 %v368, %v363
      %v399 = vpack.c.b16 %v369, %v364
      %v400 = vpack.c.b16 %v370, %v365
      %v401 = vpack.c.b16 %v376, %v371
      %v402 = vpack.c.b16 %v377, %v372
      %v403 = vpack.c.b16 %v378, %v373
      %v404 = vpack.c.b16 %v379, %v374
      %v405 = vpack.c.b16 %v380, %v375
      %v406 = vpack.c.b16 %v386, %v381
      %v407 = vpack.c.b16 %v387, %v382
      %v408 = vpack.c.b16 %v388, %v383
      %v409 = vpack.c.b16 %v389, %v384
      %v410 = vpack.c.b16 %v390, %v385
      %v411 = vpack.c.b16 %v391, %v391
      %v412 = vpack.c.b16 %v392, %v392
      %v413 = vpack.c.b16 %v393, %v393
      %v414 = vpack.c.b16 %v394, %v394
      %v415 = vpack.c.b16 %v395, %v395
      %v516 = vunpack.c.l.b16 %v260
      %v517 = vunpack.c.l.b16 %v261
      %v518 = vunpack.c.l.b16 %v262
      %v519 = vunpack.c.l.b16 %v263
      %v520 = vunpack.c.l.b16 %v264
      %v521 = vunpack.c.l.b16 %v265
      %v522 = vunpack.c.l.b16 %v266
      %v523 = vunpack.c.l.b16 %v267
      %v524 = vunpack.c.l.b16 %v268
      %v525 = vunpack.c.l.b16 %v269
      %v526 = vunpack.c.l.b16 %v270
      %v527 = vunpack.c.l.b16 %v271
      %v528 = vunpack.c.l.b16 %v272
      %v529 = vunpack.c.l.b16 %v273
      %v530 = vunpack.c.l.b16 %v274
      %v531 = vunpack.c.l.b16 %v275
      %v532 = vunpack.c.l.b16 %v276
      %v533 = vunpack.c.l.b16 %v277
      %v534 = vunpack.c.l.b16 %v278
      %v535 = vunpack.c.l.b16 %v279
      %v536 = vunpack.c.l.b16 %v280
      %v537 = vunpack.c.l.b16 %v281
      %v538 = vunpack.c.l.b16 %v282
      %v539 = vunpack.c.l.b16 %v283
      %v540 = vunpack.c.l.b16 %v284
      %v541 = vunpack.c.l.b16 %v285
      %v542 = vunpack.c.l.b16 %v286
      %v543 = vunpack.c.l.b16 %v287
      %v544 = vunpack.c.l.b16 %v288
      %v545 = vunpack.c.l.b16 %v289
      %v546 = vunpack.c.l.b16 %v290
      %v547 = vunpack.c.l.b16 %v291
      %v548 = vunpack.c.l.b16 %v292
      %v549 = vunpack.c.l.b16 %v293
      %v550 = vunpack.c.l.b16 %v294
      %v551 = vunpack.c.l.b16 %v295
      %v552 = vunpack.c.l.b16 %v296
      %v553 = vunpack.c.l.b16 %v297
      %v554 = vunpack.c.l.b16 %v298
      %v555 = vunpack.c.l.b16 %v299
      %v556 = vunpack.c.l.b16 %v300
      %v557 = vunpack.c.l.b16 %v301
      %v558 = vunpack.c.l.b16 %v302
      %v559 = vunpack.c.l.b16 %v303
      %v560 = vunpack.c.l.b16 %v304
      %v561 = vunpack.c.l.b16 %v305
      %v562 = vunpack.c.l.b16 %v306
      %v563 = vunpack.c.l.b16 %v307
      %v564 = vunpack.c.l.b16 %v308
      %v565 = vunpack.c.l.b16 %v309
      %v566 = vunpack.c.l.b16 %v310
      %v567 = vunpack.c.l.b16 %v311
      %v568 = vunpack.c.l.b16 %v312
      %v569 = vunpack.c.l.b16 %v313
      %v570 = vunpack.c.l.b16 %v314
      %v571 = vunpack.c.l.b16 %v315
      %v572 = vunpack.c.l.b16 %v316
      %v573 = vunpack.c.l.b16 %v317
      %v574 = vunpack.c.l.b16 %v318
      %v575 = vunpack.c.l.b16 %v319
      %v576 = vunpack.c.l.b16 %v320
      %v577 = vunpack.c.l.b16 %v321
      %v578 = vunpack.c.l.b16 %v322
      %v579 = vunpack.c.l.b16 %v323
      %v580 = vunpack.c.l.b16 %v324
      %v581 = vunpack.c.l.b16 %v325
      %v582 = vunpack.c.l.b16 %v326
      %v583 = vunpack.c.l.b16 %v327
      %v584 = vunpack.c.l.b16 %v328
      %v585 = vunpack.c.l.b16 %v329
      %v586 = vunpack.c.l.b16 %v330
      %v587 = vunpack.c.l.b16 %v331
      %v588 = vunpack.c.l.b16 %v332
      %v589 = vunpack.c.l.b16 %v333
      %v590 = vunpack.c.l.b16 %v334
      %v591 = vunpack.c.l.b16 %v335
      %v592 = vunpack.c.l.b16 %v336
      %v593 = vunpack.c.l.b16 %v337
      %v594 = vunpack.c.l.b16 %v338
      %v595 = vunpack.c.l.b16 %v339
      %v596 = vpack.c.b16 %v517, %v516
      %v597 = vpack.c.b16 %v519, %v518
      %v598 = vpack.c.b16 %v521, %v520
      %v599 = vpack.c.b16 %v523, %v522
      %v600 = vpack.c.b16 %v525, %v524
      %v601 = vpack.c.b16 %v527, %v526
      %v602 = vpack.c.b16 %v529, %v528
      %v603 = vpack.c.b16 %v531, %v530
      %v604 = vpack.c.b16 %v533, %v532
      %v605 = vpack.c.b16 %v535, %v534
      %v606 = vpack.c.b16 %v537, %v536
      %v607 = vpack.c.b16 %v539, %v538
      %v608 = vpack.c.b16 %v541, %v540
      %v609 = vpack.c.b16 %v543, %v542
      %v610 = vpack.c.b16 %v545, %v544
      %v611 = vpack.c.b16 %v547, %v546
      %v612 = vpack.c.b16 %v549, %v548
      %v613 = vpack.c.b16 %v551, %v550
      %v614 = vpack.c.b16 %v553, %v552
      %v615 = vpack.c.b16 %v555, %v554
      %v616 = vpack.c.b16 %v557, %v556
      %v617 = vpack.c.b16 %v559, %v558
      %v618 = vpack.c.b16 %v561, %v560
      %v619 = vpack.c.b16 %v563, %v562
      %v620 = vpack.c.b16 %v565, %v564
      %v621 = vpack.c.b16 %v567, %v566
      %v622 = vpack.c.b16 %v569, %v568
      %v623 = vpack.c.b16 %v571, %v570
      %v624 = vpack.c.b16 %v573, %v572
      %v625 = vpack.c.b16 %v575, %v574
      %v626 = vpack.c.b16 %v577, %v576
      %v627 = vpack.c.b16 %v579, %v578
      %v628 = vpack.c.b16 %v581, %v580
      %v629 = vpack.c.b16 %v583, %v582
      %v630 = vpack.c.b16 %v585, %v584
      %v631 = vpack.c.b16 %v587, %v586
      %v632 = vpack.c.b16 %v589, %v588
      %v633 = vpack.c.b16 %v591, %v590
      %v634 = vpack.c.b16 %v593, %v592
      %v635 = vpack.c.b16 %v595, %v594
      %676 = vmatpush.bf16.msra.mxu0 %v603
      %677 = vmatpush.bf16.msra.mxu0 %v602
      %678 = vmatpush.bf16.msra.mxu0 %v601
      %679 = vmatpush.bf16.msra.mxu0 %v600
      %680 = vmatpush.bf16.msra.mxu0 %v599
      %681 = vmatpush.bf16.msra.mxu0 %v598
      %682 = vmatpush.bf16.msra.mxu0 %v597
      %683 = vmatpush.bf16.msra.mxu0 %v596
      %684 = vmatmul.bf16.gmra.mxu0 %v396
      %v685 = vpop.f32.mrf.mxu0
      %v686 = vadd.f32 0.0, %v685
      %v687 = vpop.f32.mrf.mxu0
      %v688 = vadd.f32 0.0, %v687
      %689 = vmatmul.bf16.gmra.mxu0 %v401
      %v690 = vpop.f32.mrf.mxu0
      %v691 = vadd.f32 0.0, %v690
      %v692 = vpop.f32.mrf.mxu0
      %v693 = vadd.f32 0.0, %v692
      %694 = vmatmul.bf16.gmra.mxu0 %v406
      %v695 = vpop.f32.mrf.mxu0
      %v696 = vadd.f32 0.0, %v695
      %v697 = vpop.f32.mrf.mxu0
      %v698 = vadd.f32 0.0, %v697
      %699 = vmatmul.bf16.gmra.mxu0 %v411
      %v700 = vpop.f32.mrf.mxu0
      %v701 = vadd.f32 0.0, %v700
      %v702 = vpop.f32.mrf.mxu0
      %703 = vdwg.mxu0
      %704 = vmatpush.bf16.msra.mxu0 %v611
      %705 = vmatpush.bf16.msra.mxu0 %v610
      %706 = vmatpush.bf16.msra.mxu0 %v609
      %707 = vmatpush.bf16.msra.mxu0 %v608
      %708 = vmatpush.bf16.msra.mxu0 %v607
      %709 = vmatpush.bf16.msra.mxu0 %v606
      %710 = vmatpush.bf16.msra.mxu0 %v605
      %711 = vmatpush.bf16.msra.mxu0 %v604
      %712 = vmatmul.bf16.gmra.mxu0 %v397
      %v713 = vpop.f32.mrf.mxu0
      %v714 = vadd.f32 %v686, %v713
      %v715 = vpop.f32.mrf.mxu0
      %v716 = vadd.f32 %v688, %v715
      %717 = vmatmul.bf16.gmra.mxu0 %v402
      %v718 = vpop.f32.mrf.mxu0
      %v719 = vadd.f32 %v691, %v718
      %v720 = vpop.f32.mrf.mxu0
      %v721 = vadd.f32 %v693, %v720
      %722 = vmatmul.bf16.gmra.mxu0 %v407
      %v723 = vpop.f32.mrf.mxu0
      %v724 = vadd.f32 %v696, %v723
      %v725 = vpop.f32.mrf.mxu0
      %v726 = vadd.f32 %v698, %v725
      %727 = vmatmul.bf16.gmra.mxu0 %v412
      %v728 = vpop.f32.mrf.mxu0
      %v729 = vadd.f32 %v701, %v728
      %v730 = vpop.f32.mrf.mxu0
      %731 = vdwg.mxu0
      %732 = vmatpush.bf16.msra.mxu0 %v619
      %733 = vmatpush.bf16.msra.mxu0 %v618
      %734 = vmatpush.bf16.msra.mxu0 %v617
      %735 = vmatpush.bf16.msra.mxu0 %v616
      %736 = vmatpush.bf16.msra.mxu0 %v615
      %737 = vmatpush.bf16.msra.mxu0 %v614
      %738 = vmatpush.bf16.msra.mxu0 %v613
      %739 = vmatpush.bf16.msra.mxu0 %v612
      %740 = vmatmul.bf16.gmra.mxu0 %v398
      %v741 = vpop.f32.mrf.mxu0
      %v742 = vadd.f32 %v714, %v741
      %v743 = vpop.f32.mrf.mxu0
      %v744 = vadd.f32 %v716, %v743
      %745 = vmatmul.bf16.gmra.mxu0 %v403
      %v746 = vpop.f32.mrf.mxu0
      %v747 = vadd.f32 %v719, %v746
      %v748 = vpop.f32.mrf.mxu0
      %v749 = vadd.f32 %v721, %v748
      %750 = vmatmul.bf16.gmra.mxu0 %v408
      %v751 = vpop.f32.mrf.mxu0
      %v752 = vadd.f32 %v724, %v751
      %v753 = vpop.f32.mrf.mxu0
      %v754 = vadd.f32 %v726, %v753
      %755 = vmatmul.bf16.gmra.mxu0 %v413
      %v756 = vpop.f32.mrf.mxu0
      %v757 = vadd.f32 %v729, %v756
      %v758 = vpop.f32.mrf.mxu0
      %759 = vdwg.mxu0
      %760 = vmatpush.bf16.msra.mxu0 %v627
      %761 = vmatpush.bf16.msra.mxu0 %v626
      %762 = vmatpush.bf16.msra.mxu0 %v625
      %763 = vmatpush.bf16.msra.mxu0 %v624
      %764 = vmatpush.bf16.msra.mxu0 %v623
      %765 = vmatpush.bf16.msra.mxu0 %v622
      %766 = vmatpush.bf16.msra.mxu0 %v621
      %767 = vmatpush.bf16.msra.mxu0 %v620
      %768 = vmatmul.bf16.gmra.mxu0 %v399
      %v769 = vpop.f32.mrf.mxu0
      %v770 = vadd.f32 %v742, %v769
      %v771 = vpop.f32.mrf.mxu0
      %v772 = vadd.f32 %v744, %v771
      %773 = vmatmul.bf16.gmra.mxu0 %v404
      %v774 = vpop.f32.mrf.mxu0
      %v775 = vadd.f32 %v747, %v774
      %v776 = vpop.f32.mrf.mxu0
      %v777 = vadd.f32 %v749, %v776
      %778 = vmatmul.bf16.gmra.mxu0 %v409
      %v779 = vpop.f32.mrf.mxu0
      %v780 = vadd.f32 %v752, %v779
      %v781 = vpop.f32.mrf.mxu0
      %v782 = vadd.f32 %v754, %v781
      %783 = vmatmul.bf16.gmra.mxu0 %v414
      %v784 = vpop.f32.mrf.mxu0
      %v785 = vadd.f32 %v757, %v784
      %v786 = vpop.f32.mrf.mxu0
      %787 = vdwg.mxu0
      %788 = vmatpush.bf16.msra.mxu0 %v635
      %789 = vmatpush.bf16.msra.mxu0 %v634
      %790 = vmatpush.bf16.msra.mxu0 %v633
      %791 = vmatpush.bf16.msra.mxu0 %v632
      %792 = vmatpush.bf16.msra.mxu0 %v631
      %793 = vmatpush.bf16.msra.mxu0 %v630
      %794 = vmatpush.bf16.msra.mxu0 %v629
      %795 = vmatpush.bf16.msra.mxu0 %v628
      %796 = vmatmul.bf16.gmra.mxu0 %v400
      %v797 = vpop.f32.mrf.mxu0
      %v798 = vadd.f32 %v770, %v797
      %v799 = vpop.f32.mrf.mxu0
      %v800 = vadd.f32 %v772, %v799
      %801 = vmatmul.bf16.gmra.mxu0 %v405
      %v802 = vpop.f32.mrf.mxu0
      %v803 = vadd.f32 %v775, %v802
      %v804 = vpop.f32.mrf.mxu0
      %v805 = vadd.f32 %v777, %v804
      %806 = vmatmul.bf16.gmra.mxu0 %v410
      %v807 = vpop.f32.mrf.mxu0
      %v808 = vadd.f32 %v780, %v807
      %v809 = vpop.f32.mrf.mxu0
      %v810 = vadd.f32 %v782, %v809
      %811 = vmatmul.bf16.gmra.mxu0 %v415
      %v812 = vpop.f32.mrf.mxu0
      %v813 = vadd.f32 %v785, %v812
      %v814 = vpop.f32.mrf.mxu0
      %815 = vdwg.mxu0
      %v816 = vadd.f32 %v232, %v798
      %v817 = vadd.f32 %v233, %v800
      %v818 = vadd.f32 %v234, %v803
      %v819 = vadd.f32 %v235, %v805
      %v820 = vadd.f32 %v236, %v808
      %v821 = vadd.f32 %v237, %v810
      %v822 = vadd.f32 %v238, %v813
      %823 = vst [vmem:[#allocation2] sm:$0xff] %v816
      %824 = vst [vmem:[#allocation2 + $0x8] sm:$0xff] %v817
      %825 = vst [vmem:[#allocation2 + $0x10] sm:$0xff] %v818
      %826 = vst [vmem:[#allocation2 + $0x18] sm:$0xff] %v819
      %827 = vst [vmem:[#allocation2 + $0x20] sm:$0xff] %v820
      %828 = vst [vmem:[#allocation2 + $0x28] sm:$0xff] %v821
      %829 = vst [vmem:[#allocation2 + $0x30] sm:$0x1] %v822
      // Predicated region
      $region37: #{dqn_forward.6} parent=31 // pred_check
        %p830 = pneg %p221
      $region38: #{dqn_forward.6} parent=31 // pred_check_branch
        %832 = sbr.rel (%p830) target = $region40
      $region39: #{dqn_forward.6} parent=31 // pred_region
        %v833 = vld [vmem:[#allocation2] sm:$0xff]
        %v834 = vld [vmem:[#allocation2 + $0x8] sm:$0xff]
        %v835 = vld [vmem:[#allocation2 + $0x10] sm:$0xff]
        %v836 = vld [vmem:[#allocation2 + $0x18] sm:$0xff]
        %v837 = vld [vmem:[#allocation2 + $0x20] sm:$0xff]
        %v838 = vld [vmem:[#allocation2 + $0x28] sm:$0xff]
        %v839 = vld [vmem:[#allocation2 + $0x30] sm:$0x1]
        %v840 = vld [vmem:[%s2] sm:$0x1]
        %v842 = vperm.slane %v840, 0
        %v844 = vadd.f32 %v833, %v842
        %v845 = vadd.f32 %v834, %v842
        %v846 = vadd.f32 %v835, %v842
        %v847 = vadd.f32 %v836, %v842
        %v848 = vadd.f32 %v837, %v842
        %v849 = vadd.f32 %v838, %v842
        %v850 = vadd.f32 %v839, %v842
        %v851 = vmax.f32 %v844, 0.0
        %v852 = vmax.f32 %v845, 0.0
        %v853 = vmax.f32 %v846, 0.0
        %v854 = vmax.f32 %v847, 0.0
        %v855 = vmax.f32 %v848, 0.0
        %v856 = vmax.f32 %v849, 0.0
        %v857 = vmax.f32 %v850, 0.0
        %v858 = vpack.c.bf16 %v851, %v851
        %v859 = vpack.c.bf16 %v852, %v852
        %v860 = vpack.c.bf16 %v853, %v853
        %v861 = vpack.c.bf16 %v854, %v854
        %v862 = vpack.c.bf16 %v855, %v855
        %v863 = vpack.c.bf16 %v856, %v856
        %v864 = vpack.c.bf16 %v857, %v857
        %865 = vst [vmem:[%s220] sm:$0xf] %v858
        %866 = vst [vmem:[%s220 + $0x4] sm:$0xf] %v859
        %867 = vst [vmem:[%s220 + $0x8] sm:$0xf] %v860
        %868 = vst [vmem:[%s220 + $0xc] sm:$0xf] %v861
        %869 = vst [vmem:[%s220 + $0x10] sm:$0xf] %v862
        %870 = vst [vmem:[%s220 + $0x14] sm:$0xf] %v863
        %vm871 = vcmask 1040384
        %vm872 = vsmask.f32 256
        %vm873 = vmand %vm871, %vm872
        %v874 = vld [vmem:[%s220 + $0x18] sm:$0x1]
        %v875 = vsel %vm873, %v864, %v874
        %876 = vst [vmem:[%s220 + $0x18] sm:$0x1] %v875
      $region40: #{dqn_forward.6} parent=31 // pred_fallthru
        _
      %p877 = scmp.lt.s32.totalorder %s18, 1
      %s878 = scalar_select %p877, %s18, 1
      %s879 = smul.addr %s878, 7
      %s880 = smul.addr %s879, 4
      %s881 = scalar_lea.vmem %s3, %s880
      // Predicated region
      $region41: #{dqn_forward.6} parent=31 // pred_check
        %p882 = pneg %p119
      $region42: #{dqn_forward.6} parent=31 // pred_check_branch
        %884 = sbr.rel (%p882) target = $region44
      $region43: #{dqn_forward.6} parent=31 // pred_region
        _
      $region44: #{dqn_forward.6} parent=31 // pred_fallthru
        _
    $region32: #{dqn_forward.6} parent=5 // pred_fallthru
      _
    %p885 = scmp.le.s32.totalorder 2, %s9
    // Predicated region
    $region45: #{dqn_forward.6} parent=5 // pred_check
      %p886 = pneg %p885
    $region46: #{dqn_forward.6} parent=5 // pred_check_branch
      %888 = sbr.rel (%p886) target = $region48
    $region47: #{dqn_forward.6} parent=5 // pred_region
      %s889 = ssub.s32 %s9, 2
      // Predicated region
      $region49: #{dqn_forward.6} parent=47 // pred_check
        %p890 = pneg %p125
      $region50: #{dqn_forward.6} parent=47 // pred_check_branch
        %892 = sbr.rel (%p890) target = $region52
      $region51: #{dqn_forward.6} parent=47 // pred_region
        %p893 = scmp.lt.s32.totalorder %s20, 1
        %s894 = scalar_select %p893, %s20, 1
        %s895 = smul.addr %s894, 7
        %s896 = smul.addr %s895, 4
        %s897 = scalar_lea.vmem %s3, %s896
      $region52: #{dqn_forward.6} parent=47 // pred_fallthru
        _
    $region48: #{dqn_forward.6} parent=5 // pred_fallthru
      _
  $region6: #{dqn_forward.6} parent=0 // loop_footer
    %s13 = sadd.s32 1, %s9
  $region7: #{dqn_forward.6} parent=0 // loop_footer_branch
    %8 = sbr.rel target = $region3
  $region8: #{dqn_forward.6} parent=0 // loop_exit
    _

// kernel: dqn_forward.7
$region0: #{dqn_forward.7}
  #allocation0 [shape = 'u32[]', space=smem, size = 0x4, offset = 0x4, fixed_abs, tag = 'smem constant byte address 0x4 - core index']
  #allocation1 [shape = 'u32[72,128]{1,0:T(1,128)}', space=vmem, size = 0x9000, scoped, tag = 'internal scratch']
  #allocation2 [shape = 'f32[2,1024]{1,0:T(2,128)}', space=vmem, size = 0x2000, scoped, tag = 'scratch operand']
  %s0 = inlined_call_operand.vmem [shape: bf16[2,3584], index: 0, kind: input, shape index: {}]
  %s1 = inlined_call_operand.vmem [shape: bf16[3584,1024], index: 1, kind: input, shape index: {}]
  %s2 = inlined_call_operand.vmem [shape: f32[1,1024], index: 2, kind: input, shape index: {}]
  %s3 = inlined_call_operand.vmem [shape: bf16[1024,128], index: 3, kind: input, shape index: {}]
  %s4 = inlined_call_operand.vmem [shape: f32[1,128], index: 4, kind: input, shape index: {}]
  %s5 = inlined_call_operand.vmem [shape: f32[2,128], index: 5, kind: output, shape index: {}]
  %s6 = sld [smem:[#allocation0]]
  $region61: #{dqn_forward.7} parent=0
    _
  %s8 = ssub.s32 1, %s6
  %s9 = scalar_select 0, %s8, %s6
  loop: start=0, step=1, limit=4
  $region2: #{dqn_forward.7} parent=0 // loop_pre_header
    _
  $region3: #{dqn_forward.7} parent=0 // loop_header
    %s11 = sphi 0, %s15
    %p12 = scmp.ge.s32.totalorder %s11, 4
    %s21 = sphi 0, %s23
    %s24 = sphi 0, %s21
    %s25 = sphi 0, %s24
    %s41 = sphi 0, %s25
    %s47 = sphi 0, %s49
    %s50 = sphi 0, %s47
    %s51 = sphi 0, %s50
    %s67 = sphi 0, %s51
    %s71 = sphi 0, %s71
    %s73 = sphi 0, %s71
    %s74 = sphi 0, %s73
    %s88 = sphi 0, %s74
    %s92 = sphi 0, %s92
    %s94 = sphi 0, %s92
    %s95 = sphi 0, %s94
    %s109 = sphi 0, %s95
    %s113 = sphi 0, %s113
    %s115 = sphi 0, %s113
    %s116 = sphi 0, %s115
    %s130 = sphi 0, %s116
    %s134 = sphi 0, %s134
    %s136 = sphi 0, %s134
    %s137 = sphi 0, %s136
    %s151 = sphi 0, %s137
  $region4: #{dqn_forward.7} parent=0 // loop_header_branch
    %14 = sbr.rel (%p12) target = $region8
  $region5: #{dqn_forward.7} parent=0 // loop_body
    %s16 = ssub.s32 %s11, 1
    %s17 = ssub.s32 %s11, 2
    %s18 = sadd.s32 %s11, 1
    %s19 = ssub.s32 %s11, %s18
    %p20 = scmp.eq.s32.totalorder %s19, 0
    %s22 = sadd.s32 %s21, 1
    %s23 = scalar_select %p20, %s21, %s22
    %p26 = pneg %p20
    %p27 = scmp.eq.s32.totalorder %s11, 1
    %p28 = por %p26, %p27
    %p29 = scmp.ne.s32.totalorder %s21, %s24
    %p30 = scmp.eq.s32.totalorder %s11, 0
    %p31 = por %p29, %p30
    %p32 = scmp.ne.s32.totalorder %s21, %s24
    %p33 = scmp.eq.s32.totalorder %s16, 1
    %p34 = por %p32, %p33
    %p35 = scmp.ne.s32.totalorder %s24, %s25
    %p36 = scmp.eq.s32.totalorder %s16, 0
    %p37 = por %p35, %p36
    %p38 = scmp.ne.s32.totalorder %s24, %s25
    %p39 = scmp.eq.s32.totalorder %s17, 1
    %p40 = por %p38, %p39
    %p42 = scmp.ne.s32.totalorder %s25, %s41
    %p43 = scmp.eq.s32.totalorder %s17, 0
    %p44 = por %p42, %p43
    %s45 = ssub.s32 %s11, %s18
    %p46 = scmp.eq.s32.totalorder %s45, 0
    %s48 = sadd.s32 %s47, 1
    %s49 = scalar_select %p46, %s47, %s48
    %p52 = pneg %p46
    %p53 = scmp.eq.s32.totalorder %s11, 1
    %p54 = por %p52, %p53
    %p55 = scmp.ne.s32.totalorder %s47, %s50
    %p56 = scmp.eq.s32.totalorder %s11, 0
    %p57 = por %p55, %p56
    %p58 = scmp.ne.s32.totalorder %s47, %s50
    %p59 = scmp.eq.s32.totalorder %s16, 1
    %p60 = por %p58, %p59
    %p61 = scmp.ne.s32.totalorder %s50, %s51
    %p62 = scmp.eq.s32.totalorder %s16, 0
    %p63 = por %p61, %p62
    %p64 = scmp.ne.s32.totalorder %s50, %s51
    %p65 = scmp.eq.s32.totalorder %s17, 1
    %p66 = por %p64, %p65
    %p68 = scmp.ne.s32.totalorder %s51, %s67
    %p69 = scmp.eq.s32.totalorder %s17, 0
    %p70 = por %p68, %p69
    %s72 = sadd.s32 %s71, 1
    %p75 = scmp.eq.s32.totalorder %s11, 1
    %p76 = scmp.ne.s32.totalorder %s71, %s73
    %p77 = scmp.eq.s32.totalorder %s11, 0
    %p78 = por %p76, %p77
    %p79 = scmp.ne.s32.totalorder %s71, %s73
    %p80 = scmp.eq.s32.totalorder %s16, 1
    %p81 = por %p79, %p80
    %p82 = scmp.ne.s32.totalorder %s73, %s74
    %p83 = scmp.eq.s32.totalorder %s16, 0
    %p84 = por %p82, %p83
    %p85 = scmp.ne.s32.totalorder %s73, %s74
    %p86 = scmp.eq.s32.totalorder %s17, 1
    %p87 = por %p85, %p86
    %p89 = scmp.ne.s32.totalorder %s74, %s88
    %p90 = scmp.eq.s32.totalorder %s17, 0
    %p91 = por %p89, %p90
    %s93 = sadd.s32 %s92, 1
    %p96 = scmp.eq.s32.totalorder %s11, 1
    %p97 = scmp.ne.s32.totalorder %s92, %s94
    %p98 = scmp.eq.s32.totalorder %s11, 0
    %p99 = por %p97, %p98
    %p100 = scmp.ne.s32.totalorder %s92, %s94
    %p101 = scmp.eq.s32.totalorder %s16, 1
    %p102 = por %p100, %p101
    %p103 = scmp.ne.s32.totalorder %s94, %s95
    %p104 = scmp.eq.s32.totalorder %s16, 0
    %p105 = por %p103, %p104
    %p106 = scmp.ne.s32.totalorder %s94, %s95
    %p107 = scmp.eq.s32.totalorder %s17, 1
    %p108 = por %p106, %p107
    %p110 = scmp.ne.s32.totalorder %s95, %s109
    %p111 = scmp.eq.s32.totalorder %s17, 0
    %p112 = por %p110, %p111
    %s114 = sadd.s32 %s113, 1
    %p117 = scmp.eq.s32.totalorder %s11, 1
    %p118 = scmp.ne.s32.totalorder %s113, %s115
    %p119 = scmp.eq.s32.totalorder %s11, 0
    %p120 = por %p118, %p119
    %p121 = scmp.ne.s32.totalorder %s113, %s115
    %p122 = scmp.eq.s32.totalorder %s16, 1
    %p123 = por %p121, %p122
    %p124 = scmp.ne.s32.totalorder %s115, %s116
    %p125 = scmp.eq.s32.totalorder %s16, 0
    %p126 = por %p124, %p125
    %p127 = scmp.ne.s32.totalorder %s115, %s116
    %p128 = scmp.eq.s32.totalorder %s17, 1
    %p129 = por %p127, %p128
    %p131 = scmp.ne.s32.totalorder %s116, %s130
    %p132 = scmp.eq.s32.totalorder %s17, 0
    %p133 = por %p131, %p132
    %s135 = sadd.s32 %s134, 1
    %p138 = scmp.eq.s32.totalorder %s11, 1
    %p139 = scmp.ne.s32.totalorder %s134, %s136
    %p140 = scmp.eq.s32.totalorder %s11, 0
    %p141 = por %p139, %p140
    %p142 = scmp.ne.s32.totalorder %s134, %s136
    %p143 = scmp.eq.s32.totalorder %s16, 1
    %p144 = por %p142, %p143
    %p145 = scmp.ne.s32.totalorder %s136, %s137
    %p146 = scmp.eq.s32.totalorder %s16, 0
    %p147 = por %p145, %p146
    %p148 = scmp.ne.s32.totalorder %s136, %s137
    %p149 = scmp.eq.s32.totalorder %s17, 1
    %p150 = por %p148, %p149
    %p152 = scmp.ne.s32.totalorder %s137, %s151
    %p153 = scmp.eq.s32.totalorder %s17, 0
    %p154 = por %p152, %p153
    %p155 = scmp.le.s32.totalorder 1, %s11
    %p156 = scmp.lt.s32.totalorder %s11, 3
    %p157 = pnand %p155, %p156
    %p158 = pneg %p157
    // Predicated region
    $region9: #{dqn_forward.7} parent=5 // pred_check
      _
    $region10: #{dqn_forward.7} parent=5 // pred_check_branch
      %160 = sbr.rel (%p157) target = $region12
    $region11: #{dqn_forward.7} parent=5 // pred_region
      %s161 = ssub.s32 %s11, 1
      // Predicated region
      $region13: #{dqn_forward.7} parent=11 // pred_check
        %p162 = pneg %p84
      $region14: #{dqn_forward.7} parent=11 // pred_check_branch
        %164 = sbr.rel (%p162) target = $region16
      $region15: #{dqn_forward.7} parent=11 // pred_region
        _
      $region16: #{dqn_forward.7} parent=11 // pred_fallthru
        _
      // Predicated region
      $region17: #{dqn_forward.7} parent=11 // pred_check
        %p165 = pneg %p105
      $region18: #{dqn_forward.7} parent=11 // pred_check_branch
        %167 = sbr.rel (%p165) target = $region20
      $region19: #{dqn_forward.7} parent=11 // pred_region
        _
      $region20: #{dqn_forward.7} parent=11 // pred_fallthru
        _
      // Predicated region
      $region21: #{dqn_forward.7} parent=11 // pred_check
        %p168 = pneg %p126
      $region22: #{dqn_forward.7} parent=11 // pred_check_branch
        %170 = sbr.rel (%p168) target = $region24
      $region23: #{dqn_forward.7} parent=11 // pred_region
        _
      $region24: #{dqn_forward.7} parent=11 // pred_fallthru
        _
    $region12: #{dqn_forward.7} parent=5 // pred_fallthru
      _
    %p171 = scmp.lt.s32.totalorder %s11, 2
    // Predicated region
    $region25: #{dqn_forward.7} parent=5 // pred_check
      %p172 = pneg %p171
    $region26: #{dqn_forward.7} parent=5 // pred_check_branch
      %174 = sbr.rel (%p172) target = $region28
    $region27: #{dqn_forward.7} parent=5 // pred_region
      // Predicated region
      $region29: #{dqn_forward.7} parent=27 // pred_check
        %p175 = pneg %p31
      $region30: #{dqn_forward.7} parent=27 // pred_check_branch
        %177 = sbr.rel (%p175) target = $region32
      $region31: #{dqn_forward.7} parent=27 // pred_region
        %s178 = smul.u32 14, %s11
        %p179 = scmp.lt.s32.totalorder %s178, 27
        %s180 = scalar_select %p179, %s178, 27
        %s181 = scalar_lea.vmem %s0, %s180
        %s182 = smul.u32 14, %s11
      $region32: #{dqn_forward.7} parent=27 // pred_fallthru
        _
      // Predicated region
      $region33: #{dqn_forward.7} parent=27 // pred_check
        %p183 = pneg %p57
      $region34: #{dqn_forward.7} parent=27 // pred_check_branch
        %185 = sbr.rel (%p183) target = $region36
      $region35: #{dqn_forward.7} parent=27 // pred_region
        %s186 = smul.u32 224, %s11
        %p187 = scmp.lt.s32.totalorder %s186, 447
        %s188 = scalar_select %p187, %s186, 447
        %s189 = smul.addr %s188, 8
        %s190 = smul.addr %s189, 4
        %s191 = scalar_lea.vmem %s1, %s190
        %s192 = smul.u32 224, %s11
      $region36: #{dqn_forward.7} parent=27 // pred_fallthru
        _
    $region28: #{dqn_forward.7} parent=5 // pred_fallthru
      _
    %p193 = scmp.le.s32.totalorder 1, %s11
    %p194 = scmp.lt.s32.totalorder %s11, 3
    %p195 = pnand %p193, %p194
    %p196 = pneg %p195
    // Predicated region
    $region37: #{dqn_forward.7} parent=5 // pred_check
      _
    $region38: #{dqn_forward.7} parent=5 // pred_check_branch
      %198 = sbr.rel (%p195) target = $region40
    $region39: #{dqn_forward.7} parent=5 // pred_region
      %s199 = ssub.s32 %s11, 1
      %s200 = smul.u32 14, %s16
      %p201 = scmp.lt.s32.totalorder %s200, 27
      %s202 = scalar_select %p201, %s200, 27
      %s203 = scalar_lea.vmem %s0, %s202
      %p204 = pneg %p37
      %p205 = pneg %p34
      %s206 = smul.u32 224, %s16
      %p207 = scmp.lt.s32.totalorder %s206, 447
      %s208 = scalar_select %p207, %s206, 447
      %s209 = smul.addr %s208, 8
      %s210 = smul.addr %s209, 4
      %s211 = scalar_lea.vmem %s1, %s210
      %p212 = pneg %p63
      %p213 = pneg %p60
      %p214 = pneg %p84
      %p215 = pneg %p81
      %p216 = pneg %p105
      %p217 = pneg %p102
      %p218 = pneg %p126
      %p219 = pneg %p123
      %p220 = pneg %p147
      %p221 = pneg %p144
      %s222 = smul.u32 14, %s16
      %p223 = scmp.lt.s32.totalorder %s222, 27
      %s224 = scalar_select %p223, %s222, 27
      %s225 = scalar_lea.vmem %s0, %s224
      %s226 = smul.u32 14, %s16
      %s227 = smul.u32 224, %s16
      %p228 = scmp.lt.s32.totalorder %s227, 447
      %s229 = scalar_select %p228, %s227, 447
      %s230 = smul.addr %s229, 8
      %s231 = smul.addr %s230, 4
      %s232 = scalar_lea.vmem %s1, %s231
      %s233 = smul.u32 224, %s16
      %p234 = scmp.eq.s32.totalorder %s16, 0
      // Predicated region
      $region41: #{dqn_forward.7} parent=39 // pred_check
        %p235 = pneg %p234
      $region42: #{dqn_forward.7} parent=39 // pred_check_branch
        %237 = sbr.rel (%p235) target = $region44
      $region43: #{dqn_forward.7} parent=39 // pred_region
        %238 = vst [vmem:[#allocation2] sm:$0xff] 0.0
        %239 = vst [vmem:[#allocation2 + $0x8] sm:$0xff] 0.0
      $region44: #{dqn_forward.7} parent=39 // pred_fallthru
        _
      %v240 = vld [vmem:[#allocation2] sm:$0xff]
      %v241 = vld [vmem:[#allocation2 + $0x8] sm:$0xff]
      %v242 = vld [vmem:[%s225] sm:$0xff]
      %v243 = vld [vmem:[%s225 + $0x8] sm:$0x3f]
      %v244 = vld [vmem:[%s232] sm:$0xff]
      %v245 = vld [vmem:[%s232 + $0x8] sm:$0xff]
      %v246 = vld [vmem:[%s232 + $0x10] sm:$0xff]
      %v247 = vld [vmem:[%s232 + $0x18] sm:$0xff]
      %v248 = vld [vmem:[%s232 + $0x20] sm:$0xff]
      %v249 = vld [vmem:[%s232 + $0x28] sm:$0xff]
      %v250 = vld [vmem:[%s232 + $0x30] sm:$0xff]
      %v251 = vld [vmem:[%s232 + $0x38] sm:$0xff]
      %v252 = vld [vmem:[%s232 + $0x40] sm:$0xff]
      %v253 = vld [vmem:[%s232 + $0x48] sm:$0xff]
      %v254 = vld [vmem:[%s232 + $0x50] sm:$0xff]
      %v255 = vld [vmem:[%s232 + $0x58] sm:$0xff]
      %v256 = vld [vmem:[%s232 + $0x60] sm:$0xff]
      %v257 = vld [vmem:[%s232 + $0x68] sm:$0xff]
      %v258 = vld [vmem:[%s232 + $0x70] sm:$0xff]
      %v259 = vld [vmem:[%s232 + $0x78] sm:$0xff]
      %v260 = vld [vmem:[%s232 + $0x80] sm:$0xff]
      %v261 = vld [vmem:[%s232 + $0x88] sm:$0xff]
      %v262 = vld [vmem:[%s232 + $0x90] sm:$0xff]
      %v263 = vld [vmem:[%s232 + $0x98] sm:$0xff]
      %v264 = vld [vmem:[%s232 + $0xa0] sm:$0xff]
      %v265 = vld [vmem:[%s232 + $0xa8] sm:$0xff]
      %v266 = vld [vmem:[%s232 + $0xb0] sm:$0xff]
      %v267 = vld [vmem:[%s232 + $0xb8] sm:$0xff]
      %v268 = vld [vmem:[%s232 + $0xc0] sm:$0xff]
      %v269 = vld [vmem:[%s232 + $0xc8] sm:$0xff]
      %v270 = vld [vmem:[%s232 + $0xd0] sm:$0xff]
      %v271 = vld [vmem:[%s232 + $0xd8] sm:$0xff]
      %v272 = vld [vmem:[%s232 + $0xe0] sm:$0xff]
      %v273 = vld [vmem:[%s232 + $0xe8] sm:$0xff]
      %v274 = vld [vmem:[%s232 + $0xf0] sm:$0xff]
      %v275 = vld [vmem:[%s232 + $0xf8] sm:$0xff]
      %v276 = vld [vmem:[%s232 + $0x100] sm:$0xff]
      %v277 = vld [vmem:[%s232 + $0x108] sm:$0xff]
      %v278 = vld [vmem:[%s232 + $0x110] sm:$0xff]
      %v279 = vld [vmem:[%s232 + $0x118] sm:$0xff]
      %v280 = vld [vmem:[%s232 + $0x120] sm:$0xff]
      %v281 = vld [vmem:[%s232 + $0x128] sm:$0xff]
      %v282 = vld [vmem:[%s232 + $0x130] sm:$0xff]
      %v283 = vld [vmem:[%s232 + $0x138] sm:$0xff]
      %v284 = vld [vmem:[%s232 + $0x140] sm:$0xff]
      %v285 = vld [vmem:[%s232 + $0x148] sm:$0xff]
      %v286 = vld [vmem:[%s232 + $0x150] sm:$0xff]
      %v287 = vld [vmem:[%s232 + $0x158] sm:$0xff]
      %v288 = vld [vmem:[%s232 + $0x160] sm:$0xff]
      %v289 = vld [vmem:[%s232 + $0x168] sm:$0xff]
      %v290 = vld [vmem:[%s232 + $0x170] sm:$0xff]
      %v291 = vld [vmem:[%s232 + $0x178] sm:$0xff]
      %v292 = vld [vmem:[%s232 + $0x180] sm:$0xff]
      %v293 = vld [vmem:[%s232 + $0x188] sm:$0xff]
      %v294 = vld [vmem:[%s232 + $0x190] sm:$0xff]
      %v295 = vld [vmem:[%s232 + $0x198] sm:$0xff]
      %v296 = vld [vmem:[%s232 + $0x1a0] sm:$0xff]
      %v297 = vld [vmem:[%s232 + $0x1a8] sm:$0xff]
      %v298 = vld [vmem:[%s232 + $0x1b0] sm:$0xff]
      %v299 = vld [vmem:[%s232 + $0x1b8] sm:$0xff]
      %v300 = vld [vmem:[%s232 + $0x1c0] sm:$0xff]
      %v301 = vld [vmem:[%s232 + $0x1c8] sm:$0xff]
      %v302 = vld [vmem:[%s232 + $0x1d0] sm:$0xff]
      %v303 = vld [vmem:[%s232 + $0x1d8] sm:$0xff]
      %v304 = vld [vmem:[%s232 + $0x1e0] sm:$0xff]
      %v305 = vld [vmem:[%s232 + $0x1e8] sm:$0xff]
      %v306 = vld [vmem:[%s232 + $0x1f0] sm:$0xff]
      %v307 = vld [vmem:[%s232 + $0x1f8] sm:$0xff]
      %v308 = vld [vmem:[%s232 + $0x200] sm:$0xff]
      %v309 = vld [vmem:[%s232 + $0x208] sm:$0xff]
      %v310 = vld [vmem:[%s232 + $0x210] sm:$0xff]
      %v311 = vld [vmem:[%s232 + $0x218] sm:$0xff]
      %v312 = vld [vmem:[%s232 + $0x220] sm:$0xff]
      %v313 = vld [vmem:[%s232 + $0x228] sm:$0xff]
      %v314 = vld [vmem:[%s232 + $0x230] sm:$0xff]
      %v315 = vld [vmem:[%s232 + $0x238] sm:$0xff]
      %v316 = vld [vmem:[%s232 + $0x240] sm:$0xff]
      %v317 = vld [vmem:[%s232 + $0x248] sm:$0xff]
      %v318 = vld [vmem:[%s232 + $0x250] sm:$0xff]
      %v319 = vld [vmem:[%s232 + $0x258] sm:$0xff]
      %v320 = vld [vmem:[%s232 + $0x260] sm:$0xff]
      %v321 = vld [vmem:[%s232 + $0x268] sm:$0xff]
      %v322 = vld [vmem:[%s232 + $0x270] sm:$0xff]
      %v323 = vld [vmem:[%s232 + $0x278] sm:$0xff]
      %v324 = vld [vmem:[%s232 + $0x280] sm:$0xff]
      %v325 = vld [vmem:[%s232 + $0x288] sm:$0xff]
      %v326 = vld [vmem:[%s232 + $0x290] sm:$0xff]
      %v327 = vld [vmem:[%s232 + $0x298] sm:$0xff]
      %v328 = vld [vmem:[%s232 + $0x2a0] sm:$0xff]
      %v329 = vld [vmem:[%s232 + $0x2a8] sm:$0xff]
      %v330 = vld [vmem:[%s232 + $0x2b0] sm:$0xff]
      %v331 = vld [vmem:[%s232 + $0x2b8] sm:$0xff]
      %v332 = vld [vmem:[%s232 + $0x2c0] sm:$0xff]
      %v333 = vld [vmem:[%s232 + $0x2c8] sm:$0xff]
      %v334 = vld [vmem:[%s232 + $0x2d0] sm:$0xff]
      %v335 = vld [vmem:[%s232 + $0x2d8] sm:$0xff]
      %v336 = vld [vmem:[%s232 + $0x2e0] sm:$0xff]
      %v337 = vld [vmem:[%s232 + $0x2e8] sm:$0xff]
      %v338 = vld [vmem:[%s232 + $0x2f0] sm:$0xff]
      %v339 = vld [vmem:[%s232 + $0x2f8] sm:$0xff]
      %v340 = vld [vmem:[%s232 + $0x300] sm:$0xff]
      %v341 = vld [vmem:[%s232 + $0x308] sm:$0xff]
      %v342 = vld [vmem:[%s232 + $0x310] sm:$0xff]
      %v343 = vld [vmem:[%s232 + $0x318] sm:$0xff]
      %v344 = vld [vmem:[%s232 + $0x320] sm:$0xff]
      %v345 = vld [vmem:[%s232 + $0x328] sm:$0xff]
      %v346 = vld [vmem:[%s232 + $0x330] sm:$0xff]
      %v347 = vld [vmem:[%s232 + $0x338] sm:$0xff]
      %v348 = vld [vmem:[%s232 + $0x340] sm:$0xff]
      %v349 = vld [vmem:[%s232 + $0x348] sm:$0xff]
      %v350 = vld [vmem:[%s232 + $0x350] sm:$0xff]
      %v351 = vld [vmem:[%s232 + $0x358] sm:$0xff]
      %v352 = vld [vmem:[%s232 + $0x360] sm:$0xff]
      %v353 = vld [vmem:[%s232 + $0x368] sm:$0xff]
      %v354 = vld [vmem:[%s232 + $0x370] sm:$0xff]
      %v355 = vld [vmem:[%s232 + $0x378] sm:$0xff]
      %v356 = vld [vmem:[%s232 + $0x380] sm:$0xff]
      %v357 = vld [vmem:[%s232 + $0x388] sm:$0xff]
      %v358 = vld [vmem:[%s232 + $0x390] sm:$0xff]
      %v359 = vld [vmem:[%s232 + $0x398] sm:$0xff]
      %v360 = vld [vmem:[%s232 + $0x3a0] sm:$0xff]
      %v361 = vld [vmem:[%s232 + $0x3a8] sm:$0xff]
      %v362 = vld [vmem:[%s232 + $0x3b0] sm:$0xff]
      %v363 = vld [vmem:[%s232 + $0x3b8] sm:$0xff]
      %v364 = vld [vmem:[%s232 + $0x3c0] sm:$0xff]
      %v365 = vld [vmem:[%s232 + $0x3c8] sm:$0xff]
      %v366 = vld [vmem:[%s232 + $0x3d0] sm:$0xff]
      %v367 = vld [vmem:[%s232 + $0x3d8] sm:$0xff]
      %v368 = vld [vmem:[%s232 + $0x3e0] sm:$0xff]
      %v369 = vld [vmem:[%s232 + $0x3e8] sm:$0xff]
      %v370 = vld [vmem:[%s232 + $0x3f0] sm:$0xff]
      %v371 = vld [vmem:[%s232 + $0x3f8] sm:$0xff]
      %v372 = vld [vmem:[%s232 + $0x400] sm:$0xff]
      %v373 = vld [vmem:[%s232 + $0x408] sm:$0xff]
      %v374 = vld [vmem:[%s232 + $0x410] sm:$0xff]
      %v375 = vld [vmem:[%s232 + $0x418] sm:$0xff]
      %v376 = vld [vmem:[%s232 + $0x420] sm:$0xff]
      %v377 = vld [vmem:[%s232 + $0x428] sm:$0xff]
      %v378 = vld [vmem:[%s232 + $0x430] sm:$0xff]
      %v379 = vld [vmem:[%s232 + $0x438] sm:$0xff]
      %v380 = vld [vmem:[%s232 + $0x440] sm:$0xff]
      %v381 = vld [vmem:[%s232 + $0x448] sm:$0xff]
      %v382 = vld [vmem:[%s232 + $0x450] sm:$0xff]
      %v383 = vld [vmem:[%s232 + $0x458] sm:$0xff]
      %v384 = vld [vmem:[%s232 + $0x460] sm:$0xff]
      %v385 = vld [vmem:[%s232 + $0x468] sm:$0xff]
      %v386 = vld [vmem:[%s232 + $0x470] sm:$0xff]
      %v387 = vld [vmem:[%s232 + $0x478] sm:$0xff]
      %v388 = vld [vmem:[%s232 + $0x480] sm:$0xff]
      %v389 = vld [vmem:[%s232 + $0x488] sm:$0xff]
      %v390 = vld [vmem:[%s232 + $0x490] sm:$0xff]
      %v391 = vld [vmem:[%s232 + $0x498] sm:$0xff]
      %v392 = vld [vmem:[%s232 + $0x4a0] sm:$0xff]
      %v393 = vld [vmem:[%s232 + $0x4a8] sm:$0xff]
      %v394 = vld [vmem:[%s232 + $0x4b0] sm:$0xff]
      %v395 = vld [vmem:[%s232 + $0x4b8] sm:$0xff]
      %v396 = vld [vmem:[%s232 + $0x4c0] sm:$0xff]
      %v397 = vld [vmem:[%s232 + $0x4c8] sm:$0xff]
      %v398 = vld [vmem:[%s232 + $0x4d0] sm:$0xff]
      %v399 = vld [vmem:[%s232 + $0x4d8] sm:$0xff]
      %v400 = vld [vmem:[%s232 + $0x4e0] sm:$0xff]
      %v401 = vld [vmem:[%s232 + $0x4e8] sm:$0xff]
      %v402 = vld [vmem:[%s232 + $0x4f0] sm:$0xff]
      %v403 = vld [vmem:[%s232 + $0x4f8] sm:$0xff]
      %v404 = vld [vmem:[%s232 + $0x500] sm:$0xff]
      %v405 = vld [vmem:[%s232 + $0x508] sm:$0xff]
      %v406 = vld [vmem:[%s232 + $0x510] sm:$0xff]
      %v407 = vld [vmem:[%s232 + $0x518] sm:$0xff]
      %v408 = vld [vmem:[%s232 + $0x520] sm:$0xff]
      %v409 = vld [vmem:[%s232 + $0x528] sm:$0xff]
      %v410 = vld [vmem:[%s232 + $0x530] sm:$0xff]
      %v411 = vld [vmem:[%s232 + $0x538] sm:$0xff]
      %v412 = vld [vmem:[%s232 + $0x540] sm:$0xff]
      %v413 = vld [vmem:[%s232 + $0x548] sm:$0xff]
      %v414 = vld [vmem:[%s232 + $0x550] sm:$0xff]
      %v415 = vld [vmem:[%s232 + $0x558] sm:$0xff]
      %v416 = vld [vmem:[%s232 + $0x560] sm:$0xff]
      %v417 = vld [vmem:[%s232 + $0x568] sm:$0xff]
      %v418 = vld [vmem:[%s232 + $0x570] sm:$0xff]
      %v419 = vld [vmem:[%s232 + $0x578] sm:$0xff]
      %v420 = vld [vmem:[%s232 + $0x580] sm:$0xff]
      %v421 = vld [vmem:[%s232 + $0x588] sm:$0xff]
      %v422 = vld [vmem:[%s232 + $0x590] sm:$0xff]
      %v423 = vld [vmem:[%s232 + $0x598] sm:$0xff]
      %v424 = vld [vmem:[%s232 + $0x5a0] sm:$0xff]
      %v425 = vld [vmem:[%s232 + $0x5a8] sm:$0xff]
      %v426 = vld [vmem:[%s232 + $0x5b0] sm:$0xff]
      %v427 = vld [vmem:[%s232 + $0x5b8] sm:$0xff]
      %v428 = vld [vmem:[%s232 + $0x5c0] sm:$0xff]
      %v429 = vld [vmem:[%s232 + $0x5c8] sm:$0xff]
      %v430 = vld [vmem:[%s232 + $0x5d0] sm:$0xff]
      %v431 = vld [vmem:[%s232 + $0x5d8] sm:$0xff]
      %v432 = vld [vmem:[%s232 + $0x5e0] sm:$0xff]
      %v433 = vld [vmem:[%s232 + $0x5e8] sm:$0xff]
      %v434 = vld [vmem:[%s232 + $0x5f0] sm:$0xff]
      %v435 = vld [vmem:[%s232 + $0x5f8] sm:$0xff]
      %v436 = vld [vmem:[%s232 + $0x600] sm:$0xff]
      %v437 = vld [vmem:[%s232 + $0x608] sm:$0xff]
      %v438 = vld [vmem:[%s232 + $0x610] sm:$0xff]
      %v439 = vld [vmem:[%s232 + $0x618] sm:$0xff]
      %v440 = vld [vmem:[%s232 + $0x620] sm:$0xff]
      %v441 = vld [vmem:[%s232 + $0x628] sm:$0xff]
      %v442 = vld [vmem:[%s232 + $0x630] sm:$0xff]
      %v443 = vld [vmem:[%s232 + $0x638] sm:$0xff]
      %v444 = vld [vmem:[%s232 + $0x640] sm:$0xff]
      %v445 = vld [vmem:[%s232 + $0x648] sm:$0xff]
      %v446 = vld [vmem:[%s232 + $0x650] sm:$0xff]
      %v447 = vld [vmem:[%s232 + $0x658] sm:$0xff]
      %v448 = vld [vmem:[%s232 + $0x660] sm:$0xff]
      %v449 = vld [vmem:[%s232 + $0x668] sm:$0xff]
      %v450 = vld [vmem:[%s232 + $0x670] sm:$0xff]
      %v451 = vld [vmem:[%s232 + $0x678] sm:$0xff]
      %v452 = vld [vmem:[%s232 + $0x680] sm:$0xff]
      %v453 = vld [vmem:[%s232 + $0x688] sm:$0xff]
      %v454 = vld [vmem:[%s232 + $0x690] sm:$0xff]
      %v455 = vld [vmem:[%s232 + $0x698] sm:$0xff]
      %v456 = vld [vmem:[%s232 + $0x6a0] sm:$0xff]
      %v457 = vld [vmem:[%s232 + $0x6a8] sm:$0xff]
      %v458 = vld [vmem:[%s232 + $0x6b0] sm:$0xff]
      %v459 = vld [vmem:[%s232 + $0x6b8] sm:$0xff]
      %v460 = vld [vmem:[%s232 + $0x6c0] sm:$0xff]
      %v461 = vld [vmem:[%s232 + $0x6c8] sm:$0xff]
      %v462 = vld [vmem:[%s232 + $0x6d0] sm:$0xff]
      %v463 = vld [vmem:[%s232 + $0x6d8] sm:$0xff]
      %v464 = vld [vmem:[%s232 + $0x6e0] sm:$0xff]
      %v465 = vld [vmem:[%s232 + $0x6e8] sm:$0xff]
      %v466 = vld [vmem:[%s232 + $0x6f0] sm:$0xff]
      %v467 = vld [vmem:[%s232 + $0x6f8] sm:$0xff]
      %v468 = vld [vmem:[%s232 + $0x700] sm:$0xff]
      %v469 = vld [vmem:[%s232 + $0x708] sm:$0xff]
      %v470 = vld [vmem:[%s232 + $0x710] sm:$0xff]
      %v471 = vld [vmem:[%s232 + $0x718] sm:$0xff]
      %v472 = vld [vmem:[%s232 + $0x720] sm:$0xff]
      %v473 = vld [vmem:[%s232 + $0x728] sm:$0xff]
      %v474 = vld [vmem:[%s232 + $0x730] sm:$0xff]
      %v475 = vld [vmem:[%s232 + $0x738] sm:$0xff]
      %v476 = vld [vmem:[%s232 + $0x740] sm:$0xff]
      %v477 = vld [vmem:[%s232 + $0x748] sm:$0xff]
      %v478 = vld [vmem:[%s232 + $0x750] sm:$0xff]
      %v479 = vld [vmem:[%s232 + $0x758] sm:$0xff]
      %v480 = vld [vmem:[%s232 + $0x760] sm:$0xff]
      %v481 = vld [vmem:[%s232 + $0x768] sm:$0xff]
      %v482 = vld [vmem:[%s232 + $0x770] sm:$0xff]
      %v483 = vld [vmem:[%s232 + $0x778] sm:$0xff]
      %v484 = vld [vmem:[%s232 + $0x780] sm:$0xff]
      %v485 = vld [vmem:[%s232 + $0x788] sm:$0xff]
      %v486 = vld [vmem:[%s232 + $0x790] sm:$0xff]
      %v487 = vld [vmem:[%s232 + $0x798] sm:$0xff]
      %v488 = vld [vmem:[%s232 + $0x7a0] sm:$0xff]
      %v489 = vld [vmem:[%s232 + $0x7a8] sm:$0xff]
      %v490 = vld [vmem:[%s232 + $0x7b0] sm:$0xff]
      %v491 = vld [vmem:[%s232 + $0x7b8] sm:$0xff]
      %v492 = vld [vmem:[%s232 + $0x7c0] sm:$0xff]
      %v493 = vld [vmem:[%s232 + $0x7c8] sm:$0xff]
      %v494 = vld [vmem:[%s232 + $0x7d0] sm:$0xff]
      %v495 = vld [vmem:[%s232 + $0x7d8] sm:$0xff]
      %v496 = vld [vmem:[%s232 + $0x7e0] sm:$0xff]
      %v497 = vld [vmem:[%s232 + $0x7e8] sm:$0xff]
      %v498 = vld [vmem:[%s232 + $0x7f0] sm:$0xff]
      %v499 = vld [vmem:[%s232 + $0x7f8] sm:$0xff]
      %v500 = vld [vmem:[%s232 + $0x800] sm:$0xff]
      %v501 = vld [vmem:[%s232 + $0x808] sm:$0xff]
      %v502 = vld [vmem:[%s232 + $0x810] sm:$0xff]
      %v503 = vld [vmem:[%s232 + $0x818] sm:$0xff]
      %v504 = vld [vmem:[%s232 + $0x820] sm:$0xff]
      %v505 = vld [vmem:[%s232 + $0x828] sm:$0xff]
      %v506 = vld [vmem:[%s232 + $0x830] sm:$0xff]
      %v507 = vld [vmem:[%s232 + $0x838] sm:$0xff]
      %v508 = vld [vmem:[%s232 + $0x840] sm:$0xff]
      %v509 = vld [vmem:[%s232 + $0x848] sm:$0xff]
      %v510 = vld [vmem:[%s232 + $0x850] sm:$0xff]
      %v511 = vld [vmem:[%s232 + $0x858] sm:$0xff]
      %v512 = vld [vmem:[%s232 + $0x860] sm:$0xff]
      %v513 = vld [vmem:[%s232 + $0x868] sm:$0xff]
      %v514 = vld [vmem:[%s232 + $0x870] sm:$0xff]
      %v515 = vld [vmem:[%s232 + $0x878] sm:$0xff]
      %v516 = vld [vmem:[%s232 + $0x880] sm:$0xff]
      %v517 = vld [vmem:[%s232 + $0x888] sm:$0xff]
      %v518 = vld [vmem:[%s232 + $0x890] sm:$0xff]
      %v519 = vld [vmem:[%s232 + $0x898] sm:$0xff]
      %v520 = vld [vmem:[%s232 + $0x8a0] sm:$0xff]
      %v521 = vld [vmem:[%s232 + $0x8a8] sm:$0xff]
      %v522 = vld [vmem:[%s232 + $0x8b0] sm:$0xff]
      %v523 = vld [vmem:[%s232 + $0x8b8] sm:$0xff]
      %v524 = vld [vmem:[%s232 + $0x8c0] sm:$0xff]
      %v525 = vld [vmem:[%s232 + $0x8c8] sm:$0xff]
      %v526 = vld [vmem:[%s232 + $0x8d0] sm:$0xff]
      %v527 = vld [vmem:[%s232 + $0x8d8] sm:$0xff]
      %v528 = vld [vmem:[%s232 + $0x8e0] sm:$0xff]
      %v529 = vld [vmem:[%s232 + $0x8e8] sm:$0xff]
      %v530 = vld [vmem:[%s232 + $0x8f0] sm:$0xff]
      %v531 = vld [vmem:[%s232 + $0x8f8] sm:$0xff]
      %v532 = vld [vmem:[%s232 + $0x900] sm:$0xff]
      %v533 = vld [vmem:[%s232 + $0x908] sm:$0xff]
      %v534 = vld [vmem:[%s232 + $0x910] sm:$0xff]
      %v535 = vld [vmem:[%s232 + $0x918] sm:$0xff]
      %v536 = vld [vmem:[%s232 + $0x920] sm:$0xff]
      %v537 = vld [vmem:[%s232 + $0x928] sm:$0xff]
      %v538 = vld [vmem:[%s232 + $0x930] sm:$0xff]
      %v539 = vld [vmem:[%s232 + $0x938] sm:$0xff]
      %v540 = vld [vmem:[%s232 + $0x940] sm:$0xff]
      %v541 = vld [vmem:[%s232 + $0x948] sm:$0xff]
      %v542 = vld [vmem:[%s232 + $0x950] sm:$0xff]
      %v543 = vld [vmem:[%s232 + $0x958] sm:$0xff]
      %v544 = vld [vmem:[%s232 + $0x960] sm:$0xff]
      %v545 = vld [vmem:[%s232 + $0x968] sm:$0xff]
      %v546 = vld [vmem:[%s232 + $0x970] sm:$0xff]
      %v547 = vld [vmem:[%s232 + $0x978] sm:$0xff]
      %v548 = vld [vmem:[%s232 + $0x980] sm:$0xff]
      %v549 = vld [vmem:[%s232 + $0x988] sm:$0xff]
      %v550 = vld [vmem:[%s232 + $0x990] sm:$0xff]
      %v551 = vld [vmem:[%s232 + $0x998] sm:$0xff]
      %v552 = vld [vmem:[%s232 + $0x9a0] sm:$0xff]
      %v553 = vld [vmem:[%s232 + $0x9a8] sm:$0xff]
      %v554 = vld [vmem:[%s232 + $0x9b0] sm:$0xff]
      %v555 = vld [vmem:[%s232 + $0x9b8] sm:$0xff]
      %v556 = vld [vmem:[%s232 + $0x9c0] sm:$0xff]
      %v557 = vld [vmem:[%s232 + $0x9c8] sm:$0xff]
      %v558 = vld [vmem:[%s232 + $0x9d0] sm:$0xff]
      %v559 = vld [vmem:[%s232 + $0x9d8] sm:$0xff]
      %v560 = vld [vmem:[%s232 + $0x9e0] sm:$0xff]
      %v561 = vld [vmem:[%s232 + $0x9e8] sm:$0xff]
      %v562 = vld [vmem:[%s232 + $0x9f0] sm:$0xff]
      %v563 = vld [vmem:[%s232 + $0x9f8] sm:$0xff]
      %v564 = vld [vmem:[%s232 + $0xa00] sm:$0xff]
      %v565 = vld [vmem:[%s232 + $0xa08] sm:$0xff]
      %v566 = vld [vmem:[%s232 + $0xa10] sm:$0xff]
      %v567 = vld [vmem:[%s232 + $0xa18] sm:$0xff]
      %v568 = vld [vmem:[%s232 + $0xa20] sm:$0xff]
      %v569 = vld [vmem:[%s232 + $0xa28] sm:$0xff]
      %v570 = vld [vmem:[%s232 + $0xa30] sm:$0xff]
      %v571 = vld [vmem:[%s232 + $0xa38] sm:$0xff]
      %v572 = vld [vmem:[%s232 + $0xa40] sm:$0xff]
      %v573 = vld [vmem:[%s232 + $0xa48] sm:$0xff]
      %v574 = vld [vmem:[%s232 + $0xa50] sm:$0xff]
      %v575 = vld [vmem:[%s232 + $0xa58] sm:$0xff]
      %v576 = vld [vmem:[%s232 + $0xa60] sm:$0xff]
      %v577 = vld [vmem:[%s232 + $0xa68] sm:$0xff]
      %v578 = vld [vmem:[%s232 + $0xa70] sm:$0xff]
      %v579 = vld [vmem:[%s232 + $0xa78] sm:$0xff]
      %v580 = vld [vmem:[%s232 + $0xa80] sm:$0xff]
      %v581 = vld [vmem:[%s232 + $0xa88] sm:$0xff]
      %v582 = vld [vmem:[%s232 + $0xa90] sm:$0xff]
      %v583 = vld [vmem:[%s232 + $0xa98] sm:$0xff]
      %v584 = vld [vmem:[%s232 + $0xaa0] sm:$0xff]
      %v585 = vld [vmem:[%s232 + $0xaa8] sm:$0xff]
      %v586 = vld [vmem:[%s232 + $0xab0] sm:$0xff]
      %v587 = vld [vmem:[%s232 + $0xab8] sm:$0xff]
      %v588 = vld [vmem:[%s232 + $0xac0] sm:$0xff]
      %v589 = vld [vmem:[%s232 + $0xac8] sm:$0xff]
      %v590 = vld [vmem:[%s232 + $0xad0] sm:$0xff]
      %v591 = vld [vmem:[%s232 + $0xad8] sm:$0xff]
      %v592 = vld [vmem:[%s232 + $0xae0] sm:$0xff]
      %v593 = vld [vmem:[%s232 + $0xae8] sm:$0xff]
      %v594 = vld [vmem:[%s232 + $0xaf0] sm:$0xff]
      %v595 = vld [vmem:[%s232 + $0xaf8] sm:$0xff]
      %v596 = vld [vmem:[%s232 + $0xb00] sm:$0xff]
      %v597 = vld [vmem:[%s232 + $0xb08] sm:$0xff]
      %v598 = vld [vmem:[%s232 + $0xb10] sm:$0xff]
      %v599 = vld [vmem:[%s232 + $0xb18] sm:$0xff]
      %v600 = vld [vmem:[%s232 + $0xb20] sm:$0xff]
      %v601 = vld [vmem:[%s232 + $0xb28] sm:$0xff]
      %v602 = vld [vmem:[%s232 + $0xb30] sm:$0xff]
      %v603 = vld [vmem:[%s232 + $0xb38] sm:$0xff]
      %v604 = vld [vmem:[%s232 + $0xb40] sm:$0xff]
      %v605 = vld [vmem:[%s232 + $0xb48] sm:$0xff]
      %v606 = vld [vmem:[%s232 + $0xb50] sm:$0xff]
      %v607 = vld [vmem:[%s232 + $0xb58] sm:$0xff]
      %v608 = vld [vmem:[%s232 + $0xb60] sm:$0xff]
      %v609 = vld [vmem:[%s232 + $0xb68] sm:$0xff]
      %v610 = vld [vmem:[%s232 + $0xb70] sm:$0xff]
      %v611 = vld [vmem:[%s232 + $0xb78] sm:$0xff]
      %v612 = vld [vmem:[%s232 + $0xb80] sm:$0xff]
      %v613 = vld [vmem:[%s232 + $0xb88] sm:$0xff]
      %v614 = vld [vmem:[%s232 + $0xb90] sm:$0xff]
      %v615 = vld [vmem:[%s232 + $0xb98] sm:$0xff]
      %v616 = vld [vmem:[%s232 + $0xba0] sm:$0xff]
      %v617 = vld [vmem:[%s232 + $0xba8] sm:$0xff]
      %v618 = vld [vmem:[%s232 + $0xbb0] sm:$0xff]
      %v619 = vld [vmem:[%s232 + $0xbb8] sm:$0xff]
      %v620 = vld [vmem:[%s232 + $0xbc0] sm:$0xff]
      %v621 = vld [vmem:[%s232 + $0xbc8] sm:$0xff]
      %v622 = vld [vmem:[%s232 + $0xbd0] sm:$0xff]
      %v623 = vld [vmem:[%s232 + $0xbd8] sm:$0xff]
      %v624 = vld [vmem:[%s232 + $0xbe0] sm:$0xff]
      %v625 = vld [vmem:[%s232 + $0xbe8] sm:$0xff]
      %v626 = vld [vmem:[%s232 + $0xbf0] sm:$0xff]
      %v627 = vld [vmem:[%s232 + $0xbf8] sm:$0xff]
      %v628 = vld [vmem:[%s232 + $0xc00] sm:$0xff]
      %v629 = vld [vmem:[%s232 + $0xc08] sm:$0xff]
      %v630 = vld [vmem:[%s232 + $0xc10] sm:$0xff]
      %v631 = vld [vmem:[%s232 + $0xc18] sm:$0xff]
      %v632 = vld [vmem:[%s232 + $0xc20] sm:$0xff]
      %v633 = vld [vmem:[%s232 + $0xc28] sm:$0xff]
      %v634 = vld [vmem:[%s232 + $0xc30] sm:$0xff]
      %v635 = vld [vmem:[%s232 + $0xc38] sm:$0xff]
      %v636 = vld [vmem:[%s232 + $0xc40] sm:$0xff]
      %v637 = vld [vmem:[%s232 + $0xc48] sm:$0xff]
      %v638 = vld [vmem:[%s232 + $0xc50] sm:$0xff]
      %v639 = vld [vmem:[%s232 + $0xc58] sm:$0xff]
      %v640 = vld [vmem:[%s232 + $0xc60] sm:$0xff]
      %v641 = vld [vmem:[%s232 + $0xc68] sm:$0xff]
      %v642 = vld [vmem:[%s232 + $0xc70] sm:$0xff]
      %v643 = vld [vmem:[%s232 + $0xc78] sm:$0xff]
      %v644 = vld [vmem:[%s232 + $0xc80] sm:$0xff]
      %v645 = vld [vmem:[%s232 + $0xc88] sm:$0xff]
      %v646 = vld [vmem:[%s232 + $0xc90] sm:$0xff]
      %v647 = vld [vmem:[%s232 + $0xc98] sm:$0xff]
      %v648 = vld [vmem:[%s232 + $0xca0] sm:$0xff]
      %v649 = vld [vmem:[%s232 + $0xca8] sm:$0xff]
      %v650 = vld [vmem:[%s232 + $0xcb0] sm:$0xff]
      %v651 = vld [vmem:[%s232 + $0xcb8] sm:$0xff]
      %v652 = vld [vmem:[%s232 + $0xcc0] sm:$0xff]
      %v653 = vld [vmem:[%s232 + $0xcc8] sm:$0xff]
      %v654 = vld [vmem:[%s232 + $0xcd0] sm:$0xff]
      %v655 = vld [vmem:[%s232 + $0xcd8] sm:$0xff]
      %v656 = vld [vmem:[%s232 + $0xce0] sm:$0xff]
      %v657 = vld [vmem:[%s232 + $0xce8] sm:$0xff]
      %v658 = vld [vmem:[%s232 + $0xcf0] sm:$0xff]
      %v659 = vld [vmem:[%s232 + $0xcf8] sm:$0xff]
      %v660 = vld [vmem:[%s232 + $0xd00] sm:$0xff]
      %v661 = vld [vmem:[%s232 + $0xd08] sm:$0xff]
      %v662 = vld [vmem:[%s232 + $0xd10] sm:$0xff]
      %v663 = vld [vmem:[%s232 + $0xd18] sm:$0xff]
      %v664 = vld [vmem:[%s232 + $0xd20] sm:$0xff]
      %v665 = vld [vmem:[%s232 + $0xd28] sm:$0xff]
      %v666 = vld [vmem:[%s232 + $0xd30] sm:$0xff]
      %v667 = vld [vmem:[%s232 + $0xd38] sm:$0xff]
      %v668 = vld [vmem:[%s232 + $0xd40] sm:$0xff]
      %v669 = vld [vmem:[%s232 + $0xd48] sm:$0xff]
      %v670 = vld [vmem:[%s232 + $0xd50] sm:$0xff]
      %v671 = vld [vmem:[%s232 + $0xd58] sm:$0xff]
      %v672 = vld [vmem:[%s232 + $0xd60] sm:$0xff]
      %v673 = vld [vmem:[%s232 + $0xd68] sm:$0xff]
      %v674 = vld [vmem:[%s232 + $0xd70] sm:$0xff]
      %v675 = vld [vmem:[%s232 + $0xd78] sm:$0xff]
      %v676 = vld [vmem:[%s232 + $0xd80] sm:$0xff]
      %v677 = vld [vmem:[%s232 + $0xd88] sm:$0xff]
      %v678 = vld [vmem:[%s232 + $0xd90] sm:$0xff]
      %v679 = vld [vmem:[%s232 + $0xd98] sm:$0xff]
      %v680 = vld [vmem:[%s232 + $0xda0] sm:$0xff]
      %v681 = vld [vmem:[%s232 + $0xda8] sm:$0xff]
      %v682 = vld [vmem:[%s232 + $0xdb0] sm:$0xff]
      %v683 = vld [vmem:[%s232 + $0xdb8] sm:$0xff]
      %v684 = vld [vmem:[%s232 + $0xdc0] sm:$0xff]
      %v685 = vld [vmem:[%s232 + $0xdc8] sm:$0xff]
      %v686 = vld [vmem:[%s232 + $0xdd0] sm:$0xff]
      %v687 = vld [vmem:[%s232 + $0xdd8] sm:$0xff]
      %v688 = vld [vmem:[%s232 + $0xde0] sm:$0xff]
      %v689 = vld [vmem:[%s232 + $0xde8] sm:$0xff]
      %v690 = vld [vmem:[%s232 + $0xdf0] sm:$0xff]
      %v691 = vld [vmem:[%s232 + $0xdf8] sm:$0xff]
      %v692 = vld [vmem:[%s232 + $0xe00] sm:$0xff]
      %v693 = vld [vmem:[%s232 + $0xe08] sm:$0xff]
      %v694 = vld [vmem:[%s232 + $0xe10] sm:$0xff]
      %v695 = vld [vmem:[%s232 + $0xe18] sm:$0xff]
      %v696 = vld [vmem:[%s232 + $0xe20] sm:$0xff]
      %v697 = vld [vmem:[%s232 + $0xe28] sm:$0xff]
      %v698 = vld [vmem:[%s232 + $0xe30] sm:$0xff]
      %v699 = vld [vmem:[%s232 + $0xe38] sm:$0xff]
      %v700 = vld [vmem:[%s232 + $0xe40] sm:$0xff]
      %v701 = vld [vmem:[%s232 + $0xe48] sm:$0xff]
      %v702 = vld [vmem:[%s232 + $0xe50] sm:$0xff]
      %v703 = vld [vmem:[%s232 + $0xe58] sm:$0xff]
      %v704 = vld [vmem:[%s232 + $0xe60] sm:$0xff]
      %v705 = vld [vmem:[%s232 + $0xe68] sm:$0xff]
      %v706 = vld [vmem:[%s232 + $0xe70] sm:$0xff]
      %v707 = vld [vmem:[%s232 + $0xe78] sm:$0xff]
      %v708 = vld [vmem:[%s232 + $0xe80] sm:$0xff]
      %v709 = vld [vmem:[%s232 + $0xe88] sm:$0xff]
      %v710 = vld [vmem:[%s232 + $0xe90] sm:$0xff]
      %v711 = vld [vmem:[%s232 + $0xe98] sm:$0xff]
      %v712 = vld [vmem:[%s232 + $0xea0] sm:$0xff]
      %v713 = vld [vmem:[%s232 + $0xea8] sm:$0xff]
      %v714 = vld [vmem:[%s232 + $0xeb0] sm:$0xff]
      %v715 = vld [vmem:[%s232 + $0xeb8] sm:$0xff]
      %v716 = vld [vmem:[%s232 + $0xec0] sm:$0xff]
      %v717 = vld [vmem:[%s232 + $0xec8] sm:$0xff]
      %v718 = vld [vmem:[%s232 + $0xed0] sm:$0xff]
      %v719 = vld [vmem:[%s232 + $0xed8] sm:$0xff]
      %v720 = vld [vmem:[%s232 + $0xee0] sm:$0xff]
      %v721 = vld [vmem:[%s232 + $0xee8] sm:$0xff]
      %v722 = vld [vmem:[%s232 + $0xef0] sm:$0xff]
      %v723 = vld [vmem:[%s232 + $0xef8] sm:$0xff]
      %v724 = vld [vmem:[%s232 + $0xf00] sm:$0xff]
      %v725 = vld [vmem:[%s232 + $0xf08] sm:$0xff]
      %v726 = vld [vmem:[%s232 + $0xf10] sm:$0xff]
      %v727 = vld [vmem:[%s232 + $0xf18] sm:$0xff]
      %v728 = vld [vmem:[%s232 + $0xf20] sm:$0xff]
      %v729 = vld [vmem:[%s232 + $0xf28] sm:$0xff]
      %v730 = vld [vmem:[%s232 + $0xf30] sm:$0xff]
      %v731 = vld [vmem:[%s232 + $0xf38] sm:$0xff]
      %v732 = vld [vmem:[%s232 + $0xf40] sm:$0xff]
      %v733 = vld [vmem:[%s232 + $0xf48] sm:$0xff]
      %v734 = vld [vmem:[%s232 + $0xf50] sm:$0xff]
      %v735 = vld [vmem:[%s232 + $0xf58] sm:$0xff]
      %v736 = vld [vmem:[%s232 + $0xf60] sm:$0xff]
      %v737 = vld [vmem:[%s232 + $0xf68] sm:$0xff]
      %v738 = vld [vmem:[%s232 + $0xf70] sm:$0xff]
      %v739 = vld [vmem:[%s232 + $0xf78] sm:$0xff]
      %v740 = vld [vmem:[%s232 + $0xf80] sm:$0xff]
      %v741 = vld [vmem:[%s232 + $0xf88] sm:$0xff]
      %v742 = vld [vmem:[%s232 + $0xf90] sm:$0xff]
      %v743 = vld [vmem:[%s232 + $0xf98] sm:$0xff]
      %v744 = vld [vmem:[%s232 + $0xfa0] sm:$0xff]
      %v745 = vld [vmem:[%s232 + $0xfa8] sm:$0xff]
      %v746 = vld [vmem:[%s232 + $0xfb0] sm:$0xff]
      %v747 = vld [vmem:[%s232 + $0xfb8] sm:$0xff]
      %v748 = vld [vmem:[%s232 + $0xfc0] sm:$0xff]
      %v749 = vld [vmem:[%s232 + $0xfc8] sm:$0xff]
      %v750 = vld [vmem:[%s232 + $0xfd0] sm:$0xff]
      %v751 = vld [vmem:[%s232 + $0xfd8] sm:$0xff]
      %v752 = vld [vmem:[%s232 + $0xfe0] sm:$0xff]
      %v753 = vld [vmem:[%s232 + $0xfe8] sm:$0xff]
      %v754 = vld [vmem:[%s232 + $0xff0] sm:$0xff]
      %v755 = vld [vmem:[%s232 + $0xff8] sm:$0xff]
      %v756 = vld [vmem:[%s232 + $0x1000] sm:$0xff]
      %v757 = vld [vmem:[%s232 + $0x1008] sm:$0xff]
      %v758 = vld [vmem:[%s232 + $0x1010] sm:$0xff]
      %v759 = vld [vmem:[%s232 + $0x1018] sm:$0xff]
      %v760 = vld [vmem:[%s232 + $0x1020] sm:$0xff]
      %v761 = vld [vmem:[%s232 + $0x1028] sm:$0xff]
      %v762 = vld [vmem:[%s232 + $0x1030] sm:$0xff]
      %v763 = vld [vmem:[%s232 + $0x1038] sm:$0xff]
      %v764 = vld [vmem:[%s232 + $0x1040] sm:$0xff]
      %v765 = vld [vmem:[%s232 + $0x1048] sm:$0xff]
      %v766 = vld [vmem:[%s232 + $0x1050] sm:$0xff]
      %v767 = vld [vmem:[%s232 + $0x1058] sm:$0xff]
      %v768 = vld [vmem:[%s232 + $0x1060] sm:$0xff]
      %v769 = vld [vmem:[%s232 + $0x1068] sm:$0xff]
      %v770 = vld [vmem:[%s232 + $0x1070] sm:$0xff]
      %v771 = vld [vmem:[%s232 + $0x1078] sm:$0xff]
      %v772 = vld [vmem:[%s232 + $0x1080] sm:$0xff]
      %v773 = vld [vmem:[%s232 + $0x1088] sm:$0xff]
      %v774 = vld [vmem:[%s232 + $0x1090] sm:$0xff]
      %v775 = vld [vmem:[%s232 + $0x1098] sm:$0xff]
      %v776 = vld [vmem:[%s232 + $0x10a0] sm:$0xff]
      %v777 = vld [vmem:[%s232 + $0x10a8] sm:$0xff]
      %v778 = vld [vmem:[%s232 + $0x10b0] sm:$0xff]
      %v779 = vld [vmem:[%s232 + $0x10b8] sm:$0xff]
      %v780 = vld [vmem:[%s232 + $0x10c0] sm:$0xff]
      %v781 = vld [vmem:[%s232 + $0x10c8] sm:$0xff]
      %v782 = vld [vmem:[%s232 + $0x10d0] sm:$0xff]
      %v783 = vld [vmem:[%s232 + $0x10d8] sm:$0xff]
      %v784 = vld [vmem:[%s232 + $0x10e0] sm:$0xff]
      %v785 = vld [vmem:[%s232 + $0x10e8] sm:$0xff]
      %v786 = vld [vmem:[%s232 + $0x10f0] sm:$0xff]
      %v787 = vld [vmem:[%s232 + $0x10f8] sm:$0xff]
      %v788 = vld [vmem:[%s232 + $0x1100] sm:$0xff]
      %v789 = vld [vmem:[%s232 + $0x1108] sm:$0xff]
      %v790 = vld [vmem:[%s232 + $0x1110] sm:$0xff]
      %v791 = vld [vmem:[%s232 + $0x1118] sm:$0xff]
      %v792 = vld [vmem:[%s232 + $0x1120] sm:$0xff]
      %v793 = vld [vmem:[%s232 + $0x1128] sm:$0xff]
      %v794 = vld [vmem:[%s232 + $0x1130] sm:$0xff]
      %v795 = vld [vmem:[%s232 + $0x1138] sm:$0xff]
      %v796 = vld [vmem:[%s232 + $0x1140] sm:$0xff]
      %v797 = vld [vmem:[%s232 + $0x1148] sm:$0xff]
      %v798 = vld [vmem:[%s232 + $0x1150] sm:$0xff]
      %v799 = vld [vmem:[%s232 + $0x1158] sm:$0xff]
      %v800 = vld [vmem:[%s232 + $0x1160] sm:$0xff]
      %v801 = vld [vmem:[%s232 + $0x1168] sm:$0xff]
      %v802 = vld [vmem:[%s232 + $0x1170] sm:$0xff]
      %v803 = vld [vmem:[%s232 + $0x1178] sm:$0xff]
      %v804 = vld [vmem:[%s232 + $0x1180] sm:$0xff]
      %v805 = vld [vmem:[%s232 + $0x1188] sm:$0xff]
      %v806 = vld [vmem:[%s232 + $0x1190] sm:$0xff]
      %v807 = vld [vmem:[%s232 + $0x1198] sm:$0xff]
      %v808 = vld [vmem:[%s232 + $0x11a0] sm:$0xff]
      %v809 = vld [vmem:[%s232 + $0x11a8] sm:$0xff]
      %v810 = vld [vmem:[%s232 + $0x11b0] sm:$0xff]
      %v811 = vld [vmem:[%s232 + $0x11b8] sm:$0xff]
      %v812 = vld [vmem:[%s232 + $0x11c0] sm:$0xff]
      %v813 = vld [vmem:[%s232 + $0x11c8] sm:$0xff]
      %v814 = vld [vmem:[%s232 + $0x11d0] sm:$0xff]
      %v815 = vld [vmem:[%s232 + $0x11d8] sm:$0xff]
      %v816 = vld [vmem:[%s232 + $0x11e0] sm:$0xff]
      %v817 = vld [vmem:[%s232 + $0x11e8] sm:$0xff]
      %v818 = vld [vmem:[%s232 + $0x11f0] sm:$0xff]
      %v819 = vld [vmem:[%s232 + $0x11f8] sm:$0xff]
      %v820 = vld [vmem:[%s232 + $0x1200] sm:$0xff]
      %v821 = vld [vmem:[%s232 + $0x1208] sm:$0xff]
      %v822 = vld [vmem:[%s232 + $0x1210] sm:$0xff]
      %v823 = vld [vmem:[%s232 + $0x1218] sm:$0xff]
      %v824 = vld [vmem:[%s232 + $0x1220] sm:$0xff]
      %v825 = vld [vmem:[%s232 + $0x1228] sm:$0xff]
      %v826 = vld [vmem:[%s232 + $0x1230] sm:$0xff]
      %v827 = vld [vmem:[%s232 + $0x1238] sm:$0xff]
      %v828 = vld [vmem:[%s232 + $0x1240] sm:$0xff]
      %v829 = vld [vmem:[%s232 + $0x1248] sm:$0xff]
      %v830 = vld [vmem:[%s232 + $0x1250] sm:$0xff]
      %v831 = vld [vmem:[%s232 + $0x1258] sm:$0xff]
      %v832 = vld [vmem:[%s232 + $0x1260] sm:$0xff]
      %v833 = vld [vmem:[%s232 + $0x1268] sm:$0xff]
      %v834 = vld [vmem:[%s232 + $0x1270] sm:$0xff]
      %v835 = vld [vmem:[%s232 + $0x1278] sm:$0xff]
      %v836 = vld [vmem:[%s232 + $0x1280] sm:$0xff]
      %v837 = vld [vmem:[%s232 + $0x1288] sm:$0xff]
      %v838 = vld [vmem:[%s232 + $0x1290] sm:$0xff]
      %v839 = vld [vmem:[%s232 + $0x1298] sm:$0xff]
      %v840 = vld [vmem:[%s232 + $0x12a0] sm:$0xff]
      %v841 = vld [vmem:[%s232 + $0x12a8] sm:$0xff]
      %v842 = vld [vmem:[%s232 + $0x12b0] sm:$0xff]
      %v843 = vld [vmem:[%s232 + $0x12b8] sm:$0xff]
      %v844 = vld [vmem:[%s232 + $0x12c0] sm:$0xff]
      %v845 = vld [vmem:[%s232 + $0x12c8] sm:$0xff]
      %v846 = vld [vmem:[%s232 + $0x12d0] sm:$0xff]
      %v847 = vld [vmem:[%s232 + $0x12d8] sm:$0xff]
      %v848 = vld [vmem:[%s232 + $0x12e0] sm:$0xff]
      %v849 = vld [vmem:[%s232 + $0x12e8] sm:$0xff]
      %v850 = vld [vmem:[%s232 + $0x12f0] sm:$0xff]
      %v851 = vld [vmem:[%s232 + $0x12f8] sm:$0xff]
      %v852 = vld [vmem:[%s232 + $0x1300] sm:$0xff]
      %v853 = vld [vmem:[%s232 + $0x1308] sm:$0xff]
      %v854 = vld [vmem:[%s232 + $0x1310] sm:$0xff]
      %v855 = vld [vmem:[%s232 + $0x1318] sm:$0xff]
      %v856 = vld [vmem:[%s232 + $0x1320] sm:$0xff]
      %v857 = vld [vmem:[%s232 + $0x1328] sm:$0xff]
      %v858 = vld [vmem:[%s232 + $0x1330] sm:$0xff]
      %v859 = vld [vmem:[%s232 + $0x1338] sm:$0xff]
      %v860 = vld [vmem:[%s232 + $0x1340] sm:$0xff]
      %v861 = vld [vmem:[%s232 + $0x1348] sm:$0xff]
      %v862 = vld [vmem:[%s232 + $0x1350] sm:$0xff]
      %v863 = vld [vmem:[%s232 + $0x1358] sm:$0xff]
      %v864 = vld [vmem:[%s232 + $0x1360] sm:$0xff]
      %v865 = vld [vmem:[%s232 + $0x1368] sm:$0xff]
      %v866 = vld [vmem:[%s232 + $0x1370] sm:$0xff]
      %v867 = vld [vmem:[%s232 + $0x1378] sm:$0xff]
      %v868 = vld [vmem:[%s232 + $0x1380] sm:$0xff]
      %v869 = vld [vmem:[%s232 + $0x1388] sm:$0xff]
      %v870 = vld [vmem:[%s232 + $0x1390] sm:$0xff]
      %v871 = vld [vmem:[%s232 + $0x1398] sm:$0xff]
      %v872 = vld [vmem:[%s232 + $0x13a0] sm:$0xff]
      %v873 = vld [vmem:[%s232 + $0x13a8] sm:$0xff]
      %v874 = vld [vmem:[%s232 + $0x13b0] sm:$0xff]
      %v875 = vld [vmem:[%s232 + $0x13b8] sm:$0xff]
      %v876 = vld [vmem:[%s232 + $0x13c0] sm:$0xff]
      %v877 = vld [vmem:[%s232 + $0x13c8] sm:$0xff]
      %v878 = vld [vmem:[%s232 + $0x13d0] sm:$0xff]
      %v879 = vld [vmem:[%s232 + $0x13d8] sm:$0xff]
      %v880 = vld [vmem:[%s232 + $0x13e0] sm:$0xff]
      %v881 = vld [vmem:[%s232 + $0x13e8] sm:$0xff]
      %v882 = vld [vmem:[%s232 + $0x13f0] sm:$0xff]
      %v883 = vld [vmem:[%s232 + $0x13f8] sm:$0xff]
      %v884 = vld [vmem:[%s232 + $0x1400] sm:$0xff]
      %v885 = vld [vmem:[%s232 + $0x1408] sm:$0xff]
      %v886 = vld [vmem:[%s232 + $0x1410] sm:$0xff]
      %v887 = vld [vmem:[%s232 + $0x1418] sm:$0xff]
      %v888 = vld [vmem:[%s232 + $0x1420] sm:$0xff]
      %v889 = vld [vmem:[%s232 + $0x1428] sm:$0xff]
      %v890 = vld [vmem:[%s232 + $0x1430] sm:$0xff]
      %v891 = vld [vmem:[%s232 + $0x1438] sm:$0xff]
      %v892 = vld [vmem:[%s232 + $0x1440] sm:$0xff]
      %v893 = vld [vmem:[%s232 + $0x1448] sm:$0xff]
      %v894 = vld [vmem:[%s232 + $0x1450] sm:$0xff]
      %v895 = vld [vmem:[%s232 + $0x1458] sm:$0xff]
      %v896 = vld [vmem:[%s232 + $0x1460] sm:$0xff]
      %v897 = vld [vmem:[%s232 + $0x1468] sm:$0xff]
      %v898 = vld [vmem:[%s232 + $0x1470] sm:$0xff]
      %v899 = vld [vmem:[%s232 + $0x1478] sm:$0xff]
      %v900 = vld [vmem:[%s232 + $0x1480] sm:$0xff]
      %v901 = vld [vmem:[%s232 + $0x1488] sm:$0xff]
      %v902 = vld [vmem:[%s232 + $0x1490] sm:$0xff]
      %v903 = vld [vmem:[%s232 + $0x1498] sm:$0xff]
      %v904 = vld [vmem:[%s232 + $0x14a0] sm:$0xff]
      %v905 = vld [vmem:[%s232 + $0x14a8] sm:$0xff]
      %v906 = vld [vmem:[%s232 + $0x14b0] sm:$0xff]
      %v907 = vld [vmem:[%s232 + $0x14b8] sm:$0xff]
      %v908 = vld [vmem:[%s232 + $0x14c0] sm:$0xff]
      %v909 = vld [vmem:[%s232 + $0x14c8] sm:$0xff]
      %v910 = vld [vmem:[%s232 + $0x14d0] sm:$0xff]
      %v911 = vld [vmem:[%s232 + $0x14d8] sm:$0xff]
      %v912 = vld [vmem:[%s232 + $0x14e0] sm:$0xff]
      %v913 = vld [vmem:[%s232 + $0x14e8] sm:$0xff]
      %v914 = vld [vmem:[%s232 + $0x14f0] sm:$0xff]
      %v915 = vld [vmem:[%s232 + $0x14f8] sm:$0xff]
      %v916 = vld [vmem:[%s232 + $0x1500] sm:$0xff]
      %v917 = vld [vmem:[%s232 + $0x1508] sm:$0xff]
      %v918 = vld [vmem:[%s232 + $0x1510] sm:$0xff]
      %v919 = vld [vmem:[%s232 + $0x1518] sm:$0xff]
      %v920 = vld [vmem:[%s232 + $0x1520] sm:$0xff]
      %v921 = vld [vmem:[%s232 + $0x1528] sm:$0xff]
      %v922 = vld [vmem:[%s232 + $0x1530] sm:$0xff]
      %v923 = vld [vmem:[%s232 + $0x1538] sm:$0xff]
      %v924 = vld [vmem:[%s232 + $0x1540] sm:$0xff]
      %v925 = vld [vmem:[%s232 + $0x1548] sm:$0xff]
      %v926 = vld [vmem:[%s232 + $0x1550] sm:$0xff]
      %v927 = vld [vmem:[%s232 + $0x1558] sm:$0xff]
      %v928 = vld [vmem:[%s232 + $0x1560] sm:$0xff]
      %v929 = vld [vmem:[%s232 + $0x1568] sm:$0xff]
      %v930 = vld [vmem:[%s232 + $0x1570] sm:$0xff]
      %v931 = vld [vmem:[%s232 + $0x1578] sm:$0xff]
      %v932 = vld [vmem:[%s232 + $0x1580] sm:$0xff]
      %v933 = vld [vmem:[%s232 + $0x1588] sm:$0xff]
      %v934 = vld [vmem:[%s232 + $0x1590] sm:$0xff]
      %v935 = vld [vmem:[%s232 + $0x1598] sm:$0xff]
      %v936 = vld [vmem:[%s232 + $0x15a0] sm:$0xff]
      %v937 = vld [vmem:[%s232 + $0x15a8] sm:$0xff]
      %v938 = vld [vmem:[%s232 + $0x15b0] sm:$0xff]
      %v939 = vld [vmem:[%s232 + $0x15b8] sm:$0xff]
      %v940 = vld [vmem:[%s232 + $0x15c0] sm:$0xff]
      %v941 = vld [vmem:[%s232 + $0x15c8] sm:$0xff]
      %v942 = vld [vmem:[%s232 + $0x15d0] sm:$0xff]
      %v943 = vld [vmem:[%s232 + $0x15d8] sm:$0xff]
      %v944 = vld [vmem:[%s232 + $0x15e0] sm:$0xff]
      %v945 = vld [vmem:[%s232 + $0x15e8] sm:$0xff]
      %v946 = vld [vmem:[%s232 + $0x15f0] sm:$0xff]
      %v947 = vld [vmem:[%s232 + $0x15f8] sm:$0xff]
      %v948 = vld [vmem:[%s232 + $0x1600] sm:$0xff]
      %v949 = vld [vmem:[%s232 + $0x1608] sm:$0xff]
      %v950 = vld [vmem:[%s232 + $0x1610] sm:$0xff]
      %v951 = vld [vmem:[%s232 + $0x1618] sm:$0xff]
      %v952 = vld [vmem:[%s232 + $0x1620] sm:$0xff]
      %v953 = vld [vmem:[%s232 + $0x1628] sm:$0xff]
      %v954 = vld [vmem:[%s232 + $0x1630] sm:$0xff]
      %v955 = vld [vmem:[%s232 + $0x1638] sm:$0xff]
      %v956 = vld [vmem:[%s232 + $0x1640] sm:$0xff]
      %v957 = vld [vmem:[%s232 + $0x1648] sm:$0xff]
      %v958 = vld [vmem:[%s232 + $0x1650] sm:$0xff]
      %v959 = vld [vmem:[%s232 + $0x1658] sm:$0xff]
      %v960 = vld [vmem:[%s232 + $0x1660] sm:$0xff]
      %v961 = vld [vmem:[%s232 + $0x1668] sm:$0xff]
      %v962 = vld [vmem:[%s232 + $0x1670] sm:$0xff]
      %v963 = vld [vmem:[%s232 + $0x1678] sm:$0xff]
      %v964 = vld [vmem:[%s232 + $0x1680] sm:$0xff]
      %v965 = vld [vmem:[%s232 + $0x1688] sm:$0xff]
      %v966 = vld [vmem:[%s232 + $0x1690] sm:$0xff]
      %v967 = vld [vmem:[%s232 + $0x1698] sm:$0xff]
      %v968 = vld [vmem:[%s232 + $0x16a0] sm:$0xff]
      %v969 = vld [vmem:[%s232 + $0x16a8] sm:$0xff]
      %v970 = vld [vmem:[%s232 + $0x16b0] sm:$0xff]
      %v971 = vld [vmem:[%s232 + $0x16b8] sm:$0xff]
      %v972 = vld [vmem:[%s232 + $0x16c0] sm:$0xff]
      %v973 = vld [vmem:[%s232 + $0x16c8] sm:$0xff]
      %v974 = vld [vmem:[%s232 + $0x16d0] sm:$0xff]
      %v975 = vld [vmem:[%s232 + $0x16d8] sm:$0xff]
      %v976 = vld [vmem:[%s232 + $0x16e0] sm:$0xff]
      %v977 = vld [vmem:[%s232 + $0x16e8] sm:$0xff]
      %v978 = vld [vmem:[%s232 + $0x16f0] sm:$0xff]
      %v979 = vld [vmem:[%s232 + $0x16f8] sm:$0xff]
      %v980 = vld [vmem:[%s232 + $0x1700] sm:$0xff]
      %v981 = vld [vmem:[%s232 + $0x1708] sm:$0xff]
      %v982 = vld [vmem:[%s232 + $0x1710] sm:$0xff]
      %v983 = vld [vmem:[%s232 + $0x1718] sm:$0xff]
      %v984 = vld [vmem:[%s232 + $0x1720] sm:$0xff]
      %v985 = vld [vmem:[%s232 + $0x1728] sm:$0xff]
      %v986 = vld [vmem:[%s232 + $0x1730] sm:$0xff]
      %v987 = vld [vmem:[%s232 + $0x1738] sm:$0xff]
      %v988 = vld [vmem:[%s232 + $0x1740] sm:$0xff]
      %v989 = vld [vmem:[%s232 + $0x1748] sm:$0xff]
      %v990 = vld [vmem:[%s232 + $0x1750] sm:$0xff]
      %v991 = vld [vmem:[%s232 + $0x1758] sm:$0xff]
      %v992 = vld [vmem:[%s232 + $0x1760] sm:$0xff]
      %v993 = vld [vmem:[%s232 + $0x1768] sm:$0xff]
      %v994 = vld [vmem:[%s232 + $0x1770] sm:$0xff]
      %v995 = vld [vmem:[%s232 + $0x1778] sm:$0xff]
      %v996 = vld [vmem:[%s232 + $0x1780] sm:$0xff]
      %v997 = vld [vmem:[%s232 + $0x1788] sm:$0xff]
      %v998 = vld [vmem:[%s232 + $0x1790] sm:$0xff]
      %v999 = vld [vmem:[%s232 + $0x1798] sm:$0xff]
      %v1000 = vld [vmem:[%s232 + $0x17a0] sm:$0xff]
      %v1001 = vld [vmem:[%s232 + $0x17a8] sm:$0xff]
      %v1002 = vld [vmem:[%s232 + $0x17b0] sm:$0xff]
      %v1003 = vld [vmem:[%s232 + $0x17b8] sm:$0xff]
      %v1004 = vld [vmem:[%s232 + $0x17c0] sm:$0xff]
      %v1005 = vld [vmem:[%s232 + $0x17c8] sm:$0xff]
      %v1006 = vld [vmem:[%s232 + $0x17d0] sm:$0xff]
      %v1007 = vld [vmem:[%s232 + $0x17d8] sm:$0xff]
      %v1008 = vld [vmem:[%s232 + $0x17e0] sm:$0xff]
      %v1009 = vld [vmem:[%s232 + $0x17e8] sm:$0xff]
      %v1010 = vld [vmem:[%s232 + $0x17f0] sm:$0xff]
      %v1011 = vld [vmem:[%s232 + $0x17f8] sm:$0xff]
      %v1012 = vld [vmem:[%s232 + $0x1800] sm:$0xff]
      %v1013 = vld [vmem:[%s232 + $0x1808] sm:$0xff]
      %v1014 = vld [vmem:[%s232 + $0x1810] sm:$0xff]
      %v1015 = vld [vmem:[%s232 + $0x1818] sm:$0xff]
      %v1016 = vld [vmem:[%s232 + $0x1820] sm:$0xff]
      %v1017 = vld [vmem:[%s232 + $0x1828] sm:$0xff]
      %v1018 = vld [vmem:[%s232 + $0x1830] sm:$0xff]
      %v1019 = vld [vmem:[%s232 + $0x1838] sm:$0xff]
      %v1020 = vld [vmem:[%s232 + $0x1840] sm:$0xff]
      %v1021 = vld [vmem:[%s232 + $0x1848] sm:$0xff]
      %v1022 = vld [vmem:[%s232 + $0x1850] sm:$0xff]
      %v1023 = vld [vmem:[%s232 + $0x1858] sm:$0xff]
      %v1024 = vld [vmem:[%s232 + $0x1860] sm:$0xff]
      %v1025 = vld [vmem:[%s232 + $0x1868] sm:$0xff]
      %v1026 = vld [vmem:[%s232 + $0x1870] sm:$0xff]
      %v1027 = vld [vmem:[%s232 + $0x1878] sm:$0xff]
      %v1028 = vld [vmem:[%s232 + $0x1880] sm:$0xff]
      %v1029 = vld [vmem:[%s232 + $0x1888] sm:$0xff]
      %v1030 = vld [vmem:[%s232 + $0x1890] sm:$0xff]
      %v1031 = vld [vmem:[%s232 + $0x1898] sm:$0xff]
      %v1032 = vld [vmem:[%s232 + $0x18a0] sm:$0xff]
      %v1033 = vld [vmem:[%s232 + $0x18a8] sm:$0xff]
      %v1034 = vld [vmem:[%s232 + $0x18b0] sm:$0xff]
      %v1035 = vld [vmem:[%s232 + $0x18b8] sm:$0xff]
      %v1036 = vld [vmem:[%s232 + $0x18c0] sm:$0xff]
      %v1037 = vld [vmem:[%s232 + $0x18c8] sm:$0xff]
      %v1038 = vld [vmem:[%s232 + $0x18d0] sm:$0xff]
      %v1039 = vld [vmem:[%s232 + $0x18d8] sm:$0xff]
      %v1040 = vld [vmem:[%s232 + $0x18e0] sm:$0xff]
      %v1041 = vld [vmem:[%s232 + $0x18e8] sm:$0xff]
      %v1042 = vld [vmem:[%s232 + $0x18f0] sm:$0xff]
      %v1043 = vld [vmem:[%s232 + $0x18f8] sm:$0xff]
      %v1044 = vld [vmem:[%s232 + $0x1900] sm:$0xff]
      %v1045 = vld [vmem:[%s232 + $0x1908] sm:$0xff]
      %v1046 = vld [vmem:[%s232 + $0x1910] sm:$0xff]
      %v1047 = vld [vmem:[%s232 + $0x1918] sm:$0xff]
      %v1048 = vld [vmem:[%s232 + $0x1920] sm:$0xff]
      %v1049 = vld [vmem:[%s232 + $0x1928] sm:$0xff]
      %v1050 = vld [vmem:[%s232 + $0x1930] sm:$0xff]
      %v1051 = vld [vmem:[%s232 + $0x1938] sm:$0xff]
      %v1052 = vld [vmem:[%s232 + $0x1940] sm:$0xff]
      %v1053 = vld [vmem:[%s232 + $0x1948] sm:$0xff]
      %v1054 = vld [vmem:[%s232 + $0x1950] sm:$0xff]
      %v1055 = vld [vmem:[%s232 + $0x1958] sm:$0xff]
      %v1056 = vld [vmem:[%s232 + $0x1960] sm:$0xff]
      %v1057 = vld [vmem:[%s232 + $0x1968] sm:$0xff]
      %v1058 = vld [vmem:[%s232 + $0x1970] sm:$0xff]
      %v1059 = vld [vmem:[%s232 + $0x1978] sm:$0xff]
      %v1060 = vld [vmem:[%s232 + $0x1980] sm:$0xff]
      %v1061 = vld [vmem:[%s232 + $0x1988] sm:$0xff]
      %v1062 = vld [vmem:[%s232 + $0x1990] sm:$0xff]
      %v1063 = vld [vmem:[%s232 + $0x1998] sm:$0xff]
      %v1064 = vld [vmem:[%s232 + $0x19a0] sm:$0xff]
      %v1065 = vld [vmem:[%s232 + $0x19a8] sm:$0xff]
      %v1066 = vld [vmem:[%s232 + $0x19b0] sm:$0xff]
      %v1067 = vld [vmem:[%s232 + $0x19b8] sm:$0xff]
      %v1068 = vld [vmem:[%s232 + $0x19c0] sm:$0xff]
      %v1069 = vld [vmem:[%s232 + $0x19c8] sm:$0xff]
      %v1070 = vld [vmem:[%s232 + $0x19d0] sm:$0xff]
      %v1071 = vld [vmem:[%s232 + $0x19d8] sm:$0xff]
      %v1072 = vld [vmem:[%s232 + $0x19e0] sm:$0xff]
      %v1073 = vld [vmem:[%s232 + $0x19e8] sm:$0xff]
      %v1074 = vld [vmem:[%s232 + $0x19f0] sm:$0xff]
      %v1075 = vld [vmem:[%s232 + $0x19f8] sm:$0xff]
      %v1076 = vld [vmem:[%s232 + $0x1a00] sm:$0xff]
      %v1077 = vld [vmem:[%s232 + $0x1a08] sm:$0xff]
      %v1078 = vld [vmem:[%s232 + $0x1a10] sm:$0xff]
      %v1079 = vld [vmem:[%s232 + $0x1a18] sm:$0xff]
      %v1080 = vld [vmem:[%s232 + $0x1a20] sm:$0xff]
      %v1081 = vld [vmem:[%s232 + $0x1a28] sm:$0xff]
      %v1082 = vld [vmem:[%s232 + $0x1a30] sm:$0xff]
      %v1083 = vld [vmem:[%s232 + $0x1a38] sm:$0xff]
      %v1084 = vld [vmem:[%s232 + $0x1a40] sm:$0xff]
      %v1085 = vld [vmem:[%s232 + $0x1a48] sm:$0xff]
      %v1086 = vld [vmem:[%s232 + $0x1a50] sm:$0xff]
      %v1087 = vld [vmem:[%s232 + $0x1a58] sm:$0xff]
      %v1088 = vld [vmem:[%s232 + $0x1a60] sm:$0xff]
      %v1089 = vld [vmem:[%s232 + $0x1a68] sm:$0xff]
      %v1090 = vld [vmem:[%s232 + $0x1a70] sm:$0xff]
      %v1091 = vld [vmem:[%s232 + $0x1a78] sm:$0xff]
      %v1092 = vld [vmem:[%s232 + $0x1a80] sm:$0xff]
      %v1093 = vld [vmem:[%s232 + $0x1a88] sm:$0xff]
      %v1094 = vld [vmem:[%s232 + $0x1a90] sm:$0xff]
      %v1095 = vld [vmem:[%s232 + $0x1a98] sm:$0xff]
      %v1096 = vld [vmem:[%s232 + $0x1aa0] sm:$0xff]
      %v1097 = vld [vmem:[%s232 + $0x1aa8] sm:$0xff]
      %v1098 = vld [vmem:[%s232 + $0x1ab0] sm:$0xff]
      %v1099 = vld [vmem:[%s232 + $0x1ab8] sm:$0xff]
      %v1100 = vld [vmem:[%s232 + $0x1ac0] sm:$0xff]
      %v1101 = vld [vmem:[%s232 + $0x1ac8] sm:$0xff]
      %v1102 = vld [vmem:[%s232 + $0x1ad0] sm:$0xff]
      %v1103 = vld [vmem:[%s232 + $0x1ad8] sm:$0xff]
      %v1104 = vld [vmem:[%s232 + $0x1ae0] sm:$0xff]
      %v1105 = vld [vmem:[%s232 + $0x1ae8] sm:$0xff]
      %v1106 = vld [vmem:[%s232 + $0x1af0] sm:$0xff]
      %v1107 = vld [vmem:[%s232 + $0x1af8] sm:$0xff]
      %v1108 = vld [vmem:[%s232 + $0x1b00] sm:$0xff]
      %v1109 = vld [vmem:[%s232 + $0x1b08] sm:$0xff]
      %v1110 = vld [vmem:[%s232 + $0x1b10] sm:$0xff]
      %v1111 = vld [vmem:[%s232 + $0x1b18] sm:$0xff]
      %v1112 = vld [vmem:[%s232 + $0x1b20] sm:$0xff]
      %v1113 = vld [vmem:[%s232 + $0x1b28] sm:$0xff]
      %v1114 = vld [vmem:[%s232 + $0x1b30] sm:$0xff]
      %v1115 = vld [vmem:[%s232 + $0x1b38] sm:$0xff]
      %v1116 = vld [vmem:[%s232 + $0x1b40] sm:$0xff]
      %v1117 = vld [vmem:[%s232 + $0x1b48] sm:$0xff]
      %v1118 = vld [vmem:[%s232 + $0x1b50] sm:$0xff]
      %v1119 = vld [vmem:[%s232 + $0x1b58] sm:$0xff]
      %v1120 = vld [vmem:[%s232 + $0x1b60] sm:$0xff]
      %v1121 = vld [vmem:[%s232 + $0x1b68] sm:$0xff]
      %v1122 = vld [vmem:[%s232 + $0x1b70] sm:$0xff]
      %v1123 = vld [vmem:[%s232 + $0x1b78] sm:$0xff]
      %v1124 = vld [vmem:[%s232 + $0x1b80] sm:$0xff]
      %v1125 = vld [vmem:[%s232 + $0x1b88] sm:$0xff]
      %v1126 = vld [vmem:[%s232 + $0x1b90] sm:$0xff]
      %v1127 = vld [vmem:[%s232 + $0x1b98] sm:$0xff]
      %v1128 = vld [vmem:[%s232 + $0x1ba0] sm:$0xff]
      %v1129 = vld [vmem:[%s232 + $0x1ba8] sm:$0xff]
      %v1130 = vld [vmem:[%s232 + $0x1bb0] sm:$0xff]
      %v1131 = vld [vmem:[%s232 + $0x1bb8] sm:$0xff]
      %v1132 = vld [vmem:[%s232 + $0x1bc0] sm:$0xff]
      %v1133 = vld [vmem:[%s232 + $0x1bc8] sm:$0xff]
      %v1134 = vld [vmem:[%s232 + $0x1bd0] sm:$0xff]
      %v1135 = vld [vmem:[%s232 + $0x1bd8] sm:$0xff]
      %v1136 = vld [vmem:[%s232 + $0x1be0] sm:$0xff]
      %v1137 = vld [vmem:[%s232 + $0x1be8] sm:$0xff]
      %v1138 = vld [vmem:[%s232 + $0x1bf0] sm:$0xff]
      %v1139 = vld [vmem:[%s232 + $0x1bf8] sm:$0xff]
      %1141 = vst [vmem:[#allocation1] ss:$9 sm:$0xff] %v242
      %v1142 = vld [vmem:[#allocation1] sm:$0xff]
      %v1143 = vld [vmem:[#allocation1 + $0x9] sm:$0xff]
      %v1144 = vld [vmem:[#allocation1 + $0x12] sm:$0xff]
      %v1145 = vld [vmem:[#allocation1 + $0x1b] sm:$0xff]
      %v1146 = vld [vmem:[#allocation1 + $0x24] sm:$0xff]
      %v1147 = vld [vmem:[#allocation1 + $0x2d] sm:$0xff]
      %v1148 = vld [vmem:[#allocation1 + $0x36] sm:$0xff]
      %v1149 = vld [vmem:[#allocation1 + $0x3f] sm:$0xff]
      %1151 = vst [vmem:[#allocation1] ss:$9 sm:$0xff] %v243
      %v1152 = vld [vmem:[#allocation1] sm:$0xff]
      %v1153 = vld [vmem:[#allocation1 + $0x9] sm:$0xff]
      %v1154 = vld [vmem:[#allocation1 + $0x12] sm:$0xff]
      %v1155 = vld [vmem:[#allocation1 + $0x1b] sm:$0xff]
      %v1156 = vld [vmem:[#allocation1 + $0x24] sm:$0xff]
      %v1157 = vld [vmem:[#allocation1 + $0x2d] sm:$0xff]
      %v2068 = vunpack.c.l.b16 %v244
      %v2069 = vunpack.c.h.b16 %v244
      %v2070 = vunpack.c.l.b16 %v245
      %v2071 = vunpack.c.h.b16 %v245
      %v2072 = vunpack.c.l.b16 %v246
      %v2073 = vunpack.c.h.b16 %v246
      %v2074 = vunpack.c.l.b16 %v247
      %v2075 = vunpack.c.h.b16 %v247
      %v2076 = vunpack.c.l.b16 %v248
      %v2077 = vunpack.c.h.b16 %v248
      %v2078 = vunpack.c.l.b16 %v249
      %v2079 = vunpack.c.h.b16 %v249
      %v2080 = vunpack.c.l.b16 %v250
      %v2081 = vunpack.c.h.b16 %v250
      %v2082 = vunpack.c.l.b16 %v251
      %v2083 = vunpack.c.h.b16 %v251
      %v2084 = vunpack.c.l.b16 %v252
      %v2085 = vunpack.c.h.b16 %v252
      %v2086 = vunpack.c.l.b16 %v253
      %v2087 = vunpack.c.h.b16 %v253
      %v2088 = vunpack.c.l.b16 %v254
      %v2089 = vunpack.c.h.b16 %v254
      %v2090 = vunpack.c.l.b16 %v255
      %v2091 = vunpack.c.h.b16 %v255
      %v2092 = vunpack.c.l.b16 %v256
      %v2093 = vunpack.c.h.b16 %v256
      %v2094 = vunpack.c.l.b16 %v257
      %v2095 = vunpack.c.h.b16 %v257
      %v2096 = vunpack.c.l.b16 %v258
      %v2097 = vunpack.c.h.b16 %v258
      %v2098 = vunpack.c.l.b16 %v259
      %v2099 = vunpack.c.h.b16 %v259
      %v2100 = vunpack.c.l.b16 %v260
      %v2101 = vunpack.c.h.b16 %v260
      %v2102 = vunpack.c.l.b16 %v261
      %v2103 = vunpack.c.h.b16 %v261
      %v2104 = vunpack.c.l.b16 %v262
      %v2105 = vunpack.c.h.b16 %v262
      %v2106 = vunpack.c.l.b16 %v263
      %v2107 = vunpack.c.h.b16 %v263
      %v2108 = vunpack.c.l.b16 %v264
      %v2109 = vunpack.c.h.b16 %v264
      %v2110 = vunpack.c.l.b16 %v265
      %v2111 = vunpack.c.h.b16 %v265
      %v2112 = vunpack.c.l.b16 %v266
      %v2113 = vunpack.c.h.b16 %v266
      %v2114 = vunpack.c.l.b16 %v267
      %v2115 = vunpack.c.h.b16 %v267
      %v2116 = vunpack.c.l.b16 %v268
      %v2117 = vunpack.c.h.b16 %v268
      %v2118 = vunpack.c.l.b16 %v269
      %v2119 = vunpack.c.h.b16 %v269
      %v2120 = vunpack.c.l.b16 %v270
      %v2121 = vunpack.c.h.b16 %v270
      %v2122 = vunpack.c.l.b16 %v271
      %v2123 = vunpack.c.h.b16 %v271
      %v2124 = vunpack.c.l.b16 %v272
      %v2125 = vunpack.c.h.b16 %v272
      %v2126 = vunpack.c.l.b16 %v273
      %v2127 = vunpack.c.h.b16 %v273
      %v2128 = vunpack.c.l.b16 %v274
      %v2129 = vunpack.c.h.b16 %v274
      %v2130 = vunpack.c.l.b16 %v275
      %v2131 = vunpack.c.h.b16 %v275
      %v2132 = vunpack.c.l.b16 %v276
      %v2133 = vunpack.c.h.b16 %v276
      %v2134 = vunpack.c.l.b16 %v277
      %v2135 = vunpack.c.h.b16 %v277
      %v2136 = vunpack.c.l.b16 %v278
      %v2137 = vunpack.c.h.b16 %v278
      %v2138 = vunpack.c.l.b16 %v279
      %v2139 = vunpack.c.h.b16 %v279
      %v2140 = vunpack.c.l.b16 %v280
      %v2141 = vunpack.c.h.b16 %v280
      %v2142 = vunpack.c.l.b16 %v281
      %v2143 = vunpack.c.h.b16 %v281
      %v2144 = vunpack.c.l.b16 %v282
      %v2145 = vunpack.c.h.b16 %v282
      %v2146 = vunpack.c.l.b16 %v283
      %v2147 = vunpack.c.h.b16 %v283
      %v2148 = vunpack.c.l.b16 %v284
      %v2149 = vunpack.c.h.b16 %v284
      %v2150 = vunpack.c.l.b16 %v285
      %v2151 = vunpack.c.h.b16 %v285
      %v2152 = vunpack.c.l.b16 %v286
      %v2153 = vunpack.c.h.b16 %v286
      %v2154 = vunpack.c.l.b16 %v287
      %v2155 = vunpack.c.h.b16 %v287
      %v2156 = vunpack.c.l.b16 %v288
      %v2157 = vunpack.c.h.b16 %v288
      %v2158 = vunpack.c.l.b16 %v289
      %v2159 = vunpack.c.h.b16 %v289
      %v2160 = vunpack.c.l.b16 %v290
      %v2161 = vunpack.c.h.b16 %v290
      %v2162 = vunpack.c.l.b16 %v291
      %v2163 = vunpack.c.h.b16 %v291
      %v2164 = vunpack.c.l.b16 %v292
      %v2165 = vunpack.c.h.b16 %v292
      %v2166 = vunpack.c.l.b16 %v293
      %v2167 = vunpack.c.h.b16 %v293
      %v2168 = vunpack.c.l.b16 %v294
      %v2169 = vunpack.c.h.b16 %v294
      %v2170 = vunpack.c.l.b16 %v295
      %v2171 = vunpack.c.h.b16 %v295
      %v2172 = vunpack.c.l.b16 %v296
      %v2173 = vunpack.c.h.b16 %v296
      %v2174 = vunpack.c.l.b16 %v297
      %v2175 = vunpack.c.h.b16 %v297
      %v2176 = vunpack.c.l.b16 %v298
      %v2177 = vunpack.c.h.b16 %v298
      %v2178 = vunpack.c.l.b16 %v299
      %v2179 = vunpack.c.h.b16 %v299
      %v2180 = vunpack.c.l.b16 %v300
      %v2181 = vunpack.c.h.b16 %v300
      %v2182 = vunpack.c.l.b16 %v301
      %v2183 = vunpack.c.h.b16 %v301
      %v2184 = vunpack.c.l.b16 %v302
      %v2185 = vunpack.c.h.b16 %v302
      %v2186 = vunpack.c.l.b16 %v303
      %v2187 = vunpack.c.h.b16 %v303
      %v2188 = vunpack.c.l.b16 %v304
      %v2189 = vunpack.c.h.b16 %v304
      %v2190 = vunpack.c.l.b16 %v305
      %v2191 = vunpack.c.h.b16 %v305
      %v2192 = vunpack.c.l.b16 %v306
      %v2193 = vunpack.c.h.b16 %v306
      %v2194 = vunpack.c.l.b16 %v307
      %v2195 = vunpack.c.h.b16 %v307
      %v2196 = vunpack.c.l.b16 %v308
      %v2197 = vunpack.c.h.b16 %v308
      %v2198 = vunpack.c.l.b16 %v309
      %v2199 = vunpack.c.h.b16 %v309
      %v2200 = vunpack.c.l.b16 %v310
      %v2201 = vunpack.c.h.b16 %v310
      %v2202 = vunpack.c.l.b16 %v311
      %v2203 = vunpack.c.h.b16 %v311
      %v2204 = vunpack.c.l.b16 %v312
      %v2205 = vunpack.c.h.b16 %v312
      %v2206 = vunpack.c.l.b16 %v313
      %v2207 = vunpack.c.h.b16 %v313
      %v2208 = vunpack.c.l.b16 %v314
      %v2209 = vunpack.c.h.b16 %v314
      %v2210 = vunpack.c.l.b16 %v315
      %v2211 = vunpack.c.h.b16 %v315
      %v2212 = vunpack.c.l.b16 %v316
      %v2213 = vunpack.c.h.b16 %v316
      %v2214 = vunpack.c.l.b16 %v317
      %v2215 = vunpack.c.h.b16 %v317
      %v2216 = vunpack.c.l.b16 %v318
      %v2217 = vunpack.c.h.b16 %v318
      %v2218 = vunpack.c.l.b16 %v319
      %v2219 = vunpack.c.h.b16 %v319
      %v2220 = vunpack.c.l.b16 %v320
      %v2221 = vunpack.c.h.b16 %v320
      %v2222 = vunpack.c.l.b16 %v321
      %v2223 = vunpack.c.h.b16 %v321
      %v2224 = vunpack.c.l.b16 %v322
      %v2225 = vunpack.c.h.b16 %v322
      %v2226 = vunpack.c.l.b16 %v323
      %v2227 = vunpack.c.h.b16 %v323
      %v2228 = vunpack.c.l.b16 %v324
      %v2229 = vunpack.c.h.b16 %v324
      %v2230 = vunpack.c.l.b16 %v325
      %v2231 = vunpack.c.h.b16 %v325
      %v2232 = vunpack.c.l.b16 %v326
      %v2233 = vunpack.c.h.b16 %v326
      %v2234 = vunpack.c.l.b16 %v327
      %v2235 = vunpack.c.h.b16 %v327
      %v2236 = vunpack.c.l.b16 %v328
      %v2237 = vunpack.c.h.b16 %v328
      %v2238 = vunpack.c.l.b16 %v329
      %v2239 = vunpack.c.h.b16 %v329
      %v2240 = vunpack.c.l.b16 %v330
      %v2241 = vunpack.c.h.b16 %v330
      %v2242 = vunpack.c.l.b16 %v331
      %v2243 = vunpack.c.h.b16 %v331
      %v2244 = vunpack.c.l.b16 %v332
      %v2245 = vunpack.c.h.b16 %v332
      %v2246 = vunpack.c.l.b16 %v333
      %v2247 = vunpack.c.h.b16 %v333
      %v2248 = vunpack.c.l.b16 %v334
      %v2249 = vunpack.c.h.b16 %v334
      %v2250 = vunpack.c.l.b16 %v335
      %v2251 = vunpack.c.h.b16 %v335
      %v2252 = vunpack.c.l.b16 %v336
      %v2253 = vunpack.c.h.b16 %v336
      %v2254 = vunpack.c.l.b16 %v337
      %v2255 = vunpack.c.h.b16 %v337
      %v2256 = vunpack.c.l.b16 %v338
      %v2257 = vunpack.c.h.b16 %v338
      %v2258 = vunpack.c.l.b16 %v339
      %v2259 = vunpack.c.h.b16 %v339
      %v2260 = vunpack.c.l.b16 %v340
      %v2261 = vunpack.c.h.b16 %v340
      %v2262 = vunpack.c.l.b16 %v341
      %v2263 = vunpack.c.h.b16 %v341
      %v2264 = vunpack.c.l.b16 %v342
      %v2265 = vunpack.c.h.b16 %v342
      %v2266 = vunpack.c.l.b16 %v343
      %v2267 = vunpack.c.h.b16 %v343
      %v2268 = vunpack.c.l.b16 %v344
      %v2269 = vunpack.c.h.b16 %v344
      %v2270 = vunpack.c.l.b16 %v345
      %v2271 = vunpack.c.h.b16 %v345
      %v2272 = vunpack.c.l.b16 %v346
      %v2273 = vunpack.c.h.b16 %v346
      %v2274 = vunpack.c.l.b16 %v347
      %v2275 = vunpack.c.h.b16 %v347
      %v2276 = vunpack.c.l.b16 %v348
      %v2277 = vunpack.c.h.b16 %v348
      %v2278 = vunpack.c.l.b16 %v349
      %v2279 = vunpack.c.h.b16 %v349
      %v2280 = vunpack.c.l.b16 %v350
      %v2281 = vunpack.c.h.b16 %v350
      %v2282 = vunpack.c.l.b16 %v351
      %v2283 = vunpack.c.h.b16 %v351
      %v2284 = vunpack.c.l.b16 %v352
      %v2285 = vunpack.c.h.b16 %v352
      %v2286 = vunpack.c.l.b16 %v353
      %v2287 = vunpack.c.h.b16 %v353
      %v2288 = vunpack.c.l.b16 %v354
      %v2289 = vunpack.c.h.b16 %v354
      %v2290 = vunpack.c.l.b16 %v355
      %v2291 = vunpack.c.h.b16 %v355
      %v2292 = vunpack.c.l.b16 %v356
      %v2293 = vunpack.c.h.b16 %v356
      %v2294 = vunpack.c.l.b16 %v357
      %v2295 = vunpack.c.h.b16 %v357
      %v2296 = vunpack.c.l.b16 %v358
      %v2297 = vunpack.c.h.b16 %v358
      %v2298 = vunpack.c.l.b16 %v359
      %v2299 = vunpack.c.h.b16 %v359
      %v2300 = vunpack.c.l.b16 %v360
      %v2301 = vunpack.c.h.b16 %v360
      %v2302 = vunpack.c.l.b16 %v361
      %v2303 = vunpack.c.h.b16 %v361
      %v2304 = vunpack.c.l.b16 %v362
      %v2305 = vunpack.c.h.b16 %v362
      %v2306 = vunpack.c.l.b16 %v363
      %v2307 = vunpack.c.h.b16 %v363
      %v2308 = vunpack.c.l.b16 %v364
      %v2309 = vunpack.c.h.b16 %v364
      %v2310 = vunpack.c.l.b16 %v365
      %v2311 = vunpack.c.h.b16 %v365
      %v2312 = vunpack.c.l.b16 %v366
      %v2313 = vunpack.c.h.b16 %v366
      %v2314 = vunpack.c.l.b16 %v367
      %v2315 = vunpack.c.h.b16 %v367
      %v2316 = vunpack.c.l.b16 %v368
      %v2317 = vunpack.c.h.b16 %v368
      %v2318 = vunpack.c.l.b16 %v369
      %v2319 = vunpack.c.h.b16 %v369
      %v2320 = vunpack.c.l.b16 %v370
      %v2321 = vunpack.c.h.b16 %v370
      %v2322 = vunpack.c.l.b16 %v371
      %v2323 = vunpack.c.h.b16 %v371
      %v2324 = vunpack.c.l.b16 %v372
      %v2325 = vunpack.c.h.b16 %v372
      %v2326 = vunpack.c.l.b16 %v373
      %v2327 = vunpack.c.h.b16 %v373
      %v2328 = vunpack.c.l.b16 %v374
      %v2329 = vunpack.c.h.b16 %v374
      %v2330 = vunpack.c.l.b16 %v375
      %v2331 = vunpack.c.h.b16 %v375
      %v2332 = vunpack.c.l.b16 %v376
      %v2333 = vunpack.c.h.b16 %v376
      %v2334 = vunpack.c.l.b16 %v377
      %v2335 = vunpack.c.h.b16 %v377
      %v2336 = vunpack.c.l.b16 %v378
      %v2337 = vunpack.c.h.b16 %v378
      %v2338 = vunpack.c.l.b16 %v379
      %v2339 = vunpack.c.h.b16 %v379
      %v2340 = vunpack.c.l.b16 %v380
      %v2341 = vunpack.c.h.b16 %v380
      %v2342 = vunpack.c.l.b16 %v381
      %v2343 = vunpack.c.h.b16 %v381
      %v2344 = vunpack.c.l.b16 %v382
      %v2345 = vunpack.c.h.b16 %v382
      %v2346 = vunpack.c.l.b16 %v383
      %v2347 = vunpack.c.h.b16 %v383
      %v2348 = vunpack.c.l.b16 %v384
      %v2349 = vunpack.c.h.b16 %v384
      %v2350 = vunpack.c.l.b16 %v385
      %v2351 = vunpack.c.h.b16 %v385
      %v2352 = vunpack.c.l.b16 %v386
      %v2353 = vunpack.c.h.b16 %v386
      %v2354 = vunpack.c.l.b16 %v387
      %v2355 = vunpack.c.h.b16 %v387
      %v2356 = vunpack.c.l.b16 %v388
      %v2357 = vunpack.c.h.b16 %v388
      %v2358 = vunpack.c.l.b16 %v389
      %v2359 = vunpack.c.h.b16 %v389
      %v2360 = vunpack.c.l.b16 %v390
      %v2361 = vunpack.c.h.b16 %v390
      %v2362 = vunpack.c.l.b16 %v391
      %v2363 = vunpack.c.h.b16 %v391
      %v2364 = vunpack.c.l.b16 %v392
      %v2365 = vunpack.c.h.b16 %v392
      %v2366 = vunpack.c.l.b16 %v393
      %v2367 = vunpack.c.h.b16 %v393
      %v2368 = vunpack.c.l.b16 %v394
      %v2369 = vunpack.c.h.b16 %v394
      %v2370 = vunpack.c.l.b16 %v395
      %v2371 = vunpack.c.h.b16 %v395
      %v2372 = vunpack.c.l.b16 %v396
      %v2373 = vunpack.c.h.b16 %v396
      %v2374 = vunpack.c.l.b16 %v397
      %v2375 = vunpack.c.h.b16 %v397
      %v2376 = vunpack.c.l.b16 %v398
      %v2377 = vunpack.c.h.b16 %v398
      %v2378 = vunpack.c.l.b16 %v399
      %v2379 = vunpack.c.h.b16 %v399
      %v2380 = vunpack.c.l.b16 %v400
      %v2381 = vunpack.c.h.b16 %v400
      %v2382 = vunpack.c.l.b16 %v401
      %v2383 = vunpack.c.h.b16 %v401
      %v2384 = vunpack.c.l.b16 %v402
      %v2385 = vunpack.c.h.b16 %v402
      %v2386 = vunpack.c.l.b16 %v403
      %v2387 = vunpack.c.h.b16 %v403
      %v2388 = vunpack.c.l.b16 %v404
      %v2389 = vunpack.c.h.b16 %v404
      %v2390 = vunpack.c.l.b16 %v405
      %v2391 = vunpack.c.h.b16 %v405
      %v2392 = vunpack.c.l.b16 %v406
      %v2393 = vunpack.c.h.b16 %v406
      %v2394 = vunpack.c.l.b16 %v407
      %v2395 = vunpack.c.h.b16 %v407
      %v2396 = vunpack.c.l.b16 %v408
      %v2397 = vunpack.c.h.b16 %v408
      %v2398 = vunpack.c.l.b16 %v409
      %v2399 = vunpack.c.h.b16 %v409
      %v2400 = vunpack.c.l.b16 %v410
      %v2401 = vunpack.c.h.b16 %v410
      %v2402 = vunpack.c.l.b16 %v411
      %v2403 = vunpack.c.h.b16 %v411
      %v2404 = vunpack.c.l.b16 %v412
      %v2405 = vunpack.c.h.b16 %v412
      %v2406 = vunpack.c.l.b16 %v413
      %v2407 = vunpack.c.h.b16 %v413
      %v2408 = vunpack.c.l.b16 %v414
      %v2409 = vunpack.c.h.b16 %v414
      %v2410 = vunpack.c.l.b16 %v415
      %v2411 = vunpack.c.h.b16 %v415
      %v2412 = vunpack.c.l.b16 %v416
      %v2413 = vunpack.c.h.b16 %v416
      %v2414 = vunpack.c.l.b16 %v417
      %v2415 = vunpack.c.h.b16 %v417
      %v2416 = vunpack.c.l.b16 %v418
      %v2417 = vunpack.c.h.b16 %v418
      %v2418 = vunpack.c.l.b16 %v419
      %v2419 = vunpack.c.h.b16 %v419
      %v2420 = vunpack.c.l.b16 %v420
      %v2421 = vunpack.c.h.b16 %v420
      %v2422 = vunpack.c.l.b16 %v421
      %v2423 = vunpack.c.h.b16 %v421
      %v2424 = vunpack.c.l.b16 %v422
      %v2425 = vunpack.c.h.b16 %v422
      %v2426 = vunpack.c.l.b16 %v423
      %v2427 = vunpack.c.h.b16 %v423
      %v2428 = vunpack.c.l.b16 %v424
      %v2429 = vunpack.c.h.b16 %v424
      %v2430 = vunpack.c.l.b16 %v425
      %v2431 = vunpack.c.h.b16 %v425
      %v2432 = vunpack.c.l.b16 %v426
      %v2433 = vunpack.c.h.b16 %v426
      %v2434 = vunpack.c.l.b16 %v427
      %v2435 = vunpack.c.h.b16 %v427
      %v2436 = vunpack.c.l.b16 %v428
      %v2437 = vunpack.c.h.b16 %v428
      %v2438 = vunpack.c.l.b16 %v429
      %v2439 = vunpack.c.h.b16 %v429
      %v2440 = vunpack.c.l.b16 %v430
      %v2441 = vunpack.c.h.b16 %v430
      %v2442 = vunpack.c.l.b16 %v431
      %v2443 = vunpack.c.h.b16 %v431
      %v2444 = vunpack.c.l.b16 %v432
      %v2445 = vunpack.c.h.b16 %v432
      %v2446 = vunpack.c.l.b16 %v433
      %v2447 = vunpack.c.h.b16 %v433
      %v2448 = vunpack.c.l.b16 %v434
      %v2449 = vunpack.c.h.b16 %v434
      %v2450 = vunpack.c.l.b16 %v435
      %v2451 = vunpack.c.h.b16 %v435
      %v2452 = vunpack.c.l.b16 %v436
      %v2453 = vunpack.c.h.b16 %v436
      %v2454 = vunpack.c.l.b16 %v437
      %v2455 = vunpack.c.h.b16 %v437
      %v2456 = vunpack.c.l.b16 %v438
      %v2457 = vunpack.c.h.b16 %v438
      %v2458 = vunpack.c.l.b16 %v439
      %v2459 = vunpack.c.h.b16 %v439
      %v2460 = vunpack.c.l.b16 %v440
      %v2461 = vunpack.c.h.b16 %v440
      %v2462 = vunpack.c.l.b16 %v441
      %v2463 = vunpack.c.h.b16 %v441
      %v2464 = vunpack.c.l.b16 %v442
      %v2465 = vunpack.c.h.b16 %v442
      %v2466 = vunpack.c.l.b16 %v443
      %v2467 = vunpack.c.h.b16 %v443
      %v2468 = vunpack.c.l.b16 %v444
      %v2469 = vunpack.c.h.b16 %v444
      %v2470 = vunpack.c.l.b16 %v445
      %v2471 = vunpack.c.h.b16 %v445
      %v2472 = vunpack.c.l.b16 %v446
      %v2473 = vunpack.c.h.b16 %v446
      %v2474 = vunpack.c.l.b16 %v447
      %v2475 = vunpack.c.h.b16 %v447
      %v2476 = vunpack.c.l.b16 %v448
      %v2477 = vunpack.c.h.b16 %v448
      %v2478 = vunpack.c.l.b16 %v449
      %v2479 = vunpack.c.h.b16 %v449
      %v2480 = vunpack.c.l.b16 %v450
      %v2481 = vunpack.c.h.b16 %v450
      %v2482 = vunpack.c.l.b16 %v451
      %v2483 = vunpack.c.h.b16 %v451
      %v2484 = vunpack.c.l.b16 %v452
      %v2485 = vunpack.c.h.b16 %v452
      %v2486 = vunpack.c.l.b16 %v453
      %v2487 = vunpack.c.h.b16 %v453
      %v2488 = vunpack.c.l.b16 %v454
      %v2489 = vunpack.c.h.b16 %v454
      %v2490 = vunpack.c.l.b16 %v455
      %v2491 = vunpack.c.h.b16 %v455
      %v2492 = vunpack.c.l.b16 %v456
      %v2493 = vunpack.c.h.b16 %v456
      %v2494 = vunpack.c.l.b16 %v457
      %v2495 = vunpack.c.h.b16 %v457
      %v2496 = vunpack.c.l.b16 %v458
      %v2497 = vunpack.c.h.b16 %v458
      %v2498 = vunpack.c.l.b16 %v459
      %v2499 = vunpack.c.h.b16 %v459
      %v2500 = vunpack.c.l.b16 %v460
      %v2501 = vunpack.c.h.b16 %v460
      %v2502 = vunpack.c.l.b16 %v461
      %v2503 = vunpack.c.h.b16 %v461
      %v2504 = vunpack.c.l.b16 %v462
      %v2505 = vunpack.c.h.b16 %v462
      %v2506 = vunpack.c.l.b16 %v463
      %v2507 = vunpack.c.h.b16 %v463
      %v2508 = vunpack.c.l.b16 %v464
      %v2509 = vunpack.c.h.b16 %v464
      %v2510 = vunpack.c.l.b16 %v465
      %v2511 = vunpack.c.h.b16 %v465
      %v2512 = vunpack.c.l.b16 %v466
      %v2513 = vunpack.c.h.b16 %v466
      %v2514 = vunpack.c.l.b16 %v467
      %v2515 = vunpack.c.h.b16 %v467
      %v2516 = vunpack.c.l.b16 %v468
      %v2517 = vunpack.c.h.b16 %v468
      %v2518 = vunpack.c.l.b16 %v469
      %v2519 = vunpack.c.h.b16 %v469
      %v2520 = vunpack.c.l.b16 %v470
      %v2521 = vunpack.c.h.b16 %v470
      %v2522 = vunpack.c.l.b16 %v471
      %v2523 = vunpack.c.h.b16 %v471
      %v2524 = vunpack.c.l.b16 %v472
      %v2525 = vunpack.c.h.b16 %v472
      %v2526 = vunpack.c.l.b16 %v473
      %v2527 = vunpack.c.h.b16 %v473
      %v2528 = vunpack.c.l.b16 %v474
      %v2529 = vunpack.c.h.b16 %v474
      %v2530 = vunpack.c.l.b16 %v475
      %v2531 = vunpack.c.h.b16 %v475
      %v2532 = vunpack.c.l.b16 %v476
      %v2533 = vunpack.c.h.b16 %v476
      %v2534 = vunpack.c.l.b16 %v477
      %v2535 = vunpack.c.h.b16 %v477
      %v2536 = vunpack.c.l.b16 %v478
      %v2537 = vunpack.c.h.b16 %v478
      %v2538 = vunpack.c.l.b16 %v479
      %v2539 = vunpack.c.h.b16 %v479
      %v2540 = vunpack.c.l.b16 %v480
      %v2541 = vunpack.c.h.b16 %v480
      %v2542 = vunpack.c.l.b16 %v481
      %v2543 = vunpack.c.h.b16 %v481
      %v2544 = vunpack.c.l.b16 %v482
      %v2545 = vunpack.c.h.b16 %v482
      %v2546 = vunpack.c.l.b16 %v483
      %v2547 = vunpack.c.h.b16 %v483
      %v2548 = vunpack.c.l.b16 %v484
      %v2549 = vunpack.c.h.b16 %v484
      %v2550 = vunpack.c.l.b16 %v485
      %v2551 = vunpack.c.h.b16 %v485
      %v2552 = vunpack.c.l.b16 %v486
      %v2553 = vunpack.c.h.b16 %v486
      %v2554 = vunpack.c.l.b16 %v487
      %v2555 = vunpack.c.h.b16 %v487
      %v2556 = vunpack.c.l.b16 %v488
      %v2557 = vunpack.c.h.b16 %v488
      %v2558 = vunpack.c.l.b16 %v489
      %v2559 = vunpack.c.h.b16 %v489
      %v2560 = vunpack.c.l.b16 %v490
      %v2561 = vunpack.c.h.b16 %v490
      %v2562 = vunpack.c.l.b16 %v491
      %v2563 = vunpack.c.h.b16 %v491
      %v2564 = vunpack.c.l.b16 %v492
      %v2565 = vunpack.c.h.b16 %v492
      %v2566 = vunpack.c.l.b16 %v493
      %v2567 = vunpack.c.h.b16 %v493
      %v2568 = vunpack.c.l.b16 %v494
      %v2569 = vunpack.c.h.b16 %v494
      %v2570 = vunpack.c.l.b16 %v495
      %v2571 = vunpack.c.h.b16 %v495
      %v2572 = vunpack.c.l.b16 %v496
      %v2573 = vunpack.c.h.b16 %v496
      %v2574 = vunpack.c.l.b16 %v497
      %v2575 = vunpack.c.h.b16 %v497
      %v2576 = vunpack.c.l.b16 %v498
      %v2577 = vunpack.c.h.b16 %v498
      %v2578 = vunpack.c.l.b16 %v499
      %v2579 = vunpack.c.h.b16 %v499
      %v2580 = vunpack.c.l.b16 %v500
      %v2581 = vunpack.c.h.b16 %v500
      %v2582 = vunpack.c.l.b16 %v501
      %v2583 = vunpack.c.h.b16 %v501
      %v2584 = vunpack.c.l.b16 %v502
      %v2585 = vunpack.c.h.b16 %v502
      %v2586 = vunpack.c.l.b16 %v503
      %v2587 = vunpack.c.h.b16 %v503
      %v2588 = vunpack.c.l.b16 %v504
      %v2589 = vunpack.c.h.b16 %v504
      %v2590 = vunpack.c.l.b16 %v505
      %v2591 = vunpack.c.h.b16 %v505
      %v2592 = vunpack.c.l.b16 %v506
      %v2593 = vunpack.c.h.b16 %v506
      %v2594 = vunpack.c.l.b16 %v507
      %v2595 = vunpack.c.h.b16 %v507
      %v2596 = vunpack.c.l.b16 %v508
      %v2597 = vunpack.c.h.b16 %v508
      %v2598 = vunpack.c.l.b16 %v509
      %v2599 = vunpack.c.h.b16 %v509
      %v2600 = vunpack.c.l.b16 %v510
      %v2601 = vunpack.c.h.b16 %v510
      %v2602 = vunpack.c.l.b16 %v511
      %v2603 = vunpack.c.h.b16 %v511
      %v2604 = vunpack.c.l.b16 %v512
      %v2605 = vunpack.c.h.b16 %v512
      %v2606 = vunpack.c.l.b16 %v513
      %v2607 = vunpack.c.h.b16 %v513
      %v2608 = vunpack.c.l.b16 %v514
      %v2609 = vunpack.c.h.b16 %v514
      %v2610 = vunpack.c.l.b16 %v515
      %v2611 = vunpack.c.h.b16 %v515
      %v2612 = vunpack.c.l.b16 %v516
      %v2613 = vunpack.c.h.b16 %v516
      %v2614 = vunpack.c.l.b16 %v517
      %v2615 = vunpack.c.h.b16 %v517
      %v2616 = vunpack.c.l.b16 %v518
      %v2617 = vunpack.c.h.b16 %v518
      %v2618 = vunpack.c.l.b16 %v519
      %v2619 = vunpack.c.h.b16 %v519
      %v2620 = vunpack.c.l.b16 %v520
      %v2621 = vunpack.c.h.b16 %v520
      %v2622 = vunpack.c.l.b16 %v521
      %v2623 = vunpack.c.h.b16 %v521
      %v2624 = vunpack.c.l.b16 %v522
      %v2625 = vunpack.c.h.b16 %v522
      %v2626 = vunpack.c.l.b16 %v523
      %v2627 = vunpack.c.h.b16 %v523
      %v2628 = vunpack.c.l.b16 %v524
      %v2629 = vunpack.c.h.b16 %v524
      %v2630 = vunpack.c.l.b16 %v525
      %v2631 = vunpack.c.h.b16 %v525
      %v2632 = vunpack.c.l.b16 %v526
      %v2633 = vunpack.c.h.b16 %v526
      %v2634 = vunpack.c.l.b16 %v527
      %v2635 = vunpack.c.h.b16 %v527
      %v2636 = vunpack.c.l.b16 %v528
      %v2637 = vunpack.c.h.b16 %v528
      %v2638 = vunpack.c.l.b16 %v529
      %v2639 = vunpack.c.h.b16 %v529
      %v2640 = vunpack.c.l.b16 %v530
      %v2641 = vunpack.c.h.b16 %v530
      %v2642 = vunpack.c.l.b16 %v531
      %v2643 = vunpack.c.h.b16 %v531
      %v2644 = vunpack.c.l.b16 %v532
      %v2645 = vunpack.c.h.b16 %v532
      %v2646 = vunpack.c.l.b16 %v533
      %v2647 = vunpack.c.h.b16 %v533
      %v2648 = vunpack.c.l.b16 %v534
      %v2649 = vunpack.c.h.b16 %v534
      %v2650 = vunpack.c.l.b16 %v535
      %v2651 = vunpack.c.h.b16 %v535
      %v2652 = vunpack.c.l.b16 %v536
      %v2653 = vunpack.c.h.b16 %v536
      %v2654 = vunpack.c.l.b16 %v537
      %v2655 = vunpack.c.h.b16 %v537
      %v2656 = vunpack.c.l.b16 %v538
      %v2657 = vunpack.c.h.b16 %v538
      %v2658 = vunpack.c.l.b16 %v539
      %v2659 = vunpack.c.h.b16 %v539
      %v2660 = vunpack.c.l.b16 %v540
      %v2661 = vunpack.c.h.b16 %v540
      %v2662 = vunpack.c.l.b16 %v541
      %v2663 = vunpack.c.h.b16 %v541
      %v2664 = vunpack.c.l.b16 %v542
      %v2665 = vunpack.c.h.b16 %v542
      %v2666 = vunpack.c.l.b16 %v543
      %v2667 = vunpack.c.h.b16 %v543
      %v2668 = vunpack.c.l.b16 %v544
      %v2669 = vunpack.c.h.b16 %v544
      %v2670 = vunpack.c.l.b16 %v545
      %v2671 = vunpack.c.h.b16 %v545
      %v2672 = vunpack.c.l.b16 %v546
      %v2673 = vunpack.c.h.b16 %v546
      %v2674 = vunpack.c.l.b16 %v547
      %v2675 = vunpack.c.h.b16 %v547
      %v2676 = vunpack.c.l.b16 %v548
      %v2677 = vunpack.c.h.b16 %v548
      %v2678 = vunpack.c.l.b16 %v549
      %v2679 = vunpack.c.h.b16 %v549
      %v2680 = vunpack.c.l.b16 %v550
      %v2681 = vunpack.c.h.b16 %v550
      %v2682 = vunpack.c.l.b16 %v551
      %v2683 = vunpack.c.h.b16 %v551
      %v2684 = vunpack.c.l.b16 %v552
      %v2685 = vunpack.c.h.b16 %v552
      %v2686 = vunpack.c.l.b16 %v553
      %v2687 = vunpack.c.h.b16 %v553
      %v2688 = vunpack.c.l.b16 %v554
      %v2689 = vunpack.c.h.b16 %v554
      %v2690 = vunpack.c.l.b16 %v555
      %v2691 = vunpack.c.h.b16 %v555
      %v2692 = vunpack.c.l.b16 %v556
      %v2693 = vunpack.c.h.b16 %v556
      %v2694 = vunpack.c.l.b16 %v557
      %v2695 = vunpack.c.h.b16 %v557
      %v2696 = vunpack.c.l.b16 %v558
      %v2697 = vunpack.c.h.b16 %v558
      %v2698 = vunpack.c.l.b16 %v559
      %v2699 = vunpack.c.h.b16 %v559
      %v2700 = vunpack.c.l.b16 %v560
      %v2701 = vunpack.c.h.b16 %v560
      %v2702 = vunpack.c.l.b16 %v561
      %v2703 = vunpack.c.h.b16 %v561
      %v2704 = vunpack.c.l.b16 %v562
      %v2705 = vunpack.c.h.b16 %v562
      %v2706 = vunpack.c.l.b16 %v563
      %v2707 = vunpack.c.h.b16 %v563
      %v2708 = vunpack.c.l.b16 %v564
      %v2709 = vunpack.c.h.b16 %v564
      %v2710 = vunpack.c.l.b16 %v565
      %v2711 = vunpack.c.h.b16 %v565
      %v2712 = vunpack.c.l.b16 %v566
      %v2713 = vunpack.c.h.b16 %v566
      %v2714 = vunpack.c.l.b16 %v567
      %v2715 = vunpack.c.h.b16 %v567
      %v2716 = vunpack.c.l.b16 %v568
      %v2717 = vunpack.c.h.b16 %v568
      %v2718 = vunpack.c.l.b16 %v569
      %v2719 = vunpack.c.h.b16 %v569
      %v2720 = vunpack.c.l.b16 %v570
      %v2721 = vunpack.c.h.b16 %v570
      %v2722 = vunpack.c.l.b16 %v571
      %v2723 = vunpack.c.h.b16 %v571
      %v2724 = vunpack.c.l.b16 %v572
      %v2725 = vunpack.c.h.b16 %v572
      %v2726 = vunpack.c.l.b16 %v573
      %v2727 = vunpack.c.h.b16 %v573
      %v2728 = vunpack.c.l.b16 %v574
      %v2729 = vunpack.c.h.b16 %v574
      %v2730 = vunpack.c.l.b16 %v575
      %v2731 = vunpack.c.h.b16 %v575
      %v2732 = vunpack.c.l.b16 %v576
      %v2733 = vunpack.c.h.b16 %v576
      %v2734 = vunpack.c.l.b16 %v577
      %v2735 = vunpack.c.h.b16 %v577
      %v2736 = vunpack.c.l.b16 %v578
      %v2737 = vunpack.c.h.b16 %v578
      %v2738 = vunpack.c.l.b16 %v579
      %v2739 = vunpack.c.h.b16 %v579
      %v2740 = vunpack.c.l.b16 %v580
      %v2741 = vunpack.c.h.b16 %v580
      %v2742 = vunpack.c.l.b16 %v581
      %v2743 = vunpack.c.h.b16 %v581
      %v2744 = vunpack.c.l.b16 %v582
      %v2745 = vunpack.c.h.b16 %v582
      %v2746 = vunpack.c.l.b16 %v583
      %v2747 = vunpack.c.h.b16 %v583
      %v2748 = vunpack.c.l.b16 %v584
      %v2749 = vunpack.c.h.b16 %v584
      %v2750 = vunpack.c.l.b16 %v585
      %v2751 = vunpack.c.h.b16 %v585
      %v2752 = vunpack.c.l.b16 %v586
      %v2753 = vunpack.c.h.b16 %v586
      %v2754 = vunpack.c.l.b16 %v587
      %v2755 = vunpack.c.h.b16 %v587
      %v2756 = vunpack.c.l.b16 %v588
      %v2757 = vunpack.c.h.b16 %v588
      %v2758 = vunpack.c.l.b16 %v589
      %v2759 = vunpack.c.h.b16 %v589
      %v2760 = vunpack.c.l.b16 %v590
      %v2761 = vunpack.c.h.b16 %v590
      %v2762 = vunpack.c.l.b16 %v591
      %v2763 = vunpack.c.h.b16 %v591
      %v2764 = vunpack.c.l.b16 %v592
      %v2765 = vunpack.c.h.b16 %v592
      %v2766 = vunpack.c.l.b16 %v593
      %v2767 = vunpack.c.h.b16 %v593
      %v2768 = vunpack.c.l.b16 %v594
      %v2769 = vunpack.c.h.b16 %v594
      %v2770 = vunpack.c.l.b16 %v595
      %v2771 = vunpack.c.h.b16 %v595
      %v2772 = vunpack.c.l.b16 %v596
      %v2773 = vunpack.c.h.b16 %v596
      %v2774 = vunpack.c.l.b16 %v597
      %v2775 = vunpack.c.h.b16 %v597
      %v2776 = vunpack.c.l.b16 %v598
      %v2777 = vunpack.c.h.b16 %v598
      %v2778 = vunpack.c.l.b16 %v599
      %v2779 = vunpack.c.h.b16 %v599
      %v2780 = vunpack.c.l.b16 %v600
      %v2781 = vunpack.c.h.b16 %v600
      %v2782 = vunpack.c.l.b16 %v601
      %v2783 = vunpack.c.h.b16 %v601
      %v2784 = vunpack.c.l.b16 %v602
      %v2785 = vunpack.c.h.b16 %v602
      %v2786 = vunpack.c.l.b16 %v603
      %v2787 = vunpack.c.h.b16 %v603
      %v2788 = vunpack.c.l.b16 %v604
      %v2789 = vunpack.c.h.b16 %v604
      %v2790 = vunpack.c.l.b16 %v605
      %v2791 = vunpack.c.h.b16 %v605
      %v2792 = vunpack.c.l.b16 %v606
      %v2793 = vunpack.c.h.b16 %v606
      %v2794 = vunpack.c.l.b16 %v607
      %v2795 = vunpack.c.h.b16 %v607
      %v2796 = vunpack.c.l.b16 %v608
      %v2797 = vunpack.c.h.b16 %v608
      %v2798 = vunpack.c.l.b16 %v609
      %v2799 = vunpack.c.h.b16 %v609
      %v2800 = vunpack.c.l.b16 %v610
      %v2801 = vunpack.c.h.b16 %v610
      %v2802 = vunpack.c.l.b16 %v611
      %v2803 = vunpack.c.h.b16 %v611
      %v2804 = vunpack.c.l.b16 %v612
      %v2805 = vunpack.c.h.b16 %v612
      %v2806 = vunpack.c.l.b16 %v613
      %v2807 = vunpack.c.h.b16 %v613
      %v2808 = vunpack.c.l.b16 %v614
      %v2809 = vunpack.c.h.b16 %v614
      %v2810 = vunpack.c.l.b16 %v615
      %v2811 = vunpack.c.h.b16 %v615
      %v2812 = vunpack.c.l.b16 %v616
      %v2813 = vunpack.c.h.b16 %v616
      %v2814 = vunpack.c.l.b16 %v617
      %v2815 = vunpack.c.h.b16 %v617
      %v2816 = vunpack.c.l.b16 %v618
      %v2817 = vunpack.c.h.b16 %v618
      %v2818 = vunpack.c.l.b16 %v619
      %v2819 = vunpack.c.h.b16 %v619
      %v2820 = vunpack.c.l.b16 %v620
      %v2821 = vunpack.c.h.b16 %v620
      %v2822 = vunpack.c.l.b16 %v621
      %v2823 = vunpack.c.h.b16 %v621
      %v2824 = vunpack.c.l.b16 %v622
      %v2825 = vunpack.c.h.b16 %v622
      %v2826 = vunpack.c.l.b16 %v623
      %v2827 = vunpack.c.h.b16 %v623
      %v2828 = vunpack.c.l.b16 %v624
      %v2829 = vunpack.c.h.b16 %v624
      %v2830 = vunpack.c.l.b16 %v625
      %v2831 = vunpack.c.h.b16 %v625
      %v2832 = vunpack.c.l.b16 %v626
      %v2833 = vunpack.c.h.b16 %v626
      %v2834 = vunpack.c.l.b16 %v627
      %v2835 = vunpack.c.h.b16 %v627
      %v2836 = vunpack.c.l.b16 %v628
      %v2837 = vunpack.c.h.b16 %v628
      %v2838 = vunpack.c.l.b16 %v629
      %v2839 = vunpack.c.h.b16 %v629
      %v2840 = vunpack.c.l.b16 %v630
      %v2841 = vunpack.c.h.b16 %v630
      %v2842 = vunpack.c.l.b16 %v631
      %v2843 = vunpack.c.h.b16 %v631
      %v2844 = vunpack.c.l.b16 %v632
      %v2845 = vunpack.c.h.b16 %v632
      %v2846 = vunpack.c.l.b16 %v633
      %v2847 = vunpack.c.h.b16 %v633
      %v2848 = vunpack.c.l.b16 %v634
      %v2849 = vunpack.c.h.b16 %v634
      %v2850 = vunpack.c.l.b16 %v635
      %v2851 = vunpack.c.h.b16 %v635
      %v2852 = vunpack.c.l.b16 %v636
      %v2853 = vunpack.c.h.b16 %v636
      %v2854 = vunpack.c.l.b16 %v637
      %v2855 = vunpack.c.h.b16 %v637
      %v2856 = vunpack.c.l.b16 %v638
      %v2857 = vunpack.c.h.b16 %v638
      %v2858 = vunpack.c.l.b16 %v639
      %v2859 = vunpack.c.h.b16 %v639
      %v2860 = vunpack.c.l.b16 %v640
      %v2861 = vunpack.c.h.b16 %v640
      %v2862 = vunpack.c.l.b16 %v641
      %v2863 = vunpack.c.h.b16 %v641
      %v2864 = vunpack.c.l.b16 %v642
      %v2865 = vunpack.c.h.b16 %v642
      %v2866 = vunpack.c.l.b16 %v643
      %v2867 = vunpack.c.h.b16 %v643
      %v2868 = vunpack.c.l.b16 %v644
      %v2869 = vunpack.c.h.b16 %v644
      %v2870 = vunpack.c.l.b16 %v645
      %v2871 = vunpack.c.h.b16 %v645
      %v2872 = vunpack.c.l.b16 %v646
      %v2873 = vunpack.c.h.b16 %v646
      %v2874 = vunpack.c.l.b16 %v647
      %v2875 = vunpack.c.h.b16 %v647
      %v2876 = vunpack.c.l.b16 %v648
      %v2877 = vunpack.c.h.b16 %v648
      %v2878 = vunpack.c.l.b16 %v649
      %v2879 = vunpack.c.h.b16 %v649
      %v2880 = vunpack.c.l.b16 %v650
      %v2881 = vunpack.c.h.b16 %v650
      %v2882 = vunpack.c.l.b16 %v651
      %v2883 = vunpack.c.h.b16 %v651
      %v2884 = vunpack.c.l.b16 %v652
      %v2885 = vunpack.c.h.b16 %v652
      %v2886 = vunpack.c.l.b16 %v653
      %v2887 = vunpack.c.h.b16 %v653
      %v2888 = vunpack.c.l.b16 %v654
      %v2889 = vunpack.c.h.b16 %v654
      %v2890 = vunpack.c.l.b16 %v655
      %v2891 = vunpack.c.h.b16 %v655
      %v2892 = vunpack.c.l.b16 %v656
      %v2893 = vunpack.c.h.b16 %v656
      %v2894 = vunpack.c.l.b16 %v657
      %v2895 = vunpack.c.h.b16 %v657
      %v2896 = vunpack.c.l.b16 %v658
      %v2897 = vunpack.c.h.b16 %v658
      %v2898 = vunpack.c.l.b16 %v659
      %v2899 = vunpack.c.h.b16 %v659
      %v2900 = vunpack.c.l.b16 %v660
      %v2901 = vunpack.c.h.b16 %v660
      %v2902 = vunpack.c.l.b16 %v661
      %v2903 = vunpack.c.h.b16 %v661
      %v2904 = vunpack.c.l.b16 %v662
      %v2905 = vunpack.c.h.b16 %v662
      %v2906 = vunpack.c.l.b16 %v663
      %v2907 = vunpack.c.h.b16 %v663
      %v2908 = vunpack.c.l.b16 %v664
      %v2909 = vunpack.c.h.b16 %v664
      %v2910 = vunpack.c.l.b16 %v665
      %v2911 = vunpack.c.h.b16 %v665
      %v2912 = vunpack.c.l.b16 %v666
      %v2913 = vunpack.c.h.b16 %v666
      %v2914 = vunpack.c.l.b16 %v667
      %v2915 = vunpack.c.h.b16 %v667
      %v2916 = vunpack.c.l.b16 %v668
      %v2917 = vunpack.c.h.b16 %v668
      %v2918 = vunpack.c.l.b16 %v669
      %v2919 = vunpack.c.h.b16 %v669
      %v2920 = vunpack.c.l.b16 %v670
      %v2921 = vunpack.c.h.b16 %v670
      %v2922 = vunpack.c.l.b16 %v671
      %v2923 = vunpack.c.h.b16 %v671
      %v2924 = vunpack.c.l.b16 %v672
      %v2925 = vunpack.c.h.b16 %v672
      %v2926 = vunpack.c.l.b16 %v673
      %v2927 = vunpack.c.h.b16 %v673
      %v2928 = vunpack.c.l.b16 %v674
      %v2929 = vunpack.c.h.b16 %v674
      %v2930 = vunpack.c.l.b16 %v675
      %v2931 = vunpack.c.h.b16 %v675
      %v2932 = vunpack.c.l.b16 %v676
      %v2933 = vunpack.c.h.b16 %v676
      %v2934 = vunpack.c.l.b16 %v677
      %v2935 = vunpack.c.h.b16 %v677
      %v2936 = vunpack.c.l.b16 %v678
      %v2937 = vunpack.c.h.b16 %v678
      %v2938 = vunpack.c.l.b16 %v679
      %v2939 = vunpack.c.h.b16 %v679
      %v2940 = vunpack.c.l.b16 %v680
      %v2941 = vunpack.c.h.b16 %v680
      %v2942 = vunpack.c.l.b16 %v681
      %v2943 = vunpack.c.h.b16 %v681
      %v2944 = vunpack.c.l.b16 %v682
      %v2945 = vunpack.c.h.b16 %v682
      %v2946 = vunpack.c.l.b16 %v683
      %v2947 = vunpack.c.h.b16 %v683
      %v2948 = vunpack.c.l.b16 %v684
      %v2949 = vunpack.c.h.b16 %v684
      %v2950 = vunpack.c.l.b16 %v685
      %v2951 = vunpack.c.h.b16 %v685
      %v2952 = vunpack.c.l.b16 %v686
      %v2953 = vunpack.c.h.b16 %v686
      %v2954 = vunpack.c.l.b16 %v687
      %v2955 = vunpack.c.h.b16 %v687
      %v2956 = vunpack.c.l.b16 %v688
      %v2957 = vunpack.c.h.b16 %v688
      %v2958 = vunpack.c.l.b16 %v689
      %v2959 = vunpack.c.h.b16 %v689
      %v2960 = vunpack.c.l.b16 %v690
      %v2961 = vunpack.c.h.b16 %v690
      %v2962 = vunpack.c.l.b16 %v691
      %v2963 = vunpack.c.h.b16 %v691
      %v2964 = vunpack.c.l.b16 %v692
      %v2965 = vunpack.c.h.b16 %v692
      %v2966 = vunpack.c.l.b16 %v693
      %v2967 = vunpack.c.h.b16 %v693
      %v2968 = vunpack.c.l.b16 %v694
      %v2969 = vunpack.c.h.b16 %v694
      %v2970 = vunpack.c.l.b16 %v695
      %v2971 = vunpack.c.h.b16 %v695
      %v2972 = vunpack.c.l.b16 %v696
      %v2973 = vunpack.c.h.b16 %v696
      %v2974 = vunpack.c.l.b16 %v697
      %v2975 = vunpack.c.h.b16 %v697
      %v2976 = vunpack.c.l.b16 %v698
      %v2977 = vunpack.c.h.b16 %v698
      %v2978 = vunpack.c.l.b16 %v699
      %v2979 = vunpack.c.h.b16 %v699
      %v2980 = vunpack.c.l.b16 %v700
      %v2981 = vunpack.c.h.b16 %v700
      %v2982 = vunpack.c.l.b16 %v701
      %v2983 = vunpack.c.h.b16 %v701
      %v2984 = vunpack.c.l.b16 %v702
      %v2985 = vunpack.c.h.b16 %v702
      %v2986 = vunpack.c.l.b16 %v703
      %v2987 = vunpack.c.h.b16 %v703
      %v2988 = vunpack.c.l.b16 %v704
      %v2989 = vunpack.c.h.b16 %v704
      %v2990 = vunpack.c.l.b16 %v705
      %v2991 = vunpack.c.h.b16 %v705
      %v2992 = vunpack.c.l.b16 %v706
      %v2993 = vunpack.c.h.b16 %v706
      %v2994 = vunpack.c.l.b16 %v707
      %v2995 = vunpack.c.h.b16 %v707
      %v2996 = vunpack.c.l.b16 %v708
      %v2997 = vunpack.c.h.b16 %v708
      %v2998 = vunpack.c.l.b16 %v709
      %v2999 = vunpack.c.h.b16 %v709
      %v3000 = vunpack.c.l.b16 %v710
      %v3001 = vunpack.c.h.b16 %v710
      %v3002 = vunpack.c.l.b16 %v711
      %v3003 = vunpack.c.h.b16 %v711
      %v3004 = vunpack.c.l.b16 %v712
      %v3005 = vunpack.c.h.b16 %v712
      %v3006 = vunpack.c.l.b16 %v713
      %v3007 = vunpack.c.h.b16 %v713
      %v3008 = vunpack.c.l.b16 %v714
      %v3009 = vunpack.c.h.b16 %v714
      %v3010 = vunpack.c.l.b16 %v715
      %v3011 = vunpack.c.h.b16 %v715
      %v3012 = vunpack.c.l.b16 %v716
      %v3013 = vunpack.c.h.b16 %v716
      %v3014 = vunpack.c.l.b16 %v717
      %v3015 = vunpack.c.h.b16 %v717
      %v3016 = vunpack.c.l.b16 %v718
      %v3017 = vunpack.c.h.b16 %v718
      %v3018 = vunpack.c.l.b16 %v719
      %v3019 = vunpack.c.h.b16 %v719
      %v3020 = vunpack.c.l.b16 %v720
      %v3021 = vunpack.c.h.b16 %v720
      %v3022 = vunpack.c.l.b16 %v721
      %v3023 = vunpack.c.h.b16 %v721
      %v3024 = vunpack.c.l.b16 %v722
      %v3025 = vunpack.c.h.b16 %v722
      %v3026 = vunpack.c.l.b16 %v723
      %v3027 = vunpack.c.h.b16 %v723
      %v3028 = vunpack.c.l.b16 %v724
      %v3029 = vunpack.c.h.b16 %v724
      %v3030 = vunpack.c.l.b16 %v725
      %v3031 = vunpack.c.h.b16 %v725
      %v3032 = vunpack.c.l.b16 %v726
      %v3033 = vunpack.c.h.b16 %v726
      %v3034 = vunpack.c.l.b16 %v727
      %v3035 = vunpack.c.h.b16 %v727
      %v3036 = vunpack.c.l.b16 %v728
      %v3037 = vunpack.c.h.b16 %v728
      %v3038 = vunpack.c.l.b16 %v729
      %v3039 = vunpack.c.h.b16 %v729
      %v3040 = vunpack.c.l.b16 %v730
      %v3041 = vunpack.c.h.b16 %v730
      %v3042 = vunpack.c.l.b16 %v731
      %v3043 = vunpack.c.h.b16 %v731
      %v3044 = vunpack.c.l.b16 %v732
      %v3045 = vunpack.c.h.b16 %v732
      %v3046 = vunpack.c.l.b16 %v733
      %v3047 = vunpack.c.h.b16 %v733
      %v3048 = vunpack.c.l.b16 %v734
      %v3049 = vunpack.c.h.b16 %v734
      %v3050 = vunpack.c.l.b16 %v735
      %v3051 = vunpack.c.h.b16 %v735
      %v3052 = vunpack.c.l.b16 %v736
      %v3053 = vunpack.c.h.b16 %v736
      %v3054 = vunpack.c.l.b16 %v737
      %v3055 = vunpack.c.h.b16 %v737
      %v3056 = vunpack.c.l.b16 %v738
      %v3057 = vunpack.c.h.b16 %v738
      %v3058 = vunpack.c.l.b16 %v739
      %v3059 = vunpack.c.h.b16 %v739
      %v3060 = vunpack.c.l.b16 %v740
      %v3061 = vunpack.c.h.b16 %v740
      %v3062 = vunpack.c.l.b16 %v741
      %v3063 = vunpack.c.h.b16 %v741
      %v3064 = vunpack.c.l.b16 %v742
      %v3065 = vunpack.c.h.b16 %v742
      %v3066 = vunpack.c.l.b16 %v743
      %v3067 = vunpack.c.h.b16 %v743
      %v3068 = vunpack.c.l.b16 %v744
      %v3069 = vunpack.c.h.b16 %v744
      %v3070 = vunpack.c.l.b16 %v745
      %v3071 = vunpack.c.h.b16 %v745
      %v3072 = vunpack.c.l.b16 %v746
      %v3073 = vunpack.c.h.b16 %v746
      %v3074 = vunpack.c.l.b16 %v747
      %v3075 = vunpack.c.h.b16 %v747
      %v3076 = vunpack.c.l.b16 %v748
      %v3077 = vunpack.c.h.b16 %v748
      %v3078 = vunpack.c.l.b16 %v749
      %v3079 = vunpack.c.h.b16 %v749
      %v3080 = vunpack.c.l.b16 %v750
      %v3081 = vunpack.c.h.b16 %v750
      %v3082 = vunpack.c.l.b16 %v751
      %v3083 = vunpack.c.h.b16 %v751
      %v3084 = vunpack.c.l.b16 %v752
      %v3085 = vunpack.c.h.b16 %v752
      %v3086 = vunpack.c.l.b16 %v753
      %v3087 = vunpack.c.h.b16 %v753
      %v3088 = vunpack.c.l.b16 %v754
      %v3089 = vunpack.c.h.b16 %v754
      %v3090 = vunpack.c.l.b16 %v755
      %v3091 = vunpack.c.h.b16 %v755
      %v3092 = vunpack.c.l.b16 %v756
      %v3093 = vunpack.c.h.b16 %v756
      %v3094 = vunpack.c.l.b16 %v757
      %v3095 = vunpack.c.h.b16 %v757
      %v3096 = vunpack.c.l.b16 %v758
      %v3097 = vunpack.c.h.b16 %v758
      %v3098 = vunpack.c.l.b16 %v759
      %v3099 = vunpack.c.h.b16 %v759
      %v3100 = vunpack.c.l.b16 %v760
      %v3101 = vunpack.c.h.b16 %v760
      %v3102 = vunpack.c.l.b16 %v761
      %v3103 = vunpack.c.h.b16 %v761
      %v3104 = vunpack.c.l.b16 %v762
      %v3105 = vunpack.c.h.b16 %v762
      %v3106 = vunpack.c.l.b16 %v763
      %v3107 = vunpack.c.h.b16 %v763
      %v3108 = vunpack.c.l.b16 %v764
      %v3109 = vunpack.c.h.b16 %v764
      %v3110 = vunpack.c.l.b16 %v765
      %v3111 = vunpack.c.h.b16 %v765
      %v3112 = vunpack.c.l.b16 %v766
      %v3113 = vunpack.c.h.b16 %v766
      %v3114 = vunpack.c.l.b16 %v767
      %v3115 = vunpack.c.h.b16 %v767
      %v3116 = vunpack.c.l.b16 %v768
      %v3117 = vunpack.c.h.b16 %v768
      %v3118 = vunpack.c.l.b16 %v769
      %v3119 = vunpack.c.h.b16 %v769
      %v3120 = vunpack.c.l.b16 %v770
      %v3121 = vunpack.c.h.b16 %v770
      %v3122 = vunpack.c.l.b16 %v771
      %v3123 = vunpack.c.h.b16 %v771
      %v3124 = vunpack.c.l.b16 %v772
      %v3125 = vunpack.c.h.b16 %v772
      %v3126 = vunpack.c.l.b16 %v773
      %v3127 = vunpack.c.h.b16 %v773
      %v3128 = vunpack.c.l.b16 %v774
      %v3129 = vunpack.c.h.b16 %v774
      %v3130 = vunpack.c.l.b16 %v775
      %v3131 = vunpack.c.h.b16 %v775
      %v3132 = vunpack.c.l.b16 %v776
      %v3133 = vunpack.c.h.b16 %v776
      %v3134 = vunpack.c.l.b16 %v777
      %v3135 = vunpack.c.h.b16 %v777
      %v3136 = vunpack.c.l.b16 %v778
      %v3137 = vunpack.c.h.b16 %v778
      %v3138 = vunpack.c.l.b16 %v779
      %v3139 = vunpack.c.h.b16 %v779
      %v3140 = vunpack.c.l.b16 %v780
      %v3141 = vunpack.c.h.b16 %v780
      %v3142 = vunpack.c.l.b16 %v781
      %v3143 = vunpack.c.h.b16 %v781
      %v3144 = vunpack.c.l.b16 %v782
      %v3145 = vunpack.c.h.b16 %v782
      %v3146 = vunpack.c.l.b16 %v783
      %v3147 = vunpack.c.h.b16 %v783
      %v3148 = vunpack.c.l.b16 %v784
      %v3149 = vunpack.c.h.b16 %v784
      %v3150 = vunpack.c.l.b16 %v785
      %v3151 = vunpack.c.h.b16 %v785
      %v3152 = vunpack.c.l.b16 %v786
      %v3153 = vunpack.c.h.b16 %v786
      %v3154 = vunpack.c.l.b16 %v787
      %v3155 = vunpack.c.h.b16 %v787
      %v3156 = vunpack.c.l.b16 %v788
      %v3157 = vunpack.c.h.b16 %v788
      %v3158 = vunpack.c.l.b16 %v789
      %v3159 = vunpack.c.h.b16 %v789
      %v3160 = vunpack.c.l.b16 %v790
      %v3161 = vunpack.c.h.b16 %v790
      %v3162 = vunpack.c.l.b16 %v791
      %v3163 = vunpack.c.h.b16 %v791
      %v3164 = vunpack.c.l.b16 %v792
      %v3165 = vunpack.c.h.b16 %v792
      %v3166 = vunpack.c.l.b16 %v793
      %v3167 = vunpack.c.h.b16 %v793
      %v3168 = vunpack.c.l.b16 %v794
      %v3169 = vunpack.c.h.b16 %v794
      %v3170 = vunpack.c.l.b16 %v795
      %v3171 = vunpack.c.h.b16 %v795
      %v3172 = vunpack.c.l.b16 %v796
      %v3173 = vunpack.c.h.b16 %v796
      %v3174 = vunpack.c.l.b16 %v797
      %v3175 = vunpack.c.h.b16 %v797
      %v3176 = vunpack.c.l.b16 %v798
      %v3177 = vunpack.c.h.b16 %v798
      %v3178 = vunpack.c.l.b16 %v799
      %v3179 = vunpack.c.h.b16 %v799
      %v3180 = vunpack.c.l.b16 %v800
      %v3181 = vunpack.c.h.b16 %v800
      %v3182 = vunpack.c.l.b16 %v801
      %v3183 = vunpack.c.h.b16 %v801
      %v3184 = vunpack.c.l.b16 %v802
      %v3185 = vunpack.c.h.b16 %v802
      %v3186 = vunpack.c.l.b16 %v803
      %v3187 = vunpack.c.h.b16 %v803
      %v3188 = vunpack.c.l.b16 %v804
      %v3189 = vunpack.c.h.b16 %v804
      %v3190 = vunpack.c.l.b16 %v805
      %v3191 = vunpack.c.h.b16 %v805
      %v3192 = vunpack.c.l.b16 %v806
      %v3193 = vunpack.c.h.b16 %v806
      %v3194 = vunpack.c.l.b16 %v807
      %v3195 = vunpack.c.h.b16 %v807
      %v3196 = vunpack.c.l.b16 %v808
      %v3197 = vunpack.c.h.b16 %v808
      %v3198 = vunpack.c.l.b16 %v809
      %v3199 = vunpack.c.h.b16 %v809
      %v3200 = vunpack.c.l.b16 %v810
      %v3201 = vunpack.c.h.b16 %v810
      %v3202 = vunpack.c.l.b16 %v811
      %v3203 = vunpack.c.h.b16 %v811
      %v3204 = vunpack.c.l.b16 %v812
      %v3205 = vunpack.c.h.b16 %v812
      %v3206 = vunpack.c.l.b16 %v813
      %v3207 = vunpack.c.h.b16 %v813
      %v3208 = vunpack.c.l.b16 %v814
      %v3209 = vunpack.c.h.b16 %v814
      %v3210 = vunpack.c.l.b16 %v815
      %v3211 = vunpack.c.h.b16 %v815
      %v3212 = vunpack.c.l.b16 %v816
      %v3213 = vunpack.c.h.b16 %v816
      %v3214 = vunpack.c.l.b16 %v817
      %v3215 = vunpack.c.h.b16 %v817
      %v3216 = vunpack.c.l.b16 %v818
      %v3217 = vunpack.c.h.b16 %v818
      %v3218 = vunpack.c.l.b16 %v819
      %v3219 = vunpack.c.h.b16 %v819
      %v3220 = vunpack.c.l.b16 %v820
      %v3221 = vunpack.c.h.b16 %v820
      %v3222 = vunpack.c.l.b16 %v821
      %v3223 = vunpack.c.h.b16 %v821
      %v3224 = vunpack.c.l.b16 %v822
      %v3225 = vunpack.c.h.b16 %v822
      %v3226 = vunpack.c.l.b16 %v823
      %v3227 = vunpack.c.h.b16 %v823
      %v3228 = vunpack.c.l.b16 %v824
      %v3229 = vunpack.c.h.b16 %v824
      %v3230 = vunpack.c.l.b16 %v825
      %v3231 = vunpack.c.h.b16 %v825
      %v3232 = vunpack.c.l.b16 %v826
      %v3233 = vunpack.c.h.b16 %v826
      %v3234 = vunpack.c.l.b16 %v827
      %v3235 = vunpack.c.h.b16 %v827
      %v3236 = vunpack.c.l.b16 %v828
      %v3237 = vunpack.c.h.b16 %v828
      %v3238 = vunpack.c.l.b16 %v829
      %v3239 = vunpack.c.h.b16 %v829
      %v3240 = vunpack.c.l.b16 %v830
      %v3241 = vunpack.c.h.b16 %v830
      %v3242 = vunpack.c.l.b16 %v831
      %v3243 = vunpack.c.h.b16 %v831
      %v3244 = vunpack.c.l.b16 %v832
      %v3245 = vunpack.c.h.b16 %v832
      %v3246 = vunpack.c.l.b16 %v833
      %v3247 = vunpack.c.h.b16 %v833
      %v3248 = vunpack.c.l.b16 %v834
      %v3249 = vunpack.c.h.b16 %v834
      %v3250 = vunpack.c.l.b16 %v835
      %v3251 = vunpack.c.h.b16 %v835
      %v3252 = vunpack.c.l.b16 %v836
      %v3253 = vunpack.c.h.b16 %v836
      %v3254 = vunpack.c.l.b16 %v837
      %v3255 = vunpack.c.h.b16 %v837
      %v3256 = vunpack.c.l.b16 %v838
      %v3257 = vunpack.c.h.b16 %v838
      %v3258 = vunpack.c.l.b16 %v839
      %v3259 = vunpack.c.h.b16 %v839
      %v3260 = vunpack.c.l.b16 %v840
      %v3261 = vunpack.c.h.b16 %v840
      %v3262 = vunpack.c.l.b16 %v841
      %v3263 = vunpack.c.h.b16 %v841
      %v3264 = vunpack.c.l.b16 %v842
      %v3265 = vunpack.c.h.b16 %v842
      %v3266 = vunpack.c.l.b16 %v843
      %v3267 = vunpack.c.h.b16 %v843
      %v3268 = vunpack.c.l.b16 %v844
      %v3269 = vunpack.c.h.b16 %v844
      %v3270 = vunpack.c.l.b16 %v845
      %v3271 = vunpack.c.h.b16 %v845
      %v3272 = vunpack.c.l.b16 %v846
      %v3273 = vunpack.c.h.b16 %v846
      %v3274 = vunpack.c.l.b16 %v847
      %v3275 = vunpack.c.h.b16 %v847
      %v3276 = vunpack.c.l.b16 %v848
      %v3277 = vunpack.c.h.b16 %v848
      %v3278 = vunpack.c.l.b16 %v849
      %v3279 = vunpack.c.h.b16 %v849
      %v3280 = vunpack.c.l.b16 %v850
      %v3281 = vunpack.c.h.b16 %v850
      %v3282 = vunpack.c.l.b16 %v851
      %v3283 = vunpack.c.h.b16 %v851
      %v3284 = vunpack.c.l.b16 %v852
      %v3285 = vunpack.c.h.b16 %v852
      %v3286 = vunpack.c.l.b16 %v853
      %v3287 = vunpack.c.h.b16 %v853
      %v3288 = vunpack.c.l.b16 %v854
      %v3289 = vunpack.c.h.b16 %v854
      %v3290 = vunpack.c.l.b16 %v855
      %v3291 = vunpack.c.h.b16 %v855
      %v3292 = vunpack.c.l.b16 %v856
      %v3293 = vunpack.c.h.b16 %v856
      %v3294 = vunpack.c.l.b16 %v857
      %v3295 = vunpack.c.h.b16 %v857
      %v3296 = vunpack.c.l.b16 %v858
      %v3297 = vunpack.c.h.b16 %v858
      %v3298 = vunpack.c.l.b16 %v859
      %v3299 = vunpack.c.h.b16 %v859
      %v3300 = vunpack.c.l.b16 %v860
      %v3301 = vunpack.c.h.b16 %v860
      %v3302 = vunpack.c.l.b16 %v861
      %v3303 = vunpack.c.h.b16 %v861
      %v3304 = vunpack.c.l.b16 %v862
      %v3305 = vunpack.c.h.b16 %v862
      %v3306 = vunpack.c.l.b16 %v863
      %v3307 = vunpack.c.h.b16 %v863
      %v3308 = vunpack.c.l.b16 %v864
      %v3309 = vunpack.c.h.b16 %v864
      %v3310 = vunpack.c.l.b16 %v865
      %v3311 = vunpack.c.h.b16 %v865
      %v3312 = vunpack.c.l.b16 %v866
      %v3313 = vunpack.c.h.b16 %v866
      %v3314 = vunpack.c.l.b16 %v867
      %v3315 = vunpack.c.h.b16 %v867
      %v3316 = vunpack.c.l.b16 %v868
      %v3317 = vunpack.c.h.b16 %v868
      %v3318 = vunpack.c.l.b16 %v869
      %v3319 = vunpack.c.h.b16 %v869
      %v3320 = vunpack.c.l.b16 %v870
      %v3321 = vunpack.c.h.b16 %v870
      %v3322 = vunpack.c.l.b16 %v871
      %v3323 = vunpack.c.h.b16 %v871
      %v3324 = vunpack.c.l.b16 %v872
      %v3325 = vunpack.c.h.b16 %v872
      %v3326 = vunpack.c.l.b16 %v873
      %v3327 = vunpack.c.h.b16 %v873
      %v3328 = vunpack.c.l.b16 %v874
      %v3329 = vunpack.c.h.b16 %v874
      %v3330 = vunpack.c.l.b16 %v875
      %v3331 = vunpack.c.h.b16 %v875
      %v3332 = vunpack.c.l.b16 %v876
      %v3333 = vunpack.c.h.b16 %v876
      %v3334 = vunpack.c.l.b16 %v877
      %v3335 = vunpack.c.h.b16 %v877
      %v3336 = vunpack.c.l.b16 %v878
      %v3337 = vunpack.c.h.b16 %v878
      %v3338 = vunpack.c.l.b16 %v879
      %v3339 = vunpack.c.h.b16 %v879
      %v3340 = vunpack.c.l.b16 %v880
      %v3341 = vunpack.c.h.b16 %v880
      %v3342 = vunpack.c.l.b16 %v881
      %v3343 = vunpack.c.h.b16 %v881
      %v3344 = vunpack.c.l.b16 %v882
      %v3345 = vunpack.c.h.b16 %v882
      %v3346 = vunpack.c.l.b16 %v883
      %v3347 = vunpack.c.h.b16 %v883
      %v3348 = vunpack.c.l.b16 %v884
      %v3349 = vunpack.c.h.b16 %v884
      %v3350 = vunpack.c.l.b16 %v885
      %v3351 = vunpack.c.h.b16 %v885
      %v3352 = vunpack.c.l.b16 %v886
      %v3353 = vunpack.c.h.b16 %v886
      %v3354 = vunpack.c.l.b16 %v887
      %v3355 = vunpack.c.h.b16 %v887
      %v3356 = vunpack.c.l.b16 %v888
      %v3357 = vunpack.c.h.b16 %v888
      %v3358 = vunpack.c.l.b16 %v889
      %v3359 = vunpack.c.h.b16 %v889
      %v3360 = vunpack.c.l.b16 %v890
      %v3361 = vunpack.c.h.b16 %v890
      %v3362 = vunpack.c.l.b16 %v891
      %v3363 = vunpack.c.h.b16 %v891
      %v3364 = vunpack.c.l.b16 %v892
      %v3365 = vunpack.c.h.b16 %v892
      %v3366 = vunpack.c.l.b16 %v893
      %v3367 = vunpack.c.h.b16 %v893
      %v3368 = vunpack.c.l.b16 %v894
      %v3369 = vunpack.c.h.b16 %v894
      %v3370 = vunpack.c.l.b16 %v895
      %v3371 = vunpack.c.h.b16 %v895
      %v3372 = vunpack.c.l.b16 %v896
      %v3373 = vunpack.c.h.b16 %v896
      %v3374 = vunpack.c.l.b16 %v897
      %v3375 = vunpack.c.h.b16 %v897
      %v3376 = vunpack.c.l.b16 %v898
      %v3377 = vunpack.c.h.b16 %v898
      %v3378 = vunpack.c.l.b16 %v899
      %v3379 = vunpack.c.h.b16 %v899
      %v3380 = vunpack.c.l.b16 %v900
      %v3381 = vunpack.c.h.b16 %v900
      %v3382 = vunpack.c.l.b16 %v901
      %v3383 = vunpack.c.h.b16 %v901
      %v3384 = vunpack.c.l.b16 %v902
      %v3385 = vunpack.c.h.b16 %v902
      %v3386 = vunpack.c.l.b16 %v903
      %v3387 = vunpack.c.h.b16 %v903
      %v3388 = vunpack.c.l.b16 %v904
      %v3389 = vunpack.c.h.b16 %v904
      %v3390 = vunpack.c.l.b16 %v905
      %v3391 = vunpack.c.h.b16 %v905
      %v3392 = vunpack.c.l.b16 %v906
      %v3393 = vunpack.c.h.b16 %v906
      %v3394 = vunpack.c.l.b16 %v907
      %v3395 = vunpack.c.h.b16 %v907
      %v3396 = vunpack.c.l.b16 %v908
      %v3397 = vunpack.c.h.b16 %v908
      %v3398 = vunpack.c.l.b16 %v909
      %v3399 = vunpack.c.h.b16 %v909
      %v3400 = vunpack.c.l.b16 %v910
      %v3401 = vunpack.c.h.b16 %v910
      %v3402 = vunpack.c.l.b16 %v911
      %v3403 = vunpack.c.h.b16 %v911
      %v3404 = vunpack.c.l.b16 %v912
      %v3405 = vunpack.c.h.b16 %v912
      %v3406 = vunpack.c.l.b16 %v913
      %v3407 = vunpack.c.h.b16 %v913
      %v3408 = vunpack.c.l.b16 %v914
      %v3409 = vunpack.c.h.b16 %v914
      %v3410 = vunpack.c.l.b16 %v915
      %v3411 = vunpack.c.h.b16 %v915
      %v3412 = vunpack.c.l.b16 %v916
      %v3413 = vunpack.c.h.b16 %v916
      %v3414 = vunpack.c.l.b16 %v917
      %v3415 = vunpack.c.h.b16 %v917
      %v3416 = vunpack.c.l.b16 %v918
      %v3417 = vunpack.c.h.b16 %v918
      %v3418 = vunpack.c.l.b16 %v919
      %v3419 = vunpack.c.h.b16 %v919
      %v3420 = vunpack.c.l.b16 %v920
      %v3421 = vunpack.c.h.b16 %v920
      %v3422 = vunpack.c.l.b16 %v921
      %v3423 = vunpack.c.h.b16 %v921
      %v3424 = vunpack.c.l.b16 %v922
      %v3425 = vunpack.c.h.b16 %v922
      %v3426 = vunpack.c.l.b16 %v923
      %v3427 = vunpack.c.h.b16 %v923
      %v3428 = vunpack.c.l.b16 %v924
      %v3429 = vunpack.c.h.b16 %v924
      %v3430 = vunpack.c.l.b16 %v925
      %v3431 = vunpack.c.h.b16 %v925
      %v3432 = vunpack.c.l.b16 %v926
      %v3433 = vunpack.c.h.b16 %v926
      %v3434 = vunpack.c.l.b16 %v927
      %v3435 = vunpack.c.h.b16 %v927
      %v3436 = vunpack.c.l.b16 %v928
      %v3437 = vunpack.c.h.b16 %v928
      %v3438 = vunpack.c.l.b16 %v929
      %v3439 = vunpack.c.h.b16 %v929
      %v3440 = vunpack.c.l.b16 %v930
      %v3441 = vunpack.c.h.b16 %v930
      %v3442 = vunpack.c.l.b16 %v931
      %v3443 = vunpack.c.h.b16 %v931
      %v3444 = vunpack.c.l.b16 %v932
      %v3445 = vunpack.c.h.b16 %v932
      %v3446 = vunpack.c.l.b16 %v933
      %v3447 = vunpack.c.h.b16 %v933
      %v3448 = vunpack.c.l.b16 %v934
      %v3449 = vunpack.c.h.b16 %v934
      %v3450 = vunpack.c.l.b16 %v935
      %v3451 = vunpack.c.h.b16 %v935
      %v3452 = vunpack.c.l.b16 %v936
      %v3453 = vunpack.c.h.b16 %v936
      %v3454 = vunpack.c.l.b16 %v937
      %v3455 = vunpack.c.h.b16 %v937
      %v3456 = vunpack.c.l.b16 %v938
      %v3457 = vunpack.c.h.b16 %v938
      %v3458 = vunpack.c.l.b16 %v939
      %v3459 = vunpack.c.h.b16 %v939
      %v3460 = vunpack.c.l.b16 %v940
      %v3461 = vunpack.c.h.b16 %v940
      %v3462 = vunpack.c.l.b16 %v941
      %v3463 = vunpack.c.h.b16 %v941
      %v3464 = vunpack.c.l.b16 %v942
      %v3465 = vunpack.c.h.b16 %v942
      %v3466 = vunpack.c.l.b16 %v943
      %v3467 = vunpack.c.h.b16 %v943
      %v3468 = vunpack.c.l.b16 %v944
      %v3469 = vunpack.c.h.b16 %v944
      %v3470 = vunpack.c.l.b16 %v945
      %v3471 = vunpack.c.h.b16 %v945
      %v3472 = vunpack.c.l.b16 %v946
      %v3473 = vunpack.c.h.b16 %v946
      %v3474 = vunpack.c.l.b16 %v947
      %v3475 = vunpack.c.h.b16 %v947
      %v3476 = vunpack.c.l.b16 %v948
      %v3477 = vunpack.c.h.b16 %v948
      %v3478 = vunpack.c.l.b16 %v949
      %v3479 = vunpack.c.h.b16 %v949
      %v3480 = vunpack.c.l.b16 %v950
      %v3481 = vunpack.c.h.b16 %v950
      %v3482 = vunpack.c.l.b16 %v951
      %v3483 = vunpack.c.h.b16 %v951
      %v3484 = vunpack.c.l.b16 %v952
      %v3485 = vunpack.c.h.b16 %v952
      %v3486 = vunpack.c.l.b16 %v953
      %v3487 = vunpack.c.h.b16 %v953
      %v3488 = vunpack.c.l.b16 %v954
      %v3489 = vunpack.c.h.b16 %v954
      %v3490 = vunpack.c.l.b16 %v955
      %v3491 = vunpack.c.h.b16 %v955
      %v3492 = vunpack.c.l.b16 %v956
      %v3493 = vunpack.c.h.b16 %v956
      %v3494 = vunpack.c.l.b16 %v957
      %v3495 = vunpack.c.h.b16 %v957
      %v3496 = vunpack.c.l.b16 %v958
      %v3497 = vunpack.c.h.b16 %v958
      %v3498 = vunpack.c.l.b16 %v959
      %v3499 = vunpack.c.h.b16 %v959
      %v3500 = vunpack.c.l.b16 %v960
      %v3501 = vunpack.c.h.b16 %v960
      %v3502 = vunpack.c.l.b16 %v961
      %v3503 = vunpack.c.h.b16 %v961
      %v3504 = vunpack.c.l.b16 %v962
      %v3505 = vunpack.c.h.b16 %v962
      %v3506 = vunpack.c.l.b16 %v963
      %v3507 = vunpack.c.h.b16 %v963
      %v3508 = vunpack.c.l.b16 %v964
      %v3509 = vunpack.c.h.b16 %v964
      %v3510 = vunpack.c.l.b16 %v965
      %v3511 = vunpack.c.h.b16 %v965
      %v3512 = vunpack.c.l.b16 %v966
      %v3513 = vunpack.c.h.b16 %v966
      %v3514 = vunpack.c.l.b16 %v967
      %v3515 = vunpack.c.h.b16 %v967
      %v3516 = vunpack.c.l.b16 %v968
      %v3517 = vunpack.c.h.b16 %v968
      %v3518 = vunpack.c.l.b16 %v969
      %v3519 = vunpack.c.h.b16 %v969
      %v3520 = vunpack.c.l.b16 %v970
      %v3521 = vunpack.c.h.b16 %v970
      %v3522 = vunpack.c.l.b16 %v971
      %v3523 = vunpack.c.h.b16 %v971
      %v3524 = vunpack.c.l.b16 %v972
      %v3525 = vunpack.c.h.b16 %v972
      %v3526 = vunpack.c.l.b16 %v973
      %v3527 = vunpack.c.h.b16 %v973
      %v3528 = vunpack.c.l.b16 %v974
      %v3529 = vunpack.c.h.b16 %v974
      %v3530 = vunpack.c.l.b16 %v975
      %v3531 = vunpack.c.h.b16 %v975
      %v3532 = vunpack.c.l.b16 %v976
      %v3533 = vunpack.c.h.b16 %v976
      %v3534 = vunpack.c.l.b16 %v977
      %v3535 = vunpack.c.h.b16 %v977
      %v3536 = vunpack.c.l.b16 %v978
      %v3537 = vunpack.c.h.b16 %v978
      %v3538 = vunpack.c.l.b16 %v979
      %v3539 = vunpack.c.h.b16 %v979
      %v3540 = vunpack.c.l.b16 %v980
      %v3541 = vunpack.c.h.b16 %v980
      %v3542 = vunpack.c.l.b16 %v981
      %v3543 = vunpack.c.h.b16 %v981
      %v3544 = vunpack.c.l.b16 %v982
      %v3545 = vunpack.c.h.b16 %v982
      %v3546 = vunpack.c.l.b16 %v983
      %v3547 = vunpack.c.h.b16 %v983
      %v3548 = vunpack.c.l.b16 %v984
      %v3549 = vunpack.c.h.b16 %v984
      %v3550 = vunpack.c.l.b16 %v985
      %v3551 = vunpack.c.h.b16 %v985
      %v3552 = vunpack.c.l.b16 %v986
      %v3553 = vunpack.c.h.b16 %v986
      %v3554 = vunpack.c.l.b16 %v987
      %v3555 = vunpack.c.h.b16 %v987
      %v3556 = vunpack.c.l.b16 %v988
      %v3557 = vunpack.c.h.b16 %v988
      %v3558 = vunpack.c.l.b16 %v989
      %v3559 = vunpack.c.h.b16 %v989
      %v3560 = vunpack.c.l.b16 %v990
      %v3561 = vunpack.c.h.b16 %v990
      %v3562 = vunpack.c.l.b16 %v991
      %v3563 = vunpack.c.h.b16 %v991
      %v3564 = vunpack.c.l.b16 %v992
      %v3565 = vunpack.c.h.b16 %v992
      %v3566 = vunpack.c.l.b16 %v993
      %v3567 = vunpack.c.h.b16 %v993
      %v3568 = vunpack.c.l.b16 %v994
      %v3569 = vunpack.c.h.b16 %v994
      %v3570 = vunpack.c.l.b16 %v995
      %v3571 = vunpack.c.h.b16 %v995
      %v3572 = vunpack.c.l.b16 %v996
      %v3573 = vunpack.c.h.b16 %v996
      %v3574 = vunpack.c.l.b16 %v997
      %v3575 = vunpack.c.h.b16 %v997
      %v3576 = vunpack.c.l.b16 %v998
      %v3577 = vunpack.c.h.b16 %v998
      %v3578 = vunpack.c.l.b16 %v999
      %v3579 = vunpack.c.h.b16 %v999
      %v3580 = vunpack.c.l.b16 %v1000
      %v3581 = vunpack.c.h.b16 %v1000
      %v3582 = vunpack.c.l.b16 %v1001
      %v3583 = vunpack.c.h.b16 %v1001
      %v3584 = vunpack.c.l.b16 %v1002
      %v3585 = vunpack.c.h.b16 %v1002
      %v3586 = vunpack.c.l.b16 %v1003
      %v3587 = vunpack.c.h.b16 %v1003
      %v3588 = vunpack.c.l.b16 %v1004
      %v3589 = vunpack.c.h.b16 %v1004
      %v3590 = vunpack.c.l.b16 %v1005
      %v3591 = vunpack.c.h.b16 %v1005
      %v3592 = vunpack.c.l.b16 %v1006
      %v3593 = vunpack.c.h.b16 %v1006
      %v3594 = vunpack.c.l.b16 %v1007
      %v3595 = vunpack.c.h.b16 %v1007
      %v3596 = vunpack.c.l.b16 %v1008
      %v3597 = vunpack.c.h.b16 %v1008
      %v3598 = vunpack.c.l.b16 %v1009
      %v3599 = vunpack.c.h.b16 %v1009
      %v3600 = vunpack.c.l.b16 %v1010
      %v3601 = vunpack.c.h.b16 %v1010
      %v3602 = vunpack.c.l.b16 %v1011
      %v3603 = vunpack.c.h.b16 %v1011
      %v3604 = vunpack.c.l.b16 %v1012
      %v3605 = vunpack.c.h.b16 %v1012
      %v3606 = vunpack.c.l.b16 %v1013
      %v3607 = vunpack.c.h.b16 %v1013
      %v3608 = vunpack.c.l.b16 %v1014
      %v3609 = vunpack.c.h.b16 %v1014
      %v3610 = vunpack.c.l.b16 %v1015
      %v3611 = vunpack.c.h.b16 %v1015
      %v3612 = vunpack.c.l.b16 %v1016
      %v3613 = vunpack.c.h.b16 %v1016
      %v3614 = vunpack.c.l.b16 %v1017
      %v3615 = vunpack.c.h.b16 %v1017
      %v3616 = vunpack.c.l.b16 %v1018
      %v3617 = vunpack.c.h.b16 %v1018
      %v3618 = vunpack.c.l.b16 %v1019
      %v3619 = vunpack.c.h.b16 %v1019
      %v3620 = vunpack.c.l.b16 %v1020
      %v3621 = vunpack.c.h.b16 %v1020
      %v3622 = vunpack.c.l.b16 %v1021
      %v3623 = vunpack.c.h.b16 %v1021
      %v3624 = vunpack.c.l.b16 %v1022
      %v3625 = vunpack.c.h.b16 %v1022
      %v3626 = vunpack.c.l.b16 %v1023
      %v3627 = vunpack.c.h.b16 %v1023
      %v3628 = vunpack.c.l.b16 %v1024
      %v3629 = vunpack.c.h.b16 %v1024
      %v3630 = vunpack.c.l.b16 %v1025
      %v3631 = vunpack.c.h.b16 %v1025
      %v3632 = vunpack.c.l.b16 %v1026
      %v3633 = vunpack.c.h.b16 %v1026
      %v3634 = vunpack.c.l.b16 %v1027
      %v3635 = vunpack.c.h.b16 %v1027
      %v3636 = vunpack.c.l.b16 %v1028
      %v3637 = vunpack.c.h.b16 %v1028
      %v3638 = vunpack.c.l.b16 %v1029
      %v3639 = vunpack.c.h.b16 %v1029
      %v3640 = vunpack.c.l.b16 %v1030
      %v3641 = vunpack.c.h.b16 %v1030
      %v3642 = vunpack.c.l.b16 %v1031
      %v3643 = vunpack.c.h.b16 %v1031
      %v3644 = vunpack.c.l.b16 %v1032
      %v3645 = vunpack.c.h.b16 %v1032
      %v3646 = vunpack.c.l.b16 %v1033
      %v3647 = vunpack.c.h.b16 %v1033
      %v3648 = vunpack.c.l.b16 %v1034
      %v3649 = vunpack.c.h.b16 %v1034
      %v3650 = vunpack.c.l.b16 %v1035
      %v3651 = vunpack.c.h.b16 %v1035
      %v3652 = vunpack.c.l.b16 %v1036
      %v3653 = vunpack.c.h.b16 %v1036
      %v3654 = vunpack.c.l.b16 %v1037
      %v3655 = vunpack.c.h.b16 %v1037
      %v3656 = vunpack.c.l.b16 %v1038
      %v3657 = vunpack.c.h.b16 %v1038
      %v3658 = vunpack.c.l.b16 %v1039
      %v3659 = vunpack.c.h.b16 %v1039
      %v3660 = vunpack.c.l.b16 %v1040
      %v3661 = vunpack.c.h.b16 %v1040
      %v3662 = vunpack.c.l.b16 %v1041
      %v3663 = vunpack.c.h.b16 %v1041
      %v3664 = vunpack.c.l.b16 %v1042
      %v3665 = vunpack.c.h.b16 %v1042
      %v3666 = vunpack.c.l.b16 %v1043
      %v3667 = vunpack.c.h.b16 %v1043
      %v3668 = vunpack.c.l.b16 %v1044
      %v3669 = vunpack.c.h.b16 %v1044
      %v3670 = vunpack.c.l.b16 %v1045
      %v3671 = vunpack.c.h.b16 %v1045
      %v3672 = vunpack.c.l.b16 %v1046
      %v3673 = vunpack.c.h.b16 %v1046
      %v3674 = vunpack.c.l.b16 %v1047
      %v3675 = vunpack.c.h.b16 %v1047
      %v3676 = vunpack.c.l.b16 %v1048
      %v3677 = vunpack.c.h.b16 %v1048
      %v3678 = vunpack.c.l.b16 %v1049
      %v3679 = vunpack.c.h.b16 %v1049
      %v3680 = vunpack.c.l.b16 %v1050
      %v3681 = vunpack.c.h.b16 %v1050
      %v3682 = vunpack.c.l.b16 %v1051
      %v3683 = vunpack.c.h.b16 %v1051
      %v3684 = vunpack.c.l.b16 %v1052
      %v3685 = vunpack.c.h.b16 %v1052
      %v3686 = vunpack.c.l.b16 %v1053
      %v3687 = vunpack.c.h.b16 %v1053
      %v3688 = vunpack.c.l.b16 %v1054
      %v3689 = vunpack.c.h.b16 %v1054
      %v3690 = vunpack.c.l.b16 %v1055
      %v3691 = vunpack.c.h.b16 %v1055
      %v3692 = vunpack.c.l.b16 %v1056
      %v3693 = vunpack.c.h.b16 %v1056
      %v3694 = vunpack.c.l.b16 %v1057
      %v3695 = vunpack.c.h.b16 %v1057
      %v3696 = vunpack.c.l.b16 %v1058
      %v3697 = vunpack.c.h.b16 %v1058
      %v3698 = vunpack.c.l.b16 %v1059
      %v3699 = vunpack.c.h.b16 %v1059
      %v3700 = vunpack.c.l.b16 %v1060
      %v3701 = vunpack.c.h.b16 %v1060
      %v3702 = vunpack.c.l.b16 %v1061
      %v3703 = vunpack.c.h.b16 %v1061
      %v3704 = vunpack.c.l.b16 %v1062
      %v3705 = vunpack.c.h.b16 %v1062
      %v3706 = vunpack.c.l.b16 %v1063
      %v3707 = vunpack.c.h.b16 %v1063
      %v3708 = vunpack.c.l.b16 %v1064
      %v3709 = vunpack.c.h.b16 %v1064
      %v3710 = vunpack.c.l.b16 %v1065
      %v3711 = vunpack.c.h.b16 %v1065
      %v3712 = vunpack.c.l.b16 %v1066
      %v3713 = vunpack.c.h.b16 %v1066
      %v3714 = vunpack.c.l.b16 %v1067
      %v3715 = vunpack.c.h.b16 %v1067
      %v3716 = vunpack.c.l.b16 %v1068
      %v3717 = vunpack.c.h.b16 %v1068
      %v3718 = vunpack.c.l.b16 %v1069
      %v3719 = vunpack.c.h.b16 %v1069
      %v3720 = vunpack.c.l.b16 %v1070
      %v3721 = vunpack.c.h.b16 %v1070
      %v3722 = vunpack.c.l.b16 %v1071
      %v3723 = vunpack.c.h.b16 %v1071
      %v3724 = vunpack.c.l.b16 %v1072
      %v3725 = vunpack.c.h.b16 %v1072
      %v3726 = vunpack.c.l.b16 %v1073
      %v3727 = vunpack.c.h.b16 %v1073
      %v3728 = vunpack.c.l.b16 %v1074
      %v3729 = vunpack.c.h.b16 %v1074
      %v3730 = vunpack.c.l.b16 %v1075
      %v3731 = vunpack.c.h.b16 %v1075
      %v3732 = vunpack.c.l.b16 %v1076
      %v3733 = vunpack.c.h.b16 %v1076
      %v3734 = vunpack.c.l.b16 %v1077
      %v3735 = vunpack.c.h.b16 %v1077
      %v3736 = vunpack.c.l.b16 %v1078
      %v3737 = vunpack.c.h.b16 %v1078
      %v3738 = vunpack.c.l.b16 %v1079
      %v3739 = vunpack.c.h.b16 %v1079
      %v3740 = vunpack.c.l.b16 %v1080
      %v3741 = vunpack.c.h.b16 %v1080
      %v3742 = vunpack.c.l.b16 %v1081
      %v3743 = vunpack.c.h.b16 %v1081
      %v3744 = vunpack.c.l.b16 %v1082
      %v3745 = vunpack.c.h.b16 %v1082
      %v3746 = vunpack.c.l.b16 %v1083
      %v3747 = vunpack.c.h.b16 %v1083
      %v3748 = vunpack.c.l.b16 %v1084
      %v3749 = vunpack.c.h.b16 %v1084
      %v3750 = vunpack.c.l.b16 %v1085
      %v3751 = vunpack.c.h.b16 %v1085
      %v3752 = vunpack.c.l.b16 %v1086
      %v3753 = vunpack.c.h.b16 %v1086
      %v3754 = vunpack.c.l.b16 %v1087
      %v3755 = vunpack.c.h.b16 %v1087
      %v3756 = vunpack.c.l.b16 %v1088
      %v3757 = vunpack.c.h.b16 %v1088
      %v3758 = vunpack.c.l.b16 %v1089
      %v3759 = vunpack.c.h.b16 %v1089
      %v3760 = vunpack.c.l.b16 %v1090
      %v3761 = vunpack.c.h.b16 %v1090
      %v3762 = vunpack.c.l.b16 %v1091
      %v3763 = vunpack.c.h.b16 %v1091
      %v3764 = vunpack.c.l.b16 %v1092
      %v3765 = vunpack.c.h.b16 %v1092
      %v3766 = vunpack.c.l.b16 %v1093
      %v3767 = vunpack.c.h.b16 %v1093
      %v3768 = vunpack.c.l.b16 %v1094
      %v3769 = vunpack.c.h.b16 %v1094
      %v3770 = vunpack.c.l.b16 %v1095
      %v3771 = vunpack.c.h.b16 %v1095
      %v3772 = vunpack.c.l.b16 %v1096
      %v3773 = vunpack.c.h.b16 %v1096
      %v3774 = vunpack.c.l.b16 %v1097
      %v3775 = vunpack.c.h.b16 %v1097
      %v3776 = vunpack.c.l.b16 %v1098
      %v3777 = vunpack.c.h.b16 %v1098
      %v3778 = vunpack.c.l.b16 %v1099
      %v3779 = vunpack.c.h.b16 %v1099
      %v3780 = vunpack.c.l.b16 %v1100
      %v3781 = vunpack.c.h.b16 %v1100
      %v3782 = vunpack.c.l.b16 %v1101
      %v3783 = vunpack.c.h.b16 %v1101
      %v3784 = vunpack.c.l.b16 %v1102
      %v3785 = vunpack.c.h.b16 %v1102
      %v3786 = vunpack.c.l.b16 %v1103
      %v3787 = vunpack.c.h.b16 %v1103
      %v3788 = vunpack.c.l.b16 %v1104
      %v3789 = vunpack.c.h.b16 %v1104
      %v3790 = vunpack.c.l.b16 %v1105
      %v3791 = vunpack.c.h.b16 %v1105
      %v3792 = vunpack.c.l.b16 %v1106
      %v3793 = vunpack.c.h.b16 %v1106
      %v3794 = vunpack.c.l.b16 %v1107
      %v3795 = vunpack.c.h.b16 %v1107
      %v3796 = vunpack.c.l.b16 %v1108
      %v3797 = vunpack.c.h.b16 %v1108
      %v3798 = vunpack.c.l.b16 %v1109
      %v3799 = vunpack.c.h.b16 %v1109
      %v3800 = vunpack.c.l.b16 %v1110
      %v3801 = vunpack.c.h.b16 %v1110
      %v3802 = vunpack.c.l.b16 %v1111
      %v3803 = vunpack.c.h.b16 %v1111
      %v3804 = vunpack.c.l.b16 %v1112
      %v3805 = vunpack.c.h.b16 %v1112
      %v3806 = vunpack.c.l.b16 %v1113
      %v3807 = vunpack.c.h.b16 %v1113
      %v3808 = vunpack.c.l.b16 %v1114
      %v3809 = vunpack.c.h.b16 %v1114
      %v3810 = vunpack.c.l.b16 %v1115
      %v3811 = vunpack.c.h.b16 %v1115
      %v3812 = vunpack.c.l.b16 %v1116
      %v3813 = vunpack.c.h.b16 %v1116
      %v3814 = vunpack.c.l.b16 %v1117
      %v3815 = vunpack.c.h.b16 %v1117
      %v3816 = vunpack.c.l.b16 %v1118
      %v3817 = vunpack.c.h.b16 %v1118
      %v3818 = vunpack.c.l.b16 %v1119
      %v3819 = vunpack.c.h.b16 %v1119
      %v3820 = vunpack.c.l.b16 %v1120
      %v3821 = vunpack.c.h.b16 %v1120
      %v3822 = vunpack.c.l.b16 %v1121
      %v3823 = vunpack.c.h.b16 %v1121
      %v3824 = vunpack.c.l.b16 %v1122
      %v3825 = vunpack.c.h.b16 %v1122
      %v3826 = vunpack.c.l.b16 %v1123
      %v3827 = vunpack.c.h.b16 %v1123
      %v3828 = vunpack.c.l.b16 %v1124
      %v3829 = vunpack.c.h.b16 %v1124
      %v3830 = vunpack.c.l.b16 %v1125
      %v3831 = vunpack.c.h.b16 %v1125
      %v3832 = vunpack.c.l.b16 %v1126
      %v3833 = vunpack.c.h.b16 %v1126
      %v3834 = vunpack.c.l.b16 %v1127
      %v3835 = vunpack.c.h.b16 %v1127
      %v3836 = vunpack.c.l.b16 %v1128
      %v3837 = vunpack.c.h.b16 %v1128
      %v3838 = vunpack.c.l.b16 %v1129
      %v3839 = vunpack.c.h.b16 %v1129
      %v3840 = vunpack.c.l.b16 %v1130
      %v3841 = vunpack.c.h.b16 %v1130
      %v3842 = vunpack.c.l.b16 %v1131
      %v3843 = vunpack.c.h.b16 %v1131
      %v3844 = vunpack.c.l.b16 %v1132
      %v3845 = vunpack.c.h.b16 %v1132
      %v3846 = vunpack.c.l.b16 %v1133
      %v3847 = vunpack.c.h.b16 %v1133
      %v3848 = vunpack.c.l.b16 %v1134
      %v3849 = vunpack.c.h.b16 %v1134
      %v3850 = vunpack.c.l.b16 %v1135
      %v3851 = vunpack.c.h.b16 %v1135
      %v3852 = vunpack.c.l.b16 %v1136
      %v3853 = vunpack.c.h.b16 %v1136
      %v3854 = vunpack.c.l.b16 %v1137
      %v3855 = vunpack.c.h.b16 %v1137
      %v3856 = vunpack.c.l.b16 %v1138
      %v3857 = vunpack.c.h.b16 %v1138
      %v3858 = vunpack.c.l.b16 %v1139
      %v3859 = vunpack.c.h.b16 %v1139
      %v3860 = vpack.c.b16 %v2076, %v2068
      %v3861 = vpack.c.b16 %v2077, %v2069
      %v3862 = vpack.c.b16 %v2078, %v2070
      %v3863 = vpack.c.b16 %v2079, %v2071
      %v3864 = vpack.c.b16 %v2080, %v2072
      %v3865 = vpack.c.b16 %v2081, %v2073
      %v3866 = vpack.c.b16 %v2082, %v2074
      %v3867 = vpack.c.b16 %v2083, %v2075
      %v3868 = vpack.c.b16 %v2092, %v2084
      %v3869 = vpack.c.b16 %v2093, %v2085
      %v3870 = vpack.c.b16 %v2094, %v2086
      %v3871 = vpack.c.b16 %v2095, %v2087
      %v3872 = vpack.c.b16 %v2096, %v2088
      %v3873 = vpack.c.b16 %v2097, %v2089
      %v3874 = vpack.c.b16 %v2098, %v2090
      %v3875 = vpack.c.b16 %v2099, %v2091
      %v3876 = vpack.c.b16 %v2108, %v2100
      %v3877 = vpack.c.b16 %v2109, %v2101
      %v3878 = vpack.c.b16 %v2110, %v2102
      %v3879 = vpack.c.b16 %v2111, %v2103
      %v3880 = vpack.c.b16 %v2112, %v2104
      %v3881 = vpack.c.b16 %v2113, %v2105
      %v3882 = vpack.c.b16 %v2114, %v2106
      %v3883 = vpack.c.b16 %v2115, %v2107
      %v3884 = vpack.c.b16 %v2124, %v2116
      %v3885 = vpack.c.b16 %v2125, %v2117
      %v3886 = vpack.c.b16 %v2126, %v2118
      %v3887 = vpack.c.b16 %v2127, %v2119
      %v3888 = vpack.c.b16 %v2128, %v2120
      %v3889 = vpack.c.b16 %v2129, %v2121
      %v3890 = vpack.c.b16 %v2130, %v2122
      %v3891 = vpack.c.b16 %v2131, %v2123
      %v3892 = vpack.c.b16 %v2140, %v2132
      %v3893 = vpack.c.b16 %v2141, %v2133
      %v3894 = vpack.c.b16 %v2142, %v2134
      %v3895 = vpack.c.b16 %v2143, %v2135
      %v3896 = vpack.c.b16 %v2144, %v2136
      %v3897 = vpack.c.b16 %v2145, %v2137
      %v3898 = vpack.c.b16 %v2146, %v2138
      %v3899 = vpack.c.b16 %v2147, %v2139
      %v3900 = vpack.c.b16 %v2156, %v2148
      %v3901 = vpack.c.b16 %v2157, %v2149
      %v3902 = vpack.c.b16 %v2158, %v2150
      %v3903 = vpack.c.b16 %v2159, %v2151
      %v3904 = vpack.c.b16 %v2160, %v2152
      %v3905 = vpack.c.b16 %v2161, %v2153
      %v3906 = vpack.c.b16 %v2162, %v2154
      %v3907 = vpack.c.b16 %v2163, %v2155
      %v3908 = vpack.c.b16 %v2172, %v2164
      %v3909 = vpack.c.b16 %v2173, %v2165
      %v3910 = vpack.c.b16 %v2174, %v2166
      %v3911 = vpack.c.b16 %v2175, %v2167
      %v3912 = vpack.c.b16 %v2176, %v2168
      %v3913 = vpack.c.b16 %v2177, %v2169
      %v3914 = vpack.c.b16 %v2178, %v2170
      %v3915 = vpack.c.b16 %v2179, %v2171
      %v3916 = vpack.c.b16 %v2188, %v2180
      %v3917 = vpack.c.b16 %v2189, %v2181
      %v3918 = vpack.c.b16 %v2190, %v2182
      %v3919 = vpack.c.b16 %v2191, %v2183
      %v3920 = vpack.c.b16 %v2192, %v2184
      %v3921 = vpack.c.b16 %v2193, %v2185
      %v3922 = vpack.c.b16 %v2194, %v2186
      %v3923 = vpack.c.b16 %v2195, %v2187
      %v3924 = vpack.c.b16 %v2204, %v2196
      %v3925 = vpack.c.b16 %v2205, %v2197
      %v3926 = vpack.c.b16 %v2206, %v2198
      %v3927 = vpack.c.b16 %v2207, %v2199
      %v3928 = vpack.c.b16 %v2208, %v2200
      %v3929 = vpack.c.b16 %v2209, %v2201
      %v3930 = vpack.c.b16 %v2210, %v2202
      %v3931 = vpack.c.b16 %v2211, %v2203
      %v3932 = vpack.c.b16 %v2220, %v2212
      %v3933 = vpack.c.b16 %v2221, %v2213
      %v3934 = vpack.c.b16 %v2222, %v2214
      %v3935 = vpack.c.b16 %v2223, %v2215
      %v3936 = vpack.c.b16 %v2224, %v2216
      %v3937 = vpack.c.b16 %v2225, %v2217
      %v3938 = vpack.c.b16 %v2226, %v2218
      %v3939 = vpack.c.b16 %v2227, %v2219
      %v3940 = vpack.c.b16 %v2236, %v2228
      %v3941 = vpack.c.b16 %v2237, %v2229
      %v3942 = vpack.c.b16 %v2238, %v2230
      %v3943 = vpack.c.b16 %v2239, %v2231
      %v3944 = vpack.c.b16 %v2240, %v2232
      %v3945 = vpack.c.b16 %v2241, %v2233
      %v3946 = vpack.c.b16 %v2242, %v2234
      %v3947 = vpack.c.b16 %v2243, %v2235
      %v3948 = vpack.c.b16 %v2252, %v2244
      %v3949 = vpack.c.b16 %v2253, %v2245
      %v3950 = vpack.c.b16 %v2254, %v2246
      %v3951 = vpack.c.b16 %v2255, %v2247
      %v3952 = vpack.c.b16 %v2256, %v2248
      %v3953 = vpack.c.b16 %v2257, %v2249
      %v3954 = vpack.c.b16 %v2258, %v2250
      %v3955 = vpack.c.b16 %v2259, %v2251
      %v3956 = vpack.c.b16 %v2268, %v2260
      %v3957 = vpack.c.b16 %v2269, %v2261
      %v3958 = vpack.c.b16 %v2270, %v2262
      %v3959 = vpack.c.b16 %v2271, %v2263
      %v3960 = vpack.c.b16 %v2272, %v2264
      %v3961 = vpack.c.b16 %v2273, %v2265
      %v3962 = vpack.c.b16 %v2274, %v2266
      %v3963 = vpack.c.b16 %v2275, %v2267
      %v3964 = vpack.c.b16 %v2284, %v2276
      %v3965 = vpack.c.b16 %v2285, %v2277
      %v3966 = vpack.c.b16 %v2286, %v2278
      %v3967 = vpack.c.b16 %v2287, %v2279
      %v3968 = vpack.c.b16 %v2288, %v2280
      %v3969 = vpack.c.b16 %v2289, %v2281
      %v3970 = vpack.c.b16 %v2290, %v2282
      %v3971 = vpack.c.b16 %v2291, %v2283
      %v3972 = vpack.c.b16 %v2300, %v2292
      %v3973 = vpack.c.b16 %v2301, %v2293
      %v3974 = vpack.c.b16 %v2302, %v2294
      %v3975 = vpack.c.b16 %v2303, %v2295
      %v3976 = vpack.c.b16 %v2304, %v2296
      %v3977 = vpack.c.b16 %v2305, %v2297
      %v3978 = vpack.c.b16 %v2306, %v2298
      %v3979 = vpack.c.b16 %v2307, %v2299
      %v3980 = vpack.c.b16 %v2316, %v2308
      %v3981 = vpack.c.b16 %v2317, %v2309
      %v3982 = vpack.c.b16 %v2318, %v2310
      %v3983 = vpack.c.b16 %v2319, %v2311
      %v3984 = vpack.c.b16 %v2320, %v2312
      %v3985 = vpack.c.b16 %v2321, %v2313
      %v3986 = vpack.c.b16 %v2322, %v2314
      %v3987 = vpack.c.b16 %v2323, %v2315
      %v3988 = vpack.c.b16 %v2332, %v2324
      %v3989 = vpack.c.b16 %v2333, %v2325
      %v3990 = vpack.c.b16 %v2334, %v2326
      %v3991 = vpack.c.b16 %v2335, %v2327
      %v3992 = vpack.c.b16 %v2336, %v2328
      %v3993 = vpack.c.b16 %v2337, %v2329
      %v3994 = vpack.c.b16 %v2338, %v2330
      %v3995 = vpack.c.b16 %v2339, %v2331
      %v3996 = vpack.c.b16 %v2348, %v2340
      %v3997 = vpack.c.b16 %v2349, %v2341
      %v3998 = vpack.c.b16 %v2350, %v2342
      %v3999 = vpack.c.b16 %v2351, %v2343
      %v4000 = vpack.c.b16 %v2352, %v2344
      %v4001 = vpack.c.b16 %v2353, %v2345
      %v4002 = vpack.c.b16 %v2354, %v2346
      %v4003 = vpack.c.b16 %v2355, %v2347
      %v4004 = vpack.c.b16 %v2364, %v2356
      %v4005 = vpack.c.b16 %v2365, %v2357
      %v4006 = vpack.c.b16 %v2366, %v2358
      %v4007 = vpack.c.b16 %v2367, %v2359
      %v4008 = vpack.c.b16 %v2368, %v2360
      %v4009 = vpack.c.b16 %v2369, %v2361
      %v4010 = vpack.c.b16 %v2370, %v2362
      %v4011 = vpack.c.b16 %v2371, %v2363
      %v4012 = vpack.c.b16 %v2380, %v2372
      %v4013 = vpack.c.b16 %v2381, %v2373
      %v4014 = vpack.c.b16 %v2382, %v2374
      %v4015 = vpack.c.b16 %v2383, %v2375
      %v4016 = vpack.c.b16 %v2384, %v2376
      %v4017 = vpack.c.b16 %v2385, %v2377
      %v4018 = vpack.c.b16 %v2386, %v2378
      %v4019 = vpack.c.b16 %v2387, %v2379
      %v4020 = vpack.c.b16 %v2396, %v2388
      %v4021 = vpack.c.b16 %v2397, %v2389
      %v4022 = vpack.c.b16 %v2398, %v2390
      %v4023 = vpack.c.b16 %v2399, %v2391
      %v4024 = vpack.c.b16 %v2400, %v2392
      %v4025 = vpack.c.b16 %v2401, %v2393
      %v4026 = vpack.c.b16 %v2402, %v2394
      %v4027 = vpack.c.b16 %v2403, %v2395
      %v4028 = vpack.c.b16 %v2412, %v2404
      %v4029 = vpack.c.b16 %v2413, %v2405
      %v4030 = vpack.c.b16 %v2414, %v2406
      %v4031 = vpack.c.b16 %v2415, %v2407
      %v4032 = vpack.c.b16 %v2416, %v2408
      %v4033 = vpack.c.b16 %v2417, %v2409
      %v4034 = vpack.c.b16 %v2418, %v2410
      %v4035 = vpack.c.b16 %v2419, %v2411
      %v4036 = vpack.c.b16 %v2428, %v2420
      %v4037 = vpack.c.b16 %v2429, %v2421
      %v4038 = vpack.c.b16 %v2430, %v2422
      %v4039 = vpack.c.b16 %v2431, %v2423
      %v4040 = vpack.c.b16 %v2432, %v2424
      %v4041 = vpack.c.b16 %v2433, %v2425
      %v4042 = vpack.c.b16 %v2434, %v2426
      %v4043 = vpack.c.b16 %v2435, %v2427
      %v4044 = vpack.c.b16 %v2444, %v2436
      %v4045 = vpack.c.b16 %v2445, %v2437
      %v4046 = vpack.c.b16 %v2446, %v2438
      %v4047 = vpack.c.b16 %v2447, %v2439
      %v4048 = vpack.c.b16 %v2448, %v2440
      %v4049 = vpack.c.b16 %v2449, %v2441
      %v4050 = vpack.c.b16 %v2450, %v2442
      %v4051 = vpack.c.b16 %v2451, %v2443
      %v4052 = vpack.c.b16 %v2460, %v2452
      %v4053 = vpack.c.b16 %v2461, %v2453
      %v4054 = vpack.c.b16 %v2462, %v2454
      %v4055 = vpack.c.b16 %v2463, %v2455
      %v4056 = vpack.c.b16 %v2464, %v2456
      %v4057 = vpack.c.b16 %v2465, %v2457
      %v4058 = vpack.c.b16 %v2466, %v2458
      %v4059 = vpack.c.b16 %v2467, %v2459
      %v4060 = vpack.c.b16 %v2476, %v2468
      %v4061 = vpack.c.b16 %v2477, %v2469
      %v4062 = vpack.c.b16 %v2478, %v2470
      %v4063 = vpack.c.b16 %v2479, %v2471
      %v4064 = vpack.c.b16 %v2480, %v2472
      %v4065 = vpack.c.b16 %v2481, %v2473
      %v4066 = vpack.c.b16 %v2482, %v2474
      %v4067 = vpack.c.b16 %v2483, %v2475
      %v4068 = vpack.c.b16 %v2492, %v2484
      %v4069 = vpack.c.b16 %v2493, %v2485
      %v4070 = vpack.c.b16 %v2494, %v2486
      %v4071 = vpack.c.b16 %v2495, %v2487
      %v4072 = vpack.c.b16 %v2496, %v2488
      %v4073 = vpack.c.b16 %v2497, %v2489
      %v4074 = vpack.c.b16 %v2498, %v2490
      %v4075 = vpack.c.b16 %v2499, %v2491
      %v4076 = vpack.c.b16 %v2508, %v2500
      %v4077 = vpack.c.b16 %v2509, %v2501
      %v4078 = vpack.c.b16 %v2510, %v2502
      %v4079 = vpack.c.b16 %v2511, %v2503
      %v4080 = vpack.c.b16 %v2512, %v2504
      %v4081 = vpack.c.b16 %v2513, %v2505
      %v4082 = vpack.c.b16 %v2514, %v2506
      %v4083 = vpack.c.b16 %v2515, %v2507
      %v4084 = vpack.c.b16 %v2524, %v2516
      %v4085 = vpack.c.b16 %v2525, %v2517
      %v4086 = vpack.c.b16 %v2526, %v2518
      %v4087 = vpack.c.b16 %v2527, %v2519
      %v4088 = vpack.c.b16 %v2528, %v2520
      %v4089 = vpack.c.b16 %v2529, %v2521
      %v4090 = vpack.c.b16 %v2530, %v2522
      %v4091 = vpack.c.b16 %v2531, %v2523
      %v4092 = vpack.c.b16 %v2540, %v2532
      %v4093 = vpack.c.b16 %v2541, %v2533
      %v4094 = vpack.c.b16 %v2542, %v2534
      %v4095 = vpack.c.b16 %v2543, %v2535
      %v4096 = vpack.c.b16 %v2544, %v2536
      %v4097 = vpack.c.b16 %v2545, %v2537
      %v4098 = vpack.c.b16 %v2546, %v2538
      %v4099 = vpack.c.b16 %v2547, %v2539
      %v4100 = vpack.c.b16 %v2556, %v2548
      %v4101 = vpack.c.b16 %v2557, %v2549
      %v4102 = vpack.c.b16 %v2558, %v2550
      %v4103 = vpack.c.b16 %v2559, %v2551
      %v4104 = vpack.c.b16 %v2560, %v2552
      %v4105 = vpack.c.b16 %v2561, %v2553
      %v4106 = vpack.c.b16 %v2562, %v2554
      %v4107 = vpack.c.b16 %v2563, %v2555
      %v4108 = vpack.c.b16 %v2572, %v2564
      %v4109 = vpack.c.b16 %v2573, %v2565
      %v4110 = vpack.c.b16 %v2574, %v2566
      %v4111 = vpack.c.b16 %v2575, %v2567
      %v4112 = vpack.c.b16 %v2576, %v2568
      %v4113 = vpack.c.b16 %v2577, %v2569
      %v4114 = vpack.c.b16 %v2578, %v2570
      %v4115 = vpack.c.b16 %v2579, %v2571
      %v4116 = vpack.c.b16 %v2588, %v2580
      %v4117 = vpack.c.b16 %v2589, %v2581
      %v4118 = vpack.c.b16 %v2590, %v2582
      %v4119 = vpack.c.b16 %v2591, %v2583
      %v4120 = vpack.c.b16 %v2592, %v2584
      %v4121 = vpack.c.b16 %v2593, %v2585
      %v4122 = vpack.c.b16 %v2594, %v2586
      %v4123 = vpack.c.b16 %v2595, %v2587
      %v4124 = vpack.c.b16 %v2604, %v2596
      %v4125 = vpack.c.b16 %v2605, %v2597
      %v4126 = vpack.c.b16 %v2606, %v2598
      %v4127 = vpack.c.b16 %v2607, %v2599
      %v4128 = vpack.c.b16 %v2608, %v2600
      %v4129 = vpack.c.b16 %v2609, %v2601
      %v4130 = vpack.c.b16 %v2610, %v2602
      %v4131 = vpack.c.b16 %v2611, %v2603
      %v4132 = vpack.c.b16 %v2620, %v2612
      %v4133 = vpack.c.b16 %v2621, %v2613
      %v4134 = vpack.c.b16 %v2622, %v2614
      %v4135 = vpack.c.b16 %v2623, %v2615
      %v4136 = vpack.c.b16 %v2624, %v2616
      %v4137 = vpack.c.b16 %v2625, %v2617
      %v4138 = vpack.c.b16 %v2626, %v2618
      %v4139 = vpack.c.b16 %v2627, %v2619
      %v4140 = vpack.c.b16 %v2636, %v2628
      %v4141 = vpack.c.b16 %v2637, %v2629
      %v4142 = vpack.c.b16 %v2638, %v2630
      %v4143 = vpack.c.b16 %v2639, %v2631
      %v4144 = vpack.c.b16 %v2640, %v2632
      %v4145 = vpack.c.b16 %v2641, %v2633
      %v4146 = vpack.c.b16 %v2642, %v2634
      %v4147 = vpack.c.b16 %v2643, %v2635
      %v4148 = vpack.c.b16 %v2652, %v2644
      %v4149 = vpack.c.b16 %v2653, %v2645
      %v4150 = vpack.c.b16 %v2654, %v2646
      %v4151 = vpack.c.b16 %v2655, %v2647
      %v4152 = vpack.c.b16 %v2656, %v2648
      %v4153 = vpack.c.b16 %v2657, %v2649
      %v4154 = vpack.c.b16 %v2658, %v2650
      %v4155 = vpack.c.b16 %v2659, %v2651
      %v4156 = vpack.c.b16 %v2668, %v2660
      %v4157 = vpack.c.b16 %v2669, %v2661
      %v4158 = vpack.c.b16 %v2670, %v2662
      %v4159 = vpack.c.b16 %v2671, %v2663
      %v4160 = vpack.c.b16 %v2672, %v2664
      %v4161 = vpack.c.b16 %v2673, %v2665
      %v4162 = vpack.c.b16 %v2674, %v2666
      %v4163 = vpack.c.b16 %v2675, %v2667
      %v4164 = vpack.c.b16 %v2684, %v2676
      %v4165 = vpack.c.b16 %v2685, %v2677
      %v4166 = vpack.c.b16 %v2686, %v2678
      %v4167 = vpack.c.b16 %v2687, %v2679
      %v4168 = vpack.c.b16 %v2688, %v2680
      %v4169 = vpack.c.b16 %v2689, %v2681
      %v4170 = vpack.c.b16 %v2690, %v2682
      %v4171 = vpack.c.b16 %v2691, %v2683
      %v4172 = vpack.c.b16 %v2700, %v2692
      %v4173 = vpack.c.b16 %v2701, %v2693
      %v4174 = vpack.c.b16 %v2702, %v2694
      %v4175 = vpack.c.b16 %v2703, %v2695
      %v4176 = vpack.c.b16 %v2704, %v2696
      %v4177 = vpack.c.b16 %v2705, %v2697
      %v4178 = vpack.c.b16 %v2706, %v2698
      %v4179 = vpack.c.b16 %v2707, %v2699
      %v4180 = vpack.c.b16 %v2716, %v2708
      %v4181 = vpack.c.b16 %v2717, %v2709
      %v4182 = vpack.c.b16 %v2718, %v2710
      %v4183 = vpack.c.b16 %v2719, %v2711
      %v4184 = vpack.c.b16 %v2720, %v2712
      %v4185 = vpack.c.b16 %v2721, %v2713
      %v4186 = vpack.c.b16 %v2722, %v2714
      %v4187 = vpack.c.b16 %v2723, %v2715
      %v4188 = vpack.c.b16 %v2732, %v2724
      %v4189 = vpack.c.b16 %v2733, %v2725
      %v4190 = vpack.c.b16 %v2734, %v2726
      %v4191 = vpack.c.b16 %v2735, %v2727
      %v4192 = vpack.c.b16 %v2736, %v2728
      %v4193 = vpack.c.b16 %v2737, %v2729
      %v4194 = vpack.c.b16 %v2738, %v2730
      %v4195 = vpack.c.b16 %v2739, %v2731
      %v4196 = vpack.c.b16 %v2748, %v2740
      %v4197 = vpack.c.b16 %v2749, %v2741
      %v4198 = vpack.c.b16 %v2750, %v2742
      %v4199 = vpack.c.b16 %v2751, %v2743
      %v4200 = vpack.c.b16 %v2752, %v2744
      %v4201 = vpack.c.b16 %v2753, %v2745
      %v4202 = vpack.c.b16 %v2754, %v2746
      %v4203 = vpack.c.b16 %v2755, %v2747
      %v4204 = vpack.c.b16 %v2764, %v2756
      %v4205 = vpack.c.b16 %v2765, %v2757
      %v4206 = vpack.c.b16 %v2766, %v2758
      %v4207 = vpack.c.b16 %v2767, %v2759
      %v4208 = vpack.c.b16 %v2768, %v2760
      %v4209 = vpack.c.b16 %v2769, %v2761
      %v4210 = vpack.c.b16 %v2770, %v2762
      %v4211 = vpack.c.b16 %v2771, %v2763
      %v4212 = vpack.c.b16 %v2780, %v2772
      %v4213 = vpack.c.b16 %v2781, %v2773
      %v4214 = vpack.c.b16 %v2782, %v2774
      %v4215 = vpack.c.b16 %v2783, %v2775
      %v4216 = vpack.c.b16 %v2784, %v2776
      %v4217 = vpack.c.b16 %v2785, %v2777
      %v4218 = vpack.c.b16 %v2786, %v2778
      %v4219 = vpack.c.b16 %v2787, %v2779
      %v4220 = vpack.c.b16 %v2796, %v2788
      %v4221 = vpack.c.b16 %v2797, %v2789
      %v4222 = vpack.c.b16 %v2798, %v2790
      %v4223 = vpack.c.b16 %v2799, %v2791
      %v4224 = vpack.c.b16 %v2800, %v2792
      %v4225 = vpack.c.b16 %v2801, %v2793
      %v4226 = vpack.c.b16 %v2802, %v2794
      %v4227 = vpack.c.b16 %v2803, %v2795
      %v4228 = vpack.c.b16 %v2812, %v2804
      %v4229 = vpack.c.b16 %v2813, %v2805
      %v4230 = vpack.c.b16 %v2814, %v2806
      %v4231 = vpack.c.b16 %v2815, %v2807
      %v4232 = vpack.c.b16 %v2816, %v2808
      %v4233 = vpack.c.b16 %v2817, %v2809
      %v4234 = vpack.c.b16 %v2818, %v2810
      %v4235 = vpack.c.b16 %v2819, %v2811
      %v4236 = vpack.c.b16 %v2828, %v2820
      %v4237 = vpack.c.b16 %v2829, %v2821
      %v4238 = vpack.c.b16 %v2830, %v2822
      %v4239 = vpack.c.b16 %v2831, %v2823
      %v4240 = vpack.c.b16 %v2832, %v2824
      %v4241 = vpack.c.b16 %v2833, %v2825
      %v4242 = vpack.c.b16 %v2834, %v2826
      %v4243 = vpack.c.b16 %v2835, %v2827
      %v4244 = vpack.c.b16 %v2844, %v2836
      %v4245 = vpack.c.b16 %v2845, %v2837
      %v4246 = vpack.c.b16 %v2846, %v2838
      %v4247 = vpack.c.b16 %v2847, %v2839
      %v4248 = vpack.c.b16 %v2848, %v2840
      %v4249 = vpack.c.b16 %v2849, %v2841
      %v4250 = vpack.c.b16 %v2850, %v2842
      %v4251 = vpack.c.b16 %v2851, %v2843
      %v4252 = vpack.c.b16 %v2860, %v2852
      %v4253 = vpack.c.b16 %v2861, %v2853
      %v4254 = vpack.c.b16 %v2862, %v2854
      %v4255 = vpack.c.b16 %v2863, %v2855
      %v4256 = vpack.c.b16 %v2864, %v2856
      %v4257 = vpack.c.b16 %v2865, %v2857
      %v4258 = vpack.c.b16 %v2866, %v2858
      %v4259 = vpack.c.b16 %v2867, %v2859
      %v4260 = vpack.c.b16 %v2876, %v2868
      %v4261 = vpack.c.b16 %v2877, %v2869
      %v4262 = vpack.c.b16 %v2878, %v2870
      %v4263 = vpack.c.b16 %v2879, %v2871
      %v4264 = vpack.c.b16 %v2880, %v2872
      %v4265 = vpack.c.b16 %v2881, %v2873
      %v4266 = vpack.c.b16 %v2882, %v2874
      %v4267 = vpack.c.b16 %v2883, %v2875
      %v4268 = vpack.c.b16 %v2892, %v2884
      %v4269 = vpack.c.b16 %v2893, %v2885
      %v4270 = vpack.c.b16 %v2894, %v2886
      %v4271 = vpack.c.b16 %v2895, %v2887
      %v4272 = vpack.c.b16 %v2896, %v2888
      %v4273 = vpack.c.b16 %v2897, %v2889
      %v4274 = vpack.c.b16 %v2898, %v2890
      %v4275 = vpack.c.b16 %v2899, %v2891
      %v4276 = vpack.c.b16 %v2908, %v2900
      %v4277 = vpack.c.b16 %v2909, %v2901
      %v4278 = vpack.c.b16 %v2910, %v2902
      %v4279 = vpack.c.b16 %v2911, %v2903
      %v4280 = vpack.c.b16 %v2912, %v2904
      %v4281 = vpack.c.b16 %v2913, %v2905
      %v4282 = vpack.c.b16 %v2914, %v2906
      %v4283 = vpack.c.b16 %v2915, %v2907
      %v4284 = vpack.c.b16 %v2924, %v2916
      %v4285 = vpack.c.b16 %v2925, %v2917
      %v4286 = vpack.c.b16 %v2926, %v2918
      %v4287 = vpack.c.b16 %v2927, %v2919
      %v4288 = vpack.c.b16 %v2928, %v2920
      %v4289 = vpack.c.b16 %v2929, %v2921
      %v4290 = vpack.c.b16 %v2930, %v2922
      %v4291 = vpack.c.b16 %v2931, %v2923
      %v4292 = vpack.c.b16 %v2940, %v2932
      %v4293 = vpack.c.b16 %v2941, %v2933
      %v4294 = vpack.c.b16 %v2942, %v2934
      %v4295 = vpack.c.b16 %v2943, %v2935
      %v4296 = vpack.c.b16 %v2944, %v2936
      %v4297 = vpack.c.b16 %v2945, %v2937
      %v4298 = vpack.c.b16 %v2946, %v2938
      %v4299 = vpack.c.b16 %v2947, %v2939
      %v4300 = vpack.c.b16 %v2956, %v2948
      %v4301 = vpack.c.b16 %v2957, %v2949
      %v4302 = vpack.c.b16 %v2958, %v2950
      %v4303 = vpack.c.b16 %v2959, %v2951
      %v4304 = vpack.c.b16 %v2960, %v2952
      %v4305 = vpack.c.b16 %v2961, %v2953
      %v4306 = vpack.c.b16 %v2962, %v2954
      %v4307 = vpack.c.b16 %v2963, %v2955
      %v4308 = vpack.c.b16 %v2972, %v2964
      %v4309 = vpack.c.b16 %v2973, %v2965
      %v4310 = vpack.c.b16 %v2974, %v2966
      %v4311 = vpack.c.b16 %v2975, %v2967
      %v4312 = vpack.c.b16 %v2976, %v2968
      %v4313 = vpack.c.b16 %v2977, %v2969
      %v4314 = vpack.c.b16 %v2978, %v2970
      %v4315 = vpack.c.b16 %v2979, %v2971
      %v4316 = vpack.c.b16 %v2988, %v2980
      %v4317 = vpack.c.b16 %v2989, %v2981
      %v4318 = vpack.c.b16 %v2990, %v2982
      %v4319 = vpack.c.b16 %v2991, %v2983
      %v4320 = vpack.c.b16 %v2992, %v2984
      %v4321 = vpack.c.b16 %v2993, %v2985
      %v4322 = vpack.c.b16 %v2994, %v2986
      %v4323 = vpack.c.b16 %v2995, %v2987
      %v4324 = vpack.c.b16 %v3004, %v2996
      %v4325 = vpack.c.b16 %v3005, %v2997
      %v4326 = vpack.c.b16 %v3006, %v2998
      %v4327 = vpack.c.b16 %v3007, %v2999
      %v4328 = vpack.c.b16 %v3008, %v3000
      %v4329 = vpack.c.b16 %v3009, %v3001
      %v4330 = vpack.c.b16 %v3010, %v3002
      %v4331 = vpack.c.b16 %v3011, %v3003
      %v4332 = vpack.c.b16 %v3020, %v3012
      %v4333 = vpack.c.b16 %v3021, %v3013
      %v4334 = vpack.c.b16 %v3022, %v3014
      %v4335 = vpack.c.b16 %v3023, %v3015
      %v4336 = vpack.c.b16 %v3024, %v3016
      %v4337 = vpack.c.b16 %v3025, %v3017
      %v4338 = vpack.c.b16 %v3026, %v3018
      %v4339 = vpack.c.b16 %v3027, %v3019
      %v4340 = vpack.c.b16 %v3036, %v3028
      %v4341 = vpack.c.b16 %v3037, %v3029
      %v4342 = vpack.c.b16 %v3038, %v3030
      %v4343 = vpack.c.b16 %v3039, %v3031
      %v4344 = vpack.c.b16 %v3040, %v3032
      %v4345 = vpack.c.b16 %v3041, %v3033
      %v4346 = vpack.c.b16 %v3042, %v3034
      %v4347 = vpack.c.b16 %v3043, %v3035
      %v4348 = vpack.c.b16 %v3052, %v3044
      %v4349 = vpack.c.b16 %v3053, %v3045
      %v4350 = vpack.c.b16 %v3054, %v3046
      %v4351 = vpack.c.b16 %v3055, %v3047
      %v4352 = vpack.c.b16 %v3056, %v3048
      %v4353 = vpack.c.b16 %v3057, %v3049
      %v4354 = vpack.c.b16 %v3058, %v3050
      %v4355 = vpack.c.b16 %v3059, %v3051
      %v4356 = vpack.c.b16 %v3068, %v3060
      %v4357 = vpack.c.b16 %v3069, %v3061
      %v4358 = vpack.c.b16 %v3070, %v3062
      %v4359 = vpack.c.b16 %v3071, %v3063
      %v4360 = vpack.c.b16 %v3072, %v3064
      %v4361 = vpack.c.b16 %v3073, %v3065
      %v4362 = vpack.c.b16 %v3074, %v3066
      %v4363 = vpack.c.b16 %v3075, %v3067
      %v4364 = vpack.c.b16 %v3084, %v3076
      %v4365 = vpack.c.b16 %v3085, %v3077
      %v4366 = vpack.c.b16 %v3086, %v3078
      %v4367 = vpack.c.b16 %v3087, %v3079
      %v4368 = vpack.c.b16 %v3088, %v3080
      %v4369 = vpack.c.b16 %v3089, %v3081
      %v4370 = vpack.c.b16 %v3090, %v3082
      %v4371 = vpack.c.b16 %v3091, %v3083
      %v4372 = vpack.c.b16 %v3100, %v3092
      %v4373 = vpack.c.b16 %v3101, %v3093
      %v4374 = vpack.c.b16 %v3102, %v3094
      %v4375 = vpack.c.b16 %v3103, %v3095
      %v4376 = vpack.c.b16 %v3104, %v3096
      %v4377 = vpack.c.b16 %v3105, %v3097
      %v4378 = vpack.c.b16 %v3106, %v3098
      %v4379 = vpack.c.b16 %v3107, %v3099
      %v4380 = vpack.c.b16 %v3116, %v3108
      %v4381 = vpack.c.b16 %v3117, %v3109
      %v4382 = vpack.c.b16 %v3118, %v3110
      %v4383 = vpack.c.b16 %v3119, %v3111
      %v4384 = vpack.c.b16 %v3120, %v3112
      %v4385 = vpack.c.b16 %v3121, %v3113
      %v4386 = vpack.c.b16 %v3122, %v3114
      %v4387 = vpack.c.b16 %v3123, %v3115
      %v4388 = vpack.c.b16 %v3132, %v3124
      %v4389 = vpack.c.b16 %v3133, %v3125
      %v4390 = vpack.c.b16 %v3134, %v3126
      %v4391 = vpack.c.b16 %v3135, %v3127
      %v4392 = vpack.c.b16 %v3136, %v3128
      %v4393 = vpack.c.b16 %v3137, %v3129
      %v4394 = vpack.c.b16 %v3138, %v3130
      %v4395 = vpack.c.b16 %v3139, %v3131
      %v4396 = vpack.c.b16 %v3148, %v3140
      %v4397 = vpack.c.b16 %v3149, %v3141
      %v4398 = vpack.c.b16 %v3150, %v3142
      %v4399 = vpack.c.b16 %v3151, %v3143
      %v4400 = vpack.c.b16 %v3152, %v3144
      %v4401 = vpack.c.b16 %v3153, %v3145
      %v4402 = vpack.c.b16 %v3154, %v3146
      %v4403 = vpack.c.b16 %v3155, %v3147
      %v4404 = vpack.c.b16 %v3164, %v3156
      %v4405 = vpack.c.b16 %v3165, %v3157
      %v4406 = vpack.c.b16 %v3166, %v3158
      %v4407 = vpack.c.b16 %v3167, %v3159
      %v4408 = vpack.c.b16 %v3168, %v3160
      %v4409 = vpack.c.b16 %v3169, %v3161
      %v4410 = vpack.c.b16 %v3170, %v3162
      %v4411 = vpack.c.b16 %v3171, %v3163
      %v4412 = vpack.c.b16 %v3180, %v3172
      %v4413 = vpack.c.b16 %v3181, %v3173
      %v4414 = vpack.c.b16 %v3182, %v3174
      %v4415 = vpack.c.b16 %v3183, %v3175
      %v4416 = vpack.c.b16 %v3184, %v3176
      %v4417 = vpack.c.b16 %v3185, %v3177
      %v4418 = vpack.c.b16 %v3186, %v3178
      %v4419 = vpack.c.b16 %v3187, %v3179
      %v4420 = vpack.c.b16 %v3196, %v3188
      %v4421 = vpack.c.b16 %v3197, %v3189
      %v4422 = vpack.c.b16 %v3198, %v3190
      %v4423 = vpack.c.b16 %v3199, %v3191
      %v4424 = vpack.c.b16 %v3200, %v3192
      %v4425 = vpack.c.b16 %v3201, %v3193
      %v4426 = vpack.c.b16 %v3202, %v3194
      %v4427 = vpack.c.b16 %v3203, %v3195
      %v4428 = vpack.c.b16 %v3212, %v3204
      %v4429 = vpack.c.b16 %v3213, %v3205
      %v4430 = vpack.c.b16 %v3214, %v3206
      %v4431 = vpack.c.b16 %v3215, %v3207
      %v4432 = vpack.c.b16 %v3216, %v3208
      %v4433 = vpack.c.b16 %v3217, %v3209
      %v4434 = vpack.c.b16 %v3218, %v3210
      %v4435 = vpack.c.b16 %v3219, %v3211
      %v4436 = vpack.c.b16 %v3228, %v3220
      %v4437 = vpack.c.b16 %v3229, %v3221
      %v4438 = vpack.c.b16 %v3230, %v3222
      %v4439 = vpack.c.b16 %v3231, %v3223
      %v4440 = vpack.c.b16 %v3232, %v3224
      %v4441 = vpack.c.b16 %v3233, %v3225
      %v4442 = vpack.c.b16 %v3234, %v3226
      %v4443 = vpack.c.b16 %v3235, %v3227
      %v4444 = vpack.c.b16 %v3244, %v3236
      %v4445 = vpack.c.b16 %v3245, %v3237
      %v4446 = vpack.c.b16 %v3246, %v3238
      %v4447 = vpack.c.b16 %v3247, %v3239
      %v4448 = vpack.c.b16 %v3248, %v3240
      %v4449 = vpack.c.b16 %v3249, %v3241
      %v4450 = vpack.c.b16 %v3250, %v3242
      %v4451 = vpack.c.b16 %v3251, %v3243
      %v4452 = vpack.c.b16 %v3260, %v3252
      %v4453 = vpack.c.b16 %v3261, %v3253
      %v4454 = vpack.c.b16 %v3262, %v3254
      %v4455 = vpack.c.b16 %v3263, %v3255
      %v4456 = vpack.c.b16 %v3264, %v3256
      %v4457 = vpack.c.b16 %v3265, %v3257
      %v4458 = vpack.c.b16 %v3266, %v3258
      %v4459 = vpack.c.b16 %v3267, %v3259
      %v4460 = vpack.c.b16 %v3276, %v3268
      %v4461 = vpack.c.b16 %v3277, %v3269
      %v4462 = vpack.c.b16 %v3278, %v3270
      %v4463 = vpack.c.b16 %v3279, %v3271
      %v4464 = vpack.c.b16 %v3280, %v3272
      %v4465 = vpack.c.b16 %v3281, %v3273
      %v4466 = vpack.c.b16 %v3282, %v3274
      %v4467 = vpack.c.b16 %v3283, %v3275
      %v4468 = vpack.c.b16 %v3292, %v3284
      %v4469 = vpack.c.b16 %v3293, %v3285
      %v4470 = vpack.c.b16 %v3294, %v3286
      %v4471 = vpack.c.b16 %v3295, %v3287
      %v4472 = vpack.c.b16 %v3296, %v3288
      %v4473 = vpack.c.b16 %v3297, %v3289
      %v4474 = vpack.c.b16 %v3298, %v3290
      %v4475 = vpack.c.b16 %v3299, %v3291
      %v4476 = vpack.c.b16 %v3308, %v3300
      %v4477 = vpack.c.b16 %v3309, %v3301
      %v4478 = vpack.c.b16 %v3310, %v3302
      %v4479 = vpack.c.b16 %v3311, %v3303
      %v4480 = vpack.c.b16 %v3312, %v3304
      %v4481 = vpack.c.b16 %v3313, %v3305
      %v4482 = vpack.c.b16 %v3314, %v3306
      %v4483 = vpack.c.b16 %v3315, %v3307
      %v4484 = vpack.c.b16 %v3324, %v3316
      %v4485 = vpack.c.b16 %v3325, %v3317
      %v4486 = vpack.c.b16 %v3326, %v3318
      %v4487 = vpack.c.b16 %v3327, %v3319
      %v4488 = vpack.c.b16 %v3328, %v3320
      %v4489 = vpack.c.b16 %v3329, %v3321
      %v4490 = vpack.c.b16 %v3330, %v3322
      %v4491 = vpack.c.b16 %v3331, %v3323
      %v4492 = vpack.c.b16 %v3340, %v3332
      %v4493 = vpack.c.b16 %v3341, %v3333
      %v4494 = vpack.c.b16 %v3342, %v3334
      %v4495 = vpack.c.b16 %v3343, %v3335
      %v4496 = vpack.c.b16 %v3344, %v3336
      %v4497 = vpack.c.b16 %v3345, %v3337
      %v4498 = vpack.c.b16 %v3346, %v3338
      %v4499 = vpack.c.b16 %v3347, %v3339
      %v4500 = vpack.c.b16 %v3356, %v3348
      %v4501 = vpack.c.b16 %v3357, %v3349
      %v4502 = vpack.c.b16 %v3358, %v3350
      %v4503 = vpack.c.b16 %v3359, %v3351
      %v4504 = vpack.c.b16 %v3360, %v3352
      %v4505 = vpack.c.b16 %v3361, %v3353
      %v4506 = vpack.c.b16 %v3362, %v3354
      %v4507 = vpack.c.b16 %v3363, %v3355
      %v4508 = vpack.c.b16 %v3372, %v3364
      %v4509 = vpack.c.b16 %v3373, %v3365
      %v4510 = vpack.c.b16 %v3374, %v3366
      %v4511 = vpack.c.b16 %v3375, %v3367
      %v4512 = vpack.c.b16 %v3376, %v3368
      %v4513 = vpack.c.b16 %v3377, %v3369
      %v4514 = vpack.c.b16 %v3378, %v3370
      %v4515 = vpack.c.b16 %v3379, %v3371
      %v4516 = vpack.c.b16 %v3388, %v3380
      %v4517 = vpack.c.b16 %v3389, %v3381
      %v4518 = vpack.c.b16 %v3390, %v3382
      %v4519 = vpack.c.b16 %v3391, %v3383
      %v4520 = vpack.c.b16 %v3392, %v3384
      %v4521 = vpack.c.b16 %v3393, %v3385
      %v4522 = vpack.c.b16 %v3394, %v3386
      %v4523 = vpack.c.b16 %v3395, %v3387
      %v4524 = vpack.c.b16 %v3404, %v3396
      %v4525 = vpack.c.b16 %v3405, %v3397
      %v4526 = vpack.c.b16 %v3406, %v3398
      %v4527 = vpack.c.b16 %v3407, %v3399
      %v4528 = vpack.c.b16 %v3408, %v3400
      %v4529 = vpack.c.b16 %v3409, %v3401
      %v4530 = vpack.c.b16 %v3410, %v3402
      %v4531 = vpack.c.b16 %v3411, %v3403
      %v4532 = vpack.c.b16 %v3420, %v3412
      %v4533 = vpack.c.b16 %v3421, %v3413
      %v4534 = vpack.c.b16 %v3422, %v3414
      %v4535 = vpack.c.b16 %v3423, %v3415
      %v4536 = vpack.c.b16 %v3424, %v3416
      %v4537 = vpack.c.b16 %v3425, %v3417
      %v4538 = vpack.c.b16 %v3426, %v3418
      %v4539 = vpack.c.b16 %v3427, %v3419
      %v4540 = vpack.c.b16 %v3436, %v3428
      %v4541 = vpack.c.b16 %v3437, %v3429
      %v4542 = vpack.c.b16 %v3438, %v3430
      %v4543 = vpack.c.b16 %v3439, %v3431
      %v4544 = vpack.c.b16 %v3440, %v3432
      %v4545 = vpack.c.b16 %v3441, %v3433
      %v4546 = vpack.c.b16 %v3442, %v3434
      %v4547 = vpack.c.b16 %v3443, %v3435
      %v4548 = vpack.c.b16 %v3452, %v3444
      %v4549 = vpack.c.b16 %v3453, %v3445
      %v4550 = vpack.c.b16 %v3454, %v3446
      %v4551 = vpack.c.b16 %v3455, %v3447
      %v4552 = vpack.c.b16 %v3456, %v3448
      %v4553 = vpack.c.b16 %v3457, %v3449
      %v4554 = vpack.c.b16 %v3458, %v3450
      %v4555 = vpack.c.b16 %v3459, %v3451
      %v4556 = vpack.c.b16 %v3468, %v3460
      %v4557 = vpack.c.b16 %v3469, %v3461
      %v4558 = vpack.c.b16 %v3470, %v3462
      %v4559 = vpack.c.b16 %v3471, %v3463
      %v4560 = vpack.c.b16 %v3472, %v3464
      %v4561 = vpack.c.b16 %v3473, %v3465
      %v4562 = vpack.c.b16 %v3474, %v3466
      %v4563 = vpack.c.b16 %v3475, %v3467
      %v4564 = vpack.c.b16 %v3484, %v3476
      %v4565 = vpack.c.b16 %v3485, %v3477
      %v4566 = vpack.c.b16 %v3486, %v3478
      %v4567 = vpack.c.b16 %v3487, %v3479
      %v4568 = vpack.c.b16 %v3488, %v3480
      %v4569 = vpack.c.b16 %v3489, %v3481
      %v4570 = vpack.c.b16 %v3490, %v3482
      %v4571 = vpack.c.b16 %v3491, %v3483
      %v4572 = vpack.c.b16 %v3500, %v3492
      %v4573 = vpack.c.b16 %v3501, %v3493
      %v4574 = vpack.c.b16 %v3502, %v3494
      %v4575 = vpack.c.b16 %v3503, %v3495
      %v4576 = vpack.c.b16 %v3504, %v3496
      %v4577 = vpack.c.b16 %v3505, %v3497
      %v4578 = vpack.c.b16 %v3506, %v3498
      %v4579 = vpack.c.b16 %v3507, %v3499
      %v4580 = vpack.c.b16 %v3516, %v3508
      %v4581 = vpack.c.b16 %v3517, %v3509
      %v4582 = vpack.c.b16 %v3518, %v3510
      %v4583 = vpack.c.b16 %v3519, %v3511
      %v4584 = vpack.c.b16 %v3520, %v3512
      %v4585 = vpack.c.b16 %v3521, %v3513
      %v4586 = vpack.c.b16 %v3522, %v3514
      %v4587 = vpack.c.b16 %v3523, %v3515
      %v4588 = vpack.c.b16 %v3532, %v3524
      %v4589 = vpack.c.b16 %v3533, %v3525
      %v4590 = vpack.c.b16 %v3534, %v3526
      %v4591 = vpack.c.b16 %v3535, %v3527
      %v4592 = vpack.c.b16 %v3536, %v3528
      %v4593 = vpack.c.b16 %v3537, %v3529
      %v4594 = vpack.c.b16 %v3538, %v3530
      %v4595 = vpack.c.b16 %v3539, %v3531
      %v4596 = vpack.c.b16 %v3548, %v3540
      %v4597 = vpack.c.b16 %v3549, %v3541
      %v4598 = vpack.c.b16 %v3550, %v3542
      %v4599 = vpack.c.b16 %v3551, %v3543
      %v4600 = vpack.c.b16 %v3552, %v3544
      %v4601 = vpack.c.b16 %v3553, %v3545
      %v4602 = vpack.c.b16 %v3554, %v3546
      %v4603 = vpack.c.b16 %v3555, %v3547
      %v4604 = vpack.c.b16 %v3564, %v3556
      %v4605 = vpack.c.b16 %v3565, %v3557
      %v4606 = vpack.c.b16 %v3566, %v3558
      %v4607 = vpack.c.b16 %v3567, %v3559
      %v4608 = vpack.c.b16 %v3568, %v3560
      %v4609 = vpack.c.b16 %v3569, %v3561
      %v4610 = vpack.c.b16 %v3570, %v3562
      %v4611 = vpack.c.b16 %v3571, %v3563
      %v4612 = vpack.c.b16 %v3580, %v3572
      %v4613 = vpack.c.b16 %v3581, %v3573
      %v4614 = vpack.c.b16 %v3582, %v3574
      %v4615 = vpack.c.b16 %v3583, %v3575
      %v4616 = vpack.c.b16 %v3584, %v3576
      %v4617 = vpack.c.b16 %v3585, %v3577
      %v4618 = vpack.c.b16 %v3586, %v3578
      %v4619 = vpack.c.b16 %v3587, %v3579
      %v4620 = vpack.c.b16 %v3596, %v3588
      %v4621 = vpack.c.b16 %v3597, %v3589
      %v4622 = vpack.c.b16 %v3598, %v3590
      %v4623 = vpack.c.b16 %v3599, %v3591
      %v4624 = vpack.c.b16 %v3600, %v3592
      %v4625 = vpack.c.b16 %v3601, %v3593
      %v4626 = vpack.c.b16 %v3602, %v3594
      %v4627 = vpack.c.b16 %v3603, %v3595
      %v4628 = vpack.c.b16 %v3612, %v3604
      %v4629 = vpack.c.b16 %v3613, %v3605
      %v4630 = vpack.c.b16 %v3614, %v3606
      %v4631 = vpack.c.b16 %v3615, %v3607
      %v4632 = vpack.c.b16 %v3616, %v3608
      %v4633 = vpack.c.b16 %v3617, %v3609
      %v4634 = vpack.c.b16 %v3618, %v3610
      %v4635 = vpack.c.b16 %v3619, %v3611
      %v4636 = vpack.c.b16 %v3628, %v3620
      %v4637 = vpack.c.b16 %v3629, %v3621
      %v4638 = vpack.c.b16 %v3630, %v3622
      %v4639 = vpack.c.b16 %v3631, %v3623
      %v4640 = vpack.c.b16 %v3632, %v3624
      %v4641 = vpack.c.b16 %v3633, %v3625
      %v4642 = vpack.c.b16 %v3634, %v3626
      %v4643 = vpack.c.b16 %v3635, %v3627
      %v4644 = vpack.c.b16 %v3644, %v3636
      %v4645 = vpack.c.b16 %v3645, %v3637
      %v4646 = vpack.c.b16 %v3646, %v3638
      %v4647 = vpack.c.b16 %v3647, %v3639
      %v4648 = vpack.c.b16 %v3648, %v3640
      %v4649 = vpack.c.b16 %v3649, %v3641
      %v4650 = vpack.c.b16 %v3650, %v3642
      %v4651 = vpack.c.b16 %v3651, %v3643
      %v4652 = vpack.c.b16 %v3660, %v3652
      %v4653 = vpack.c.b16 %v3661, %v3653
      %v4654 = vpack.c.b16 %v3662, %v3654
      %v4655 = vpack.c.b16 %v3663, %v3655
      %v4656 = vpack.c.b16 %v3664, %v3656
      %v4657 = vpack.c.b16 %v3665, %v3657
      %v4658 = vpack.c.b16 %v3666, %v3658
      %v4659 = vpack.c.b16 %v3667, %v3659
      %v4660 = vpack.c.b16 %v3676, %v3668
      %v4661 = vpack.c.b16 %v3677, %v3669
      %v4662 = vpack.c.b16 %v3678, %v3670
      %v4663 = vpack.c.b16 %v3679, %v3671
      %v4664 = vpack.c.b16 %v3680, %v3672
      %v4665 = vpack.c.b16 %v3681, %v3673
      %v4666 = vpack.c.b16 %v3682, %v3674
      %v4667 = vpack.c.b16 %v3683, %v3675
      %v4668 = vpack.c.b16 %v3692, %v3684
      %v4669 = vpack.c.b16 %v3693, %v3685
      %v4670 = vpack.c.b16 %v3694, %v3686
      %v4671 = vpack.c.b16 %v3695, %v3687
      %v4672 = vpack.c.b16 %v3696, %v3688
      %v4673 = vpack.c.b16 %v3697, %v3689
      %v4674 = vpack.c.b16 %v3698, %v3690
      %v4675 = vpack.c.b16 %v3699, %v3691
      %v4676 = vpack.c.b16 %v3708, %v3700
      %v4677 = vpack.c.b16 %v3709, %v3701
      %v4678 = vpack.c.b16 %v3710, %v3702
      %v4679 = vpack.c.b16 %v3711, %v3703
      %v4680 = vpack.c.b16 %v3712, %v3704
      %v4681 = vpack.c.b16 %v3713, %v3705
      %v4682 = vpack.c.b16 %v3714, %v3706
      %v4683 = vpack.c.b16 %v3715, %v3707
      %v4684 = vpack.c.b16 %v3724, %v3716
      %v4685 = vpack.c.b16 %v3725, %v3717
      %v4686 = vpack.c.b16 %v3726, %v3718
      %v4687 = vpack.c.b16 %v3727, %v3719
      %v4688 = vpack.c.b16 %v3728, %v3720
      %v4689 = vpack.c.b16 %v3729, %v3721
      %v4690 = vpack.c.b16 %v3730, %v3722
      %v4691 = vpack.c.b16 %v3731, %v3723
      %v4692 = vpack.c.b16 %v3740, %v3732
      %v4693 = vpack.c.b16 %v3741, %v3733
      %v4694 = vpack.c.b16 %v3742, %v3734
      %v4695 = vpack.c.b16 %v3743, %v3735
      %v4696 = vpack.c.b16 %v3744, %v3736
      %v4697 = vpack.c.b16 %v3745, %v3737
      %v4698 = vpack.c.b16 %v3746, %v3738
      %v4699 = vpack.c.b16 %v3747, %v3739
      %v4700 = vpack.c.b16 %v3756, %v3748
      %v4701 = vpack.c.b16 %v3757, %v3749
      %v4702 = vpack.c.b16 %v3758, %v3750
      %v4703 = vpack.c.b16 %v3759, %v3751
      %v4704 = vpack.c.b16 %v3760, %v3752
      %v4705 = vpack.c.b16 %v3761, %v3753
      %v4706 = vpack.c.b16 %v3762, %v3754
      %v4707 = vpack.c.b16 %v3763, %v3755
      %v4708 = vpack.c.b16 %v3772, %v3764
      %v4709 = vpack.c.b16 %v3773, %v3765
      %v4710 = vpack.c.b16 %v3774, %v3766
      %v4711 = vpack.c.b16 %v3775, %v3767
      %v4712 = vpack.c.b16 %v3776, %v3768
      %v4713 = vpack.c.b16 %v3777, %v3769
      %v4714 = vpack.c.b16 %v3778, %v3770
      %v4715 = vpack.c.b16 %v3779, %v3771
      %v4716 = vpack.c.b16 %v3788, %v3780
      %v4717 = vpack.c.b16 %v3789, %v3781
      %v4718 = vpack.c.b16 %v3790, %v3782
      %v4719 = vpack.c.b16 %v3791, %v3783
      %v4720 = vpack.c.b16 %v3792, %v3784
      %v4721 = vpack.c.b16 %v3793, %v3785
      %v4722 = vpack.c.b16 %v3794, %v3786
      %v4723 = vpack.c.b16 %v3795, %v3787
      %v4724 = vpack.c.b16 %v3804, %v3796
      %v4725 = vpack.c.b16 %v3805, %v3797
      %v4726 = vpack.c.b16 %v3806, %v3798
      %v4727 = vpack.c.b16 %v3807, %v3799
      %v4728 = vpack.c.b16 %v3808, %v3800
      %v4729 = vpack.c.b16 %v3809, %v3801
      %v4730 = vpack.c.b16 %v3810, %v3802
      %v4731 = vpack.c.b16 %v3811, %v3803
      %v4732 = vpack.c.b16 %v3820, %v3812
      %v4733 = vpack.c.b16 %v3821, %v3813
      %v4734 = vpack.c.b16 %v3822, %v3814
      %v4735 = vpack.c.b16 %v3823, %v3815
      %v4736 = vpack.c.b16 %v3824, %v3816
      %v4737 = vpack.c.b16 %v3825, %v3817
      %v4738 = vpack.c.b16 %v3826, %v3818
      %v4739 = vpack.c.b16 %v3827, %v3819
      %v4740 = vpack.c.b16 %v3836, %v3828
      %v4741 = vpack.c.b16 %v3837, %v3829
      %v4742 = vpack.c.b16 %v3838, %v3830
      %v4743 = vpack.c.b16 %v3839, %v3831
      %v4744 = vpack.c.b16 %v3840, %v3832
      %v4745 = vpack.c.b16 %v3841, %v3833
      %v4746 = vpack.c.b16 %v3842, %v3834
      %v4747 = vpack.c.b16 %v3843, %v3835
      %v4748 = vpack.c.b16 %v3852, %v3844
      %v4749 = vpack.c.b16 %v3853, %v3845
      %v4750 = vpack.c.b16 %v3854, %v3846
      %v4751 = vpack.c.b16 %v3855, %v3847
      %v4752 = vpack.c.b16 %v3856, %v3848
      %v4753 = vpack.c.b16 %v3857, %v3849
      %v4754 = vpack.c.b16 %v3858, %v3850
      %v4755 = vpack.c.b16 %v3859, %v3851
      %5652 = vmatpush.bf16.msra.mxu0 %v3916
      %5653 = vmatpush.bf16.msra.mxu0 %v3908
      %5654 = vmatpush.bf16.msra.mxu0 %v3900
      %5655 = vmatpush.bf16.msra.mxu0 %v3892
      %5656 = vmatpush.bf16.msra.mxu0 %v3884
      %5657 = vmatpush.bf16.msra.mxu0 %v3876
      %5658 = vmatpush.bf16.msra.mxu0 %v3868
      %5659 = vmatpush.bf16.msra.mxu0 %v3860
      %5660 = vmatmul.bf16.gmra.mxu0 %v1142
      %v5661 = vpop.f32.mrf.mxu0
      %v5662 = vadd.f32 0.0, %v5661
      %v5663 = vpop.f32.mrf.mxu0
      %5664 = vdwg.mxu0
      %5665 = vmatpush.bf16.msra.mxu0 %v3980
      %5666 = vmatpush.bf16.msra.mxu0 %v3972
      %5667 = vmatpush.bf16.msra.mxu0 %v3964
      %5668 = vmatpush.bf16.msra.mxu0 %v3956
      %5669 = vmatpush.bf16.msra.mxu0 %v3948
      %5670 = vmatpush.bf16.msra.mxu0 %v3940
      %5671 = vmatpush.bf16.msra.mxu0 %v3932
      %5672 = vmatpush.bf16.msra.mxu0 %v3924
      %5673 = vmatmul.bf16.gmra.mxu0 %v1143
      %v5674 = vpop.f32.mrf.mxu0
      %v5675 = vadd.f32 %v5662, %v5674
      %v5676 = vpop.f32.mrf.mxu0
      %5677 = vdwg.mxu0
      %5678 = vmatpush.bf16.msra.mxu0 %v4044
      %5679 = vmatpush.bf16.msra.mxu0 %v4036
      %5680 = vmatpush.bf16.msra.mxu0 %v4028
      %5681 = vmatpush.bf16.msra.mxu0 %v4020
      %5682 = vmatpush.bf16.msra.mxu0 %v4012
      %5683 = vmatpush.bf16.msra.mxu0 %v4004
      %5684 = vmatpush.bf16.msra.mxu0 %v3996
      %5685 = vmatpush.bf16.msra.mxu0 %v3988
      %5686 = vmatmul.bf16.gmra.mxu0 %v1144
      %v5687 = vpop.f32.mrf.mxu0
      %v5688 = vadd.f32 %v5675, %v5687
      %v5689 = vpop.f32.mrf.mxu0
      %5690 = vdwg.mxu0
      %5691 = vmatpush.bf16.msra.mxu0 %v4108
      %5692 = vmatpush.bf16.msra.mxu0 %v4100
      %5693 = vmatpush.bf16.msra.mxu0 %v4092
      %5694 = vmatpush.bf16.msra.mxu0 %v4084
      %5695 = vmatpush.bf16.msra.mxu0 %v4076
      %5696 = vmatpush.bf16.msra.mxu0 %v4068
      %5697 = vmatpush.bf16.msra.mxu0 %v4060
      %5698 = vmatpush.bf16.msra.mxu0 %v4052
      %5699 = vmatmul.bf16.gmra.mxu0 %v1145
      %v5700 = vpop.f32.mrf.mxu0
      %v5701 = vadd.f32 %v5688, %v5700
      %v5702 = vpop.f32.mrf.mxu0
      %5703 = vdwg.mxu0
      %5704 = vmatpush.bf16.msra.mxu0 %v4172
      %5705 = vmatpush.bf16.msra.mxu0 %v4164
      %5706 = vmatpush.bf16.msra.mxu0 %v4156
      %5707 = vmatpush.bf16.msra.mxu0 %v4148
      %5708 = vmatpush.bf16.msra.mxu0 %v4140
      %5709 = vmatpush.bf16.msra.mxu0 %v4132
      %5710 = vmatpush.bf16.msra.mxu0 %v4124
      %5711 = vmatpush.bf16.msra.mxu0 %v4116
      %5712 = vmatmul.bf16.gmra.mxu0 %v1146
      %v5713 = vpop.f32.mrf.mxu0
      %v5714 = vadd.f32 %v5701, %v5713
      %v5715 = vpop.f32.mrf.mxu0
      %5716 = vdwg.mxu0
      %5717 = vmatpush.bf16.msra.mxu0 %v4236
      %5718 = vmatpush.bf16.msra.mxu0 %v4228
      %5719 = vmatpush.bf16.msra.mxu0 %v4220
      %5720 = vmatpush.bf16.msra.mxu0 %v4212
      %5721 = vmatpush.bf16.msra.mxu0 %v4204
      %5722 = vmatpush.bf16.msra.mxu0 %v4196
      %5723 = vmatpush.bf16.msra.mxu0 %v4188
      %5724 = vmatpush.bf16.msra.mxu0 %v4180
      %5725 = vmatmul.bf16.gmra.mxu0 %v1147
      %v5726 = vpop.f32.mrf.mxu0
      %v5727 = vadd.f32 %v5714, %v5726
      %v5728 = vpop.f32.mrf.mxu0
      %5729 = vdwg.mxu0
      %5730 = vmatpush.bf16.msra.mxu0 %v4300
      %5731 = vmatpush.bf16.msra.mxu0 %v4292
      %5732 = vmatpush.bf16.msra.mxu0 %v4284
      %5733 = vmatpush.bf16.msra.mxu0 %v4276
      %5734 = vmatpush.bf16.msra.mxu0 %v4268
      %5735 = vmatpush.bf16.msra.mxu0 %v4260
      %5736 = vmatpush.bf16.msra.mxu0 %v4252
      %5737 = vmatpush.bf16.msra.mxu0 %v4244
      %5738 = vmatmul.bf16.gmra.mxu0 %v1148
      %v5739 = vpop.f32.mrf.mxu0
      %v5740 = vadd.f32 %v5727, %v5739
      %v5741 = vpop.f32.mrf.mxu0
      %5742 = vdwg.mxu0
      %5743 = vmatpush.bf16.msra.mxu0 %v4364
      %5744 = vmatpush.bf16.msra.mxu0 %v4356
      %5745 = vmatpush.bf16.msra.mxu0 %v4348
      %5746 = vmatpush.bf16.msra.mxu0 %v4340
      %5747 = vmatpush.bf16.msra.mxu0 %v4332
      %5748 = vmatpush.bf16.msra.mxu0 %v4324
      %5749 = vmatpush.bf16.msra.mxu0 %v4316
      %5750 = vmatpush.bf16.msra.mxu0 %v4308
      %5751 = vmatmul.bf16.gmra.mxu0 %v1149
      %v5752 = vpop.f32.mrf.mxu0
      %v5753 = vadd.f32 %v5740, %v5752
      %v5754 = vpop.f32.mrf.mxu0
      %5755 = vdwg.mxu0
      %5756 = vmatpush.bf16.msra.mxu0 %v4428
      %5757 = vmatpush.bf16.msra.mxu0 %v4420
      %5758 = vmatpush.bf16.msra.mxu0 %v4412
      %5759 = vmatpush.bf16.msra.mxu0 %v4404
      %5760 = vmatpush.bf16.msra.mxu0 %v4396
      %5761 = vmatpush.bf16.msra.mxu0 %v4388
      %5762 = vmatpush.bf16.msra.mxu0 %v4380
      %5763 = vmatpush.bf16.msra.mxu0 %v4372
      %5764 = vmatmul.bf16.gmra.mxu0 %v1152
      %v5765 = vpop.f32.mrf.mxu0
      %v5766 = vadd.f32 %v5753, %v5765
      %v5767 = vpop.f32.mrf.mxu0
      %5768 = vdwg.mxu0
      %5769 = vmatpush.bf16.msra.mxu0 %v4492
      %5770 = vmatpush.bf16.msra.mxu0 %v4484
      %5771 = vmatpush.bf16.msra.mxu0 %v4476
      %5772 = vmatpush.bf16.msra.mxu0 %v4468
      %5773 = vmatpush.bf16.msra.mxu0 %v4460
      %5774 = vmatpush.bf16.msra.mxu0 %v4452
      %5775 = vmatpush.bf16.msra.mxu0 %v4444
      %5776 = vmatpush.bf16.msra.mxu0 %v4436
      %5777 = vmatmul.bf16.gmra.mxu0 %v1153
      %v5778 = vpop.f32.mrf.mxu0
      %v5779 = vadd.f32 %v5766, %v5778
      %v5780 = vpop.f32.mrf.mxu0
      %5781 = vdwg.mxu0
      %5782 = vmatpush.bf16.msra.mxu0 %v4556
      %5783 = vmatpush.bf16.msra.mxu0 %v4548
      %5784 = vmatpush.bf16.msra.mxu0 %v4540
      %5785 = vmatpush.bf16.msra.mxu0 %v4532
      %5786 = vmatpush.bf16.msra.mxu0 %v4524
      %5787 = vmatpush.bf16.msra.mxu0 %v4516
      %5788 = vmatpush.bf16.msra.mxu0 %v4508
      %5789 = vmatpush.bf16.msra.mxu0 %v4500
      %5790 = vmatmul.bf16.gmra.mxu0 %v1154
      %v5791 = vpop.f32.mrf.mxu0
      %v5792 = vadd.f32 %v5779, %v5791
      %v5793 = vpop.f32.mrf.mxu0
      %5794 = vdwg.mxu0
      %5795 = vmatpush.bf16.msra.mxu0 %v4620
      %5796 = vmatpush.bf16.msra.mxu0 %v4612
      %5797 = vmatpush.bf16.msra.mxu0 %v4604
      %5798 = vmatpush.bf16.msra.mxu0 %v4596
      %5799 = vmatpush.bf16.msra.mxu0 %v4588
      %5800 = vmatpush.bf16.msra.mxu0 %v4580
      %5801 = vmatpush.bf16.msra.mxu0 %v4572
      %5802 = vmatpush.bf16.msra.mxu0 %v4564
      %5803 = vmatmul.bf16.gmra.mxu0 %v1155
      %v5804 = vpop.f32.mrf.mxu0
      %v5805 = vadd.f32 %v5792, %v5804
      %v5806 = vpop.f32.mrf.mxu0
      %5807 = vdwg.mxu0
      %5808 = vmatpush.bf16.msra.mxu0 %v4684
      %5809 = vmatpush.bf16.msra.mxu0 %v4676
      %5810 = vmatpush.bf16.msra.mxu0 %v4668
      %5811 = vmatpush.bf16.msra.mxu0 %v4660
      %5812 = vmatpush.bf16.msra.mxu0 %v4652
      %5813 = vmatpush.bf16.msra.mxu0 %v4644
      %5814 = vmatpush.bf16.msra.mxu0 %v4636
      %5815 = vmatpush.bf16.msra.mxu0 %v4628
      %5816 = vmatmul.bf16.gmra.mxu0 %v1156
      %v5817 = vpop.f32.mrf.mxu0
      %v5818 = vadd.f32 %v5805, %v5817
      %v5819 = vpop.f32.mrf.mxu0
      %5820 = vdwg.mxu0
      %5821 = vmatpush.bf16.msra.mxu0 %v4748
      %5822 = vmatpush.bf16.msra.mxu0 %v4740
      %5823 = vmatpush.bf16.msra.mxu0 %v4732
      %5824 = vmatpush.bf16.msra.mxu0 %v4724
      %5825 = vmatpush.bf16.msra.mxu0 %v4716
      %5826 = vmatpush.bf16.msra.mxu0 %v4708
      %5827 = vmatpush.bf16.msra.mxu0 %v4700
      %5828 = vmatpush.bf16.msra.mxu0 %v4692
      %5829 = vmatmul.bf16.gmra.mxu0 %v1157
      %v5830 = vpop.f32.mrf.mxu0
      %v5831 = vadd.f32 %v5818, %v5830
      %v5832 = vpop.f32.mrf.mxu0
      %5833 = vdwg.mxu0
      %5834 = vmatpush.bf16.msra.mxu0 %v3917
      %5835 = vmatpush.bf16.msra.mxu0 %v3909
      %5836 = vmatpush.bf16.msra.mxu0 %v3901
      %5837 = vmatpush.bf16.msra.mxu0 %v3893
      %5838 = vmatpush.bf16.msra.mxu0 %v3885
      %5839 = vmatpush.bf16.msra.mxu0 %v3877
      %5840 = vmatpush.bf16.msra.mxu0 %v3869
      %5841 = vmatpush.bf16.msra.mxu0 %v3861
      %5842 = vmatmul.bf16.gmra.mxu0 %v1142
      %v5843 = vpop.f32.mrf.mxu0
      %v5844 = vadd.f32 0.0, %v5843
      %v5845 = vpop.f32.mrf.mxu0
      %5846 = vdwg.mxu0
      %5847 = vmatpush.bf16.msra.mxu0 %v3981
      %5848 = vmatpush.bf16.msra.mxu0 %v3973
      %5849 = vmatpush.bf16.msra.mxu0 %v3965
      %5850 = vmatpush.bf16.msra.mxu0 %v3957
      %5851 = vmatpush.bf16.msra.mxu0 %v3949
      %5852 = vmatpush.bf16.msra.mxu0 %v3941
      %5853 = vmatpush.bf16.msra.mxu0 %v3933
      %5854 = vmatpush.bf16.msra.mxu0 %v3925
      %5855 = vmatmul.bf16.gmra.mxu0 %v1143
      %v5856 = vpop.f32.mrf.mxu0
      %v5857 = vadd.f32 %v5844, %v5856
      %v5858 = vpop.f32.mrf.mxu0
      %5859 = vdwg.mxu0
      %5860 = vmatpush.bf16.msra.mxu0 %v4045
      %5861 = vmatpush.bf16.msra.mxu0 %v4037
      %5862 = vmatpush.bf16.msra.mxu0 %v4029
      %5863 = vmatpush.bf16.msra.mxu0 %v4021
      %5864 = vmatpush.bf16.msra.mxu0 %v4013
      %5865 = vmatpush.bf16.msra.mxu0 %v4005
      %5866 = vmatpush.bf16.msra.mxu0 %v3997
      %5867 = vmatpush.bf16.msra.mxu0 %v3989
      %5868 = vmatmul.bf16.gmra.mxu0 %v1144
      %v5869 = vpop.f32.mrf.mxu0
      %v5870 = vadd.f32 %v5857, %v5869
      %v5871 = vpop.f32.mrf.mxu0
      %5872 = vdwg.mxu0
      %5873 = vmatpush.bf16.msra.mxu0 %v4109
      %5874 = vmatpush.bf16.msra.mxu0 %v4101
      %5875 = vmatpush.bf16.msra.mxu0 %v4093
      %5876 = vmatpush.bf16.msra.mxu0 %v4085
      %5877 = vmatpush.bf16.msra.mxu0 %v4077
      %5878 = vmatpush.bf16.msra.mxu0 %v4069
      %5879 = vmatpush.bf16.msra.mxu0 %v4061
      %5880 = vmatpush.bf16.msra.mxu0 %v4053
      %5881 = vmatmul.bf16.gmra.mxu0 %v1145
      %v5882 = vpop.f32.mrf.mxu0
      %v5883 = vadd.f32 %v5870, %v5882
      %v5884 = vpop.f32.mrf.mxu0
      %5885 = vdwg.mxu0
      %5886 = vmatpush.bf16.msra.mxu0 %v4173
      %5887 = vmatpush.bf16.msra.mxu0 %v4165
      %5888 = vmatpush.bf16.msra.mxu0 %v4157
      %5889 = vmatpush.bf16.msra.mxu0 %v4149
      %5890 = vmatpush.bf16.msra.mxu0 %v4141
      %5891 = vmatpush.bf16.msra.mxu0 %v4133
      %5892 = vmatpush.bf16.msra.mxu0 %v4125
      %5893 = vmatpush.bf16.msra.mxu0 %v4117
      %5894 = vmatmul.bf16.gmra.mxu0 %v1146
      %v5895 = vpop.f32.mrf.mxu0
      %v5896 = vadd.f32 %v5883, %v5895
      %v5897 = vpop.f32.mrf.mxu0
      %5898 = vdwg.mxu0
      %5899 = vmatpush.bf16.msra.mxu0 %v4237
      %5900 = vmatpush.bf16.msra.mxu0 %v4229
      %5901 = vmatpush.bf16.msra.mxu0 %v4221
      %5902 = vmatpush.bf16.msra.mxu0 %v4213
      %5903 = vmatpush.bf16.msra.mxu0 %v4205
      %5904 = vmatpush.bf16.msra.mxu0 %v4197
      %5905 = vmatpush.bf16.msra.mxu0 %v4189
      %5906 = vmatpush.bf16.msra.mxu0 %v4181
      %5907 = vmatmul.bf16.gmra.mxu0 %v1147
      %v5908 = vpop.f32.mrf.mxu0
      %v5909 = vadd.f32 %v5896, %v5908
      %v5910 = vpop.f32.mrf.mxu0
      %5911 = vdwg.mxu0
      %5912 = vmatpush.bf16.msra.mxu0 %v4301
      %5913 = vmatpush.bf16.msra.mxu0 %v4293
      %5914 = vmatpush.bf16.msra.mxu0 %v4285
      %5915 = vmatpush.bf16.msra.mxu0 %v4277
      %5916 = vmatpush.bf16.msra.mxu0 %v4269
      %5917 = vmatpush.bf16.msra.mxu0 %v4261
      %5918 = vmatpush.bf16.msra.mxu0 %v4253
      %5919 = vmatpush.bf16.msra.mxu0 %v4245
      %5920 = vmatmul.bf16.gmra.mxu0 %v1148
      %v5921 = vpop.f32.mrf.mxu0
      %v5922 = vadd.f32 %v5909, %v5921
      %v5923 = vpop.f32.mrf.mxu0
      %5924 = vdwg.mxu0
      %5925 = vmatpush.bf16.msra.mxu0 %v4365
      %5926 = vmatpush.bf16.msra.mxu0 %v4357
      %5927 = vmatpush.bf16.msra.mxu0 %v4349
      %5928 = vmatpush.bf16.msra.mxu0 %v4341
      %5929 = vmatpush.bf16.msra.mxu0 %v4333
      %5930 = vmatpush.bf16.msra.mxu0 %v4325
      %5931 = vmatpush.bf16.msra.mxu0 %v4317
      %5932 = vmatpush.bf16.msra.mxu0 %v4309
      %5933 = vmatmul.bf16.gmra.mxu0 %v1149
      %v5934 = vpop.f32.mrf.mxu0
      %v5935 = vadd.f32 %v5922, %v5934
      %v5936 = vpop.f32.mrf.mxu0
      %5937 = vdwg.mxu0
      %5938 = vmatpush.bf16.msra.mxu0 %v4429
      %5939 = vmatpush.bf16.msra.mxu0 %v4421
      %5940 = vmatpush.bf16.msra.mxu0 %v4413
      %5941 = vmatpush.bf16.msra.mxu0 %v4405
      %5942 = vmatpush.bf16.msra.mxu0 %v4397
      %5943 = vmatpush.bf16.msra.mxu0 %v4389
      %5944 = vmatpush.bf16.msra.mxu0 %v4381
      %5945 = vmatpush.bf16.msra.mxu0 %v4373
      %5946 = vmatmul.bf16.gmra.mxu0 %v1152
      %v5947 = vpop.f32.mrf.mxu0
      %v5948 = vadd.f32 %v5935, %v5947
      %v5949 = vpop.f32.mrf.mxu0
      %5950 = vdwg.mxu0
      %5951 = vmatpush.bf16.msra.mxu0 %v4493
      %5952 = vmatpush.bf16.msra.mxu0 %v4485
      %5953 = vmatpush.bf16.msra.mxu0 %v4477
      %5954 = vmatpush.bf16.msra.mxu0 %v4469
      %5955 = vmatpush.bf16.msra.mxu0 %v4461
      %5956 = vmatpush.bf16.msra.mxu0 %v4453
      %5957 = vmatpush.bf16.msra.mxu0 %v4445
      %5958 = vmatpush.bf16.msra.mxu0 %v4437
      %5959 = vmatmul.bf16.gmra.mxu0 %v1153
      %v5960 = vpop.f32.mrf.mxu0
      %v5961 = vadd.f32 %v5948, %v5960
      %v5962 = vpop.f32.mrf.mxu0
      %5963 = vdwg.mxu0
      %5964 = vmatpush.bf16.msra.mxu0 %v4557
      %5965 = vmatpush.bf16.msra.mxu0 %v4549
      %5966 = vmatpush.bf16.msra.mxu0 %v4541
      %5967 = vmatpush.bf16.msra.mxu0 %v4533
      %5968 = vmatpush.bf16.msra.mxu0 %v4525
      %5969 = vmatpush.bf16.msra.mxu0 %v4517
      %5970 = vmatpush.bf16.msra.mxu0 %v4509
      %5971 = vmatpush.bf16.msra.mxu0 %v4501
      %5972 = vmatmul.bf16.gmra.mxu0 %v1154
      %v5973 = vpop.f32.mrf.mxu0
      %v5974 = vadd.f32 %v5961, %v5973
      %v5975 = vpop.f32.mrf.mxu0
      %5976 = vdwg.mxu0
      %5977 = vmatpush.bf16.msra.mxu0 %v4621
      %5978 = vmatpush.bf16.msra.mxu0 %v4613
      %5979 = vmatpush.bf16.msra.mxu0 %v4605
      %5980 = vmatpush.bf16.msra.mxu0 %v4597
      %5981 = vmatpush.bf16.msra.mxu0 %v4589
      %5982 = vmatpush.bf16.msra.mxu0 %v4581
      %5983 = vmatpush.bf16.msra.mxu0 %v4573
      %5984 = vmatpush.bf16.msra.mxu0 %v4565
      %5985 = vmatmul.bf16.gmra.mxu0 %v1155
      %v5986 = vpop.f32.mrf.mxu0
      %v5987 = vadd.f32 %v5974, %v5986
      %v5988 = vpop.f32.mrf.mxu0
      %5989 = vdwg.mxu0
      %5990 = vmatpush.bf16.msra.mxu0 %v4685
      %5991 = vmatpush.bf16.msra.mxu0 %v4677
      %5992 = vmatpush.bf16.msra.mxu0 %v4669
      %5993 = vmatpush.bf16.msra.mxu0 %v4661
      %5994 = vmatpush.bf16.msra.mxu0 %v4653
      %5995 = vmatpush.bf16.msra.mxu0 %v4645
      %5996 = vmatpush.bf16.msra.mxu0 %v4637
      %5997 = vmatpush.bf16.msra.mxu0 %v4629
      %5998 = vmatmul.bf16.gmra.mxu0 %v1156
      %v5999 = vpop.f32.mrf.mxu0
      %v6000 = vadd.f32 %v5987, %v5999
      %v6001 = vpop.f32.mrf.mxu0
      %6002 = vdwg.mxu0
      %6003 = vmatpush.bf16.msra.mxu0 %v4749
      %6004 = vmatpush.bf16.msra.mxu0 %v4741
      %6005 = vmatpush.bf16.msra.mxu0 %v4733
      %6006 = vmatpush.bf16.msra.mxu0 %v4725
      %6007 = vmatpush.bf16.msra.mxu0 %v4717
      %6008 = vmatpush.bf16.msra.mxu0 %v4709
      %6009 = vmatpush.bf16.msra.mxu0 %v4701
      %6010 = vmatpush.bf16.msra.mxu0 %v4693
      %6011 = vmatmul.bf16.gmra.mxu0 %v1157
      %v6012 = vpop.f32.mrf.mxu0
      %v6013 = vadd.f32 %v6000, %v6012
      %v6014 = vpop.f32.mrf.mxu0
      %6015 = vdwg.mxu0
      %6016 = vmatpush.bf16.msra.mxu0 %v3918
      %6017 = vmatpush.bf16.msra.mxu0 %v3910
      %6018 = vmatpush.bf16.msra.mxu0 %v3902
      %6019 = vmatpush.bf16.msra.mxu0 %v3894
      %6020 = vmatpush.bf16.msra.mxu0 %v3886
      %6021 = vmatpush.bf16.msra.mxu0 %v3878
      %6022 = vmatpush.bf16.msra.mxu0 %v3870
      %6023 = vmatpush.bf16.msra.mxu0 %v3862
      %6024 = vmatmul.bf16.gmra.mxu0 %v1142
      %v6025 = vpop.f32.mrf.mxu0
      %v6026 = vadd.f32 0.0, %v6025
      %v6027 = vpop.f32.mrf.mxu0
      %6028 = vdwg.mxu0
      %6029 = vmatpush.bf16.msra.mxu0 %v3982
      %6030 = vmatpush.bf16.msra.mxu0 %v3974
      %6031 = vmatpush.bf16.msra.mxu0 %v3966
      %6032 = vmatpush.bf16.msra.mxu0 %v3958
      %6033 = vmatpush.bf16.msra.mxu0 %v3950
      %6034 = vmatpush.bf16.msra.mxu0 %v3942
      %6035 = vmatpush.bf16.msra.mxu0 %v3934
      %6036 = vmatpush.bf16.msra.mxu0 %v3926
      %6037 = vmatmul.bf16.gmra.mxu0 %v1143
      %v6038 = vpop.f32.mrf.mxu0
      %v6039 = vadd.f32 %v6026, %v6038
      %v6040 = vpop.f32.mrf.mxu0
      %6041 = vdwg.mxu0
      %6042 = vmatpush.bf16.msra.mxu0 %v4046
      %6043 = vmatpush.bf16.msra.mxu0 %v4038
      %6044 = vmatpush.bf16.msra.mxu0 %v4030
      %6045 = vmatpush.bf16.msra.mxu0 %v4022
      %6046 = vmatpush.bf16.msra.mxu0 %v4014
      %6047 = vmatpush.bf16.msra.mxu0 %v4006
      %6048 = vmatpush.bf16.msra.mxu0 %v3998
      %6049 = vmatpush.bf16.msra.mxu0 %v3990
      %6050 = vmatmul.bf16.gmra.mxu0 %v1144
      %v6051 = vpop.f32.mrf.mxu0
      %v6052 = vadd.f32 %v6039, %v6051
      %v6053 = vpop.f32.mrf.mxu0
      %6054 = vdwg.mxu0
      %6055 = vmatpush.bf16.msra.mxu0 %v4110
      %6056 = vmatpush.bf16.msra.mxu0 %v4102
      %6057 = vmatpush.bf16.msra.mxu0 %v4094
      %6058 = vmatpush.bf16.msra.mxu0 %v4086
      %6059 = vmatpush.bf16.msra.mxu0 %v4078
      %6060 = vmatpush.bf16.msra.mxu0 %v4070
      %6061 = vmatpush.bf16.msra.mxu0 %v4062
      %6062 = vmatpush.bf16.msra.mxu0 %v4054
      %6063 = vmatmul.bf16.gmra.mxu0 %v1145
      %v6064 = vpop.f32.mrf.mxu0
      %v6065 = vadd.f32 %v6052, %v6064
      %v6066 = vpop.f32.mrf.mxu0
      %6067 = vdwg.mxu0
      %6068 = vmatpush.bf16.msra.mxu0 %v4174
      %6069 = vmatpush.bf16.msra.mxu0 %v4166
      %6070 = vmatpush.bf16.msra.mxu0 %v4158
      %6071 = vmatpush.bf16.msra.mxu0 %v4150
      %6072 = vmatpush.bf16.msra.mxu0 %v4142
      %6073 = vmatpush.bf16.msra.mxu0 %v4134
      %6074 = vmatpush.bf16.msra.mxu0 %v4126
      %6075 = vmatpush.bf16.msra.mxu0 %v4118
      %6076 = vmatmul.bf16.gmra.mxu0 %v1146
      %v6077 = vpop.f32.mrf.mxu0
      %v6078 = vadd.f32 %v6065, %v6077
      %v6079 = vpop.f32.mrf.mxu0
      %6080 = vdwg.mxu0
      %6081 = vmatpush.bf16.msra.mxu0 %v4238
      %6082 = vmatpush.bf16.msra.mxu0 %v4230
      %6083 = vmatpush.bf16.msra.mxu0 %v4222
      %6084 = vmatpush.bf16.msra.mxu0 %v4214
      %6085 = vmatpush.bf16.msra.mxu0 %v4206
      %6086 = vmatpush.bf16.msra.mxu0 %v4198
      %6087 = vmatpush.bf16.msra.mxu0 %v4190
      %6088 = vmatpush.bf16.msra.mxu0 %v4182
      %6089 = vmatmul.bf16.gmra.mxu0 %v1147
      %v6090 = vpop.f32.mrf.mxu0
      %v6091 = vadd.f32 %v6078, %v6090
      %v6092 = vpop.f32.mrf.mxu0
      %6093 = vdwg.mxu0
      %6094 = vmatpush.bf16.msra.mxu0 %v4302
      %6095 = vmatpush.bf16.msra.mxu0 %v4294
      %6096 = vmatpush.bf16.msra.mxu0 %v4286
      %6097 = vmatpush.bf16.msra.mxu0 %v4278
      %6098 = vmatpush.bf16.msra.mxu0 %v4270
      %6099 = vmatpush.bf16.msra.mxu0 %v4262
      %6100 = vmatpush.bf16.msra.mxu0 %v4254
      %6101 = vmatpush.bf16.msra.mxu0 %v4246
      %6102 = vmatmul.bf16.gmra.mxu0 %v1148
      %v6103 = vpop.f32.mrf.mxu0
      %v6104 = vadd.f32 %v6091, %v6103
      %v6105 = vpop.f32.mrf.mxu0
      %6106 = vdwg.mxu0
      %6107 = vmatpush.bf16.msra.mxu0 %v4366
      %6108 = vmatpush.bf16.msra.mxu0 %v4358
      %6109 = vmatpush.bf16.msra.mxu0 %v4350
      %6110 = vmatpush.bf16.msra.mxu0 %v4342
      %6111 = vmatpush.bf16.msra.mxu0 %v4334
      %6112 = vmatpush.bf16.msra.mxu0 %v4326
      %6113 = vmatpush.bf16.msra.mxu0 %v4318
      %6114 = vmatpush.bf16.msra.mxu0 %v4310
      %6115 = vmatmul.bf16.gmra.mxu0 %v1149
      %v6116 = vpop.f32.mrf.mxu0
      %v6117 = vadd.f32 %v6104, %v6116
      %v6118 = vpop.f32.mrf.mxu0
      %6119 = vdwg.mxu0
      %6120 = vmatpush.bf16.msra.mxu0 %v4430
      %6121 = vmatpush.bf16.msra.mxu0 %v4422
      %6122 = vmatpush.bf16.msra.mxu0 %v4414
      %6123 = vmatpush.bf16.msra.mxu0 %v4406
      %6124 = vmatpush.bf16.msra.mxu0 %v4398
      %6125 = vmatpush.bf16.msra.mxu0 %v4390
      %6126 = vmatpush.bf16.msra.mxu0 %v4382
      %6127 = vmatpush.bf16.msra.mxu0 %v4374
      %6128 = vmatmul.bf16.gmra.mxu0 %v1152
      %v6129 = vpop.f32.mrf.mxu0
      %v6130 = vadd.f32 %v6117, %v6129
      %v6131 = vpop.f32.mrf.mxu0
      %6132 = vdwg.mxu0
      %6133 = vmatpush.bf16.msra.mxu0 %v4494
      %6134 = vmatpush.bf16.msra.mxu0 %v4486
      %6135 = vmatpush.bf16.msra.mxu0 %v4478
      %6136 = vmatpush.bf16.msra.mxu0 %v4470
      %6137 = vmatpush.bf16.msra.mxu0 %v4462
      %6138 = vmatpush.bf16.msra.mxu0 %v4454
      %6139 = vmatpush.bf16.msra.mxu0 %v4446
      %6140 = vmatpush.bf16.msra.mxu0 %v4438
      %6141 = vmatmul.bf16.gmra.mxu0 %v1153
      %v6142 = vpop.f32.mrf.mxu0
      %v6143 = vadd.f32 %v6130, %v6142
      %v6144 = vpop.f32.mrf.mxu0
      %6145 = vdwg.mxu0
      %6146 = vmatpush.bf16.msra.mxu0 %v4558
      %6147 = vmatpush.bf16.msra.mxu0 %v4550
      %6148 = vmatpush.bf16.msra.mxu0 %v4542
      %6149 = vmatpush.bf16.msra.mxu0 %v4534
      %6150 = vmatpush.bf16.msra.mxu0 %v4526
      %6151 = vmatpush.bf16.msra.mxu0 %v4518
      %6152 = vmatpush.bf16.msra.mxu0 %v4510
      %6153 = vmatpush.bf16.msra.mxu0 %v4502
      %6154 = vmatmul.bf16.gmra.mxu0 %v1154
      %v6155 = vpop.f32.mrf.mxu0
      %v6156 = vadd.f32 %v6143, %v6155
      %v6157 = vpop.f32.mrf.mxu0
      %6158 = vdwg.mxu0
      %6159 = vmatpush.bf16.msra.mxu0 %v4622
      %6160 = vmatpush.bf16.msra.mxu0 %v4614
      %6161 = vmatpush.bf16.msra.mxu0 %v4606
      %6162 = vmatpush.bf16.msra.mxu0 %v4598
      %6163 = vmatpush.bf16.msra.mxu0 %v4590
      %6164 = vmatpush.bf16.msra.mxu0 %v4582
      %6165 = vmatpush.bf16.msra.mxu0 %v4574
      %6166 = vmatpush.bf16.msra.mxu0 %v4566
      %6167 = vmatmul.bf16.gmra.mxu0 %v1155
      %v6168 = vpop.f32.mrf.mxu0
      %v6169 = vadd.f32 %v6156, %v6168
      %v6170 = vpop.f32.mrf.mxu0
      %6171 = vdwg.mxu0
      %6172 = vmatpush.bf16.msra.mxu0 %v4686
      %6173 = vmatpush.bf16.msra.mxu0 %v4678
      %6174 = vmatpush.bf16.msra.mxu0 %v4670
      %6175 = vmatpush.bf16.msra.mxu0 %v4662
      %6176 = vmatpush.bf16.msra.mxu0 %v4654
      %6177 = vmatpush.bf16.msra.mxu0 %v4646
      %6178 = vmatpush.bf16.msra.mxu0 %v4638
      %6179 = vmatpush.bf16.msra.mxu0 %v4630
      %6180 = vmatmul.bf16.gmra.mxu0 %v1156
      %v6181 = vpop.f32.mrf.mxu0
      %v6182 = vadd.f32 %v6169, %v6181
      %v6183 = vpop.f32.mrf.mxu0
      %6184 = vdwg.mxu0
      %6185 = vmatpush.bf16.msra.mxu0 %v4750
      %6186 = vmatpush.bf16.msra.mxu0 %v4742
      %6187 = vmatpush.bf16.msra.mxu0 %v4734
      %6188 = vmatpush.bf16.msra.mxu0 %v4726
      %6189 = vmatpush.bf16.msra.mxu0 %v4718
      %6190 = vmatpush.bf16.msra.mxu0 %v4710
      %6191 = vmatpush.bf16.msra.mxu0 %v4702
      %6192 = vmatpush.bf16.msra.mxu0 %v4694
      %6193 = vmatmul.bf16.gmra.mxu0 %v1157
      %v6194 = vpop.f32.mrf.mxu0
      %v6195 = vadd.f32 %v6182, %v6194
      %v6196 = vpop.f32.mrf.mxu0
      %6197 = vdwg.mxu0
      %6198 = vmatpush.bf16.msra.mxu0 %v3919
      %6199 = vmatpush.bf16.msra.mxu0 %v3911
      %6200 = vmatpush.bf16.msra.mxu0 %v3903
      %6201 = vmatpush.bf16.msra.mxu0 %v3895
      %6202 = vmatpush.bf16.msra.mxu0 %v3887
      %6203 = vmatpush.bf16.msra.mxu0 %v3879
      %6204 = vmatpush.bf16.msra.mxu0 %v3871
      %6205 = vmatpush.bf16.msra.mxu0 %v3863
      %6206 = vmatmul.bf16.gmra.mxu0 %v1142
      %v6207 = vpop.f32.mrf.mxu0
      %v6208 = vadd.f32 0.0, %v6207
      %v6209 = vpop.f32.mrf.mxu0
      %6210 = vdwg.mxu0
      %6211 = vmatpush.bf16.msra.mxu0 %v3983
      %6212 = vmatpush.bf16.msra.mxu0 %v3975
      %6213 = vmatpush.bf16.msra.mxu0 %v3967
      %6214 = vmatpush.bf16.msra.mxu0 %v3959
      %6215 = vmatpush.bf16.msra.mxu0 %v3951
      %6216 = vmatpush.bf16.msra.mxu0 %v3943
      %6217 = vmatpush.bf16.msra.mxu0 %v3935
      %6218 = vmatpush.bf16.msra.mxu0 %v3927
      %6219 = vmatmul.bf16.gmra.mxu0 %v1143
      %v6220 = vpop.f32.mrf.mxu0
      %v6221 = vadd.f32 %v6208, %v6220
      %v6222 = vpop.f32.mrf.mxu0
      %6223 = vdwg.mxu0
      %6224 = vmatpush.bf16.msra.mxu0 %v4047
      %6225 = vmatpush.bf16.msra.mxu0 %v4039
      %6226 = vmatpush.bf16.msra.mxu0 %v4031
      %6227 = vmatpush.bf16.msra.mxu0 %v4023
      %6228 = vmatpush.bf16.msra.mxu0 %v4015
      %6229 = vmatpush.bf16.msra.mxu0 %v4007
      %6230 = vmatpush.bf16.msra.mxu0 %v3999
      %6231 = vmatpush.bf16.msra.mxu0 %v3991
      %6232 = vmatmul.bf16.gmra.mxu0 %v1144
      %v6233 = vpop.f32.mrf.mxu0
      %v6234 = vadd.f32 %v6221, %v6233
      %v6235 = vpop.f32.mrf.mxu0
      %6236 = vdwg.mxu0
      %6237 = vmatpush.bf16.msra.mxu0 %v4111
      %6238 = vmatpush.bf16.msra.mxu0 %v4103
      %6239 = vmatpush.bf16.msra.mxu0 %v4095
      %6240 = vmatpush.bf16.msra.mxu0 %v4087
      %6241 = vmatpush.bf16.msra.mxu0 %v4079
      %6242 = vmatpush.bf16.msra.mxu0 %v4071
      %6243 = vmatpush.bf16.msra.mxu0 %v4063
      %6244 = vmatpush.bf16.msra.mxu0 %v4055
      %6245 = vmatmul.bf16.gmra.mxu0 %v1145
      %v6246 = vpop.f32.mrf.mxu0
      %v6247 = vadd.f32 %v6234, %v6246
      %v6248 = vpop.f32.mrf.mxu0
      %6249 = vdwg.mxu0
      %6250 = vmatpush.bf16.msra.mxu0 %v4175
      %6251 = vmatpush.bf16.msra.mxu0 %v4167
      %6252 = vmatpush.bf16.msra.mxu0 %v4159
      %6253 = vmatpush.bf16.msra.mxu0 %v4151
      %6254 = vmatpush.bf16.msra.mxu0 %v4143
      %6255 = vmatpush.bf16.msra.mxu0 %v4135
      %6256 = vmatpush.bf16.msra.mxu0 %v4127
      %6257 = vmatpush.bf16.msra.mxu0 %v4119
      %6258 = vmatmul.bf16.gmra.mxu0 %v1146
      %v6259 = vpop.f32.mrf.mxu0
      %v6260 = vadd.f32 %v6247, %v6259
      %v6261 = vpop.f32.mrf.mxu0
      %6262 = vdwg.mxu0
      %6263 = vmatpush.bf16.msra.mxu0 %v4239
      %6264 = vmatpush.bf16.msra.mxu0 %v4231
      %6265 = vmatpush.bf16.msra.mxu0 %v4223
      %6266 = vmatpush.bf16.msra.mxu0 %v4215
      %6267 = vmatpush.bf16.msra.mxu0 %v4207
      %6268 = vmatpush.bf16.msra.mxu0 %v4199
      %6269 = vmatpush.bf16.msra.mxu0 %v4191
      %6270 = vmatpush.bf16.msra.mxu0 %v4183
      %6271 = vmatmul.bf16.gmra.mxu0 %v1147
      %v6272 = vpop.f32.mrf.mxu0
      %v6273 = vadd.f32 %v6260, %v6272
      %v6274 = vpop.f32.mrf.mxu0
      %6275 = vdwg.mxu0
      %6276 = vmatpush.bf16.msra.mxu0 %v4303
      %6277 = vmatpush.bf16.msra.mxu0 %v4295
      %6278 = vmatpush.bf16.msra.mxu0 %v4287
      %6279 = vmatpush.bf16.msra.mxu0 %v4279
      %6280 = vmatpush.bf16.msra.mxu0 %v4271
      %6281 = vmatpush.bf16.msra.mxu0 %v4263
      %6282 = vmatpush.bf16.msra.mxu0 %v4255
      %6283 = vmatpush.bf16.msra.mxu0 %v4247
      %6284 = vmatmul.bf16.gmra.mxu0 %v1148
      %v6285 = vpop.f32.mrf.mxu0
      %v6286 = vadd.f32 %v6273, %v6285
      %v6287 = vpop.f32.mrf.mxu0
      %6288 = vdwg.mxu0
      %6289 = vmatpush.bf16.msra.mxu0 %v4367
      %6290 = vmatpush.bf16.msra.mxu0 %v4359
      %6291 = vmatpush.bf16.msra.mxu0 %v4351
      %6292 = vmatpush.bf16.msra.mxu0 %v4343
      %6293 = vmatpush.bf16.msra.mxu0 %v4335
      %6294 = vmatpush.bf16.msra.mxu0 %v4327
      %6295 = vmatpush.bf16.msra.mxu0 %v4319
      %6296 = vmatpush.bf16.msra.mxu0 %v4311
      %6297 = vmatmul.bf16.gmra.mxu0 %v1149
      %v6298 = vpop.f32.mrf.mxu0
      %v6299 = vadd.f32 %v6286, %v6298
      %v6300 = vpop.f32.mrf.mxu0
      %6301 = vdwg.mxu0
      %6302 = vmatpush.bf16.msra.mxu0 %v4431
      %6303 = vmatpush.bf16.msra.mxu0 %v4423
      %6304 = vmatpush.bf16.msra.mxu0 %v4415
      %6305 = vmatpush.bf16.msra.mxu0 %v4407
      %6306 = vmatpush.bf16.msra.mxu0 %v4399
      %6307 = vmatpush.bf16.msra.mxu0 %v4391
      %6308 = vmatpush.bf16.msra.mxu0 %v4383
      %6309 = vmatpush.bf16.msra.mxu0 %v4375
      %6310 = vmatmul.bf16.gmra.mxu0 %v1152
      %v6311 = vpop.f32.mrf.mxu0
      %v6312 = vadd.f32 %v6299, %v6311
      %v6313 = vpop.f32.mrf.mxu0
      %6314 = vdwg.mxu0
      %6315 = vmatpush.bf16.msra.mxu0 %v4495
      %6316 = vmatpush.bf16.msra.mxu0 %v4487
      %6317 = vmatpush.bf16.msra.mxu0 %v4479
      %6318 = vmatpush.bf16.msra.mxu0 %v4471
      %6319 = vmatpush.bf16.msra.mxu0 %v4463
      %6320 = vmatpush.bf16.msra.mxu0 %v4455
      %6321 = vmatpush.bf16.msra.mxu0 %v4447
      %6322 = vmatpush.bf16.msra.mxu0 %v4439
      %6323 = vmatmul.bf16.gmra.mxu0 %v1153
      %v6324 = vpop.f32.mrf.mxu0
      %v6325 = vadd.f32 %v6312, %v6324
      %v6326 = vpop.f32.mrf.mxu0
      %6327 = vdwg.mxu0
      %6328 = vmatpush.bf16.msra.mxu0 %v4559
      %6329 = vmatpush.bf16.msra.mxu0 %v4551
      %6330 = vmatpush.bf16.msra.mxu0 %v4543
      %6331 = vmatpush.bf16.msra.mxu0 %v4535
      %6332 = vmatpush.bf16.msra.mxu0 %v4527
      %6333 = vmatpush.bf16.msra.mxu0 %v4519
      %6334 = vmatpush.bf16.msra.mxu0 %v4511
      %6335 = vmatpush.bf16.msra.mxu0 %v4503
      %6336 = vmatmul.bf16.gmra.mxu0 %v1154
      %v6337 = vpop.f32.mrf.mxu0
      %v6338 = vadd.f32 %v6325, %v6337
      %v6339 = vpop.f32.mrf.mxu0
      %6340 = vdwg.mxu0
      %6341 = vmatpush.bf16.msra.mxu0 %v4623
      %6342 = vmatpush.bf16.msra.mxu0 %v4615
      %6343 = vmatpush.bf16.msra.mxu0 %v4607
      %6344 = vmatpush.bf16.msra.mxu0 %v4599
      %6345 = vmatpush.bf16.msra.mxu0 %v4591
      %6346 = vmatpush.bf16.msra.mxu0 %v4583
      %6347 = vmatpush.bf16.msra.mxu0 %v4575
      %6348 = vmatpush.bf16.msra.mxu0 %v4567
      %6349 = vmatmul.bf16.gmra.mxu0 %v1155
      %v6350 = vpop.f32.mrf.mxu0
      %v6351 = vadd.f32 %v6338, %v6350
      %v6352 = vpop.f32.mrf.mxu0
      %6353 = vdwg.mxu0
      %6354 = vmatpush.bf16.msra.mxu0 %v4687
      %6355 = vmatpush.bf16.msra.mxu0 %v4679
      %6356 = vmatpush.bf16.msra.mxu0 %v4671
      %6357 = vmatpush.bf16.msra.mxu0 %v4663
      %6358 = vmatpush.bf16.msra.mxu0 %v4655
      %6359 = vmatpush.bf16.msra.mxu0 %v4647
      %6360 = vmatpush.bf16.msra.mxu0 %v4639
      %6361 = vmatpush.bf16.msra.mxu0 %v4631
      %6362 = vmatmul.bf16.gmra.mxu0 %v1156
      %v6363 = vpop.f32.mrf.mxu0
      %v6364 = vadd.f32 %v6351, %v6363
      %v6365 = vpop.f32.mrf.mxu0
      %6366 = vdwg.mxu0
      %6367 = vmatpush.bf16.msra.mxu0 %v4751
      %6368 = vmatpush.bf16.msra.mxu0 %v4743
      %6369 = vmatpush.bf16.msra.mxu0 %v4735
      %6370 = vmatpush.bf16.msra.mxu0 %v4727
      %6371 = vmatpush.bf16.msra.mxu0 %v4719
      %6372 = vmatpush.bf16.msra.mxu0 %v4711
      %6373 = vmatpush.bf16.msra.mxu0 %v4703
      %6374 = vmatpush.bf16.msra.mxu0 %v4695
      %6375 = vmatmul.bf16.gmra.mxu0 %v1157
      %v6376 = vpop.f32.mrf.mxu0
      %v6377 = vadd.f32 %v6364, %v6376
      %v6378 = vpop.f32.mrf.mxu0
      %6379 = vdwg.mxu0
      %6380 = vmatpush.bf16.msra.mxu0 %v3920
      %6381 = vmatpush.bf16.msra.mxu0 %v3912
      %6382 = vmatpush.bf16.msra.mxu0 %v3904
      %6383 = vmatpush.bf16.msra.mxu0 %v3896
      %6384 = vmatpush.bf16.msra.mxu0 %v3888
      %6385 = vmatpush.bf16.msra.mxu0 %v3880
      %6386 = vmatpush.bf16.msra.mxu0 %v3872
      %6387 = vmatpush.bf16.msra.mxu0 %v3864
      %6388 = vmatmul.bf16.gmra.mxu0 %v1142
      %v6389 = vpop.f32.mrf.mxu0
      %v6390 = vadd.f32 0.0, %v6389
      %v6391 = vpop.f32.mrf.mxu0
      %6392 = vdwg.mxu0
      %6393 = vmatpush.bf16.msra.mxu0 %v3984
      %6394 = vmatpush.bf16.msra.mxu0 %v3976
      %6395 = vmatpush.bf16.msra.mxu0 %v3968
      %6396 = vmatpush.bf16.msra.mxu0 %v3960
      %6397 = vmatpush.bf16.msra.mxu0 %v3952
      %6398 = vmatpush.bf16.msra.mxu0 %v3944
      %6399 = vmatpush.bf16.msra.mxu0 %v3936
      %6400 = vmatpush.bf16.msra.mxu0 %v3928
      %6401 = vmatmul.bf16.gmra.mxu0 %v1143
      %v6402 = vpop.f32.mrf.mxu0
      %v6403 = vadd.f32 %v6390, %v6402
      %v6404 = vpop.f32.mrf.mxu0
      %6405 = vdwg.mxu0
      %6406 = vmatpush.bf16.msra.mxu0 %v4048
      %6407 = vmatpush.bf16.msra.mxu0 %v4040
      %6408 = vmatpush.bf16.msra.mxu0 %v4032
      %6409 = vmatpush.bf16.msra.mxu0 %v4024
      %6410 = vmatpush.bf16.msra.mxu0 %v4016
      %6411 = vmatpush.bf16.msra.mxu0 %v4008
      %6412 = vmatpush.bf16.msra.mxu0 %v4000
      %6413 = vmatpush.bf16.msra.mxu0 %v3992
      %6414 = vmatmul.bf16.gmra.mxu0 %v1144
      %v6415 = vpop.f32.mrf.mxu0
      %v6416 = vadd.f32 %v6403, %v6415
      %v6417 = vpop.f32.mrf.mxu0
      %6418 = vdwg.mxu0
      %6419 = vmatpush.bf16.msra.mxu0 %v4112
      %6420 = vmatpush.bf16.msra.mxu0 %v4104
      %6421 = vmatpush.bf16.msra.mxu0 %v4096
      %6422 = vmatpush.bf16.msra.mxu0 %v4088
      %6423 = vmatpush.bf16.msra.mxu0 %v4080
      %6424 = vmatpush.bf16.msra.mxu0 %v4072
      %6425 = vmatpush.bf16.msra.mxu0 %v4064
      %6426 = vmatpush.bf16.msra.mxu0 %v4056
      %6427 = vmatmul.bf16.gmra.mxu0 %v1145
      %v6428 = vpop.f32.mrf.mxu0
      %v6429 = vadd.f32 %v6416, %v6428
      %v6430 = vpop.f32.mrf.mxu0
      %6431 = vdwg.mxu0
      %6432 = vmatpush.bf16.msra.mxu0 %v4176
      %6433 = vmatpush.bf16.msra.mxu0 %v4168
      %6434 = vmatpush.bf16.msra.mxu0 %v4160
      %6435 = vmatpush.bf16.msra.mxu0 %v4152
      %6436 = vmatpush.bf16.msra.mxu0 %v4144
      %6437 = vmatpush.bf16.msra.mxu0 %v4136
      %6438 = vmatpush.bf16.msra.mxu0 %v4128
      %6439 = vmatpush.bf16.msra.mxu0 %v4120
      %6440 = vmatmul.bf16.gmra.mxu0 %v1146
      %v6441 = vpop.f32.mrf.mxu0
      %v6442 = vadd.f32 %v6429, %v6441
      %v6443 = vpop.f32.mrf.mxu0
      %6444 = vdwg.mxu0
      %6445 = vmatpush.bf16.msra.mxu0 %v4240
      %6446 = vmatpush.bf16.msra.mxu0 %v4232
      %6447 = vmatpush.bf16.msra.mxu0 %v4224
      %6448 = vmatpush.bf16.msra.mxu0 %v4216
      %6449 = vmatpush.bf16.msra.mxu0 %v4208
      %6450 = vmatpush.bf16.msra.mxu0 %v4200
      %6451 = vmatpush.bf16.msra.mxu0 %v4192
      %6452 = vmatpush.bf16.msra.mxu0 %v4184
      %6453 = vmatmul.bf16.gmra.mxu0 %v1147
      %v6454 = vpop.f32.mrf.mxu0
      %v6455 = vadd.f32 %v6442, %v6454
      %v6456 = vpop.f32.mrf.mxu0
      %6457 = vdwg.mxu0
      %6458 = vmatpush.bf16.msra.mxu0 %v4304
      %6459 = vmatpush.bf16.msra.mxu0 %v4296
      %6460 = vmatpush.bf16.msra.mxu0 %v4288
      %6461 = vmatpush.bf16.msra.mxu0 %v4280
      %6462 = vmatpush.bf16.msra.mxu0 %v4272
      %6463 = vmatpush.bf16.msra.mxu0 %v4264
      %6464 = vmatpush.bf16.msra.mxu0 %v4256
      %6465 = vmatpush.bf16.msra.mxu0 %v4248
      %6466 = vmatmul.bf16.gmra.mxu0 %v1148
      %v6467 = vpop.f32.mrf.mxu0
      %v6468 = vadd.f32 %v6455, %v6467
      %v6469 = vpop.f32.mrf.mxu0
      %6470 = vdwg.mxu0
      %6471 = vmatpush.bf16.msra.mxu0 %v4368
      %6472 = vmatpush.bf16.msra.mxu0 %v4360
      %6473 = vmatpush.bf16.msra.mxu0 %v4352
      %6474 = vmatpush.bf16.msra.mxu0 %v4344
      %6475 = vmatpush.bf16.msra.mxu0 %v4336
      %6476 = vmatpush.bf16.msra.mxu0 %v4328
      %6477 = vmatpush.bf16.msra.mxu0 %v4320
      %6478 = vmatpush.bf16.msra.mxu0 %v4312
      %6479 = vmatmul.bf16.gmra.mxu0 %v1149
      %v6480 = vpop.f32.mrf.mxu0
      %v6481 = vadd.f32 %v6468, %v6480
      %v6482 = vpop.f32.mrf.mxu0
      %6483 = vdwg.mxu0
      %6484 = vmatpush.bf16.msra.mxu0 %v4432
      %6485 = vmatpush.bf16.msra.mxu0 %v4424
      %6486 = vmatpush.bf16.msra.mxu0 %v4416
      %6487 = vmatpush.bf16.msra.mxu0 %v4408
      %6488 = vmatpush.bf16.msra.mxu0 %v4400
      %6489 = vmatpush.bf16.msra.mxu0 %v4392
      %6490 = vmatpush.bf16.msra.mxu0 %v4384
      %6491 = vmatpush.bf16.msra.mxu0 %v4376
      %6492 = vmatmul.bf16.gmra.mxu0 %v1152
      %v6493 = vpop.f32.mrf.mxu0
      %v6494 = vadd.f32 %v6481, %v6493
      %v6495 = vpop.f32.mrf.mxu0
      %6496 = vdwg.mxu0
      %6497 = vmatpush.bf16.msra.mxu0 %v4496
      %6498 = vmatpush.bf16.msra.mxu0 %v4488
      %6499 = vmatpush.bf16.msra.mxu0 %v4480
      %6500 = vmatpush.bf16.msra.mxu0 %v4472
      %6501 = vmatpush.bf16.msra.mxu0 %v4464
      %6502 = vmatpush.bf16.msra.mxu0 %v4456
      %6503 = vmatpush.bf16.msra.mxu0 %v4448
      %6504 = vmatpush.bf16.msra.mxu0 %v4440
      %6505 = vmatmul.bf16.gmra.mxu0 %v1153
      %v6506 = vpop.f32.mrf.mxu0
      %v6507 = vadd.f32 %v6494, %v6506
      %v6508 = vpop.f32.mrf.mxu0
      %6509 = vdwg.mxu0
      %6510 = vmatpush.bf16.msra.mxu0 %v4560
      %6511 = vmatpush.bf16.msra.mxu0 %v4552
      %6512 = vmatpush.bf16.msra.mxu0 %v4544
      %6513 = vmatpush.bf16.msra.mxu0 %v4536
      %6514 = vmatpush.bf16.msra.mxu0 %v4528
      %6515 = vmatpush.bf16.msra.mxu0 %v4520
      %6516 = vmatpush.bf16.msra.mxu0 %v4512
      %6517 = vmatpush.bf16.msra.mxu0 %v4504
      %6518 = vmatmul.bf16.gmra.mxu0 %v1154
      %v6519 = vpop.f32.mrf.mxu0
      %v6520 = vadd.f32 %v6507, %v6519
      %v6521 = vpop.f32.mrf.mxu0
      %6522 = vdwg.mxu0
      %6523 = vmatpush.bf16.msra.mxu0 %v4624
      %6524 = vmatpush.bf16.msra.mxu0 %v4616
      %6525 = vmatpush.bf16.msra.mxu0 %v4608
      %6526 = vmatpush.bf16.msra.mxu0 %v4600
      %6527 = vmatpush.bf16.msra.mxu0 %v4592
      %6528 = vmatpush.bf16.msra.mxu0 %v4584
      %6529 = vmatpush.bf16.msra.mxu0 %v4576
      %6530 = vmatpush.bf16.msra.mxu0 %v4568
      %6531 = vmatmul.bf16.gmra.mxu0 %v1155
      %v6532 = vpop.f32.mrf.mxu0
      %v6533 = vadd.f32 %v6520, %v6532
      %v6534 = vpop.f32.mrf.mxu0
      %6535 = vdwg.mxu0
      %6536 = vmatpush.bf16.msra.mxu0 %v4688
      %6537 = vmatpush.bf16.msra.mxu0 %v4680
      %6538 = vmatpush.bf16.msra.mxu0 %v4672
      %6539 = vmatpush.bf16.msra.mxu0 %v4664
      %6540 = vmatpush.bf16.msra.mxu0 %v4656
      %6541 = vmatpush.bf16.msra.mxu0 %v4648
      %6542 = vmatpush.bf16.msra.mxu0 %v4640
      %6543 = vmatpush.bf16.msra.mxu0 %v4632
      %6544 = vmatmul.bf16.gmra.mxu0 %v1156
      %v6545 = vpop.f32.mrf.mxu0
      %v6546 = vadd.f32 %v6533, %v6545
      %v6547 = vpop.f32.mrf.mxu0
      %6548 = vdwg.mxu0
      %6549 = vmatpush.bf16.msra.mxu0 %v4752
      %6550 = vmatpush.bf16.msra.mxu0 %v4744
      %6551 = vmatpush.bf16.msra.mxu0 %v4736
      %6552 = vmatpush.bf16.msra.mxu0 %v4728
      %6553 = vmatpush.bf16.msra.mxu0 %v4720
      %6554 = vmatpush.bf16.msra.mxu0 %v4712
      %6555 = vmatpush.bf16.msra.mxu0 %v4704
      %6556 = vmatpush.bf16.msra.mxu0 %v4696
      %6557 = vmatmul.bf16.gmra.mxu0 %v1157
      %v6558 = vpop.f32.mrf.mxu0
      %v6559 = vadd.f32 %v6546, %v6558
      %v6560 = vpop.f32.mrf.mxu0
      %6561 = vdwg.mxu0
      %6562 = vmatpush.bf16.msra.mxu0 %v3921
      %6563 = vmatpush.bf16.msra.mxu0 %v3913
      %6564 = vmatpush.bf16.msra.mxu0 %v3905
      %6565 = vmatpush.bf16.msra.mxu0 %v3897
      %6566 = vmatpush.bf16.msra.mxu0 %v3889
      %6567 = vmatpush.bf16.msra.mxu0 %v3881
      %6568 = vmatpush.bf16.msra.mxu0 %v3873
      %6569 = vmatpush.bf16.msra.mxu0 %v3865
      %6570 = vmatmul.bf16.gmra.mxu0 %v1142
      %v6571 = vpop.f32.mrf.mxu0
      %v6572 = vadd.f32 0.0, %v6571
      %v6573 = vpop.f32.mrf.mxu0
      %6574 = vdwg.mxu0
      %6575 = vmatpush.bf16.msra.mxu0 %v3985
      %6576 = vmatpush.bf16.msra.mxu0 %v3977
      %6577 = vmatpush.bf16.msra.mxu0 %v3969
      %6578 = vmatpush.bf16.msra.mxu0 %v3961
      %6579 = vmatpush.bf16.msra.mxu0 %v3953
      %6580 = vmatpush.bf16.msra.mxu0 %v3945
      %6581 = vmatpush.bf16.msra.mxu0 %v3937
      %6582 = vmatpush.bf16.msra.mxu0 %v3929
      %6583 = vmatmul.bf16.gmra.mxu0 %v1143
      %v6584 = vpop.f32.mrf.mxu0
      %v6585 = vadd.f32 %v6572, %v6584
      %v6586 = vpop.f32.mrf.mxu0
      %6587 = vdwg.mxu0
      %6588 = vmatpush.bf16.msra.mxu0 %v4049
      %6589 = vmatpush.bf16.msra.mxu0 %v4041
      %6590 = vmatpush.bf16.msra.mxu0 %v4033
      %6591 = vmatpush.bf16.msra.mxu0 %v4025
      %6592 = vmatpush.bf16.msra.mxu0 %v4017
      %6593 = vmatpush.bf16.msra.mxu0 %v4009
      %6594 = vmatpush.bf16.msra.mxu0 %v4001
      %6595 = vmatpush.bf16.msra.mxu0 %v3993
      %6596 = vmatmul.bf16.gmra.mxu0 %v1144
      %v6597 = vpop.f32.mrf.mxu0
      %v6598 = vadd.f32 %v6585, %v6597
      %v6599 = vpop.f32.mrf.mxu0
      %6600 = vdwg.mxu0
      %6601 = vmatpush.bf16.msra.mxu0 %v4113
      %6602 = vmatpush.bf16.msra.mxu0 %v4105
      %6603 = vmatpush.bf16.msra.mxu0 %v4097
      %6604 = vmatpush.bf16.msra.mxu0 %v4089
      %6605 = vmatpush.bf16.msra.mxu0 %v4081
      %6606 = vmatpush.bf16.msra.mxu0 %v4073
      %6607 = vmatpush.bf16.msra.mxu0 %v4065
      %6608 = vmatpush.bf16.msra.mxu0 %v4057
      %6609 = vmatmul.bf16.gmra.mxu0 %v1145
      %v6610 = vpop.f32.mrf.mxu0
      %v6611 = vadd.f32 %v6598, %v6610
      %v6612 = vpop.f32.mrf.mxu0
      %6613 = vdwg.mxu0
      %6614 = vmatpush.bf16.msra.mxu0 %v4177
      %6615 = vmatpush.bf16.msra.mxu0 %v4169
      %6616 = vmatpush.bf16.msra.mxu0 %v4161
      %6617 = vmatpush.bf16.msra.mxu0 %v4153
      %6618 = vmatpush.bf16.msra.mxu0 %v4145
      %6619 = vmatpush.bf16.msra.mxu0 %v4137
      %6620 = vmatpush.bf16.msra.mxu0 %v4129
      %6621 = vmatpush.bf16.msra.mxu0 %v4121
      %6622 = vmatmul.bf16.gmra.mxu0 %v1146
      %v6623 = vpop.f32.mrf.mxu0
      %v6624 = vadd.f32 %v6611, %v6623
      %v6625 = vpop.f32.mrf.mxu0
      %6626 = vdwg.mxu0
      %6627 = vmatpush.bf16.msra.mxu0 %v4241
      %6628 = vmatpush.bf16.msra.mxu0 %v4233
      %6629 = vmatpush.bf16.msra.mxu0 %v4225
      %6630 = vmatpush.bf16.msra.mxu0 %v4217
      %6631 = vmatpush.bf16.msra.mxu0 %v4209
      %6632 = vmatpush.bf16.msra.mxu0 %v4201
      %6633 = vmatpush.bf16.msra.mxu0 %v4193
      %6634 = vmatpush.bf16.msra.mxu0 %v4185
      %6635 = vmatmul.bf16.gmra.mxu0 %v1147
      %v6636 = vpop.f32.mrf.mxu0
      %v6637 = vadd.f32 %v6624, %v6636
      %v6638 = vpop.f32.mrf.mxu0
      %6639 = vdwg.mxu0
      %6640 = vmatpush.bf16.msra.mxu0 %v4305
      %6641 = vmatpush.bf16.msra.mxu0 %v4297
      %6642 = vmatpush.bf16.msra.mxu0 %v4289
      %6643 = vmatpush.bf16.msra.mxu0 %v4281
      %6644 = vmatpush.bf16.msra.mxu0 %v4273
      %6645 = vmatpush.bf16.msra.mxu0 %v4265
      %6646 = vmatpush.bf16.msra.mxu0 %v4257
      %6647 = vmatpush.bf16.msra.mxu0 %v4249
      %6648 = vmatmul.bf16.gmra.mxu0 %v1148
      %v6649 = vpop.f32.mrf.mxu0
      %v6650 = vadd.f32 %v6637, %v6649
      %v6651 = vpop.f32.mrf.mxu0
      %6652 = vdwg.mxu0
      %6653 = vmatpush.bf16.msra.mxu0 %v4369
      %6654 = vmatpush.bf16.msra.mxu0 %v4361
      %6655 = vmatpush.bf16.msra.mxu0 %v4353
      %6656 = vmatpush.bf16.msra.mxu0 %v4345
      %6657 = vmatpush.bf16.msra.mxu0 %v4337
      %6658 = vmatpush.bf16.msra.mxu0 %v4329
      %6659 = vmatpush.bf16.msra.mxu0 %v4321
      %6660 = vmatpush.bf16.msra.mxu0 %v4313
      %6661 = vmatmul.bf16.gmra.mxu0 %v1149
      %v6662 = vpop.f32.mrf.mxu0
      %v6663 = vadd.f32 %v6650, %v6662
      %v6664 = vpop.f32.mrf.mxu0
      %6665 = vdwg.mxu0
      %6666 = vmatpush.bf16.msra.mxu0 %v4433
      %6667 = vmatpush.bf16.msra.mxu0 %v4425
      %6668 = vmatpush.bf16.msra.mxu0 %v4417
      %6669 = vmatpush.bf16.msra.mxu0 %v4409
      %6670 = vmatpush.bf16.msra.mxu0 %v4401
      %6671 = vmatpush.bf16.msra.mxu0 %v4393
      %6672 = vmatpush.bf16.msra.mxu0 %v4385
      %6673 = vmatpush.bf16.msra.mxu0 %v4377
      %6674 = vmatmul.bf16.gmra.mxu0 %v1152
      %v6675 = vpop.f32.mrf.mxu0
      %v6676 = vadd.f32 %v6663, %v6675
      %v6677 = vpop.f32.mrf.mxu0
      %6678 = vdwg.mxu0
      %6679 = vmatpush.bf16.msra.mxu0 %v4497
      %6680 = vmatpush.bf16.msra.mxu0 %v4489
      %6681 = vmatpush.bf16.msra.mxu0 %v4481
      %6682 = vmatpush.bf16.msra.mxu0 %v4473
      %6683 = vmatpush.bf16.msra.mxu0 %v4465
      %6684 = vmatpush.bf16.msra.mxu0 %v4457
      %6685 = vmatpush.bf16.msra.mxu0 %v4449
      %6686 = vmatpush.bf16.msra.mxu0 %v4441
      %6687 = vmatmul.bf16.gmra.mxu0 %v1153
      %v6688 = vpop.f32.mrf.mxu0
      %v6689 = vadd.f32 %v6676, %v6688
      %v6690 = vpop.f32.mrf.mxu0
      %6691 = vdwg.mxu0
      %6692 = vmatpush.bf16.msra.mxu0 %v4561
      %6693 = vmatpush.bf16.msra.mxu0 %v4553
      %6694 = vmatpush.bf16.msra.mxu0 %v4545
      %6695 = vmatpush.bf16.msra.mxu0 %v4537
      %6696 = vmatpush.bf16.msra.mxu0 %v4529
      %6697 = vmatpush.bf16.msra.mxu0 %v4521
      %6698 = vmatpush.bf16.msra.mxu0 %v4513
      %6699 = vmatpush.bf16.msra.mxu0 %v4505
      %6700 = vmatmul.bf16.gmra.mxu0 %v1154
      %v6701 = vpop.f32.mrf.mxu0
      %v6702 = vadd.f32 %v6689, %v6701
      %v6703 = vpop.f32.mrf.mxu0
      %6704 = vdwg.mxu0
      %6705 = vmatpush.bf16.msra.mxu0 %v4625
      %6706 = vmatpush.bf16.msra.mxu0 %v4617
      %6707 = vmatpush.bf16.msra.mxu0 %v4609
      %6708 = vmatpush.bf16.msra.mxu0 %v4601
      %6709 = vmatpush.bf16.msra.mxu0 %v4593
      %6710 = vmatpush.bf16.msra.mxu0 %v4585
      %6711 = vmatpush.bf16.msra.mxu0 %v4577
      %6712 = vmatpush.bf16.msra.mxu0 %v4569
      %6713 = vmatmul.bf16.gmra.mxu0 %v1155
      %v6714 = vpop.f32.mrf.mxu0
      %v6715 = vadd.f32 %v6702, %v6714
      %v6716 = vpop.f32.mrf.mxu0
      %6717 = vdwg.mxu0
      %6718 = vmatpush.bf16.msra.mxu0 %v4689
      %6719 = vmatpush.bf16.msra.mxu0 %v4681
      %6720 = vmatpush.bf16.msra.mxu0 %v4673
      %6721 = vmatpush.bf16.msra.mxu0 %v4665
      %6722 = vmatpush.bf16.msra.mxu0 %v4657
      %6723 = vmatpush.bf16.msra.mxu0 %v4649
      %6724 = vmatpush.bf16.msra.mxu0 %v4641
      %6725 = vmatpush.bf16.msra.mxu0 %v4633
      %6726 = vmatmul.bf16.gmra.mxu0 %v1156
      %v6727 = vpop.f32.mrf.mxu0
      %v6728 = vadd.f32 %v6715, %v6727
      %v6729 = vpop.f32.mrf.mxu0
      %6730 = vdwg.mxu0
      %6731 = vmatpush.bf16.msra.mxu0 %v4753
      %6732 = vmatpush.bf16.msra.mxu0 %v4745
      %6733 = vmatpush.bf16.msra.mxu0 %v4737
      %6734 = vmatpush.bf16.msra.mxu0 %v4729
      %6735 = vmatpush.bf16.msra.mxu0 %v4721
      %6736 = vmatpush.bf16.msra.mxu0 %v4713
      %6737 = vmatpush.bf16.msra.mxu0 %v4705
      %6738 = vmatpush.bf16.msra.mxu0 %v4697
      %6739 = vmatmul.bf16.gmra.mxu0 %v1157
      %v6740 = vpop.f32.mrf.mxu0
      %v6741 = vadd.f32 %v6728, %v6740
      %v6742 = vpop.f32.mrf.mxu0
      %6743 = vdwg.mxu0
      %6744 = vmatpush.bf16.msra.mxu0 %v3922
      %6745 = vmatpush.bf16.msra.mxu0 %v3914
      %6746 = vmatpush.bf16.msra.mxu0 %v3906
      %6747 = vmatpush.bf16.msra.mxu0 %v3898
      %6748 = vmatpush.bf16.msra.mxu0 %v3890
      %6749 = vmatpush.bf16.msra.mxu0 %v3882
      %6750 = vmatpush.bf16.msra.mxu0 %v3874
      %6751 = vmatpush.bf16.msra.mxu0 %v3866
      %6752 = vmatmul.bf16.gmra.mxu0 %v1142
      %v6753 = vpop.f32.mrf.mxu0
      %v6754 = vadd.f32 0.0, %v6753
      %v6755 = vpop.f32.mrf.mxu0
      %6756 = vdwg.mxu0
      %6757 = vmatpush.bf16.msra.mxu0 %v3986
      %6758 = vmatpush.bf16.msra.mxu0 %v3978
      %6759 = vmatpush.bf16.msra.mxu0 %v3970
      %6760 = vmatpush.bf16.msra.mxu0 %v3962
      %6761 = vmatpush.bf16.msra.mxu0 %v3954
      %6762 = vmatpush.bf16.msra.mxu0 %v3946
      %6763 = vmatpush.bf16.msra.mxu0 %v3938
      %6764 = vmatpush.bf16.msra.mxu0 %v3930
      %6765 = vmatmul.bf16.gmra.mxu0 %v1143
      %v6766 = vpop.f32.mrf.mxu0
      %v6767 = vadd.f32 %v6754, %v6766
      %v6768 = vpop.f32.mrf.mxu0
      %6769 = vdwg.mxu0
      %6770 = vmatpush.bf16.msra.mxu0 %v4050
      %6771 = vmatpush.bf16.msra.mxu0 %v4042
      %6772 = vmatpush.bf16.msra.mxu0 %v4034
      %6773 = vmatpush.bf16.msra.mxu0 %v4026
      %6774 = vmatpush.bf16.msra.mxu0 %v4018
      %6775 = vmatpush.bf16.msra.mxu0 %v4010
      %6776 = vmatpush.bf16.msra.mxu0 %v4002
      %6777 = vmatpush.bf16.msra.mxu0 %v3994
      %6778 = vmatmul.bf16.gmra.mxu0 %v1144
      %v6779 = vpop.f32.mrf.mxu0
      %v6780 = vadd.f32 %v6767, %v6779
      %v6781 = vpop.f32.mrf.mxu0
      %6782 = vdwg.mxu0
      %6783 = vmatpush.bf16.msra.mxu0 %v4114
      %6784 = vmatpush.bf16.msra.mxu0 %v4106
      %6785 = vmatpush.bf16.msra.mxu0 %v4098
      %6786 = vmatpush.bf16.msra.mxu0 %v4090
      %6787 = vmatpush.bf16.msra.mxu0 %v4082
      %6788 = vmatpush.bf16.msra.mxu0 %v4074
      %6789 = vmatpush.bf16.msra.mxu0 %v4066
      %6790 = vmatpush.bf16.msra.mxu0 %v4058
      %6791 = vmatmul.bf16.gmra.mxu0 %v1145
      %v6792 = vpop.f32.mrf.mxu0
      %v6793 = vadd.f32 %v6780, %v6792
      %v6794 = vpop.f32.mrf.mxu0
      %6795 = vdwg.mxu0
      %6796 = vmatpush.bf16.msra.mxu0 %v4178
      %6797 = vmatpush.bf16.msra.mxu0 %v4170
      %6798 = vmatpush.bf16.msra.mxu0 %v4162
      %6799 = vmatpush.bf16.msra.mxu0 %v4154
      %6800 = vmatpush.bf16.msra.mxu0 %v4146
      %6801 = vmatpush.bf16.msra.mxu0 %v4138
      %6802 = vmatpush.bf16.msra.mxu0 %v4130
      %6803 = vmatpush.bf16.msra.mxu0 %v4122
      %6804 = vmatmul.bf16.gmra.mxu0 %v1146
      %v6805 = vpop.f32.mrf.mxu0
      %v6806 = vadd.f32 %v6793, %v6805
      %v6807 = vpop.f32.mrf.mxu0
      %6808 = vdwg.mxu0
      %6809 = vmatpush.bf16.msra.mxu0 %v4242
      %6810 = vmatpush.bf16.msra.mxu0 %v4234
      %6811 = vmatpush.bf16.msra.mxu0 %v4226
      %6812 = vmatpush.bf16.msra.mxu0 %v4218
      %6813 = vmatpush.bf16.msra.mxu0 %v4210
      %6814 = vmatpush.bf16.msra.mxu0 %v4202
      %6815 = vmatpush.bf16.msra.mxu0 %v4194
      %6816 = vmatpush.bf16.msra.mxu0 %v4186
      %6817 = vmatmul.bf16.gmra.mxu0 %v1147
      %v6818 = vpop.f32.mrf.mxu0
      %v6819 = vadd.f32 %v6806, %v6818
      %v6820 = vpop.f32.mrf.mxu0
      %6821 = vdwg.mxu0
      %6822 = vmatpush.bf16.msra.mxu0 %v4306
      %6823 = vmatpush.bf16.msra.mxu0 %v4298
      %6824 = vmatpush.bf16.msra.mxu0 %v4290
      %6825 = vmatpush.bf16.msra.mxu0 %v4282
      %6826 = vmatpush.bf16.msra.mxu0 %v4274
      %6827 = vmatpush.bf16.msra.mxu0 %v4266
      %6828 = vmatpush.bf16.msra.mxu0 %v4258
      %6829 = vmatpush.bf16.msra.mxu0 %v4250
      %6830 = vmatmul.bf16.gmra.mxu0 %v1148
      %v6831 = vpop.f32.mrf.mxu0
      %v6832 = vadd.f32 %v6819, %v6831
      %v6833 = vpop.f32.mrf.mxu0
      %6834 = vdwg.mxu0
      %6835 = vmatpush.bf16.msra.mxu0 %v4370
      %6836 = vmatpush.bf16.msra.mxu0 %v4362
      %6837 = vmatpush.bf16.msra.mxu0 %v4354
      %6838 = vmatpush.bf16.msra.mxu0 %v4346
      %6839 = vmatpush.bf16.msra.mxu0 %v4338
      %6840 = vmatpush.bf16.msra.mxu0 %v4330
      %6841 = vmatpush.bf16.msra.mxu0 %v4322
      %6842 = vmatpush.bf16.msra.mxu0 %v4314
      %6843 = vmatmul.bf16.gmra.mxu0 %v1149
      %v6844 = vpop.f32.mrf.mxu0
      %v6845 = vadd.f32 %v6832, %v6844
      %v6846 = vpop.f32.mrf.mxu0
      %6847 = vdwg.mxu0
      %6848 = vmatpush.bf16.msra.mxu0 %v4434
      %6849 = vmatpush.bf16.msra.mxu0 %v4426
      %6850 = vmatpush.bf16.msra.mxu0 %v4418
      %6851 = vmatpush.bf16.msra.mxu0 %v4410
      %6852 = vmatpush.bf16.msra.mxu0 %v4402
      %6853 = vmatpush.bf16.msra.mxu0 %v4394
      %6854 = vmatpush.bf16.msra.mxu0 %v4386
      %6855 = vmatpush.bf16.msra.mxu0 %v4378
      %6856 = vmatmul.bf16.gmra.mxu0 %v1152
      %v6857 = vpop.f32.mrf.mxu0
      %v6858 = vadd.f32 %v6845, %v6857
      %v6859 = vpop.f32.mrf.mxu0
      %6860 = vdwg.mxu0
      %6861 = vmatpush.bf16.msra.mxu0 %v4498
      %6862 = vmatpush.bf16.msra.mxu0 %v4490
      %6863 = vmatpush.bf16.msra.mxu0 %v4482
      %6864 = vmatpush.bf16.msra.mxu0 %v4474
      %6865 = vmatpush.bf16.msra.mxu0 %v4466
      %6866 = vmatpush.bf16.msra.mxu0 %v4458
      %6867 = vmatpush.bf16.msra.mxu0 %v4450
      %6868 = vmatpush.bf16.msra.mxu0 %v4442
      %6869 = vmatmul.bf16.gmra.mxu0 %v1153
      %v6870 = vpop.f32.mrf.mxu0
      %v6871 = vadd.f32 %v6858, %v6870
      %v6872 = vpop.f32.mrf.mxu0
      %6873 = vdwg.mxu0
      %6874 = vmatpush.bf16.msra.mxu0 %v4562
      %6875 = vmatpush.bf16.msra.mxu0 %v4554
      %6876 = vmatpush.bf16.msra.mxu0 %v4546
      %6877 = vmatpush.bf16.msra.mxu0 %v4538
      %6878 = vmatpush.bf16.msra.mxu0 %v4530
      %6879 = vmatpush.bf16.msra.mxu0 %v4522
      %6880 = vmatpush.bf16.msra.mxu0 %v4514
      %6881 = vmatpush.bf16.msra.mxu0 %v4506
      %6882 = vmatmul.bf16.gmra.mxu0 %v1154
      %v6883 = vpop.f32.mrf.mxu0
      %v6884 = vadd.f32 %v6871, %v6883
      %v6885 = vpop.f32.mrf.mxu0
      %6886 = vdwg.mxu0
      %6887 = vmatpush.bf16.msra.mxu0 %v4626
      %6888 = vmatpush.bf16.msra.mxu0 %v4618
      %6889 = vmatpush.bf16.msra.mxu0 %v4610
      %6890 = vmatpush.bf16.msra.mxu0 %v4602
      %6891 = vmatpush.bf16.msra.mxu0 %v4594
      %6892 = vmatpush.bf16.msra.mxu0 %v4586
      %6893 = vmatpush.bf16.msra.mxu0 %v4578
      %6894 = vmatpush.bf16.msra.mxu0 %v4570
      %6895 = vmatmul.bf16.gmra.mxu0 %v1155
      %v6896 = vpop.f32.mrf.mxu0
      %v6897 = vadd.f32 %v6884, %v6896
      %v6898 = vpop.f32.mrf.mxu0
      %6899 = vdwg.mxu0
      %6900 = vmatpush.bf16.msra.mxu0 %v4690
      %6901 = vmatpush.bf16.msra.mxu0 %v4682
      %6902 = vmatpush.bf16.msra.mxu0 %v4674
      %6903 = vmatpush.bf16.msra.mxu0 %v4666
      %6904 = vmatpush.bf16.msra.mxu0 %v4658
      %6905 = vmatpush.bf16.msra.mxu0 %v4650
      %6906 = vmatpush.bf16.msra.mxu0 %v4642
      %6907 = vmatpush.bf16.msra.mxu0 %v4634
      %6908 = vmatmul.bf16.gmra.mxu0 %v1156
      %v6909 = vpop.f32.mrf.mxu0
      %v6910 = vadd.f32 %v6897, %v6909
      %v6911 = vpop.f32.mrf.mxu0
      %6912 = vdwg.mxu0
      %6913 = vmatpush.bf16.msra.mxu0 %v4754
      %6914 = vmatpush.bf16.msra.mxu0 %v4746
      %6915 = vmatpush.bf16.msra.mxu0 %v4738
      %6916 = vmatpush.bf16.msra.mxu0 %v4730
      %6917 = vmatpush.bf16.msra.mxu0 %v4722
      %6918 = vmatpush.bf16.msra.mxu0 %v4714
      %6919 = vmatpush.bf16.msra.mxu0 %v4706
      %6920 = vmatpush.bf16.msra.mxu0 %v4698
      %6921 = vmatmul.bf16.gmra.mxu0 %v1157
      %v6922 = vpop.f32.mrf.mxu0
      %v6923 = vadd.f32 %v6910, %v6922
      %v6924 = vpop.f32.mrf.mxu0
      %6925 = vdwg.mxu0
      %6926 = vmatpush.bf16.msra.mxu0 %v3923
      %6927 = vmatpush.bf16.msra.mxu0 %v3915
      %6928 = vmatpush.bf16.msra.mxu0 %v3907
      %6929 = vmatpush.bf16.msra.mxu0 %v3899
      %6930 = vmatpush.bf16.msra.mxu0 %v3891
      %6931 = vmatpush.bf16.msra.mxu0 %v3883
      %6932 = vmatpush.bf16.msra.mxu0 %v3875
      %6933 = vmatpush.bf16.msra.mxu0 %v3867
      %6934 = vmatmul.bf16.gmra.mxu0 %v1142
      %v6935 = vpop.f32.mrf.mxu0
      %v6936 = vadd.f32 0.0, %v6935
      %v6937 = vpop.f32.mrf.mxu0
      %6938 = vdwg.mxu0
      %6939 = vmatpush.bf16.msra.mxu0 %v3987
      %6940 = vmatpush.bf16.msra.mxu0 %v3979
      %6941 = vmatpush.bf16.msra.mxu0 %v3971
      %6942 = vmatpush.bf16.msra.mxu0 %v3963
      %6943 = vmatpush.bf16.msra.mxu0 %v3955
      %6944 = vmatpush.bf16.msra.mxu0 %v3947
      %6945 = vmatpush.bf16.msra.mxu0 %v3939
      %6946 = vmatpush.bf16.msra.mxu0 %v3931
      %6947 = vmatmul.bf16.gmra.mxu0 %v1143
      %v6948 = vpop.f32.mrf.mxu0
      %v6949 = vadd.f32 %v6936, %v6948
      %v6950 = vpop.f32.mrf.mxu0
      %6951 = vdwg.mxu0
      %6952 = vmatpush.bf16.msra.mxu0 %v4051
      %6953 = vmatpush.bf16.msra.mxu0 %v4043
      %6954 = vmatpush.bf16.msra.mxu0 %v4035
      %6955 = vmatpush.bf16.msra.mxu0 %v4027
      %6956 = vmatpush.bf16.msra.mxu0 %v4019
      %6957 = vmatpush.bf16.msra.mxu0 %v4011
      %6958 = vmatpush.bf16.msra.mxu0 %v4003
      %6959 = vmatpush.bf16.msra.mxu0 %v3995
      %6960 = vmatmul.bf16.gmra.mxu0 %v1144
      %v6961 = vpop.f32.mrf.mxu0
      %v6962 = vadd.f32 %v6949, %v6961
      %v6963 = vpop.f32.mrf.mxu0
      %6964 = vdwg.mxu0
      %6965 = vmatpush.bf16.msra.mxu0 %v4115
      %6966 = vmatpush.bf16.msra.mxu0 %v4107
      %6967 = vmatpush.bf16.msra.mxu0 %v4099
      %6968 = vmatpush.bf16.msra.mxu0 %v4091
      %6969 = vmatpush.bf16.msra.mxu0 %v4083
      %6970 = vmatpush.bf16.msra.mxu0 %v4075
      %6971 = vmatpush.bf16.msra.mxu0 %v4067
      %6972 = vmatpush.bf16.msra.mxu0 %v4059
      %6973 = vmatmul.bf16.gmra.mxu0 %v1145
      %v6974 = vpop.f32.mrf.mxu0
      %v6975 = vadd.f32 %v6962, %v6974
      %v6976 = vpop.f32.mrf.mxu0
      %6977 = vdwg.mxu0
      %6978 = vmatpush.bf16.msra.mxu0 %v4179
      %6979 = vmatpush.bf16.msra.mxu0 %v4171
      %6980 = vmatpush.bf16.msra.mxu0 %v4163
      %6981 = vmatpush.bf16.msra.mxu0 %v4155
      %6982 = vmatpush.bf16.msra.mxu0 %v4147
      %6983 = vmatpush.bf16.msra.mxu0 %v4139
      %6984 = vmatpush.bf16.msra.mxu0 %v4131
      %6985 = vmatpush.bf16.msra.mxu0 %v4123
      %6986 = vmatmul.bf16.gmra.mxu0 %v1146
      %v6987 = vpop.f32.mrf.mxu0
      %v6988 = vadd.f32 %v6975, %v6987
      %v6989 = vpop.f32.mrf.mxu0
      %6990 = vdwg.mxu0
      %6991 = vmatpush.bf16.msra.mxu0 %v4243
      %6992 = vmatpush.bf16.msra.mxu0 %v4235
      %6993 = vmatpush.bf16.msra.mxu0 %v4227
      %6994 = vmatpush.bf16.msra.mxu0 %v4219
      %6995 = vmatpush.bf16.msra.mxu0 %v4211
      %6996 = vmatpush.bf16.msra.mxu0 %v4203
      %6997 = vmatpush.bf16.msra.mxu0 %v4195
      %6998 = vmatpush.bf16.msra.mxu0 %v4187
      %6999 = vmatmul.bf16.gmra.mxu0 %v1147
      %v7000 = vpop.f32.mrf.mxu0
      %v7001 = vadd.f32 %v6988, %v7000
      %v7002 = vpop.f32.mrf.mxu0
      %7003 = vdwg.mxu0
      %7004 = vmatpush.bf16.msra.mxu0 %v4307
      %7005 = vmatpush.bf16.msra.mxu0 %v4299
      %7006 = vmatpush.bf16.msra.mxu0 %v4291
      %7007 = vmatpush.bf16.msra.mxu0 %v4283
      %7008 = vmatpush.bf16.msra.mxu0 %v4275
      %7009 = vmatpush.bf16.msra.mxu0 %v4267
      %7010 = vmatpush.bf16.msra.mxu0 %v4259
      %7011 = vmatpush.bf16.msra.mxu0 %v4251
      %7012 = vmatmul.bf16.gmra.mxu0 %v1148
      %v7013 = vpop.f32.mrf.mxu0
      %v7014 = vadd.f32 %v7001, %v7013
      %v7015 = vpop.f32.mrf.mxu0
      %7016 = vdwg.mxu0
      %7017 = vmatpush.bf16.msra.mxu0 %v4371
      %7018 = vmatpush.bf16.msra.mxu0 %v4363
      %7019 = vmatpush.bf16.msra.mxu0 %v4355
      %7020 = vmatpush.bf16.msra.mxu0 %v4347
      %7021 = vmatpush.bf16.msra.mxu0 %v4339
      %7022 = vmatpush.bf16.msra.mxu0 %v4331
      %7023 = vmatpush.bf16.msra.mxu0 %v4323
      %7024 = vmatpush.bf16.msra.mxu0 %v4315
      %7025 = vmatmul.bf16.gmra.mxu0 %v1149
      %v7026 = vpop.f32.mrf.mxu0
      %v7027 = vadd.f32 %v7014, %v7026
      %v7028 = vpop.f32.mrf.mxu0
      %7029 = vdwg.mxu0
      %7030 = vmatpush.bf16.msra.mxu0 %v4435
      %7031 = vmatpush.bf16.msra.mxu0 %v4427
      %7032 = vmatpush.bf16.msra.mxu0 %v4419
      %7033 = vmatpush.bf16.msra.mxu0 %v4411
      %7034 = vmatpush.bf16.msra.mxu0 %v4403
      %7035 = vmatpush.bf16.msra.mxu0 %v4395
      %7036 = vmatpush.bf16.msra.mxu0 %v4387
      %7037 = vmatpush.bf16.msra.mxu0 %v4379
      %7038 = vmatmul.bf16.gmra.mxu0 %v1152
      %v7039 = vpop.f32.mrf.mxu0
      %v7040 = vadd.f32 %v7027, %v7039
      %v7041 = vpop.f32.mrf.mxu0
      %7042 = vdwg.mxu0
      %7043 = vmatpush.bf16.msra.mxu0 %v4499
      %7044 = vmatpush.bf16.msra.mxu0 %v4491
      %7045 = vmatpush.bf16.msra.mxu0 %v4483
      %7046 = vmatpush.bf16.msra.mxu0 %v4475
      %7047 = vmatpush.bf16.msra.mxu0 %v4467
      %7048 = vmatpush.bf16.msra.mxu0 %v4459
      %7049 = vmatpush.bf16.msra.mxu0 %v4451
      %7050 = vmatpush.bf16.msra.mxu0 %v4443
      %7051 = vmatmul.bf16.gmra.mxu0 %v1153
      %v7052 = vpop.f32.mrf.mxu0
      %v7053 = vadd.f32 %v7040, %v7052
      %v7054 = vpop.f32.mrf.mxu0
      %7055 = vdwg.mxu0
      %7056 = vmatpush.bf16.msra.mxu0 %v4563
      %7057 = vmatpush.bf16.msra.mxu0 %v4555
      %7058 = vmatpush.bf16.msra.mxu0 %v4547
      %7059 = vmatpush.bf16.msra.mxu0 %v4539
      %7060 = vmatpush.bf16.msra.mxu0 %v4531
      %7061 = vmatpush.bf16.msra.mxu0 %v4523
      %7062 = vmatpush.bf16.msra.mxu0 %v4515
      %7063 = vmatpush.bf16.msra.mxu0 %v4507
      %7064 = vmatmul.bf16.gmra.mxu0 %v1154
      %v7065 = vpop.f32.mrf.mxu0
      %v7066 = vadd.f32 %v7053, %v7065
      %v7067 = vpop.f32.mrf.mxu0
      %7068 = vdwg.mxu0
      %7069 = vmatpush.bf16.msra.mxu0 %v4627
      %7070 = vmatpush.bf16.msra.mxu0 %v4619
      %7071 = vmatpush.bf16.msra.mxu0 %v4611
      %7072 = vmatpush.bf16.msra.mxu0 %v4603
      %7073 = vmatpush.bf16.msra.mxu0 %v4595
      %7074 = vmatpush.bf16.msra.mxu0 %v4587
      %7075 = vmatpush.bf16.msra.mxu0 %v4579
      %7076 = vmatpush.bf16.msra.mxu0 %v4571
      %7077 = vmatmul.bf16.gmra.mxu0 %v1155
      %v7078 = vpop.f32.mrf.mxu0
      %v7079 = vadd.f32 %v7066, %v7078
      %v7080 = vpop.f32.mrf.mxu0
      %7081 = vdwg.mxu0
      %7082 = vmatpush.bf16.msra.mxu0 %v4691
      %7083 = vmatpush.bf16.msra.mxu0 %v4683
      %7084 = vmatpush.bf16.msra.mxu0 %v4675
      %7085 = vmatpush.bf16.msra.mxu0 %v4667
      %7086 = vmatpush.bf16.msra.mxu0 %v4659
      %7087 = vmatpush.bf16.msra.mxu0 %v4651
      %7088 = vmatpush.bf16.msra.mxu0 %v4643
      %7089 = vmatpush.bf16.msra.mxu0 %v4635
      %7090 = vmatmul.bf16.gmra.mxu0 %v1156
      %v7091 = vpop.f32.mrf.mxu0
      %v7092 = vadd.f32 %v7079, %v7091
      %v7093 = vpop.f32.mrf.mxu0
      %7094 = vdwg.mxu0
      %7095 = vmatpush.bf16.msra.mxu0 %v4755
      %7096 = vmatpush.bf16.msra.mxu0 %v4747
      %7097 = vmatpush.bf16.msra.mxu0 %v4739
      %7098 = vmatpush.bf16.msra.mxu0 %v4731
      %7099 = vmatpush.bf16.msra.mxu0 %v4723
      %7100 = vmatpush.bf16.msra.mxu0 %v4715
      %7101 = vmatpush.bf16.msra.mxu0 %v4707
      %7102 = vmatpush.bf16.msra.mxu0 %v4699
      %7103 = vmatmul.bf16.gmra.mxu0 %v1157
      %v7104 = vpop.f32.mrf.mxu0
      %v7105 = vadd.f32 %v7092, %v7104
      %v7106 = vpop.f32.mrf.mxu0
      %7107 = vdwg.mxu0
      %v7116 = vrot.slane %v6013, 6
      %v7117 = vrot.slane %v6195, 4
      %v7118 = vrot.slane %v6377, 2
      %v7119 = vrot.slane %v6741, 6
      %v7120 = vrot.slane %v6923, 4
      %v7121 = vrot.slane %v7105, 2
      %vm7122 = vcmask 1041408
      %v7123 = vsel %vm7122, %v5831, %v7116
      %vm7124 = vcmask 1045508
      %v7125 = vsel %vm7124, %v7117, %v7118
      %vm7126 = vcmask 1043456
      %v7127 = vsel %vm7126, %v7123, %v7125
      %v7128 = vsel %vm7122, %v6559, %v7119
      %v7129 = vsel %vm7124, %v7120, %v7121
      %v7130 = vsel %vm7126, %v7128, %v7129
      %v7133 = vadd.f32 %v240, %v7127
      %v7134 = vadd.f32 %v241, %v7130
      %7135 = vst [vmem:[#allocation2] sm:$0xff] %v7133
      %7136 = vst [vmem:[#allocation2 + $0x8] sm:$0xff] %v7134
      %p7137 = scmp.eq.s32.totalorder %s16, 1
      // Predicated region
      $region45: #{dqn_forward.7} parent=39 // pred_check
        %p7138 = pneg %p7137
      $region46: #{dqn_forward.7} parent=39 // pred_check_branch
        %7140 = sbr.rel (%p7138) target = $region48
      $region47: #{dqn_forward.7} parent=39 // pred_region
        %v7141 = vld [vmem:[#allocation2] sm:$0xff]
        %v7142 = vld [vmem:[#allocation2 + $0x8] sm:$0xff]
        %v7143 = vld [vmem:[%s2] sm:$0xff]
        %v7145 = vperm.slane %v7143, 0
        %v7146 = vperm.slane %v7143, 1
        %v7147 = vperm.slane %v7143, 2
        %v7148 = vperm.slane %v7143, 3
        %v7149 = vperm.slane %v7143, 4
        %v7150 = vperm.slane %v7143, 5
        %v7151 = vperm.slane %v7143, 6
        %v7152 = vperm.slane %v7143, 7
        %v7153 = vrot.slane %v7146, 6
        %v7154 = vrot.slane %v7147, 4
        %v7155 = vrot.slane %v7148, 2
        %v7156 = vrot.slane %v7150, 6
        %v7157 = vrot.slane %v7151, 4
        %v7158 = vrot.slane %v7152, 2
        %v7159 = vsel %vm7122, %v7145, %v7153
        %v7160 = vsel %vm7124, %v7154, %v7155
        %v7161 = vsel %vm7126, %v7159, %v7160
        %v7162 = vsel %vm7122, %v7149, %v7156
        %v7163 = vsel %vm7124, %v7157, %v7158
        %v7164 = vsel %vm7126, %v7162, %v7163
        %v7167 = vadd.f32 %v7141, %v7161
        %v7168 = vadd.f32 %v7142, %v7164
        %v7169 = vmax.f32 %v7167, 0.0
        %v7170 = vmax.f32 %v7168, 0.0
        %7173 = vst [vmem:[#allocation1] ss:$4 sm:$0xff] %v7169
        %s7174 = scalar_lea.vmem [#allocation1], 32
        %7175 = vst [vmem:[%s7174] ss:$4 sm:$0xff] %v7170
        %v7176 = vld.sshfl [vmem:[#allocation1] sm:$0xff pattern:$0x73625140]
        %v7177 = vld.sshfl [vmem:[#allocation1 + $0x8] sm:$0xff pattern:$0x73625140]
        %v7178 = vld.sshfl [vmem:[#allocation1 + $0x10] sm:$0xff pattern:$0x73625140]
        %v7179 = vld.sshfl [vmem:[#allocation1 + $0x18] sm:$0xff pattern:$0x73625140]
        %v7180 = vld.sshfl [vmem:[#allocation1 + $0x20] sm:$0xff pattern:$0x73625140]
        %v7181 = vld.sshfl [vmem:[#allocation1 + $0x28] sm:$0xff pattern:$0x73625140]
        %v7182 = vld.sshfl [vmem:[#allocation1 + $0x30] sm:$0xff pattern:$0x73625140]
        %v7183 = vld.sshfl [vmem:[#allocation1 + $0x38] sm:$0xff pattern:$0x73625140]
        %v7192 = vpack.c.bf16 %v7176, %v7176
        %v7193 = vpack.c.bf16 %v7177, %v7177
        %v7194 = vpack.c.bf16 %v7178, %v7178
        %v7195 = vpack.c.bf16 %v7179, %v7179
        %v7196 = vpack.c.bf16 %v7180, %v7180
        %v7197 = vpack.c.bf16 %v7181, %v7181
        %v7198 = vpack.c.bf16 %v7182, %v7182
        %v7199 = vpack.c.bf16 %v7183, %v7183
        %v7200 = vld [vmem:[%s3] sm:$0xf]
        %v7201 = vld [vmem:[%s3 + $0x4] sm:$0xf]
        %v7202 = vld [vmem:[%s3 + $0x8] sm:$0xf]
        %v7203 = vld [vmem:[%s3 + $0xc] sm:$0xf]
        %v7204 = vld [vmem:[%s3 + $0x10] sm:$0xf]
        %v7205 = vld [vmem:[%s3 + $0x14] sm:$0xf]
        %v7206 = vld [vmem:[%s3 + $0x18] sm:$0xf]
        %v7207 = vld [vmem:[%s3 + $0x1c] sm:$0xf]
        %v7208 = vld [vmem:[%s3 + $0x20] sm:$0xf]
        %v7209 = vld [vmem:[%s3 + $0x24] sm:$0xf]
        %v7210 = vld [vmem:[%s3 + $0x28] sm:$0xf]
        %v7211 = vld [vmem:[%s3 + $0x2c] sm:$0xf]
        %v7212 = vld [vmem:[%s3 + $0x30] sm:$0xf]
        %v7213 = vld [vmem:[%s3 + $0x34] sm:$0xf]
        %v7214 = vld [vmem:[%s3 + $0x38] sm:$0xf]
        %v7215 = vld [vmem:[%s3 + $0x3c] sm:$0xf]
        %v7216 = vld [vmem:[%s3 + $0x40] sm:$0xf]
        %v7217 = vld [vmem:[%s3 + $0x44] sm:$0xf]
        %v7218 = vld [vmem:[%s3 + $0x48] sm:$0xf]
        %v7219 = vld [vmem:[%s3 + $0x4c] sm:$0xf]
        %v7220 = vld [vmem:[%s3 + $0x50] sm:$0xf]
        %v7221 = vld [vmem:[%s3 + $0x54] sm:$0xf]
        %v7222 = vld [vmem:[%s3 + $0x58] sm:$0xf]
        %v7223 = vld [vmem:[%s3 + $0x5c] sm:$0xf]
        %v7224 = vld [vmem:[%s3 + $0x60] sm:$0xf]
        %v7225 = vld [vmem:[%s3 + $0x64] sm:$0xf]
        %v7226 = vld [vmem:[%s3 + $0x68] sm:$0xf]
        %v7227 = vld [vmem:[%s3 + $0x6c] sm:$0xf]
        %v7228 = vld [vmem:[%s3 + $0x70] sm:$0xf]
        %v7229 = vld [vmem:[%s3 + $0x74] sm:$0xf]
        %v7230 = vld [vmem:[%s3 + $0x78] sm:$0xf]
        %v7231 = vld [vmem:[%s3 + $0x7c] sm:$0xf]
        %v7232 = vld [vmem:[%s3 + $0x80] sm:$0xf]
        %v7233 = vld [vmem:[%s3 + $0x84] sm:$0xf]
        %v7234 = vld [vmem:[%s3 + $0x88] sm:$0xf]
        %v7235 = vld [vmem:[%s3 + $0x8c] sm:$0xf]
        %v7236 = vld [vmem:[%s3 + $0x90] sm:$0xf]
        %v7237 = vld [vmem:[%s3 + $0x94] sm:$0xf]
        %v7238 = vld [vmem:[%s3 + $0x98] sm:$0xf]
        %v7239 = vld [vmem:[%s3 + $0x9c] sm:$0xf]
        %v7240 = vld [vmem:[%s3 + $0xa0] sm:$0xf]
        %v7241 = vld [vmem:[%s3 + $0xa4] sm:$0xf]
        %v7242 = vld [vmem:[%s3 + $0xa8] sm:$0xf]
        %v7243 = vld [vmem:[%s3 + $0xac] sm:$0xf]
        %v7244 = vld [vmem:[%s3 + $0xb0] sm:$0xf]
        %v7245 = vld [vmem:[%s3 + $0xb4] sm:$0xf]
        %v7246 = vld [vmem:[%s3 + $0xb8] sm:$0xf]
        %v7247 = vld [vmem:[%s3 + $0xbc] sm:$0xf]
        %v7248 = vld [vmem:[%s3 + $0xc0] sm:$0xf]
        %v7249 = vld [vmem:[%s3 + $0xc4] sm:$0xf]
        %v7250 = vld [vmem:[%s3 + $0xc8] sm:$0xf]
        %v7251 = vld [vmem:[%s3 + $0xcc] sm:$0xf]
        %v7252 = vld [vmem:[%s3 + $0xd0] sm:$0xf]
        %v7253 = vld [vmem:[%s3 + $0xd4] sm:$0xf]
        %v7254 = vld [vmem:[%s3 + $0xd8] sm:$0xf]
        %v7255 = vld [vmem:[%s3 + $0xdc] sm:$0xf]
        %v7256 = vld [vmem:[%s3 + $0xe0] sm:$0xf]
        %v7257 = vld [vmem:[%s3 + $0xe4] sm:$0xf]
        %v7258 = vld [vmem:[%s3 + $0xe8] sm:$0xf]
        %v7259 = vld [vmem:[%s3 + $0xec] sm:$0xf]
        %v7260 = vld [vmem:[%s3 + $0xf0] sm:$0xf]
        %v7261 = vld [vmem:[%s3 + $0xf4] sm:$0xf]
        %v7262 = vld [vmem:[%s3 + $0xf8] sm:$0xf]
        %v7263 = vld [vmem:[%s3 + $0xfc] sm:$0xf]
        %v7264 = vld [vmem:[%s3 + $0x100] sm:$0xf]
        %v7265 = vld [vmem:[%s3 + $0x104] sm:$0xf]
        %v7266 = vld [vmem:[%s3 + $0x108] sm:$0xf]
        %v7267 = vld [vmem:[%s3 + $0x10c] sm:$0xf]
        %v7268 = vld [vmem:[%s3 + $0x110] sm:$0xf]
        %v7269 = vld [vmem:[%s3 + $0x114] sm:$0xf]
        %v7270 = vld [vmem:[%s3 + $0x118] sm:$0xf]
        %v7271 = vld [vmem:[%s3 + $0x11c] sm:$0xf]
        %v7272 = vld [vmem:[%s3 + $0x120] sm:$0xf]
        %v7273 = vld [vmem:[%s3 + $0x124] sm:$0xf]
        %v7274 = vld [vmem:[%s3 + $0x128] sm:$0xf]
        %v7275 = vld [vmem:[%s3 + $0x12c] sm:$0xf]
        %v7276 = vld [vmem:[%s3 + $0x130] sm:$0xf]
        %v7277 = vld [vmem:[%s3 + $0x134] sm:$0xf]
        %v7278 = vld [vmem:[%s3 + $0x138] sm:$0xf]
        %v7279 = vld [vmem:[%s3 + $0x13c] sm:$0xf]
        %v7280 = vld [vmem:[%s3 + $0x140] sm:$0xf]
        %v7281 = vld [vmem:[%s3 + $0x144] sm:$0xf]
        %v7282 = vld [vmem:[%s3 + $0x148] sm:$0xf]
        %v7283 = vld [vmem:[%s3 + $0x14c] sm:$0xf]
        %v7284 = vld [vmem:[%s3 + $0x150] sm:$0xf]
        %v7285 = vld [vmem:[%s3 + $0x154] sm:$0xf]
        %v7286 = vld [vmem:[%s3 + $0x158] sm:$0xf]
        %v7287 = vld [vmem:[%s3 + $0x15c] sm:$0xf]
        %v7288 = vld [vmem:[%s3 + $0x160] sm:$0xf]
        %v7289 = vld [vmem:[%s3 + $0x164] sm:$0xf]
        %v7290 = vld [vmem:[%s3 + $0x168] sm:$0xf]
        %v7291 = vld [vmem:[%s3 + $0x16c] sm:$0xf]
        %v7292 = vld [vmem:[%s3 + $0x170] sm:$0xf]
        %v7293 = vld [vmem:[%s3 + $0x174] sm:$0xf]
        %v7294 = vld [vmem:[%s3 + $0x178] sm:$0xf]
        %v7295 = vld [vmem:[%s3 + $0x17c] sm:$0xf]
        %v7296 = vld [vmem:[%s3 + $0x180] sm:$0xf]
        %v7297 = vld [vmem:[%s3 + $0x184] sm:$0xf]
        %v7298 = vld [vmem:[%s3 + $0x188] sm:$0xf]
        %v7299 = vld [vmem:[%s3 + $0x18c] sm:$0xf]
        %v7300 = vld [vmem:[%s3 + $0x190] sm:$0xf]
        %v7301 = vld [vmem:[%s3 + $0x194] sm:$0xf]
        %v7302 = vld [vmem:[%s3 + $0x198] sm:$0xf]
        %v7303 = vld [vmem:[%s3 + $0x19c] sm:$0xf]
        %v7304 = vld [vmem:[%s3 + $0x1a0] sm:$0xf]
        %v7305 = vld [vmem:[%s3 + $0x1a4] sm:$0xf]
        %v7306 = vld [vmem:[%s3 + $0x1a8] sm:$0xf]
        %v7307 = vld [vmem:[%s3 + $0x1ac] sm:$0xf]
        %v7308 = vld [vmem:[%s3 + $0x1b0] sm:$0xf]
        %v7309 = vld [vmem:[%s3 + $0x1b4] sm:$0xf]
        %v7310 = vld [vmem:[%s3 + $0x1b8] sm:$0xf]
        %v7311 = vld [vmem:[%s3 + $0x1bc] sm:$0xf]
        %v7312 = vld [vmem:[%s3 + $0x1c0] sm:$0xf]
        %v7313 = vld [vmem:[%s3 + $0x1c4] sm:$0xf]
        %v7314 = vld [vmem:[%s3 + $0x1c8] sm:$0xf]
        %v7315 = vld [vmem:[%s3 + $0x1cc] sm:$0xf]
        %v7316 = vld [vmem:[%s3 + $0x1d0] sm:$0xf]
        %v7317 = vld [vmem:[%s3 + $0x1d4] sm:$0xf]
        %v7318 = vld [vmem:[%s3 + $0x1d8] sm:$0xf]
        %v7319 = vld [vmem:[%s3 + $0x1dc] sm:$0xf]
        %v7320 = vld [vmem:[%s3 + $0x1e0] sm:$0xf]
        %v7321 = vld [vmem:[%s3 + $0x1e4] sm:$0xf]
        %v7322 = vld [vmem:[%s3 + $0x1e8] sm:$0xf]
        %v7323 = vld [vmem:[%s3 + $0x1ec] sm:$0xf]
        %v7324 = vld [vmem:[%s3 + $0x1f0] sm:$0xf]
        %v7325 = vld [vmem:[%s3 + $0x1f4] sm:$0xf]
        %v7326 = vld [vmem:[%s3 + $0x1f8] sm:$0xf]
        %v7327 = vld [vmem:[%s3 + $0x1fc] sm:$0xf]
        %v7328 = vld [vmem:[%s4] sm:$0x1]
        %v7330 = vperm.slane %v7328, 0
        %v7460 = vunpack.c.l.b16 %v7200
        %v7461 = vunpack.c.l.b16 %v7201
        %v7462 = vunpack.c.l.b16 %v7202
        %v7463 = vunpack.c.l.b16 %v7203
        %v7464 = vunpack.c.l.b16 %v7204
        %v7465 = vunpack.c.l.b16 %v7205
        %v7466 = vunpack.c.l.b16 %v7206
        %v7467 = vunpack.c.l.b16 %v7207
        %v7468 = vunpack.c.l.b16 %v7208
        %v7469 = vunpack.c.l.b16 %v7209
        %v7470 = vunpack.c.l.b16 %v7210
        %v7471 = vunpack.c.l.b16 %v7211
        %v7472 = vunpack.c.l.b16 %v7212
        %v7473 = vunpack.c.l.b16 %v7213
        %v7474 = vunpack.c.l.b16 %v7214
        %v7475 = vunpack.c.l.b16 %v7215
        %v7476 = vunpack.c.l.b16 %v7216
        %v7477 = vunpack.c.l.b16 %v7217
        %v7478 = vunpack.c.l.b16 %v7218
        %v7479 = vunpack.c.l.b16 %v7219
        %v7480 = vunpack.c.l.b16 %v7220
        %v7481 = vunpack.c.l.b16 %v7221
        %v7482 = vunpack.c.l.b16 %v7222
        %v7483 = vunpack.c.l.b16 %v7223
        %v7484 = vunpack.c.l.b16 %v7224
        %v7485 = vunpack.c.l.b16 %v7225
        %v7486 = vunpack.c.l.b16 %v7226
        %v7487 = vunpack.c.l.b16 %v7227
        %v7488 = vunpack.c.l.b16 %v7228
        %v7489 = vunpack.c.l.b16 %v7229
        %v7490 = vunpack.c.l.b16 %v7230
        %v7491 = vunpack.c.l.b16 %v7231
        %v7492 = vunpack.c.l.b16 %v7232
        %v7493 = vunpack.c.l.b16 %v7233
        %v7494 = vunpack.c.l.b16 %v7234
        %v7495 = vunpack.c.l.b16 %v7235
        %v7496 = vunpack.c.l.b16 %v7236
        %v7497 = vunpack.c.l.b16 %v7237
        %v7498 = vunpack.c.l.b16 %v7238
        %v7499 = vunpack.c.l.b16 %v7239
        %v7500 = vunpack.c.l.b16 %v7240
        %v7501 = vunpack.c.l.b16 %v7241
        %v7502 = vunpack.c.l.b16 %v7242
        %v7503 = vunpack.c.l.b16 %v7243
        %v7504 = vunpack.c.l.b16 %v7244
        %v7505 = vunpack.c.l.b16 %v7245
        %v7506 = vunpack.c.l.b16 %v7246
        %v7507 = vunpack.c.l.b16 %v7247
        %v7508 = vunpack.c.l.b16 %v7248
        %v7509 = vunpack.c.l.b16 %v7249
        %v7510 = vunpack.c.l.b16 %v7250
        %v7511 = vunpack.c.l.b16 %v7251
        %v7512 = vunpack.c.l.b16 %v7252
        %v7513 = vunpack.c.l.b16 %v7253
        %v7514 = vunpack.c.l.b16 %v7254
        %v7515 = vunpack.c.l.b16 %v7255
        %v7516 = vunpack.c.l.b16 %v7256
        %v7517 = vunpack.c.l.b16 %v7257
        %v7518 = vunpack.c.l.b16 %v7258
        %v7519 = vunpack.c.l.b16 %v7259
        %v7520 = vunpack.c.l.b16 %v7260
        %v7521 = vunpack.c.l.b16 %v7261
        %v7522 = vunpack.c.l.b16 %v7262
        %v7523 = vunpack.c.l.b16 %v7263
        %v7524 = vunpack.c.l.b16 %v7264
        %v7525 = vunpack.c.l.b16 %v7265
        %v7526 = vunpack.c.l.b16 %v7266
        %v7527 = vunpack.c.l.b16 %v7267
        %v7528 = vunpack.c.l.b16 %v7268
        %v7529 = vunpack.c.l.b16 %v7269
        %v7530 = vunpack.c.l.b16 %v7270
        %v7531 = vunpack.c.l.b16 %v7271
        %v7532 = vunpack.c.l.b16 %v7272
        %v7533 = vunpack.c.l.b16 %v7273
        %v7534 = vunpack.c.l.b16 %v7274
        %v7535 = vunpack.c.l.b16 %v7275
        %v7536 = vunpack.c.l.b16 %v7276
        %v7537 = vunpack.c.l.b16 %v7277
        %v7538 = vunpack.c.l.b16 %v7278
        %v7539 = vunpack.c.l.b16 %v7279
        %v7540 = vunpack.c.l.b16 %v7280
        %v7541 = vunpack.c.l.b16 %v7281
        %v7542 = vunpack.c.l.b16 %v7282
        %v7543 = vunpack.c.l.b16 %v7283
        %v7544 = vunpack.c.l.b16 %v7284
        %v7545 = vunpack.c.l.b16 %v7285
        %v7546 = vunpack.c.l.b16 %v7286
        %v7547 = vunpack.c.l.b16 %v7287
        %v7548 = vunpack.c.l.b16 %v7288
        %v7549 = vunpack.c.l.b16 %v7289
        %v7550 = vunpack.c.l.b16 %v7290
        %v7551 = vunpack.c.l.b16 %v7291
        %v7552 = vunpack.c.l.b16 %v7292
        %v7553 = vunpack.c.l.b16 %v7293
        %v7554 = vunpack.c.l.b16 %v7294
        %v7555 = vunpack.c.l.b16 %v7295
        %v7556 = vunpack.c.l.b16 %v7296
        %v7557 = vunpack.c.l.b16 %v7297
        %v7558 = vunpack.c.l.b16 %v7298
        %v7559 = vunpack.c.l.b16 %v7299
        %v7560 = vunpack.c.l.b16 %v7300
        %v7561 = vunpack.c.l.b16 %v7301
        %v7562 = vunpack.c.l.b16 %v7302
        %v7563 = vunpack.c.l.b16 %v7303
        %v7564 = vunpack.c.l.b16 %v7304
        %v7565 = vunpack.c.l.b16 %v7305
        %v7566 = vunpack.c.l.b16 %v7306
        %v7567 = vunpack.c.l.b16 %v7307
        %v7568 = vunpack.c.l.b16 %v7308
        %v7569 = vunpack.c.l.b16 %v7309
        %v7570 = vunpack.c.l.b16 %v7310
        %v7571 = vunpack.c.l.b16 %v7311
        %v7572 = vunpack.c.l.b16 %v7312
        %v7573 = vunpack.c.l.b16 %v7313
        %v7574 = vunpack.c.l.b16 %v7314
        %v7575 = vunpack.c.l.b16 %v7315
        %v7576 = vunpack.c.l.b16 %v7316
        %v7577 = vunpack.c.l.b16 %v7317
        %v7578 = vunpack.c.l.b16 %v7318
        %v7579 = vunpack.c.l.b16 %v7319
        %v7580 = vunpack.c.l.b16 %v7320
        %v7581 = vunpack.c.l.b16 %v7321
        %v7582 = vunpack.c.l.b16 %v7322
        %v7583 = vunpack.c.l.b16 %v7323
        %v7584 = vunpack.c.l.b16 %v7324
        %v7585 = vunpack.c.l.b16 %v7325
        %v7586 = vunpack.c.l.b16 %v7326
        %v7587 = vunpack.c.l.b16 %v7327
        %v7588 = vpack.c.b16 %v7461, %v7460
        %v7589 = vpack.c.b16 %v7463, %v7462
        %v7590 = vpack.c.b16 %v7465, %v7464
        %v7591 = vpack.c.b16 %v7467, %v7466
        %v7592 = vpack.c.b16 %v7469, %v7468
        %v7593 = vpack.c.b16 %v7471, %v7470
        %v7594 = vpack.c.b16 %v7473, %v7472
        %v7595 = vpack.c.b16 %v7475, %v7474
        %v7596 = vpack.c.b16 %v7477, %v7476
        %v7597 = vpack.c.b16 %v7479, %v7478
        %v7598 = vpack.c.b16 %v7481, %v7480
        %v7599 = vpack.c.b16 %v7483, %v7482
        %v7600 = vpack.c.b16 %v7485, %v7484
        %v7601 = vpack.c.b16 %v7487, %v7486
        %v7602 = vpack.c.b16 %v7489, %v7488
        %v7603 = vpack.c.b16 %v7491, %v7490
        %v7604 = vpack.c.b16 %v7493, %v7492
        %v7605 = vpack.c.b16 %v7495, %v7494
        %v7606 = vpack.c.b16 %v7497, %v7496
        %v7607 = vpack.c.b16 %v7499, %v7498
        %v7608 = vpack.c.b16 %v7501, %v7500
        %v7609 = vpack.c.b16 %v7503, %v7502
        %v7610 = vpack.c.b16 %v7505, %v7504
        %v7611 = vpack.c.b16 %v7507, %v7506
        %v7612 = vpack.c.b16 %v7509, %v7508
        %v7613 = vpack.c.b16 %v7511, %v7510
        %v7614 = vpack.c.b16 %v7513, %v7512
        %v7615 = vpack.c.b16 %v7515, %v7514
        %v7616 = vpack.c.b16 %v7517, %v7516
        %v7617 = vpack.c.b16 %v7519, %v7518
        %v7618 = vpack.c.b16 %v7521, %v7520
        %v7619 = vpack.c.b16 %v7523, %v7522
        %v7620 = vpack.c.b16 %v7525, %v7524
        %v7621 = vpack.c.b16 %v7527, %v7526
        %v7622 = vpack.c.b16 %v7529, %v7528
        %v7623 = vpack.c.b16 %v7531, %v7530
        %v7624 = vpack.c.b16 %v7533, %v7532
        %v7625 = vpack.c.b16 %v7535, %v7534
        %v7626 = vpack.c.b16 %v7537, %v7536
        %v7627 = vpack.c.b16 %v7539, %v7538
        %v7628 = vpack.c.b16 %v7541, %v7540
        %v7629 = vpack.c.b16 %v7543, %v7542
        %v7630 = vpack.c.b16 %v7545, %v7544
        %v7631 = vpack.c.b16 %v7547, %v7546
        %v7632 = vpack.c.b16 %v7549, %v7548
        %v7633 = vpack.c.b16 %v7551, %v7550
        %v7634 = vpack.c.b16 %v7553, %v7552
        %v7635 = vpack.c.b16 %v7555, %v7554
        %v7636 = vpack.c.b16 %v7557, %v7556
        %v7637 = vpack.c.b16 %v7559, %v7558
        %v7638 = vpack.c.b16 %v7561, %v7560
        %v7639 = vpack.c.b16 %v7563, %v7562
        %v7640 = vpack.c.b16 %v7565, %v7564
        %v7641 = vpack.c.b16 %v7567, %v7566
        %v7642 = vpack.c.b16 %v7569, %v7568
        %v7643 = vpack.c.b16 %v7571, %v7570
        %v7644 = vpack.c.b16 %v7573, %v7572
        %v7645 = vpack.c.b16 %v7575, %v7574
        %v7646 = vpack.c.b16 %v7577, %v7576
        %v7647 = vpack.c.b16 %v7579, %v7578
        %v7648 = vpack.c.b16 %v7581, %v7580
        %v7649 = vpack.c.b16 %v7583, %v7582
        %v7650 = vpack.c.b16 %v7585, %v7584
        %v7651 = vpack.c.b16 %v7587, %v7586
        %7716 = vmatpush.bf16.msra.mxu0 %v7595
        %7717 = vmatpush.bf16.msra.mxu0 %v7594
        %7718 = vmatpush.bf16.msra.mxu0 %v7593
        %7719 = vmatpush.bf16.msra.mxu0 %v7592
        %7720 = vmatpush.bf16.msra.mxu0 %v7591
        %7721 = vmatpush.bf16.msra.mxu0 %v7590
        %7722 = vmatpush.bf16.msra.mxu0 %v7589
        %7723 = vmatpush.bf16.msra.mxu0 %v7588
        %7724 = vmatmul.bf16.gmra.mxu0 %v7192
        %v7725 = vpop.f32.mrf.mxu0
        %v7726 = vadd.f32 %v7330, %v7725
        %v7727 = vpop.f32.mrf.mxu0
        %7728 = vdwg.mxu0
        %7729 = vmatpush.bf16.msra.mxu0 %v7603
        %7730 = vmatpush.bf16.msra.mxu0 %v7602
        %7731 = vmatpush.bf16.msra.mxu0 %v7601
        %7732 = vmatpush.bf16.msra.mxu0 %v7600
        %7733 = vmatpush.bf16.msra.mxu0 %v7599
        %7734 = vmatpush.bf16.msra.mxu0 %v7598
        %7735 = vmatpush.bf16.msra.mxu0 %v7597
        %7736 = vmatpush.bf16.msra.mxu0 %v7596
        %7737 = vmatmul.bf16.gmra.mxu0 %v7193
        %v7738 = vpop.f32.mrf.mxu0
        %v7739 = vadd.f32 %v7726, %v7738
        %v7740 = vpop.f32.mrf.mxu0
        %7741 = vdwg.mxu0
        %7742 = vmatpush.bf16.msra.mxu0 %v7611
        %7743 = vmatpush.bf16.msra.mxu0 %v7610
        %7744 = vmatpush.bf16.msra.mxu0 %v7609
        %7745 = vmatpush.bf16.msra.mxu0 %v7608
        %7746 = vmatpush.bf16.msra.mxu0 %v7607
        %7747 = vmatpush.bf16.msra.mxu0 %v7606
        %7748 = vmatpush.bf16.msra.mxu0 %v7605
        %7749 = vmatpush.bf16.msra.mxu0 %v7604
        %7750 = vmatmul.bf16.gmra.mxu0 %v7194
        %v7751 = vpop.f32.mrf.mxu0
        %v7752 = vadd.f32 %v7739, %v7751
        %v7753 = vpop.f32.mrf.mxu0
        %7754 = vdwg.mxu0
        %7755 = vmatpush.bf16.msra.mxu0 %v7619
        %7756 = vmatpush.bf16.msra.mxu0 %v7618
        %7757 = vmatpush.bf16.msra.mxu0 %v7617
        %7758 = vmatpush.bf16.msra.mxu0 %v7616
        %7759 = vmatpush.bf16.msra.mxu0 %v7615
        %7760 = vmatpush.bf16.msra.mxu0 %v7614
        %7761 = vmatpush.bf16.msra.mxu0 %v7613
        %7762 = vmatpush.bf16.msra.mxu0 %v7612
        %7763 = vmatmul.bf16.gmra.mxu0 %v7195
        %v7764 = vpop.f32.mrf.mxu0
        %v7765 = vadd.f32 %v7752, %v7764
        %v7766 = vpop.f32.mrf.mxu0
        %7767 = vdwg.mxu0
        %7768 = vmatpush.bf16.msra.mxu0 %v7627
        %7769 = vmatpush.bf16.msra.mxu0 %v7626
        %7770 = vmatpush.bf16.msra.mxu0 %v7625
        %7771 = vmatpush.bf16.msra.mxu0 %v7624
        %7772 = vmatpush.bf16.msra.mxu0 %v7623
        %7773 = vmatpush.bf16.msra.mxu0 %v7622
        %7774 = vmatpush.bf16.msra.mxu0 %v7621
        %7775 = vmatpush.bf16.msra.mxu0 %v7620
        %7776 = vmatmul.bf16.gmra.mxu0 %v7196
        %v7777 = vpop.f32.mrf.mxu0
        %v7778 = vadd.f32 %v7765, %v7777
        %v7779 = vpop.f32.mrf.mxu0
        %7780 = vdwg.mxu0
        %7781 = vmatpush.bf16.msra.mxu0 %v7635
        %7782 = vmatpush.bf16.msra.mxu0 %v7634
        %7783 = vmatpush.bf16.msra.mxu0 %v7633
        %7784 = vmatpush.bf16.msra.mxu0 %v7632
        %7785 = vmatpush.bf16.msra.mxu0 %v7631
        %7786 = vmatpush.bf16.msra.mxu0 %v7630
        %7787 = vmatpush.bf16.msra.mxu0 %v7629
        %7788 = vmatpush.bf16.msra.mxu0 %v7628
        %7789 = vmatmul.bf16.gmra.mxu0 %v7197
        %v7790 = vpop.f32.mrf.mxu0
        %v7791 = vadd.f32 %v7778, %v7790
        %v7792 = vpop.f32.mrf.mxu0
        %7793 = vdwg.mxu0
        %7794 = vmatpush.bf16.msra.mxu0 %v7643
        %7795 = vmatpush.bf16.msra.mxu0 %v7642
        %7796 = vmatpush.bf16.msra.mxu0 %v7641
        %7797 = vmatpush.bf16.msra.mxu0 %v7640
        %7798 = vmatpush.bf16.msra.mxu0 %v7639
        %7799 = vmatpush.bf16.msra.mxu0 %v7638
        %7800 = vmatpush.bf16.msra.mxu0 %v7637
        %7801 = vmatpush.bf16.msra.mxu0 %v7636
        %7802 = vmatmul.bf16.gmra.mxu0 %v7198
        %v7803 = vpop.f32.mrf.mxu0
        %v7804 = vadd.f32 %v7791, %v7803
        %v7805 = vpop.f32.mrf.mxu0
        %7806 = vdwg.mxu0
        %7807 = vmatpush.bf16.msra.mxu0 %v7651
        %7808 = vmatpush.bf16.msra.mxu0 %v7650
        %7809 = vmatpush.bf16.msra.mxu0 %v7649
        %7810 = vmatpush.bf16.msra.mxu0 %v7648
        %7811 = vmatpush.bf16.msra.mxu0 %v7647
        %7812 = vmatpush.bf16.msra.mxu0 %v7646
        %7813 = vmatpush.bf16.msra.mxu0 %v7645
        %7814 = vmatpush.bf16.msra.mxu0 %v7644
        %7815 = vmatmul.bf16.gmra.mxu0 %v7199
        %v7816 = vpop.f32.mrf.mxu0
        %v7817 = vadd.f32 %v7804, %v7816
        %v7818 = vpop.f32.mrf.mxu0
        %7819 = vdwg.mxu0
        %v7820 = vlaneseq
        %v7821 = vand.u32 %v7820, 127
        %vm7822 = vcmp.ge.s32.totalorder %v7821, 1
        %vm7823 = vcmp.le.s32.totalorder %v7821, 6
        %vm7824 = vmand %vm7822, %vm7823
        %v7825 = vsel %vm7824, %v7817, 0.0
        %v7826 = vsel %vm7122, %v7825, 0.0
        %7827 = vadd.xlane.f32.xlu0 %v7826
        %v7828 = vpop.xlane.xlu0 %7827
        %v7829 = vrcp.pop 6.0
        %v7830 = vmul.f32 6.0, %v7829
        %v7831 = vsub.f32 1.0, %v7830
        %v7832 = vmul.f32 %v7829, %v7831
        %v7833 = vadd.f32 %v7829, %v7832
        %vm7834 = vweird.f32 %v7829
        %v7835 = vsel %vm7834, %v7829, %v7833
        %v7836 = vmul.f32 %v7828, %v7835
        %7838 = vset.pattern.permute.xlu0 0
        %7839 = vperm.xlu0 %7838, %v7817
        %v7840 = vpop.permute.xlu0 %7839
        %v7842 = vadd.f32 %v7817, %v7840
        %v7843 = vsub.f32 %v7842, %v7836
        %v7844 = vsel %vm7824, %v7843, 0.0
        %7845 = vst [vmem:[%s5] sm:$0x3] %v7844
      $region48: #{dqn_forward.7} parent=39 // pred_fallthru
        _
      // Predicated region
      $region49: #{dqn_forward.7} parent=39 // pred_check
        %p7846 = pneg %p144
      $region50: #{dqn_forward.7} parent=39 // pred_check_branch
        %7848 = sbr.rel (%p7846) target = $region52
      $region51: #{dqn_forward.7} parent=39 // pred_region
        _
      $region52: #{dqn_forward.7} parent=39 // pred_fallthru
        _
      // Predicated region
      $region53: #{dqn_forward.7} parent=39 // pred_check
        %p7849 = pneg %p144
      $region54: #{dqn_forward.7} parent=39 // pred_check_branch
        %7851 = sbr.rel (%p7849) target = $region56
      $region55: #{dqn_forward.7} parent=39 // pred_region
        _
      $region56: #{dqn_forward.7} parent=39 // pred_fallthru
        _
    $region40: #{dqn_forward.7} parent=5 // pred_fallthru
      _
    %p7852 = scmp.le.s32.totalorder 2, %s11
    // Predicated region
    $region57: #{dqn_forward.7} parent=5 // pred_check
      %p7853 = pneg %p7852
    $region58: #{dqn_forward.7} parent=5 // pred_check_branch
      %7855 = sbr.rel (%p7853) target = $region60
    $region59: #{dqn_forward.7} parent=5 // pred_region
      %s7856 = ssub.s32 %s11, 2
    $region60: #{dqn_forward.7} parent=5 // pred_fallthru
      _
  $region6: #{dqn_forward.7} parent=0 // loop_footer
    %s15 = sadd.s32 1, %s11
  $region7: #{dqn_forward.7} parent=0 // loop_footer_branch
    %10 = sbr.rel target = $region3
  $region8: #{dqn_forward.7} parent=0 // loop_exit
    _

</llo_original>
